<compile_context>
chip_gen: v5e
topology: v5e:2x2
jax: 0.10.0
libtpu: 0.0.40
codegen_flags: <defaults>
</compile_context>

<pallas_src>
import jax
import jax.numpy as jnp
from jax.experimental import pallas as pl
from jax.experimental.pallas import tpu as pltpu

LATENT_DIM = 32
CHANNELS = 4
IMG_SIZE = 16
IMG_FLAT = CHANNELS * IMG_SIZE * IMG_SIZE  # 1024
HIDDEN = (128, 256, 512, 1024)
BN_EPS = 0.8
LEAK = 0.2

# Row layout of the packed per-layer-vector slab, shape (16, IMG_FLAT) f32:
#   row 0: b1 (128)     row 1: s1 (128)
#   row 2: s2 (256)     row 3: gamma2 (256)   row 4: beta2 (256)
#   row 5: s3 (512)     row 6: gamma3 (512)   row 7: beta3 (512)
#   row 8: s4 (1024)    row 9: gamma4 (1024)  row 10: beta4 (1024)
#   row 11: s5 (1024)   row 12: b5 (1024)     rows 13-15: padding


def _leaky_relu(x):
    return jnp.where(x > 0, x, LEAK * x)


def _batchnorm(x, gamma, beta):
    # One-pass batch statistics (biased variance), eps = 0.8 as in
    # nn.BatchNorm1d(out_feat, 0.8) training-mode forward.
    # (E[x^2]-mean^2 can round slightly negative; safe only because eps=0.8.)
    mean = jnp.mean(x, axis=0, keepdims=True)
    var = jnp.mean(x * x, axis=0, keepdims=True) - mean * mean
    inv = jax.lax.rsqrt(var + BN_EPS)
    return (x - mean) * inv * gamma + beta


def _dequant_bf16(q_i8):
    # si8 -> f32 -> bf16: two-step cast, both conversions have well-supported
    # Mosaic lowerings (VPU work; compute is not the bottleneck here).
    return q_i8.astype(jnp.float32).astype(jnp.bfloat16)


def generator_kernel(z_ref, vec_ref, w1_ref, w2_ref, w3_ref, w45_ref, out_ref):
    H1, H2, H3, H4 = HIDDEN

    # Static slices into the packed vector slab (zero-cost views, then load).
    b1 = vec_ref[0:1, :H1]
    s1 = vec_ref[1:2, :H1]
    s2, g2, be2 = vec_ref[2:3, :H2], vec_ref[3:4, :H2], vec_ref[4:5, :H2]
    s3, g3, be3 = vec_ref[5:6, :H3], vec_ref[6:7, :H3], vec_ref[7:8, :H3]
    s4, g4, be4 = vec_ref[8:9, :], vec_ref[9:10, :], vec_ref[10:11, :]
    s5, b5 = vec_ref[11:12, :], vec_ref[12:13, :]

    # block 1: Linear(latent, 128) + bias + LeakyReLU (normalize=False)
    h = jnp.dot(z_ref[...].astype(jnp.bfloat16), _dequant_bf16(w1_ref[...]),
                preferred_element_type=jnp.float32) * s1 + b1
    h = _leaky_relu(h)

    # block 2: Linear(128, 256) + BatchNorm1d + LeakyReLU
    # (Linear bias dropped — exactly cancelled by the BN mean subtraction.
    #  Per-channel quant scale applied before BN because eps=0.8 is not
    #  scale-invariant.)
    h = jnp.dot(h.astype(jnp.bfloat16), _dequant_bf16(w2_ref[...]),
                preferred_element_type=jnp.float32) * s2
    h = _leaky_relu(_batchnorm(h, g2, be2))

    # block 3: Linear(256, 512) + BatchNorm1d + LeakyReLU
    h = jnp.dot(h.astype(jnp.bfloat16), _dequant_bf16(w3_ref[...]),
                preferred_element_type=jnp.float32) * s3
    h = _leaky_relu(_batchnorm(h, g3, be3))

    # block 4: Linear(512, 1024) + BatchNorm1d + LeakyReLU
    # w4 = rows [0:512) of the packed w4||w5 slab (tile-aligned static slice).
    h = jnp.dot(h.astype(jnp.bfloat16), _dequant_bf16(w45_ref[0:H3, :]),
                preferred_element_type=jnp.float32) * s4
    h = _leaky_relu(_batchnorm(h, g4, be4))

    # final: Linear(1024, C*H*W) + bias + Tanh
    # w5 = rows [512:1536) of the packed w4||w5 slab.
    h = jnp.dot(h.astype(jnp.bfloat16), _dequant_bf16(w45_ref[H3:H3 + H4, :]),
                preferred_element_type=jnp.float32) * s5 + b5
    out_ref[...] = jnp.tanh(h).astype(jnp.bfloat16)


def _quantize_per_col(w):
    """Symmetric per-output-channel int8 quantization of a (fan_in, fan_out) weight."""
    amax = jnp.max(jnp.abs(w), axis=0, keepdims=True)            # (1, out)
    scale = jnp.where(amax > 0.0, amax / 127.0, 1.0)              # (1, out)
    q = jnp.clip(jnp.round(w / scale), -127.0, 127.0).astype(jnp.int8)
    return q, scale[0]                                            # (out,)


def init_params(key):
    """PyTorch-style uniform(-1/sqrt(fan_in), +1/sqrt(fan_in)) init.

    Weights are quantized to int8 with per-output-channel f32 scales (halves the
    dominant HBM weight traffic vs bf16). Small per-layer vectors (biases, BN
    affine params, quant scales) are packed into a single (16, IMG_FLAT) f32 slab.
    """
    dims = [(LATENT_DIM, HIDDEN[0]),
            (HIDDEN[0], HIDDEN[1]),
            (HIDDEN[1], HIDDEN[2]),
            (HIDDEN[2], HIDDEN[3]),
            (HIDDEN[3], IMG_FLAT)]
    qweights, scales, biases = [], [], []
    for fan_in, fan_out in dims:
        key, kw, kb = jax.random.split(key, 3)
        bound = 1.0 / (float(fan_in) ** 0.5)
        w = jax.random.uniform(kw, (fan_in, fan_out), jnp.float32, -bound, bound)
        b = jax.random.uniform(kb, (fan_out,), jnp.float32, -bound, bound)
        q, s = _quantize_per_col(w)
        qweights.append(q)
        scales.append(s)
        biases.append(b)

    # BatchNorm affine params for blocks 2-4 (gamma=1, beta=0, PyTorch init).
    g2, be2 = jnp.ones((HIDDEN[1],), jnp.float32), jnp.zeros((HIDDEN[1],), jnp.float32)
    g3, be3 = jnp.ones((HIDDEN[2],), jnp.float32), jnp.zeros((HIDDEN[2],), jnp.float32)
    g4, be4 = jnp.ones((HIDDEN[3],), jnp.float32), jnp.zeros((HIDDEN[3],), jnp.float32)

    # Pack b1 / quant scales / BN gammas & betas / b5 into one lane-dense slab.
    # (b2/b3/b4 intentionally omitted: cancelled by batch-stat BatchNorm.)
    slab = jnp.zeros((16, IMG_FLAT), jnp.float32)
    rows = ((0, biases[0]), (1, scales[0]),
            (2, scales[1]), (3, g2), (4, be2),
            (5, scales[2]), (6, g3), (7, be3),
            (8, scales[3]), (9, g4), (10, be4),
            (11, scales[4]), (12, biases[4]))
    for r, v in rows:
        slab = slab.at[r, :v.shape[0]].set(v)

    # Concatenate the two widest weights (same 1024-lane width) into one slab
    # so their bytes move in a single contiguous DMA.
    w45 = jnp.concatenate([qweights[3], qweights[4]], axis=0)   # (1536, 1024) int8

    return (qweights[0], qweights[1], qweights[2], w45), slab


def generator_forward(z, weights, vec_slab):
    w1, w2, w3, w45 = weights
    B = z.shape[0]

    # Single-invocation kernel: the whole batch is required in one shot for
    # batch-statistic BatchNorm, and all int8 weights (~1.66 MiB) fit in VMEM.
    # vmem_limit_bytes covers the int8 weights + the transient f32/bf16
    # dequant copies of the largest layer (w5) with headroom.
    flat = pl.pallas_call(
        generator_kernel,
        out_shape=jax.ShapeDtypeStruct((B, IMG_FLAT), jnp.bfloat16),
        in_specs=[
            pl.BlockSpec(memory_space=pltpu.MemorySpace.VMEM),  # z
            pl.BlockSpec(memory_space=pltpu.MemorySpace.VMEM),  # packed vectors
            pl.BlockSpec(memory_space=pltpu.MemorySpace.VMEM),  # w1 int8
            pl.BlockSpec(memory_space=pltpu.MemorySpace.VMEM),  # w2 int8
            pl.BlockSpec(memory_space=pltpu.MemorySpace.VMEM),  # w3 int8
            pl.BlockSpec(memory_space=pltpu.MemorySpace.VMEM),  # w4||w5 int8 slab
        ],
        out_specs=pl.BlockSpec(memory_space=pltpu.MemorySpace.VMEM),
        compiler_params=pltpu.CompilerParams(
            vmem_limit_bytes=32 * 1024 * 1024),
    )(z, vec_slab, w1, w2, w3, w45)

    # Same as img.view(B, C, H, W) in the PyTorch reference.
    return flat.reshape(B, CHANNELS, IMG_SIZE, IMG_SIZE)


if __name__ == "__main__":
    key = jax.random.PRNGKey(0)
    key, zk, pk = jax.random.split(key, 3)

    B = 8  # >= 2 required for batch-stat BatchNorm; matches the f32 sublane tile
    z = jax.random.normal(zk, (B, LATENT_DIM), jnp.float32)

    weights, vec_slab = init_params(pk)

    img = generator_forward(z, weights, vec_slab)
    jax.block_until_ready(img)

    assert img.shape == (B, CHANNELS, IMG_SIZE, IMG_SIZE)
    assert img.dtype == jnp.bfloat16
    assert bool(jnp.all(jnp.isfinite(img.astype(jnp.float32))))
    print("KERNEL_OK")
</pallas_src>

<mosaic_0001>
module attributes {stable_mosaic.version = 11 : i64} {
  func.func @generator_kernel(%arg0: memref<8x32xf32, #tpu.memory_space<vmem>>, %arg1: memref<16x1024xf32, #tpu.memory_space<vmem>>, %arg2: memref<32x128xi8, #tpu.memory_space<vmem>>, %arg3: memref<128x256xi8, #tpu.memory_space<vmem>>, %arg4: memref<256x512xi8, #tpu.memory_space<vmem>>, %arg5: memref<1536x1024xi8, #tpu.memory_space<vmem>>, %arg6: memref<8x1024xbf16, #tpu.memory_space<vmem>>) attributes {dimension_semantics = [], scalar_prefetch = 0 : i64, scratch_operands = 0 : i64, tpu.core_type = #tpu.core_type<tc>} {
    %c0 = arith.constant 0 : index
    %c0_0 = arith.constant 0 : index
    %0 = vector.load %arg1[%c0, %c0_0] : memref<16x1024xf32, #tpu.memory_space<vmem>>, vector<1x128xf32>
    %c1 = arith.constant 1 : index
    %c0_1 = arith.constant 0 : index
    %1 = vector.load %arg1[%c1, %c0_1] : memref<16x1024xf32, #tpu.memory_space<vmem>>, vector<1x128xf32>
    %c2 = arith.constant 2 : index
    %c0_2 = arith.constant 0 : index
    %2 = vector.load %arg1[%c2, %c0_2] : memref<16x1024xf32, #tpu.memory_space<vmem>>, vector<1x256xf32>
    %c3 = arith.constant 3 : index
    %c0_3 = arith.constant 0 : index
    %3 = vector.load %arg1[%c3, %c0_3] : memref<16x1024xf32, #tpu.memory_space<vmem>>, vector<1x256xf32>
    %c4 = arith.constant 4 : index
    %c0_4 = arith.constant 0 : index
    %4 = vector.load %arg1[%c4, %c0_4] : memref<16x1024xf32, #tpu.memory_space<vmem>>, vector<1x256xf32>
    %c5 = arith.constant 5 : index
    %c0_5 = arith.constant 0 : index
    %5 = vector.load %arg1[%c5, %c0_5] : memref<16x1024xf32, #tpu.memory_space<vmem>>, vector<1x512xf32>
    %c6 = arith.constant 6 : index
    %c0_6 = arith.constant 0 : index
    %6 = vector.load %arg1[%c6, %c0_6] : memref<16x1024xf32, #tpu.memory_space<vmem>>, vector<1x512xf32>
    %c7 = arith.constant 7 : index
    %c0_7 = arith.constant 0 : index
    %7 = vector.load %arg1[%c7, %c0_7] : memref<16x1024xf32, #tpu.memory_space<vmem>>, vector<1x512xf32>
    %c8 = arith.constant 8 : index
    %c0_8 = arith.constant 0 : index
    %8 = vector.load %arg1[%c8, %c0_8] : memref<16x1024xf32, #tpu.memory_space<vmem>>, vector<1x1024xf32>
    %c9 = arith.constant 9 : index
    %c0_9 = arith.constant 0 : index
    %9 = vector.load %arg1[%c9, %c0_9] : memref<16x1024xf32, #tpu.memory_space<vmem>>, vector<1x1024xf32>
    %c10 = arith.constant 10 : index
    %c0_10 = arith.constant 0 : index
    %10 = vector.load %arg1[%c10, %c0_10] : memref<16x1024xf32, #tpu.memory_space<vmem>>, vector<1x1024xf32>
    %c11 = arith.constant 11 : index
    %c0_11 = arith.constant 0 : index
    %11 = vector.load %arg1[%c11, %c0_11] : memref<16x1024xf32, #tpu.memory_space<vmem>>, vector<1x1024xf32>
    %c12 = arith.constant 12 : index
    %c0_12 = arith.constant 0 : index
    %12 = vector.load %arg1[%c12, %c0_12] : memref<16x1024xf32, #tpu.memory_space<vmem>>, vector<1x1024xf32>
    %c0_13 = arith.constant 0 : index
    %c0_14 = arith.constant 0 : index
    %13 = vector.load %arg0[%c0_13, %c0_14] : memref<8x32xf32, #tpu.memory_space<vmem>>, vector<8x32xf32>
    %14 = arith.truncf %13 : vector<8x32xf32> to vector<8x32xbf16>
    %c0_15 = arith.constant 0 : index
    %c0_16 = arith.constant 0 : index
    %15 = vector.load %arg2[%c0_15, %c0_16] : memref<32x128xi8, #tpu.memory_space<vmem>>, vector<32x128xi8>
    %16 = arith.sitofp %15 : vector<32x128xi8> to vector<32x128xf32>
    %17 = arith.truncf %16 : vector<32x128xf32> to vector<32x128xbf16>
    %cst = arith.constant dense<0.000000e+00> : vector<8x128xf32>
    %18 = tpu.matmul %14, %17, %cst {dimension_numbers = #tpu.dot_dimension_numbers<[1], [0], [0], [1], [0, 0, 1, 1], [], []>} : vector<8x32xbf16>, vector<32x128xbf16>, vector<8x128xf32> -> vector<8x128xf32>
    %19 = vector.broadcast %1 : vector<1x128xf32> to vector<8x128xf32>
    %20 = arith.mulf %18, %19 : vector<8x128xf32>
    %21 = vector.broadcast %0 : vector<1x128xf32> to vector<8x128xf32>
    %22 = arith.addf %20, %21 : vector<8x128xf32>
    %cst_17 = arith.constant 0.000000e+00 : f32
    %23 = vector.broadcast %cst_17 : f32 to vector<8x128xf32>
    %24 = arith.cmpf ogt, %22, %23 : vector<8x128xf32>
    %cst_18 = arith.constant 2.000000e-01 : f32
    %25 = vector.broadcast %cst_18 : f32 to vector<8x128xf32>
    %26 = arith.mulf %25, %22 : vector<8x128xf32>
    %27 = arith.select %24, %22, %26 : vector<8x128xi1>, vector<8x128xf32>
    %28 = arith.truncf %27 : vector<8x128xf32> to vector<8x128xbf16>
    %c0_19 = arith.constant 0 : index
    %c0_20 = arith.constant 0 : index
    %29 = vector.load %arg3[%c0_19, %c0_20] : memref<128x256xi8, #tpu.memory_space<vmem>>, vector<128x256xi8>
    %30 = arith.sitofp %29 : vector<128x256xi8> to vector<128x256xf32>
    %31 = arith.truncf %30 : vector<128x256xf32> to vector<128x256xbf16>
    %cst_21 = arith.constant dense<0.000000e+00> : vector<8x256xf32>
    %32 = tpu.matmul %28, %31, %cst_21 {dimension_numbers = #tpu.dot_dimension_numbers<[1], [0], [0], [1], [0, 0, 1, 1], [], []>} : vector<8x128xbf16>, vector<128x256xbf16>, vector<8x256xf32> -> vector<8x256xf32>
    %33 = vector.broadcast %2 : vector<1x256xf32> to vector<8x256xf32>
    %34 = arith.mulf %32, %33 : vector<8x256xf32>
    %cst_22 = arith.constant dense<0.000000e+00> : vector<256xf32>
    %35 = vector.multi_reduction <add>, %34, %cst_22 [0] : vector<8x256xf32> to vector<256xf32>
    %36 = vector.shape_cast %35 : vector<256xf32> to vector<1x256xf32>
    %cst_23 = arith.constant 8.000000e+00 : f32
    %37 = vector.broadcast %cst_23 : f32 to vector<1x256xf32>
    %38 = arith.divf %36, %37 : vector<1x256xf32>
    %39 = arith.mulf %34, %34 : vector<8x256xf32>
    %cst_24 = arith.constant dense<0.000000e+00> : vector<256xf32>
    %40 = vector.multi_reduction <add>, %39, %cst_24 [0] : vector<8x256xf32> to vector<256xf32>
    %41 = vector.shape_cast %40 : vector<256xf32> to vector<1x256xf32>
    %cst_25 = arith.constant 8.000000e+00 : f32
    %42 = vector.broadcast %cst_25 : f32 to vector<1x256xf32>
    %43 = arith.divf %41, %42 : vector<1x256xf32>
    %44 = arith.mulf %38, %38 : vector<1x256xf32>
    %45 = arith.subf %43, %44 : vector<1x256xf32>
    %cst_26 = arith.constant 8.000000e-01 : f32
    %46 = vector.broadcast %cst_26 : f32 to vector<1x256xf32>
    %47 = arith.addf %45, %46 : vector<1x256xf32>
    %48 = math.rsqrt %47 : vector<1x256xf32>
    %49 = vector.broadcast %38 : vector<1x256xf32> to vector<8x256xf32>
    %50 = arith.subf %34, %49 : vector<8x256xf32>
    %51 = vector.broadcast %48 : vector<1x256xf32> to vector<8x256xf32>
    %52 = arith.mulf %50, %51 : vector<8x256xf32>
    %53 = vector.broadcast %3 : vector<1x256xf32> to vector<8x256xf32>
    %54 = arith.mulf %52, %53 : vector<8x256xf32>
    %55 = vector.broadcast %4 : vector<1x256xf32> to vector<8x256xf32>
    %56 = arith.addf %54, %55 : vector<8x256xf32>
    %cst_27 = arith.constant 0.000000e+00 : f32
    %57 = vector.broadcast %cst_27 : f32 to vector<8x256xf32>
    %58 = arith.cmpf ogt, %56, %57 : vector<8x256xf32>
    %cst_28 = arith.constant 2.000000e-01 : f32
    %59 = vector.broadcast %cst_28 : f32 to vector<8x256xf32>
    %60 = arith.mulf %59, %56 : vector<8x256xf32>
    %61 = arith.select %58, %56, %60 : vector<8x256xi1>, vector<8x256xf32>
    %62 = arith.truncf %61 : vector<8x256xf32> to vector<8x256xbf16>
    %c0_29 = arith.constant 0 : index
    %c0_30 = arith.constant 0 : index
    %63 = vector.load %arg4[%c0_29, %c0_30] : memref<256x512xi8, #tpu.memory_space<vmem>>, vector<256x512xi8>
    %64 = arith.sitofp %63 : vector<256x512xi8> to vector<256x512xf32>
    %65 = arith.truncf %64 : vector<256x512xf32> to vector<256x512xbf16>
    %cst_31 = arith.constant dense<0.000000e+00> : vector<8x512xf32>
    %66 = tpu.matmul %62, %65, %cst_31 {dimension_numbers = #tpu.dot_dimension_numbers<[1], [0], [0], [1], [0, 0, 1, 1], [], []>} : vector<8x256xbf16>, vector<256x512xbf16>, vector<8x512xf32> -> vector<8x512xf32>
    %67 = vector.broadcast %5 : vector<1x512xf32> to vector<8x512xf32>
    %68 = arith.mulf %66, %67 : vector<8x512xf32>
    %cst_32 = arith.constant dense<0.000000e+00> : vector<512xf32>
    %69 = vector.multi_reduction <add>, %68, %cst_32 [0] : vector<8x512xf32> to vector<512xf32>
    %70 = vector.shape_cast %69 : vector<512xf32> to vector<1x512xf32>
    %cst_33 = arith.constant 8.000000e+00 : f32
    %71 = vector.broadcast %cst_33 : f32 to vector<1x512xf32>
    %72 = arith.divf %70, %71 : vector<1x512xf32>
    %73 = arith.mulf %68, %68 : vector<8x512xf32>
    %cst_34 = arith.constant dense<0.000000e+00> : vector<512xf32>
    %74 = vector.multi_reduction <add>, %73, %cst_34 [0] : vector<8x512xf32> to vector<512xf32>
    %75 = vector.shape_cast %74 : vector<512xf32> to vector<1x512xf32>
    %cst_35 = arith.constant 8.000000e+00 : f32
    %76 = vector.broadcast %cst_35 : f32 to vector<1x512xf32>
    %77 = arith.divf %75, %76 : vector<1x512xf32>
    %78 = arith.mulf %72, %72 : vector<1x512xf32>
    %79 = arith.subf %77, %78 : vector<1x512xf32>
    %cst_36 = arith.constant 8.000000e-01 : f32
    %80 = vector.broadcast %cst_36 : f32 to vector<1x512xf32>
    %81 = arith.addf %79, %80 : vector<1x512xf32>
    %82 = math.rsqrt %81 : vector<1x512xf32>
    %83 = vector.broadcast %72 : vector<1x512xf32> to vector<8x512xf32>
    %84 = arith.subf %68, %83 : vector<8x512xf32>
    %85 = vector.broadcast %82 : vector<1x512xf32> to vector<8x512xf32>
    %86 = arith.mulf %84, %85 : vector<8x512xf32>
    %87 = vector.broadcast %6 : vector<1x512xf32> to vector<8x512xf32>
    %88 = arith.mulf %86, %87 : vector<8x512xf32>
    %89 = vector.broadcast %7 : vector<1x512xf32> to vector<8x512xf32>
    %90 = arith.addf %88, %89 : vector<8x512xf32>
    %cst_37 = arith.constant 0.000000e+00 : f32
    %91 = vector.broadcast %cst_37 : f32 to vector<8x512xf32>
    %92 = arith.cmpf ogt, %90, %91 : vector<8x512xf32>
    %cst_38 = arith.constant 2.000000e-01 : f32
    %93 = vector.broadcast %cst_38 : f32 to vector<8x512xf32>
    %94 = arith.mulf %93, %90 : vector<8x512xf32>
    %95 = arith.select %92, %90, %94 : vector<8x512xi1>, vector<8x512xf32>
    %96 = arith.truncf %95 : vector<8x512xf32> to vector<8x512xbf16>
    %c0_39 = arith.constant 0 : index
    %c0_40 = arith.constant 0 : index
    %97 = vector.load %arg5[%c0_39, %c0_40] : memref<1536x1024xi8, #tpu.memory_space<vmem>>, vector<512x1024xi8>
    %98 = arith.sitofp %97 : vector<512x1024xi8> to vector<512x1024xf32>
    %99 = arith.truncf %98 : vector<512x1024xf32> to vector<512x1024xbf16>
    %cst_41 = arith.constant dense<0.000000e+00> : vector<8x1024xf32>
    %100 = tpu.matmul %96, %99, %cst_41 {dimension_numbers = #tpu.dot_dimension_numbers<[1], [0], [0], [1], [0, 0, 1, 1], [], []>} : vector<8x512xbf16>, vector<512x1024xbf16>, vector<8x1024xf32> -> vector<8x1024xf32>
    %101 = vector.broadcast %8 : vector<1x1024xf32> to vector<8x1024xf32>
    %102 = arith.mulf %100, %101 : vector<8x1024xf32>
    %cst_42 = arith.constant dense<0.000000e+00> : vector<1024xf32>
    %103 = vector.multi_reduction <add>, %102, %cst_42 [0] : vector<8x1024xf32> to vector<1024xf32>
    %104 = vector.shape_cast %103 : vector<1024xf32> to vector<1x1024xf32>
    %cst_43 = arith.constant 8.000000e+00 : f32
    %105 = vector.broadcast %cst_43 : f32 to vector<1x1024xf32>
    %106 = arith.divf %104, %105 : vector<1x1024xf32>
    %107 = arith.mulf %102, %102 : vector<8x1024xf32>
    %cst_44 = arith.constant dense<0.000000e+00> : vector<1024xf32>
    %108 = vector.multi_reduction <add>, %107, %cst_44 [0] : vector<8x1024xf32> to vector<1024xf32>
    %109 = vector.shape_cast %108 : vector<1024xf32> to vector<1x1024xf32>
    %cst_45 = arith.constant 8.000000e+00 : f32
    %110 = vector.broadcast %cst_45 : f32 to vector<1x1024xf32>
    %111 = arith.divf %109, %110 : vector<1x1024xf32>
    %112 = arith.mulf %106, %106 : vector<1x1024xf32>
    %113 = arith.subf %111, %112 : vector<1x1024xf32>
    %cst_46 = arith.constant 8.000000e-01 : f32
    %114 = vector.broadcast %cst_46 : f32 to vector<1x1024xf32>
    %115 = arith.addf %113, %114 : vector<1x1024xf32>
    %116 = math.rsqrt %115 : vector<1x1024xf32>
    %117 = vector.broadcast %106 : vector<1x1024xf32> to vector<8x1024xf32>
    %118 = arith.subf %102, %117 : vector<8x1024xf32>
    %119 = vector.broadcast %116 : vector<1x1024xf32> to vector<8x1024xf32>
    %120 = arith.mulf %118, %119 : vector<8x1024xf32>
    %121 = vector.broadcast %9 : vector<1x1024xf32> to vector<8x1024xf32>
    %122 = arith.mulf %120, %121 : vector<8x1024xf32>
    %123 = vector.broadcast %10 : vector<1x1024xf32> to vector<8x1024xf32>
    %124 = arith.addf %122, %123 : vector<8x1024xf32>
    %cst_47 = arith.constant 0.000000e+00 : f32
    %125 = vector.broadcast %cst_47 : f32 to vector<8x1024xf32>
    %126 = arith.cmpf ogt, %124, %125 : vector<8x1024xf32>
    %cst_48 = arith.constant 2.000000e-01 : f32
    %127 = vector.broadcast %cst_48 : f32 to vector<8x1024xf32>
    %128 = arith.mulf %127, %124 : vector<8x1024xf32>
    %129 = arith.select %126, %124, %128 : vector<8x1024xi1>, vector<8x1024xf32>
    %130 = arith.truncf %129 : vector<8x1024xf32> to vector<8x1024xbf16>
    %c512 = arith.constant 512 : index
    %c0_49 = arith.constant 0 : index
    %131 = vector.load %arg5[%c512, %c0_49] : memref<1536x1024xi8, #tpu.memory_space<vmem>>, vector<1024x1024xi8>
    %132 = arith.sitofp %131 : vector<1024x1024xi8> to vector<1024x1024xf32>
    %133 = arith.truncf %132 : vector<1024x1024xf32> to vector<1024x1024xbf16>
    %cst_50 = arith.constant dense<0.000000e+00> : vector<8x1024xf32>
    %134 = tpu.matmul %130, %133, %cst_50 {dimension_numbers = #tpu.dot_dimension_numbers<[1], [0], [0], [1], [0, 0, 1, 1], [], []>} : vector<8x1024xbf16>, vector<1024x1024xbf16>, vector<8x1024xf32> -> vector<8x1024xf32>
    %135 = vector.broadcast %11 : vector<1x1024xf32> to vector<8x1024xf32>
    %136 = arith.mulf %134, %135 : vector<8x1024xf32>
    %137 = vector.broadcast %12 : vector<1x1024xf32> to vector<8x1024xf32>
    %138 = arith.addf %136, %137 : vector<8x1024xf32>
    %139 = math.tanh %138 : vector<8x1024xf32>
    %140 = arith.truncf %139 : vector<8x1024xf32> to vector<8x1024xbf16>
    %c0_51 = arith.constant 0 : index
    %c0_52 = arith.constant 0 : index
    %141 = vector.load %arg6[%c0_51, %c0_52] : memref<8x1024xbf16, #tpu.memory_space<vmem>>, vector<8x1024xbf16>
    tpu.vector_store %arg6[%c0_51, %c0_52], %140 {strides = array<i32>} : memref<8x1024xbf16, #tpu.memory_space<vmem>>, vector<8x1024xbf16>,
    return
  }
}

</mosaic_0001>

<llo_original>
// kernel: tpu_custom_call.1
$region0: #{tpu_custom_call.1}
  #allocation0 [shape = 'u32[]', space=smem, size = 0x4, offset = 0x4, fixed_abs, tag = 'smem constant byte address 0x4 - core index']
  #allocation1 [shape = 'u32[72,128]{1,0:T(1,128)}', space=vmem, size = 0x9000, scoped, tag = 'internal scratch']
  %s0 = inlined_call_operand.hbm [shape: f32[8,32], index: 0, kind: input, shape index: {}]
  %s1 = inlined_call_operand.hbm [shape: f32[16,1024], index: 1, kind: input, shape index: {}]
  %s2 = inlined_call_operand.hbm [shape: s8[32,128], index: 2, kind: input, shape index: {}]
  %s3 = inlined_call_operand.hbm [shape: s8[128,256], index: 3, kind: input, shape index: {}]
  %s4 = inlined_call_operand.hbm [shape: s8[256,512], index: 4, kind: input, shape index: {}]
  %s5 = inlined_call_operand.hbm [shape: s8[1536,1024], index: 5, kind: input, shape index: {}]
  %s6 = inlined_call_operand.hbm [shape: bf16[8,1024], index: 6, kind: output, shape index: {}]
  %s7 = sld [smem:[#allocation0]]
  $region58: #{tpu_custom_call.1} parent=0
    _
  %s9 = ssub.s32 1, %s7
  %s10 = scalar_select 0, %s9, %s7
  $region1: #{tpu_custom_call.1} parent=0
    #allocation2 [shape = 'u8[4096]{0}', space=vmem, size = 0x1000, scoped, tag = 'input window, operand 0, single buffered']
    #allocation3 [shape = 's32[1]{0}', space=sflag, size = 0x4, scoped, tag = 'scoped memory for tpu_custom_call.1']
    #allocation4 [shape = 's32[1]{0}', space=sflag, size = 0x4, scoped, tag = 'scoped memory for tpu_custom_call.1']
    #allocation5 [shape = 'u8[65536]{0}', space=vmem, size = 0x10000, scoped, tag = 'input window, operand 1, single buffered']
    #allocation6 [shape = 's32[1]{0}', space=sflag, size = 0x4, scoped, tag = 'scoped memory for tpu_custom_call.1']
    #allocation7 [shape = 'u8[4096]{0}', space=vmem, size = 0x1000, scoped, tag = 'input window, operand 2, single buffered']
    #allocation8 [shape = 'u8[32768]{0}', space=vmem, size = 0x8000, scoped, tag = 'input window, operand 3, single buffered']
    #allocation9 [shape = 's32[1]{0}', space=sflag, size = 0x4, scoped, tag = 'scoped memory for tpu_custom_call.1']
    #allocation10 [shape = 'u8[131072]{0}', space=vmem, size = 0x20000, scoped, tag = 'input window, operand 4, single buffered']
    #allocation11 [shape = 'u8[1572864]{0}', space=vmem, size = 0x180000, scoped, tag = 'input window, operand 5, single buffered']
    #allocation12 [shape = 's32[1]{0}', space=sflag, size = 0x4, scoped, tag = 'scoped memory for tpu_custom_call.1']
    #allocation13 [shape = 'u8[16384]{0}', space=vmem, size = 0x4000, scoped, tag = 'output window, operand 0, single buffered']
    %11 = vsyncpa [#allocation3], 0
    %12 = vsyncpa [#allocation6], 0
    %13 = vsyncpa [#allocation9], 0
    %14 = vsyncpa [#allocation12], 0
    %15 = vsyncpa [#allocation4], 0
    // Predicated region
    $region2: #{tpu_custom_call.1} parent=1 // pred_check
      _
    $region3: #{tpu_custom_call.1} parent=1 // pred_check_branch
      %17 = sbr.rel (0) target = $region5
    $region4: #{tpu_custom_call.1} parent=1 // pred_region
      %19 = vsyncadd [#allocation3], 0
      %s21 = sshll.u32 %s0, 4
      %s22 = int_to_ptr.hbm [resolvable:$true] %s21
      %s23 = sshll.u32 [#allocation2], 4
      %s24 = int_to_ptr.vmem [resolvable:$true] %s23
      %26 = dma.hbm_to_vmem [thread:$0]  %s22, 128, %s24, [#allocation3]
    $region5: #{tpu_custom_call.1} parent=1 // pred_fallthru
      _
    // Predicated region
    $region6: #{tpu_custom_call.1} parent=1 // pred_check
      _
    $region7: #{tpu_custom_call.1} parent=1 // pred_check_branch
      %28 = sbr.rel (0) target = $region9
    $region8: #{tpu_custom_call.1} parent=1 // pred_region
      %30 = vsyncadd [#allocation6], 0
      %s31 = sshll.u32 %s1, 4
      %s32 = int_to_ptr.hbm [resolvable:$true] %s31
      %s33 = sshll.u32 [#allocation5], 4
      %s34 = int_to_ptr.vmem [resolvable:$true] %s33
      %39 = dma.hbm_to_vmem [thread:$0]  %s32, 2048, %s34, [#allocation6], 1024, 1024, 64
    $region9: #{tpu_custom_call.1} parent=1 // pred_fallthru
      _
    // Predicated region
    $region10: #{tpu_custom_call.1} parent=1 // pred_check
      _
    $region11: #{tpu_custom_call.1} parent=1 // pred_check_branch
      %41 = sbr.rel (0) target = $region13
    $region12: #{tpu_custom_call.1} parent=1 // pred_region
      %43 = vsyncadd [#allocation6], 0
      %s45 = sshll.u32 %s2, 4
      %s46 = int_to_ptr.hbm [resolvable:$true] %s45
      %s47 = sshll.u32 [#allocation7], 4
      %s48 = int_to_ptr.vmem [resolvable:$true] %s47
      %50 = dma.hbm_to_vmem [thread:$0]  %s46, 128, %s48, [#allocation6]
    $region13: #{tpu_custom_call.1} parent=1 // pred_fallthru
      _
    // Predicated region
    $region14: #{tpu_custom_call.1} parent=1 // pred_check
      _
    $region15: #{tpu_custom_call.1} parent=1 // pred_check_branch
      %52 = sbr.rel (0) target = $region17
    $region16: #{tpu_custom_call.1} parent=1 // pred_region
      %54 = vsyncadd [#allocation9], 0
      %s55 = sshll.u32 %s3, 4
      %s56 = int_to_ptr.hbm [resolvable:$true] %s55
      %s57 = sshll.u32 [#allocation8], 4
      %s58 = int_to_ptr.vmem [resolvable:$true] %s57
      %63 = dma.hbm_to_vmem [thread:$0]  %s56, 1024, %s58, [#allocation9], 256, 256, 16
    $region17: #{tpu_custom_call.1} parent=1 // pred_fallthru
      _
    // Predicated region
    $region18: #{tpu_custom_call.1} parent=1 // pred_check
      _
    $region19: #{tpu_custom_call.1} parent=1 // pred_check_branch
      %65 = sbr.rel (0) target = $region21
    $region20: #{tpu_custom_call.1} parent=1 // pred_region
      %67 = vsyncadd [#allocation9], 0
      %s68 = sshll.u32 %s4, 4
      %s69 = int_to_ptr.hbm [resolvable:$true] %s68
      %s70 = sshll.u32 [#allocation10], 4
      %s71 = int_to_ptr.vmem [resolvable:$true] %s70
      %76 = dma.hbm_to_vmem [thread:$0]  %s69, 4096, %s71, [#allocation9], 512, 512, 32
    $region21: #{tpu_custom_call.1} parent=1 // pred_fallthru
      _
    // Predicated region
    $region22: #{tpu_custom_call.1} parent=1 // pred_check
      _
    $region23: #{tpu_custom_call.1} parent=1 // pred_check_branch
      %78 = sbr.rel (0) target = $region25
    $region24: #{tpu_custom_call.1} parent=1 // pred_region
      %80 = vsyncadd [#allocation12], 0
      %s81 = sshll.u32 %s5, 4
      %s82 = int_to_ptr.hbm [resolvable:$true] %s81
      %s83 = sshll.u32 [#allocation11], 4
      %s84 = int_to_ptr.vmem [resolvable:$true] %s83
      %89 = dma.hbm_to_vmem [thread:$0]  %s82, 49152, %s84, [#allocation12], 1024, 1024, 64
    $region25: #{tpu_custom_call.1} parent=1 // pred_fallthru
      _
    // Predicated region
    $region26: #{tpu_custom_call.1} parent=1 // pred_check
      _
    $region27: #{tpu_custom_call.1} parent=1 // pred_check_branch
      %91 = sbr.rel (0) target = $region29
    $region28: #{tpu_custom_call.1} parent=1 // pred_region
      %93 = dma.done [#allocation3], 128
    $region29: #{tpu_custom_call.1} parent=1 // pred_fallthru
      _
    // Predicated region
    $region30: #{tpu_custom_call.1} parent=1 // pred_check
      _
    $region31: #{tpu_custom_call.1} parent=1 // pred_check_branch
      %95 = sbr.rel (0) target = $region33
    $region32: #{tpu_custom_call.1} parent=1 // pred_region
      %97 = dma.done [#allocation6], 2048
    $region33: #{tpu_custom_call.1} parent=1 // pred_fallthru
      _
    // Predicated region
    $region34: #{tpu_custom_call.1} parent=1 // pred_check
      _
    $region35: #{tpu_custom_call.1} parent=1 // pred_check_branch
      %99 = sbr.rel (0) target = $region37
    $region36: #{tpu_custom_call.1} parent=1 // pred_region
      %101 = dma.done [#allocation6], 128
    $region37: #{tpu_custom_call.1} parent=1 // pred_fallthru
      _
    // Predicated region
    $region38: #{tpu_custom_call.1} parent=1 // pred_check
      _
    $region39: #{tpu_custom_call.1} parent=1 // pred_check_branch
      %103 = sbr.rel (0) target = $region41
    $region40: #{tpu_custom_call.1} parent=1 // pred_region
      %105 = dma.done [#allocation9], 1024
    $region41: #{tpu_custom_call.1} parent=1 // pred_fallthru
      _
    // Predicated region
    $region42: #{tpu_custom_call.1} parent=1 // pred_check
      _
    $region43: #{tpu_custom_call.1} parent=1 // pred_check_branch
      %107 = sbr.rel (0) target = $region45
    $region44: #{tpu_custom_call.1} parent=1 // pred_region
      %109 = dma.done [#allocation9], 4096
    $region45: #{tpu_custom_call.1} parent=1 // pred_fallthru
      _
    // Predicated region
    $region46: #{tpu_custom_call.1} parent=1 // pred_check
      _
    $region47: #{tpu_custom_call.1} parent=1 // pred_check_branch
      %111 = sbr.rel (0) target = $region49
    $region48: #{tpu_custom_call.1} parent=1 // pred_region
      %113 = dma.done [#allocation12], 49152
    $region49: #{tpu_custom_call.1} parent=1 // pred_fallthru
      _
    %v115 = vld [vmem:[#allocation5] ss:$0 sm:$0xff]
    %v116 = vld [vmem:[#allocation5 + $0x1] ss:$0 sm:$0xff]
    %s117 = scalar_lea.vmem [#allocation5], 2
    %v118 = vld [vmem:[%s117] ss:$8 sm:$0x3]
    %s119 = scalar_lea.vmem [#allocation5], 3
    %v120 = vld [vmem:[%s119] ss:$8 sm:$0x3]
    %s121 = scalar_lea.vmem [#allocation5], 4
    %v122 = vld [vmem:[%s121] ss:$8 sm:$0x3]
    %s123 = scalar_lea.vmem [#allocation5], 5
    %v124 = vld [vmem:[%s123] ss:$8 sm:$0xf]
    %s125 = scalar_lea.vmem [#allocation5], 6
    %v126 = vld [vmem:[%s125] ss:$8 sm:$0xf]
    %s127 = scalar_lea.vmem [#allocation5], 7
    %v128 = vld [vmem:[%s127] ss:$8 sm:$0xf]
    %s129 = scalar_lea.vmem [#allocation5], 64
    %v130 = vld [vmem:[%s129] ss:$8 sm:$0xf]
    %v131 = vld [vmem:[%s129] ss:$8 sm:$0xf0]
    %v132 = vor.u32 %v130, %v131
    %s133 = scalar_lea.vmem [#allocation5], 65
    %v134 = vld [vmem:[%s133] ss:$8 sm:$0xf]
    %v135 = vld [vmem:[%s133] ss:$8 sm:$0xf0]
    %v136 = vor.u32 %v134, %v135
    %s137 = scalar_lea.vmem [#allocation5], 66
    %v138 = vld [vmem:[%s137] ss:$8 sm:$0xf]
    %v139 = vld [vmem:[%s137] ss:$8 sm:$0xf0]
    %v140 = vor.u32 %v138, %v139
    %s141 = scalar_lea.vmem [#allocation5], 67
    %v142 = vld [vmem:[%s141] ss:$8 sm:$0xf]
    %v143 = vld [vmem:[%s141] ss:$8 sm:$0xf0]
    %v144 = vor.u32 %v142, %v143
    %s145 = scalar_lea.vmem [#allocation5], 68
    %v146 = vld [vmem:[%s145] ss:$8 sm:$0xf]
    %v147 = vld [vmem:[%s145] ss:$8 sm:$0xf0]
    %v148 = vor.u32 %v146, %v147
    %v149 = vld [vmem:[#allocation2] sm:$0xff]
    %v150 = vpack.c.bf16 %v149, %v149
    %v151 = vld [vmem:[#allocation7] sm:$0xff]
    %v152 = vunpack.c.0.s8 %v151
    %v153 = vunpack.c.1.s8 %v151
    %v154 = vunpack.c.2.s8 %v151
    %v155 = vunpack.c.3.s8 %v151
    %v156 = vcvt.s32.f32 %v152
    %v157 = vcvt.s32.f32 %v153
    %v158 = vcvt.s32.f32 %v154
    %v159 = vcvt.s32.f32 %v155
    %v160 = vpack.c.bf16 %v157, %v156
    %v161 = vpack.c.bf16 %v159, %v158
    %vm162 = vcmask 261120
    %v164 = vsel %vm162, %v150, 0
    %166 = vmatpush.bf16.msra.mxu0 0
    %167 = vmatpush.bf16.msra.mxu0 0
    %168 = vmatpush.bf16.msra.mxu0 0
    %169 = vmatpush.bf16.msra.mxu0 0
    %170 = vmatpush.bf16.msra.mxu0 0
    %171 = vmatpush.bf16.msra.mxu0 0
    %172 = vmatpush.bf16.msra.mxu0 %v161
    %173 = vmatpush.bf16.msra.mxu0 %v160
    %174 = vmatmul.bf16.gmra.mxu0 %v164
    %v175 = vpop.f32.mrf.mxu0
    %v176 = vadd.f32 0.0, %v175
    %v177 = vpop.f32.mrf.mxu0
    %178 = vdwg.mxu0
    %v179 = vmul.f32 %v176, %v116
    %v180 = vadd.f32 %v179, %v115
    %vm181 = vcmp.gt.f32.partialorder %v180, 0.0
    %v182 = vmul.f32 %v180, 0.2
    %v183 = vsel %vm181, %v180, %v182
    %v184 = vpack.c.bf16 %v183, %v183
    %v185 = vld [vmem:[#allocation8] sm:$0xff]
    %v186 = vld [vmem:[#allocation8 + $0x8] sm:$0xff]
    %v187 = vld [vmem:[#allocation8 + $0x10] sm:$0xff]
    %v188 = vld [vmem:[#allocation8 + $0x18] sm:$0xff]
    %v189 = vld [vmem:[#allocation8 + $0x20] sm:$0xff]
    %v190 = vld [vmem:[#allocation8 + $0x28] sm:$0xff]
    %v191 = vld [vmem:[#allocation8 + $0x30] sm:$0xff]
    %v192 = vld [vmem:[#allocation8 + $0x38] sm:$0xff]
    %v193 = vunpack.c.0.s8 %v185
    %v194 = vunpack.c.0.s8 %v186
    %v195 = vunpack.c.1.s8 %v185
    %v196 = vunpack.c.1.s8 %v186
    %v197 = vunpack.c.2.s8 %v185
    %v198 = vunpack.c.2.s8 %v186
    %v199 = vunpack.c.3.s8 %v185
    %v200 = vunpack.c.3.s8 %v186
    %v201 = vunpack.c.0.s8 %v187
    %v202 = vunpack.c.0.s8 %v188
    %v203 = vunpack.c.1.s8 %v187
    %v204 = vunpack.c.1.s8 %v188
    %v205 = vunpack.c.2.s8 %v187
    %v206 = vunpack.c.2.s8 %v188
    %v207 = vunpack.c.3.s8 %v187
    %v208 = vunpack.c.3.s8 %v188
    %v209 = vunpack.c.0.s8 %v189
    %v210 = vunpack.c.0.s8 %v190
    %v211 = vunpack.c.1.s8 %v189
    %v212 = vunpack.c.1.s8 %v190
    %v213 = vunpack.c.2.s8 %v189
    %v214 = vunpack.c.2.s8 %v190
    %v215 = vunpack.c.3.s8 %v189
    %v216 = vunpack.c.3.s8 %v190
    %v217 = vunpack.c.0.s8 %v191
    %v218 = vunpack.c.0.s8 %v192
    %v219 = vunpack.c.1.s8 %v191
    %v220 = vunpack.c.1.s8 %v192
    %v221 = vunpack.c.2.s8 %v191
    %v222 = vunpack.c.2.s8 %v192
    %v223 = vunpack.c.3.s8 %v191
    %v224 = vunpack.c.3.s8 %v192
    %v225 = vcvt.s32.f32 %v193
    %v226 = vcvt.s32.f32 %v194
    %v227 = vcvt.s32.f32 %v195
    %v228 = vcvt.s32.f32 %v196
    %v229 = vcvt.s32.f32 %v197
    %v230 = vcvt.s32.f32 %v198
    %v231 = vcvt.s32.f32 %v199
    %v232 = vcvt.s32.f32 %v200
    %v233 = vcvt.s32.f32 %v201
    %v234 = vcvt.s32.f32 %v202
    %v235 = vcvt.s32.f32 %v203
    %v236 = vcvt.s32.f32 %v204
    %v237 = vcvt.s32.f32 %v205
    %v238 = vcvt.s32.f32 %v206
    %v239 = vcvt.s32.f32 %v207
    %v240 = vcvt.s32.f32 %v208
    %v241 = vcvt.s32.f32 %v209
    %v242 = vcvt.s32.f32 %v210
    %v243 = vcvt.s32.f32 %v211
    %v244 = vcvt.s32.f32 %v212
    %v245 = vcvt.s32.f32 %v213
    %v246 = vcvt.s32.f32 %v214
    %v247 = vcvt.s32.f32 %v215
    %v248 = vcvt.s32.f32 %v216
    %v249 = vcvt.s32.f32 %v217
    %v250 = vcvt.s32.f32 %v218
    %v251 = vcvt.s32.f32 %v219
    %v252 = vcvt.s32.f32 %v220
    %v253 = vcvt.s32.f32 %v221
    %v254 = vcvt.s32.f32 %v222
    %v255 = vcvt.s32.f32 %v223
    %v256 = vcvt.s32.f32 %v224
    %v257 = vpack.c.bf16 %v227, %v225
    %v258 = vpack.c.bf16 %v228, %v226
    %v259 = vpack.c.bf16 %v231, %v229
    %v260 = vpack.c.bf16 %v232, %v230
    %v261 = vpack.c.bf16 %v235, %v233
    %v262 = vpack.c.bf16 %v236, %v234
    %v263 = vpack.c.bf16 %v239, %v237
    %v264 = vpack.c.bf16 %v240, %v238
    %v265 = vpack.c.bf16 %v243, %v241
    %v266 = vpack.c.bf16 %v244, %v242
    %v267 = vpack.c.bf16 %v247, %v245
    %v268 = vpack.c.bf16 %v248, %v246
    %v269 = vpack.c.bf16 %v251, %v249
    %v270 = vpack.c.bf16 %v252, %v250
    %v271 = vpack.c.bf16 %v255, %v253
    %v272 = vpack.c.bf16 %v256, %v254
    %273 = vmatpush.bf16.msra.mxu0 %v271
    %274 = vmatpush.bf16.msra.mxu0 %v269
    %275 = vmatpush.bf16.msra.mxu0 %v267
    %276 = vmatpush.bf16.msra.mxu0 %v265
    %277 = vmatpush.bf16.msra.mxu0 %v263
    %278 = vmatpush.bf16.msra.mxu0 %v261
    %279 = vmatpush.bf16.msra.mxu0 %v259
    %280 = vmatpush.bf16.msra.mxu0 %v257
    %281 = vmatmul.bf16.gmra.mxu0 %v184
    %v282 = vpop.f32.mrf.mxu0
    %v283 = vadd.f32 0.0, %v282
    %v284 = vpop.f32.mrf.mxu0
    %285 = vdwg.mxu0
    %286 = vmatpush.bf16.msra.mxu0 %v272
    %287 = vmatpush.bf16.msra.mxu0 %v270
    %288 = vmatpush.bf16.msra.mxu0 %v268
    %289 = vmatpush.bf16.msra.mxu0 %v266
    %290 = vmatpush.bf16.msra.mxu0 %v264
    %291 = vmatpush.bf16.msra.mxu0 %v262
    %292 = vmatpush.bf16.msra.mxu0 %v260
    %293 = vmatpush.bf16.msra.mxu0 %v258
    %294 = vmatmul.bf16.gmra.mxu0 %v184
    %v295 = vpop.f32.mrf.mxu0
    %v296 = vadd.f32 0.0, %v295
    %v297 = vpop.f32.mrf.mxu0
    %298 = vdwg.mxu0
    %v300 = vperm.slane %v118, 0
    %v301 = vperm.slane %v118, 1
    %v304 = vmul.f32 %v283, %v300
    %v305 = vmul.f32 %v296, %v301
    %v306 = vrot.slane %v304, 4
    %v307 = vadd.f32 %v304, %v306
    %v308 = vrot.slane %v307, 2
    %v309 = vadd.f32 %v307, %v308
    %v310 = vrot.slane %v309, 1
    %v311 = vadd.f32 %v309, %v310
    %v312 = vrot.slane %v305, 4
    %v313 = vadd.f32 %v305, %v312
    %v314 = vrot.slane %v313, 2
    %v315 = vadd.f32 %v313, %v314
    %v316 = vrot.slane %v315, 1
    %v317 = vadd.f32 %v315, %v316
    %v318 = vrcp.pop 8.0
    %v319 = vmul.f32 8.0, %v318
    %v320 = vsub.f32 1.0, %v319
    %v321 = vmul.f32 %v318, %v320
    %v322 = vadd.f32 %v318, %v321
    %vm323 = vweird.f32 %v318
    %v324 = vsel %vm323, %v318, %v322
    %v325 = vmul.f32 %v311, %v324
    %v326 = vmul.f32 %v317, %v324
    %v327 = vmul.f32 %v304, %v304
    %v328 = vmul.f32 %v305, %v305
    %v329 = vrot.slane %v327, 4
    %v330 = vadd.f32 %v327, %v329
    %v331 = vrot.slane %v330, 2
    %v332 = vadd.f32 %v330, %v331
    %v333 = vrot.slane %v332, 1
    %v334 = vadd.f32 %v332, %v333
    %v335 = vrot.slane %v328, 4
    %v336 = vadd.f32 %v328, %v335
    %v337 = vrot.slane %v336, 2
    %v338 = vadd.f32 %v336, %v337
    %v339 = vrot.slane %v338, 1
    %v340 = vadd.f32 %v338, %v339
    %v341 = vmul.f32 %v334, %v324
    %v342 = vmul.f32 %v340, %v324
    %v343 = vmul.f32 %v325, %v325
    %v344 = vmul.f32 %v326, %v326
    %v345 = vsub.f32 %v341, %v343
    %v346 = vsub.f32 %v342, %v344
    %v347 = vadd.f32 %v345, 0.8
    %v348 = vadd.f32 %v346, 0.8
    %v349 = vrsqrt.pop %v347
    %v350 = vmul.f32 %v349, %v347
    %v351 = vmul.f32 %v350, %v349
    %v352 = vmul.f32 0.5, %v351
    %v353 = vsub.f32 1.5, %v352
    %v354 = vmul.f32 %v349, %v353
    %vm355 = vweird.f32 %v347
    %vm356 = vweird.f32 %v349
    %vm357 = vmor %vm355, %vm356
    %v358 = vsel %vm357, %v349, %v354
    %v359 = vrsqrt.pop %v348
    %v360 = vmul.f32 %v359, %v348
    %v361 = vmul.f32 %v360, %v359
    %v362 = vmul.f32 0.5, %v361
    %v363 = vsub.f32 1.5, %v362
    %v364 = vmul.f32 %v359, %v363
    %vm365 = vweird.f32 %v348
    %vm366 = vweird.f32 %v359
    %vm367 = vmor %vm365, %vm366
    %v368 = vsel %vm367, %v359, %v364
    %v369 = vsub.f32 %v304, %v325
    %v370 = vsub.f32 %v305, %v326
    %v371 = vmul.f32 %v369, %v358
    %v372 = vmul.f32 %v370, %v368
    %v374 = vperm.slane %v120, 0
    %v375 = vperm.slane %v120, 1
    %v378 = vmul.f32 %v371, %v374
    %v379 = vmul.f32 %v372, %v375
    %v381 = vperm.slane %v122, 0
    %v382 = vperm.slane %v122, 1
    %v385 = vadd.f32 %v378, %v381
    %v386 = vadd.f32 %v379, %v382
    %vm387 = vcmp.gt.f32.partialorder %v385, 0.0
    %vm388 = vcmp.gt.f32.partialorder %v386, 0.0
    %v389 = vmul.f32 %v385, 0.2
    %v390 = vmul.f32 %v386, 0.2
    %v391 = vsel %vm387, %v385, %v389
    %v392 = vsel %vm388, %v386, %v390
    %v393 = vpack.c.bf16 %v391, %v391
    %v394 = vpack.c.bf16 %v392, %v392
    %v395 = vld [vmem:[#allocation10] sm:$0xff]
    %v396 = vld [vmem:[#allocation10 + $0x8] sm:$0xff]
    %v397 = vld [vmem:[#allocation10 + $0x10] sm:$0xff]
    %v398 = vld [vmem:[#allocation10 + $0x18] sm:$0xff]
    %v399 = vld [vmem:[#allocation10 + $0x20] sm:$0xff]
    %v400 = vld [vmem:[#allocation10 + $0x28] sm:$0xff]
    %v401 = vld [vmem:[#allocation10 + $0x30] sm:$0xff]
    %v402 = vld [vmem:[#allocation10 + $0x38] sm:$0xff]
    %v403 = vld [vmem:[#allocation10 + $0x40] sm:$0xff]
    %v404 = vld [vmem:[#allocation10 + $0x48] sm:$0xff]
    %v405 = vld [vmem:[#allocation10 + $0x50] sm:$0xff]
    %v406 = vld [vmem:[#allocation10 + $0x58] sm:$0xff]
    %v407 = vld [vmem:[#allocation10 + $0x60] sm:$0xff]
    %v408 = vld [vmem:[#allocation10 + $0x68] sm:$0xff]
    %v409 = vld [vmem:[#allocation10 + $0x70] sm:$0xff]
    %v410 = vld [vmem:[#allocation10 + $0x78] sm:$0xff]
    %v411 = vld [vmem:[#allocation10 + $0x80] sm:$0xff]
    %v412 = vld [vmem:[#allocation10 + $0x88] sm:$0xff]
    %v413 = vld [vmem:[#allocation10 + $0x90] sm:$0xff]
    %v414 = vld [vmem:[#allocation10 + $0x98] sm:$0xff]
    %v415 = vld [vmem:[#allocation10 + $0xa0] sm:$0xff]
    %v416 = vld [vmem:[#allocation10 + $0xa8] sm:$0xff]
    %v417 = vld [vmem:[#allocation10 + $0xb0] sm:$0xff]
    %v418 = vld [vmem:[#allocation10 + $0xb8] sm:$0xff]
    %v419 = vld [vmem:[#allocation10 + $0xc0] sm:$0xff]
    %v420 = vld [vmem:[#allocation10 + $0xc8] sm:$0xff]
    %v421 = vld [vmem:[#allocation10 + $0xd0] sm:$0xff]
    %v422 = vld [vmem:[#allocation10 + $0xd8] sm:$0xff]
    %v423 = vld [vmem:[#allocation10 + $0xe0] sm:$0xff]
    %v424 = vld [vmem:[#allocation10 + $0xe8] sm:$0xff]
    %v425 = vld [vmem:[#allocation10 + $0xf0] sm:$0xff]
    %v426 = vld [vmem:[#allocation10 + $0xf8] sm:$0xff]
    %v427 = vunpack.c.0.s8 %v395
    %v428 = vunpack.c.0.s8 %v396
    %v429 = vunpack.c.0.s8 %v397
    %v430 = vunpack.c.0.s8 %v398
    %v431 = vunpack.c.1.s8 %v395
    %v432 = vunpack.c.1.s8 %v396
    %v433 = vunpack.c.1.s8 %v397
    %v434 = vunpack.c.1.s8 %v398
    %v435 = vunpack.c.2.s8 %v395
    %v436 = vunpack.c.2.s8 %v396
    %v437 = vunpack.c.2.s8 %v397
    %v438 = vunpack.c.2.s8 %v398
    %v439 = vunpack.c.3.s8 %v395
    %v440 = vunpack.c.3.s8 %v396
    %v441 = vunpack.c.3.s8 %v397
    %v442 = vunpack.c.3.s8 %v398
    %v443 = vunpack.c.0.s8 %v399
    %v444 = vunpack.c.0.s8 %v400
    %v445 = vunpack.c.0.s8 %v401
    %v446 = vunpack.c.0.s8 %v402
    %v447 = vunpack.c.1.s8 %v399
    %v448 = vunpack.c.1.s8 %v400
    %v449 = vunpack.c.1.s8 %v401
    %v450 = vunpack.c.1.s8 %v402
    %v451 = vunpack.c.2.s8 %v399
    %v452 = vunpack.c.2.s8 %v400
    %v453 = vunpack.c.2.s8 %v401
    %v454 = vunpack.c.2.s8 %v402
    %v455 = vunpack.c.3.s8 %v399
    %v456 = vunpack.c.3.s8 %v400
    %v457 = vunpack.c.3.s8 %v401
    %v458 = vunpack.c.3.s8 %v402
    %v459 = vunpack.c.0.s8 %v403
    %v460 = vunpack.c.0.s8 %v404
    %v461 = vunpack.c.0.s8 %v405
    %v462 = vunpack.c.0.s8 %v406
    %v463 = vunpack.c.1.s8 %v403
    %v464 = vunpack.c.1.s8 %v404
    %v465 = vunpack.c.1.s8 %v405
    %v466 = vunpack.c.1.s8 %v406
    %v467 = vunpack.c.2.s8 %v403
    %v468 = vunpack.c.2.s8 %v404
    %v469 = vunpack.c.2.s8 %v405
    %v470 = vunpack.c.2.s8 %v406
    %v471 = vunpack.c.3.s8 %v403
    %v472 = vunpack.c.3.s8 %v404
    %v473 = vunpack.c.3.s8 %v405
    %v474 = vunpack.c.3.s8 %v406
    %v475 = vunpack.c.0.s8 %v407
    %v476 = vunpack.c.0.s8 %v408
    %v477 = vunpack.c.0.s8 %v409
    %v478 = vunpack.c.0.s8 %v410
    %v479 = vunpack.c.1.s8 %v407
    %v480 = vunpack.c.1.s8 %v408
    %v481 = vunpack.c.1.s8 %v409
    %v482 = vunpack.c.1.s8 %v410
    %v483 = vunpack.c.2.s8 %v407
    %v484 = vunpack.c.2.s8 %v408
    %v485 = vunpack.c.2.s8 %v409
    %v486 = vunpack.c.2.s8 %v410
    %v487 = vunpack.c.3.s8 %v407
    %v488 = vunpack.c.3.s8 %v408
    %v489 = vunpack.c.3.s8 %v409
    %v490 = vunpack.c.3.s8 %v410
    %v491 = vunpack.c.0.s8 %v411
    %v492 = vunpack.c.0.s8 %v412
    %v493 = vunpack.c.0.s8 %v413
    %v494 = vunpack.c.0.s8 %v414
    %v495 = vunpack.c.1.s8 %v411
    %v496 = vunpack.c.1.s8 %v412
    %v497 = vunpack.c.1.s8 %v413
    %v498 = vunpack.c.1.s8 %v414
    %v499 = vunpack.c.2.s8 %v411
    %v500 = vunpack.c.2.s8 %v412
    %v501 = vunpack.c.2.s8 %v413
    %v502 = vunpack.c.2.s8 %v414
    %v503 = vunpack.c.3.s8 %v411
    %v504 = vunpack.c.3.s8 %v412
    %v505 = vunpack.c.3.s8 %v413
    %v506 = vunpack.c.3.s8 %v414
    %v507 = vunpack.c.0.s8 %v415
    %v508 = vunpack.c.0.s8 %v416
    %v509 = vunpack.c.0.s8 %v417
    %v510 = vunpack.c.0.s8 %v418
    %v511 = vunpack.c.1.s8 %v415
    %v512 = vunpack.c.1.s8 %v416
    %v513 = vunpack.c.1.s8 %v417
    %v514 = vunpack.c.1.s8 %v418
    %v515 = vunpack.c.2.s8 %v415
    %v516 = vunpack.c.2.s8 %v416
    %v517 = vunpack.c.2.s8 %v417
    %v518 = vunpack.c.2.s8 %v418
    %v519 = vunpack.c.3.s8 %v415
    %v520 = vunpack.c.3.s8 %v416
    %v521 = vunpack.c.3.s8 %v417
    %v522 = vunpack.c.3.s8 %v418
    %v523 = vunpack.c.0.s8 %v419
    %v524 = vunpack.c.0.s8 %v420
    %v525 = vunpack.c.0.s8 %v421
    %v526 = vunpack.c.0.s8 %v422
    %v527 = vunpack.c.1.s8 %v419
    %v528 = vunpack.c.1.s8 %v420
    %v529 = vunpack.c.1.s8 %v421
    %v530 = vunpack.c.1.s8 %v422
    %v531 = vunpack.c.2.s8 %v419
    %v532 = vunpack.c.2.s8 %v420
    %v533 = vunpack.c.2.s8 %v421
    %v534 = vunpack.c.2.s8 %v422
    %v535 = vunpack.c.3.s8 %v419
    %v536 = vunpack.c.3.s8 %v420
    %v537 = vunpack.c.3.s8 %v421
    %v538 = vunpack.c.3.s8 %v422
    %v539 = vunpack.c.0.s8 %v423
    %v540 = vunpack.c.0.s8 %v424
    %v541 = vunpack.c.0.s8 %v425
    %v542 = vunpack.c.0.s8 %v426
    %v543 = vunpack.c.1.s8 %v423
    %v544 = vunpack.c.1.s8 %v424
    %v545 = vunpack.c.1.s8 %v425
    %v546 = vunpack.c.1.s8 %v426
    %v547 = vunpack.c.2.s8 %v423
    %v548 = vunpack.c.2.s8 %v424
    %v549 = vunpack.c.2.s8 %v425
    %v550 = vunpack.c.2.s8 %v426
    %v551 = vunpack.c.3.s8 %v423
    %v552 = vunpack.c.3.s8 %v424
    %v553 = vunpack.c.3.s8 %v425
    %v554 = vunpack.c.3.s8 %v426
    %v555 = vcvt.s32.f32 %v427
    %v556 = vcvt.s32.f32 %v428
    %v557 = vcvt.s32.f32 %v429
    %v558 = vcvt.s32.f32 %v430
    %v559 = vcvt.s32.f32 %v431
    %v560 = vcvt.s32.f32 %v432
    %v561 = vcvt.s32.f32 %v433
    %v562 = vcvt.s32.f32 %v434
    %v563 = vcvt.s32.f32 %v435
    %v564 = vcvt.s32.f32 %v436
    %v565 = vcvt.s32.f32 %v437
    %v566 = vcvt.s32.f32 %v438
    %v567 = vcvt.s32.f32 %v439
    %v568 = vcvt.s32.f32 %v440
    %v569 = vcvt.s32.f32 %v441
    %v570 = vcvt.s32.f32 %v442
    %v571 = vcvt.s32.f32 %v443
    %v572 = vcvt.s32.f32 %v444
    %v573 = vcvt.s32.f32 %v445
    %v574 = vcvt.s32.f32 %v446
    %v575 = vcvt.s32.f32 %v447
    %v576 = vcvt.s32.f32 %v448
    %v577 = vcvt.s32.f32 %v449
    %v578 = vcvt.s32.f32 %v450
    %v579 = vcvt.s32.f32 %v451
    %v580 = vcvt.s32.f32 %v452
    %v581 = vcvt.s32.f32 %v453
    %v582 = vcvt.s32.f32 %v454
    %v583 = vcvt.s32.f32 %v455
    %v584 = vcvt.s32.f32 %v456
    %v585 = vcvt.s32.f32 %v457
    %v586 = vcvt.s32.f32 %v458
    %v587 = vcvt.s32.f32 %v459
    %v588 = vcvt.s32.f32 %v460
    %v589 = vcvt.s32.f32 %v461
    %v590 = vcvt.s32.f32 %v462
    %v591 = vcvt.s32.f32 %v463
    %v592 = vcvt.s32.f32 %v464
    %v593 = vcvt.s32.f32 %v465
    %v594 = vcvt.s32.f32 %v466
    %v595 = vcvt.s32.f32 %v467
    %v596 = vcvt.s32.f32 %v468
    %v597 = vcvt.s32.f32 %v469
    %v598 = vcvt.s32.f32 %v470
    %v599 = vcvt.s32.f32 %v471
    %v600 = vcvt.s32.f32 %v472
    %v601 = vcvt.s32.f32 %v473
    %v602 = vcvt.s32.f32 %v474
    %v603 = vcvt.s32.f32 %v475
    %v604 = vcvt.s32.f32 %v476
    %v605 = vcvt.s32.f32 %v477
    %v606 = vcvt.s32.f32 %v478
    %v607 = vcvt.s32.f32 %v479
    %v608 = vcvt.s32.f32 %v480
    %v609 = vcvt.s32.f32 %v481
    %v610 = vcvt.s32.f32 %v482
    %v611 = vcvt.s32.f32 %v483
    %v612 = vcvt.s32.f32 %v484
    %v613 = vcvt.s32.f32 %v485
    %v614 = vcvt.s32.f32 %v486
    %v615 = vcvt.s32.f32 %v487
    %v616 = vcvt.s32.f32 %v488
    %v617 = vcvt.s32.f32 %v489
    %v618 = vcvt.s32.f32 %v490
    %v619 = vcvt.s32.f32 %v491
    %v620 = vcvt.s32.f32 %v492
    %v621 = vcvt.s32.f32 %v493
    %v622 = vcvt.s32.f32 %v494
    %v623 = vcvt.s32.f32 %v495
    %v624 = vcvt.s32.f32 %v496
    %v625 = vcvt.s32.f32 %v497
    %v626 = vcvt.s32.f32 %v498
    %v627 = vcvt.s32.f32 %v499
    %v628 = vcvt.s32.f32 %v500
    %v629 = vcvt.s32.f32 %v501
    %v630 = vcvt.s32.f32 %v502
    %v631 = vcvt.s32.f32 %v503
    %v632 = vcvt.s32.f32 %v504
    %v633 = vcvt.s32.f32 %v505
    %v634 = vcvt.s32.f32 %v506
    %v635 = vcvt.s32.f32 %v507
    %v636 = vcvt.s32.f32 %v508
    %v637 = vcvt.s32.f32 %v509
    %v638 = vcvt.s32.f32 %v510
    %v639 = vcvt.s32.f32 %v511
    %v640 = vcvt.s32.f32 %v512
    %v641 = vcvt.s32.f32 %v513
    %v642 = vcvt.s32.f32 %v514
    %v643 = vcvt.s32.f32 %v515
    %v644 = vcvt.s32.f32 %v516
    %v645 = vcvt.s32.f32 %v517
    %v646 = vcvt.s32.f32 %v518
    %v647 = vcvt.s32.f32 %v519
    %v648 = vcvt.s32.f32 %v520
    %v649 = vcvt.s32.f32 %v521
    %v650 = vcvt.s32.f32 %v522
    %v651 = vcvt.s32.f32 %v523
    %v652 = vcvt.s32.f32 %v524
    %v653 = vcvt.s32.f32 %v525
    %v654 = vcvt.s32.f32 %v526
    %v655 = vcvt.s32.f32 %v527
    %v656 = vcvt.s32.f32 %v528
    %v657 = vcvt.s32.f32 %v529
    %v658 = vcvt.s32.f32 %v530
    %v659 = vcvt.s32.f32 %v531
    %v660 = vcvt.s32.f32 %v532
    %v661 = vcvt.s32.f32 %v533
    %v662 = vcvt.s32.f32 %v534
    %v663 = vcvt.s32.f32 %v535
    %v664 = vcvt.s32.f32 %v536
    %v665 = vcvt.s32.f32 %v537
    %v666 = vcvt.s32.f32 %v538
    %v667 = vcvt.s32.f32 %v539
    %v668 = vcvt.s32.f32 %v540
    %v669 = vcvt.s32.f32 %v541
    %v670 = vcvt.s32.f32 %v542
    %v671 = vcvt.s32.f32 %v543
    %v672 = vcvt.s32.f32 %v544
    %v673 = vcvt.s32.f32 %v545
    %v674 = vcvt.s32.f32 %v546
    %v675 = vcvt.s32.f32 %v547
    %v676 = vcvt.s32.f32 %v548
    %v677 = vcvt.s32.f32 %v549
    %v678 = vcvt.s32.f32 %v550
    %v679 = vcvt.s32.f32 %v551
    %v680 = vcvt.s32.f32 %v552
    %v681 = vcvt.s32.f32 %v553
    %v682 = vcvt.s32.f32 %v554
    %v683 = vpack.c.bf16 %v559, %v555
    %v684 = vpack.c.bf16 %v560, %v556
    %v685 = vpack.c.bf16 %v561, %v557
    %v686 = vpack.c.bf16 %v562, %v558
    %v687 = vpack.c.bf16 %v567, %v563
    %v688 = vpack.c.bf16 %v568, %v564
    %v689 = vpack.c.bf16 %v569, %v565
    %v690 = vpack.c.bf16 %v570, %v566
    %v691 = vpack.c.bf16 %v575, %v571
    %v692 = vpack.c.bf16 %v576, %v572
    %v693 = vpack.c.bf16 %v577, %v573
    %v694 = vpack.c.bf16 %v578, %v574
    %v695 = vpack.c.bf16 %v583, %v579
    %v696 = vpack.c.bf16 %v584, %v580
    %v697 = vpack.c.bf16 %v585, %v581
    %v698 = vpack.c.bf16 %v586, %v582
    %v699 = vpack.c.bf16 %v591, %v587
    %v700 = vpack.c.bf16 %v592, %v588
    %v701 = vpack.c.bf16 %v593, %v589
    %v702 = vpack.c.bf16 %v594, %v590
    %v703 = vpack.c.bf16 %v599, %v595
    %v704 = vpack.c.bf16 %v600, %v596
    %v705 = vpack.c.bf16 %v601, %v597
    %v706 = vpack.c.bf16 %v602, %v598
    %v707 = vpack.c.bf16 %v607, %v603
    %v708 = vpack.c.bf16 %v608, %v604
    %v709 = vpack.c.bf16 %v609, %v605
    %v710 = vpack.c.bf16 %v610, %v606
    %v711 = vpack.c.bf16 %v615, %v611
    %v712 = vpack.c.bf16 %v616, %v612
    %v713 = vpack.c.bf16 %v617, %v613
    %v714 = vpack.c.bf16 %v618, %v614
    %v715 = vpack.c.bf16 %v623, %v619
    %v716 = vpack.c.bf16 %v624, %v620
    %v717 = vpack.c.bf16 %v625, %v621
    %v718 = vpack.c.bf16 %v626, %v622
    %v719 = vpack.c.bf16 %v631, %v627
    %v720 = vpack.c.bf16 %v632, %v628
    %v721 = vpack.c.bf16 %v633, %v629
    %v722 = vpack.c.bf16 %v634, %v630
    %v723 = vpack.c.bf16 %v639, %v635
    %v724 = vpack.c.bf16 %v640, %v636
    %v725 = vpack.c.bf16 %v641, %v637
    %v726 = vpack.c.bf16 %v642, %v638
    %v727 = vpack.c.bf16 %v647, %v643
    %v728 = vpack.c.bf16 %v648, %v644
    %v729 = vpack.c.bf16 %v649, %v645
    %v730 = vpack.c.bf16 %v650, %v646
    %v731 = vpack.c.bf16 %v655, %v651
    %v732 = vpack.c.bf16 %v656, %v652
    %v733 = vpack.c.bf16 %v657, %v653
    %v734 = vpack.c.bf16 %v658, %v654
    %v735 = vpack.c.bf16 %v663, %v659
    %v736 = vpack.c.bf16 %v664, %v660
    %v737 = vpack.c.bf16 %v665, %v661
    %v738 = vpack.c.bf16 %v666, %v662
    %v739 = vpack.c.bf16 %v671, %v667
    %v740 = vpack.c.bf16 %v672, %v668
    %v741 = vpack.c.bf16 %v673, %v669
    %v742 = vpack.c.bf16 %v674, %v670
    %v743 = vpack.c.bf16 %v679, %v675
    %v744 = vpack.c.bf16 %v680, %v676
    %v745 = vpack.c.bf16 %v681, %v677
    %v746 = vpack.c.bf16 %v682, %v678
    %747 = vmatpush.bf16.msra.mxu0 %v711
    %748 = vmatpush.bf16.msra.mxu0 %v707
    %749 = vmatpush.bf16.msra.mxu0 %v703
    %750 = vmatpush.bf16.msra.mxu0 %v699
    %751 = vmatpush.bf16.msra.mxu0 %v695
    %752 = vmatpush.bf16.msra.mxu0 %v691
    %753 = vmatpush.bf16.msra.mxu0 %v687
    %754 = vmatpush.bf16.msra.mxu0 %v683
    %755 = vmatmul.bf16.gmra.mxu0 %v393
    %v756 = vpop.f32.mrf.mxu0
    %v757 = vadd.f32 0.0, %v756
    %v758 = vpop.f32.mrf.mxu0
    %759 = vdwg.mxu0
    %760 = vmatpush.bf16.msra.mxu0 %v743
    %761 = vmatpush.bf16.msra.mxu0 %v739
    %762 = vmatpush.bf16.msra.mxu0 %v735
    %763 = vmatpush.bf16.msra.mxu0 %v731
    %764 = vmatpush.bf16.msra.mxu0 %v727
    %765 = vmatpush.bf16.msra.mxu0 %v723
    %766 = vmatpush.bf16.msra.mxu0 %v719
    %767 = vmatpush.bf16.msra.mxu0 %v715
    %768 = vmatmul.bf16.gmra.mxu0 %v394
    %v769 = vpop.f32.mrf.mxu0
    %v770 = vadd.f32 %v757, %v769
    %v771 = vpop.f32.mrf.mxu0
    %772 = vdwg.mxu0
    %773 = vmatpush.bf16.msra.mxu0 %v712
    %774 = vmatpush.bf16.msra.mxu0 %v708
    %775 = vmatpush.bf16.msra.mxu0 %v704
    %776 = vmatpush.bf16.msra.mxu0 %v700
    %777 = vmatpush.bf16.msra.mxu0 %v696
    %778 = vmatpush.bf16.msra.mxu0 %v692
    %779 = vmatpush.bf16.msra.mxu0 %v688
    %780 = vmatpush.bf16.msra.mxu0 %v684
    %781 = vmatmul.bf16.gmra.mxu0 %v393
    %v782 = vpop.f32.mrf.mxu0
    %v783 = vadd.f32 0.0, %v782
    %v784 = vpop.f32.mrf.mxu0
    %785 = vdwg.mxu0
    %786 = vmatpush.bf16.msra.mxu0 %v744
    %787 = vmatpush.bf16.msra.mxu0 %v740
    %788 = vmatpush.bf16.msra.mxu0 %v736
    %789 = vmatpush.bf16.msra.mxu0 %v732
    %790 = vmatpush.bf16.msra.mxu0 %v728
    %791 = vmatpush.bf16.msra.mxu0 %v724
    %792 = vmatpush.bf16.msra.mxu0 %v720
    %793 = vmatpush.bf16.msra.mxu0 %v716
    %794 = vmatmul.bf16.gmra.mxu0 %v394
    %v795 = vpop.f32.mrf.mxu0
    %v796 = vadd.f32 %v783, %v795
    %v797 = vpop.f32.mrf.mxu0
    %798 = vdwg.mxu0
    %799 = vmatpush.bf16.msra.mxu0 %v713
    %800 = vmatpush.bf16.msra.mxu0 %v709
    %801 = vmatpush.bf16.msra.mxu0 %v705
    %802 = vmatpush.bf16.msra.mxu0 %v701
    %803 = vmatpush.bf16.msra.mxu0 %v697
    %804 = vmatpush.bf16.msra.mxu0 %v693
    %805 = vmatpush.bf16.msra.mxu0 %v689
    %806 = vmatpush.bf16.msra.mxu0 %v685
    %807 = vmatmul.bf16.gmra.mxu0 %v393
    %v808 = vpop.f32.mrf.mxu0
    %v809 = vadd.f32 0.0, %v808
    %v810 = vpop.f32.mrf.mxu0
    %811 = vdwg.mxu0
    %812 = vmatpush.bf16.msra.mxu0 %v745
    %813 = vmatpush.bf16.msra.mxu0 %v741
    %814 = vmatpush.bf16.msra.mxu0 %v737
    %815 = vmatpush.bf16.msra.mxu0 %v733
    %816 = vmatpush.bf16.msra.mxu0 %v729
    %817 = vmatpush.bf16.msra.mxu0 %v725
    %818 = vmatpush.bf16.msra.mxu0 %v721
    %819 = vmatpush.bf16.msra.mxu0 %v717
    %820 = vmatmul.bf16.gmra.mxu0 %v394
    %v821 = vpop.f32.mrf.mxu0
    %v822 = vadd.f32 %v809, %v821
    %v823 = vpop.f32.mrf.mxu0
    %824 = vdwg.mxu0
    %825 = vmatpush.bf16.msra.mxu0 %v714
    %826 = vmatpush.bf16.msra.mxu0 %v710
    %827 = vmatpush.bf16.msra.mxu0 %v706
    %828 = vmatpush.bf16.msra.mxu0 %v702
    %829 = vmatpush.bf16.msra.mxu0 %v698
    %830 = vmatpush.bf16.msra.mxu0 %v694
    %831 = vmatpush.bf16.msra.mxu0 %v690
    %832 = vmatpush.bf16.msra.mxu0 %v686
    %833 = vmatmul.bf16.gmra.mxu0 %v393
    %v834 = vpop.f32.mrf.mxu0
    %v835 = vadd.f32 0.0, %v834
    %v836 = vpop.f32.mrf.mxu0
    %837 = vdwg.mxu0
    %838 = vmatpush.bf16.msra.mxu0 %v746
    %839 = vmatpush.bf16.msra.mxu0 %v742
    %840 = vmatpush.bf16.msra.mxu0 %v738
    %841 = vmatpush.bf16.msra.mxu0 %v734
    %842 = vmatpush.bf16.msra.mxu0 %v730
    %843 = vmatpush.bf16.msra.mxu0 %v726
    %844 = vmatpush.bf16.msra.mxu0 %v722
    %845 = vmatpush.bf16.msra.mxu0 %v718
    %846 = vmatmul.bf16.gmra.mxu0 %v394
    %v847 = vpop.f32.mrf.mxu0
    %v848 = vadd.f32 %v835, %v847
    %v849 = vpop.f32.mrf.mxu0
    %850 = vdwg.mxu0
    %v852 = vperm.slane %v124, 0
    %v853 = vperm.slane %v124, 1
    %v854 = vperm.slane %v124, 2
    %v855 = vperm.slane %v124, 3
    %v860 = vmul.f32 %v770, %v852
    %v861 = vmul.f32 %v796, %v853
    %v862 = vmul.f32 %v822, %v854
    %v863 = vmul.f32 %v848, %v855
    %v864 = vrot.slane %v860, 4
    %v865 = vadd.f32 %v860, %v864
    %v866 = vrot.slane %v865, 2
    %v867 = vadd.f32 %v865, %v866
    %v868 = vrot.slane %v867, 1
    %v869 = vadd.f32 %v867, %v868
    %v870 = vrot.slane %v861, 4
    %v871 = vadd.f32 %v861, %v870
    %v872 = vrot.slane %v871, 2
    %v873 = vadd.f32 %v871, %v872
    %v874 = vrot.slane %v873, 1
    %v875 = vadd.f32 %v873, %v874
    %v876 = vrot.slane %v862, 4
    %v877 = vadd.f32 %v862, %v876
    %v878 = vrot.slane %v877, 2
    %v879 = vadd.f32 %v877, %v878
    %v880 = vrot.slane %v879, 1
    %v881 = vadd.f32 %v879, %v880
    %v882 = vrot.slane %v863, 4
    %v883 = vadd.f32 %v863, %v882
    %v884 = vrot.slane %v883, 2
    %v885 = vadd.f32 %v883, %v884
    %v886 = vrot.slane %v885, 1
    %v887 = vadd.f32 %v885, %v886
    %v888 = vmul.f32 %v869, %v324
    %v889 = vmul.f32 %v875, %v324
    %v890 = vmul.f32 %v881, %v324
    %v891 = vmul.f32 %v887, %v324
    %v892 = vmul.f32 %v860, %v860
    %v893 = vmul.f32 %v861, %v861
    %v894 = vmul.f32 %v862, %v862
    %v895 = vmul.f32 %v863, %v863
    %v896 = vrot.slane %v892, 4
    %v897 = vadd.f32 %v892, %v896
    %v898 = vrot.slane %v897, 2
    %v899 = vadd.f32 %v897, %v898
    %v900 = vrot.slane %v899, 1
    %v901 = vadd.f32 %v899, %v900
    %v902 = vrot.slane %v893, 4
    %v903 = vadd.f32 %v893, %v902
    %v904 = vrot.slane %v903, 2
    %v905 = vadd.f32 %v903, %v904
    %v906 = vrot.slane %v905, 1
    %v907 = vadd.f32 %v905, %v906
    %v908 = vrot.slane %v894, 4
    %v909 = vadd.f32 %v894, %v908
    %v910 = vrot.slane %v909, 2
    %v911 = vadd.f32 %v909, %v910
    %v912 = vrot.slane %v911, 1
    %v913 = vadd.f32 %v911, %v912
    %v914 = vrot.slane %v895, 4
    %v915 = vadd.f32 %v895, %v914
    %v916 = vrot.slane %v915, 2
    %v917 = vadd.f32 %v915, %v916
    %v918 = vrot.slane %v917, 1
    %v919 = vadd.f32 %v917, %v918
    %v920 = vmul.f32 %v901, %v324
    %v921 = vmul.f32 %v907, %v324
    %v922 = vmul.f32 %v913, %v324
    %v923 = vmul.f32 %v919, %v324
    %v924 = vmul.f32 %v888, %v888
    %v925 = vmul.f32 %v889, %v889
    %v926 = vmul.f32 %v890, %v890
    %v927 = vmul.f32 %v891, %v891
    %v928 = vsub.f32 %v920, %v924
    %v929 = vsub.f32 %v921, %v925
    %v930 = vsub.f32 %v922, %v926
    %v931 = vsub.f32 %v923, %v927
    %v932 = vadd.f32 %v928, 0.8
    %v933 = vadd.f32 %v929, 0.8
    %v934 = vadd.f32 %v930, 0.8
    %v935 = vadd.f32 %v931, 0.8
    %v936 = vrsqrt.pop %v932
    %v937 = vmul.f32 %v936, %v932
    %v938 = vmul.f32 %v937, %v936
    %v939 = vmul.f32 0.5, %v938
    %v940 = vsub.f32 1.5, %v939
    %v941 = vmul.f32 %v936, %v940
    %vm942 = vweird.f32 %v932
    %vm943 = vweird.f32 %v936
    %vm944 = vmor %vm942, %vm943
    %v945 = vsel %vm944, %v936, %v941
    %v946 = vrsqrt.pop %v933
    %v947 = vmul.f32 %v946, %v933
    %v948 = vmul.f32 %v947, %v946
    %v949 = vmul.f32 0.5, %v948
    %v950 = vsub.f32 1.5, %v949
    %v951 = vmul.f32 %v946, %v950
    %vm952 = vweird.f32 %v933
    %vm953 = vweird.f32 %v946
    %vm954 = vmor %vm952, %vm953
    %v955 = vsel %vm954, %v946, %v951
    %v956 = vrsqrt.pop %v934
    %v957 = vmul.f32 %v956, %v934
    %v958 = vmul.f32 %v957, %v956
    %v959 = vmul.f32 0.5, %v958
    %v960 = vsub.f32 1.5, %v959
    %v961 = vmul.f32 %v956, %v960
    %vm962 = vweird.f32 %v934
    %vm963 = vweird.f32 %v956
    %vm964 = vmor %vm962, %vm963
    %v965 = vsel %vm964, %v956, %v961
    %v966 = vrsqrt.pop %v935
    %v967 = vmul.f32 %v966, %v935
    %v968 = vmul.f32 %v967, %v966
    %v969 = vmul.f32 0.5, %v968
    %v970 = vsub.f32 1.5, %v969
    %v971 = vmul.f32 %v966, %v970
    %vm972 = vweird.f32 %v935
    %vm973 = vweird.f32 %v966
    %vm974 = vmor %vm972, %vm973
    %v975 = vsel %vm974, %v966, %v971
    %v976 = vsub.f32 %v860, %v888
    %v977 = vsub.f32 %v861, %v889
    %v978 = vsub.f32 %v862, %v890
    %v979 = vsub.f32 %v863, %v891
    %v980 = vmul.f32 %v976, %v945
    %v981 = vmul.f32 %v977, %v955
    %v982 = vmul.f32 %v978, %v965
    %v983 = vmul.f32 %v979, %v975
    %v985 = vperm.slane %v126, 0
    %v986 = vperm.slane %v126, 1
    %v987 = vperm.slane %v126, 2
    %v988 = vperm.slane %v126, 3
    %v993 = vmul.f32 %v980, %v985
    %v994 = vmul.f32 %v981, %v986
    %v995 = vmul.f32 %v982, %v987
    %v996 = vmul.f32 %v983, %v988
    %v998 = vperm.slane %v128, 0
    %v999 = vperm.slane %v128, 1
    %v1000 = vperm.slane %v128, 2
    %v1001 = vperm.slane %v128, 3
    %v1006 = vadd.f32 %v993, %v998
    %v1007 = vadd.f32 %v994, %v999
    %v1008 = vadd.f32 %v995, %v1000
    %v1009 = vadd.f32 %v996, %v1001
    %vm1010 = vcmp.gt.f32.partialorder %v1006, 0.0
    %vm1011 = vcmp.gt.f32.partialorder %v1007, 0.0
    %vm1012 = vcmp.gt.f32.partialorder %v1008, 0.0
    %vm1013 = vcmp.gt.f32.partialorder %v1009, 0.0
    %v1014 = vmul.f32 %v1006, 0.2
    %v1015 = vmul.f32 %v1007, 0.2
    %v1016 = vmul.f32 %v1008, 0.2
    %v1017 = vmul.f32 %v1009, 0.2
    %v1018 = vsel %vm1010, %v1006, %v1014
    %v1019 = vsel %vm1011, %v1007, %v1015
    %v1020 = vsel %vm1012, %v1008, %v1016
    %v1021 = vsel %vm1013, %v1009, %v1017
    %v1022 = vpack.c.bf16 %v1018, %v1018
    %v1023 = vpack.c.bf16 %v1019, %v1019
    %v1024 = vpack.c.bf16 %v1020, %v1020
    %v1025 = vpack.c.bf16 %v1021, %v1021
    %v1026 = vld [vmem:[#allocation11] sm:$0xff]
    %v1027 = vld [vmem:[#allocation11 + $0x8] sm:$0xff]
    %v1028 = vld [vmem:[#allocation11 + $0x10] sm:$0xff]
    %v1029 = vld [vmem:[#allocation11 + $0x18] sm:$0xff]
    %v1030 = vld [vmem:[#allocation11 + $0x20] sm:$0xff]
    %v1031 = vld [vmem:[#allocation11 + $0x28] sm:$0xff]
    %v1032 = vld [vmem:[#allocation11 + $0x30] sm:$0xff]
    %v1033 = vld [vmem:[#allocation11 + $0x38] sm:$0xff]
    %v1034 = vld [vmem:[#allocation11 + $0x40] sm:$0xff]
    %v1035 = vld [vmem:[#allocation11 + $0x48] sm:$0xff]
    %v1036 = vld [vmem:[#allocation11 + $0x50] sm:$0xff]
    %v1037 = vld [vmem:[#allocation11 + $0x58] sm:$0xff]
    %v1038 = vld [vmem:[#allocation11 + $0x60] sm:$0xff]
    %v1039 = vld [vmem:[#allocation11 + $0x68] sm:$0xff]
    %v1040 = vld [vmem:[#allocation11 + $0x70] sm:$0xff]
    %v1041 = vld [vmem:[#allocation11 + $0x78] sm:$0xff]
    %v1042 = vld [vmem:[#allocation11 + $0x80] sm:$0xff]
    %v1043 = vld [vmem:[#allocation11 + $0x88] sm:$0xff]
    %v1044 = vld [vmem:[#allocation11 + $0x90] sm:$0xff]
    %v1045 = vld [vmem:[#allocation11 + $0x98] sm:$0xff]
    %v1046 = vld [vmem:[#allocation11 + $0xa0] sm:$0xff]
    %v1047 = vld [vmem:[#allocation11 + $0xa8] sm:$0xff]
    %v1048 = vld [vmem:[#allocation11 + $0xb0] sm:$0xff]
    %v1049 = vld [vmem:[#allocation11 + $0xb8] sm:$0xff]
    %v1050 = vld [vmem:[#allocation11 + $0xc0] sm:$0xff]
    %v1051 = vld [vmem:[#allocation11 + $0xc8] sm:$0xff]
    %v1052 = vld [vmem:[#allocation11 + $0xd0] sm:$0xff]
    %v1053 = vld [vmem:[#allocation11 + $0xd8] sm:$0xff]
    %v1054 = vld [vmem:[#allocation11 + $0xe0] sm:$0xff]
    %v1055 = vld [vmem:[#allocation11 + $0xe8] sm:$0xff]
    %v1056 = vld [vmem:[#allocation11 + $0xf0] sm:$0xff]
    %v1057 = vld [vmem:[#allocation11 + $0xf8] sm:$0xff]
    %v1058 = vld [vmem:[#allocation11 + $0x100] sm:$0xff]
    %v1059 = vld [vmem:[#allocation11 + $0x108] sm:$0xff]
    %v1060 = vld [vmem:[#allocation11 + $0x110] sm:$0xff]
    %v1061 = vld [vmem:[#allocation11 + $0x118] sm:$0xff]
    %v1062 = vld [vmem:[#allocation11 + $0x120] sm:$0xff]
    %v1063 = vld [vmem:[#allocation11 + $0x128] sm:$0xff]
    %v1064 = vld [vmem:[#allocation11 + $0x130] sm:$0xff]
    %v1065 = vld [vmem:[#allocation11 + $0x138] sm:$0xff]
    %v1066 = vld [vmem:[#allocation11 + $0x140] sm:$0xff]
    %v1067 = vld [vmem:[#allocation11 + $0x148] sm:$0xff]
    %v1068 = vld [vmem:[#allocation11 + $0x150] sm:$0xff]
    %v1069 = vld [vmem:[#allocation11 + $0x158] sm:$0xff]
    %v1070 = vld [vmem:[#allocation11 + $0x160] sm:$0xff]
    %v1071 = vld [vmem:[#allocation11 + $0x168] sm:$0xff]
    %v1072 = vld [vmem:[#allocation11 + $0x170] sm:$0xff]
    %v1073 = vld [vmem:[#allocation11 + $0x178] sm:$0xff]
    %v1074 = vld [vmem:[#allocation11 + $0x180] sm:$0xff]
    %v1075 = vld [vmem:[#allocation11 + $0x188] sm:$0xff]
    %v1076 = vld [vmem:[#allocation11 + $0x190] sm:$0xff]
    %v1077 = vld [vmem:[#allocation11 + $0x198] sm:$0xff]
    %v1078 = vld [vmem:[#allocation11 + $0x1a0] sm:$0xff]
    %v1079 = vld [vmem:[#allocation11 + $0x1a8] sm:$0xff]
    %v1080 = vld [vmem:[#allocation11 + $0x1b0] sm:$0xff]
    %v1081 = vld [vmem:[#allocation11 + $0x1b8] sm:$0xff]
    %v1082 = vld [vmem:[#allocation11 + $0x1c0] sm:$0xff]
    %v1083 = vld [vmem:[#allocation11 + $0x1c8] sm:$0xff]
    %v1084 = vld [vmem:[#allocation11 + $0x1d0] sm:$0xff]
    %v1085 = vld [vmem:[#allocation11 + $0x1d8] sm:$0xff]
    %v1086 = vld [vmem:[#allocation11 + $0x1e0] sm:$0xff]
    %v1087 = vld [vmem:[#allocation11 + $0x1e8] sm:$0xff]
    %v1088 = vld [vmem:[#allocation11 + $0x1f0] sm:$0xff]
    %v1089 = vld [vmem:[#allocation11 + $0x1f8] sm:$0xff]
    %v1090 = vld [vmem:[#allocation11 + $0x200] sm:$0xff]
    %v1091 = vld [vmem:[#allocation11 + $0x208] sm:$0xff]
    %v1092 = vld [vmem:[#allocation11 + $0x210] sm:$0xff]
    %v1093 = vld [vmem:[#allocation11 + $0x218] sm:$0xff]
    %v1094 = vld [vmem:[#allocation11 + $0x220] sm:$0xff]
    %v1095 = vld [vmem:[#allocation11 + $0x228] sm:$0xff]
    %v1096 = vld [vmem:[#allocation11 + $0x230] sm:$0xff]
    %v1097 = vld [vmem:[#allocation11 + $0x238] sm:$0xff]
    %v1098 = vld [vmem:[#allocation11 + $0x240] sm:$0xff]
    %v1099 = vld [vmem:[#allocation11 + $0x248] sm:$0xff]
    %v1100 = vld [vmem:[#allocation11 + $0x250] sm:$0xff]
    %v1101 = vld [vmem:[#allocation11 + $0x258] sm:$0xff]
    %v1102 = vld [vmem:[#allocation11 + $0x260] sm:$0xff]
    %v1103 = vld [vmem:[#allocation11 + $0x268] sm:$0xff]
    %v1104 = vld [vmem:[#allocation11 + $0x270] sm:$0xff]
    %v1105 = vld [vmem:[#allocation11 + $0x278] sm:$0xff]
    %v1106 = vld [vmem:[#allocation11 + $0x280] sm:$0xff]
    %v1107 = vld [vmem:[#allocation11 + $0x288] sm:$0xff]
    %v1108 = vld [vmem:[#allocation11 + $0x290] sm:$0xff]
    %v1109 = vld [vmem:[#allocation11 + $0x298] sm:$0xff]
    %v1110 = vld [vmem:[#allocation11 + $0x2a0] sm:$0xff]
    %v1111 = vld [vmem:[#allocation11 + $0x2a8] sm:$0xff]
    %v1112 = vld [vmem:[#allocation11 + $0x2b0] sm:$0xff]
    %v1113 = vld [vmem:[#allocation11 + $0x2b8] sm:$0xff]
    %v1114 = vld [vmem:[#allocation11 + $0x2c0] sm:$0xff]
    %v1115 = vld [vmem:[#allocation11 + $0x2c8] sm:$0xff]
    %v1116 = vld [vmem:[#allocation11 + $0x2d0] sm:$0xff]
    %v1117 = vld [vmem:[#allocation11 + $0x2d8] sm:$0xff]
    %v1118 = vld [vmem:[#allocation11 + $0x2e0] sm:$0xff]
    %v1119 = vld [vmem:[#allocation11 + $0x2e8] sm:$0xff]
    %v1120 = vld [vmem:[#allocation11 + $0x2f0] sm:$0xff]
    %v1121 = vld [vmem:[#allocation11 + $0x2f8] sm:$0xff]
    %v1122 = vld [vmem:[#allocation11 + $0x300] sm:$0xff]
    %v1123 = vld [vmem:[#allocation11 + $0x308] sm:$0xff]
    %v1124 = vld [vmem:[#allocation11 + $0x310] sm:$0xff]
    %v1125 = vld [vmem:[#allocation11 + $0x318] sm:$0xff]
    %v1126 = vld [vmem:[#allocation11 + $0x320] sm:$0xff]
    %v1127 = vld [vmem:[#allocation11 + $0x328] sm:$0xff]
    %v1128 = vld [vmem:[#allocation11 + $0x330] sm:$0xff]
    %v1129 = vld [vmem:[#allocation11 + $0x338] sm:$0xff]
    %v1130 = vld [vmem:[#allocation11 + $0x340] sm:$0xff]
    %v1131 = vld [vmem:[#allocation11 + $0x348] sm:$0xff]
    %v1132 = vld [vmem:[#allocation11 + $0x350] sm:$0xff]
    %v1133 = vld [vmem:[#allocation11 + $0x358] sm:$0xff]
    %v1134 = vld [vmem:[#allocation11 + $0x360] sm:$0xff]
    %v1135 = vld [vmem:[#allocation11 + $0x368] sm:$0xff]
    %v1136 = vld [vmem:[#allocation11 + $0x370] sm:$0xff]
    %v1137 = vld [vmem:[#allocation11 + $0x378] sm:$0xff]
    %v1138 = vld [vmem:[#allocation11 + $0x380] sm:$0xff]
    %v1139 = vld [vmem:[#allocation11 + $0x388] sm:$0xff]
    %v1140 = vld [vmem:[#allocation11 + $0x390] sm:$0xff]
    %v1141 = vld [vmem:[#allocation11 + $0x398] sm:$0xff]
    %v1142 = vld [vmem:[#allocation11 + $0x3a0] sm:$0xff]
    %v1143 = vld [vmem:[#allocation11 + $0x3a8] sm:$0xff]
    %v1144 = vld [vmem:[#allocation11 + $0x3b0] sm:$0xff]
    %v1145 = vld [vmem:[#allocation11 + $0x3b8] sm:$0xff]
    %v1146 = vld [vmem:[#allocation11 + $0x3c0] sm:$0xff]
    %v1147 = vld [vmem:[#allocation11 + $0x3c8] sm:$0xff]
    %v1148 = vld [vmem:[#allocation11 + $0x3d0] sm:$0xff]
    %v1149 = vld [vmem:[#allocation11 + $0x3d8] sm:$0xff]
    %v1150 = vld [vmem:[#allocation11 + $0x3e0] sm:$0xff]
    %v1151 = vld [vmem:[#allocation11 + $0x3e8] sm:$0xff]
    %v1152 = vld [vmem:[#allocation11 + $0x3f0] sm:$0xff]
    %v1153 = vld [vmem:[#allocation11 + $0x3f8] sm:$0xff]
    %v1154 = vunpack.c.0.s8 %v1026
    %v1155 = vunpack.c.0.s8 %v1027
    %v1156 = vunpack.c.0.s8 %v1028
    %v1157 = vunpack.c.0.s8 %v1029
    %v1158 = vunpack.c.0.s8 %v1030
    %v1159 = vunpack.c.0.s8 %v1031
    %v1160 = vunpack.c.0.s8 %v1032
    %v1161 = vunpack.c.0.s8 %v1033
    %v1162 = vunpack.c.1.s8 %v1026
    %v1163 = vunpack.c.1.s8 %v1027
    %v1164 = vunpack.c.1.s8 %v1028
    %v1165 = vunpack.c.1.s8 %v1029
    %v1166 = vunpack.c.1.s8 %v1030
    %v1167 = vunpack.c.1.s8 %v1031
    %v1168 = vunpack.c.1.s8 %v1032
    %v1169 = vunpack.c.1.s8 %v1033
    %v1170 = vunpack.c.2.s8 %v1026
    %v1171 = vunpack.c.2.s8 %v1027
    %v1172 = vunpack.c.2.s8 %v1028
    %v1173 = vunpack.c.2.s8 %v1029
    %v1174 = vunpack.c.2.s8 %v1030
    %v1175 = vunpack.c.2.s8 %v1031
    %v1176 = vunpack.c.2.s8 %v1032
    %v1177 = vunpack.c.2.s8 %v1033
    %v1178 = vunpack.c.3.s8 %v1026
    %v1179 = vunpack.c.3.s8 %v1027
    %v1180 = vunpack.c.3.s8 %v1028
    %v1181 = vunpack.c.3.s8 %v1029
    %v1182 = vunpack.c.3.s8 %v1030
    %v1183 = vunpack.c.3.s8 %v1031
    %v1184 = vunpack.c.3.s8 %v1032
    %v1185 = vunpack.c.3.s8 %v1033
    %v1186 = vunpack.c.0.s8 %v1034
    %v1187 = vunpack.c.0.s8 %v1035
    %v1188 = vunpack.c.0.s8 %v1036
    %v1189 = vunpack.c.0.s8 %v1037
    %v1190 = vunpack.c.0.s8 %v1038
    %v1191 = vunpack.c.0.s8 %v1039
    %v1192 = vunpack.c.0.s8 %v1040
    %v1193 = vunpack.c.0.s8 %v1041
    %v1194 = vunpack.c.1.s8 %v1034
    %v1195 = vunpack.c.1.s8 %v1035
    %v1196 = vunpack.c.1.s8 %v1036
    %v1197 = vunpack.c.1.s8 %v1037
    %v1198 = vunpack.c.1.s8 %v1038
    %v1199 = vunpack.c.1.s8 %v1039
    %v1200 = vunpack.c.1.s8 %v1040
    %v1201 = vunpack.c.1.s8 %v1041
    %v1202 = vunpack.c.2.s8 %v1034
    %v1203 = vunpack.c.2.s8 %v1035
    %v1204 = vunpack.c.2.s8 %v1036
    %v1205 = vunpack.c.2.s8 %v1037
    %v1206 = vunpack.c.2.s8 %v1038
    %v1207 = vunpack.c.2.s8 %v1039
    %v1208 = vunpack.c.2.s8 %v1040
    %v1209 = vunpack.c.2.s8 %v1041
    %v1210 = vunpack.c.3.s8 %v1034
    %v1211 = vunpack.c.3.s8 %v1035
    %v1212 = vunpack.c.3.s8 %v1036
    %v1213 = vunpack.c.3.s8 %v1037
    %v1214 = vunpack.c.3.s8 %v1038
    %v1215 = vunpack.c.3.s8 %v1039
    %v1216 = vunpack.c.3.s8 %v1040
    %v1217 = vunpack.c.3.s8 %v1041
    %v1218 = vunpack.c.0.s8 %v1042
    %v1219 = vunpack.c.0.s8 %v1043
    %v1220 = vunpack.c.0.s8 %v1044
    %v1221 = vunpack.c.0.s8 %v1045
    %v1222 = vunpack.c.0.s8 %v1046
    %v1223 = vunpack.c.0.s8 %v1047
    %v1224 = vunpack.c.0.s8 %v1048
    %v1225 = vunpack.c.0.s8 %v1049
    %v1226 = vunpack.c.1.s8 %v1042
    %v1227 = vunpack.c.1.s8 %v1043
    %v1228 = vunpack.c.1.s8 %v1044
    %v1229 = vunpack.c.1.s8 %v1045
    %v1230 = vunpack.c.1.s8 %v1046
    %v1231 = vunpack.c.1.s8 %v1047
    %v1232 = vunpack.c.1.s8 %v1048
    %v1233 = vunpack.c.1.s8 %v1049
    %v1234 = vunpack.c.2.s8 %v1042
    %v1235 = vunpack.c.2.s8 %v1043
    %v1236 = vunpack.c.2.s8 %v1044
    %v1237 = vunpack.c.2.s8 %v1045
    %v1238 = vunpack.c.2.s8 %v1046
    %v1239 = vunpack.c.2.s8 %v1047
    %v1240 = vunpack.c.2.s8 %v1048
    %v1241 = vunpack.c.2.s8 %v1049
    %v1242 = vunpack.c.3.s8 %v1042
    %v1243 = vunpack.c.3.s8 %v1043
    %v1244 = vunpack.c.3.s8 %v1044
    %v1245 = vunpack.c.3.s8 %v1045
    %v1246 = vunpack.c.3.s8 %v1046
    %v1247 = vunpack.c.3.s8 %v1047
    %v1248 = vunpack.c.3.s8 %v1048
    %v1249 = vunpack.c.3.s8 %v1049
    %v1250 = vunpack.c.0.s8 %v1050
    %v1251 = vunpack.c.0.s8 %v1051
    %v1252 = vunpack.c.0.s8 %v1052
    %v1253 = vunpack.c.0.s8 %v1053
    %v1254 = vunpack.c.0.s8 %v1054
    %v1255 = vunpack.c.0.s8 %v1055
    %v1256 = vunpack.c.0.s8 %v1056
    %v1257 = vunpack.c.0.s8 %v1057
    %v1258 = vunpack.c.1.s8 %v1050
    %v1259 = vunpack.c.1.s8 %v1051
    %v1260 = vunpack.c.1.s8 %v1052
    %v1261 = vunpack.c.1.s8 %v1053
    %v1262 = vunpack.c.1.s8 %v1054
    %v1263 = vunpack.c.1.s8 %v1055
    %v1264 = vunpack.c.1.s8 %v1056
    %v1265 = vunpack.c.1.s8 %v1057
    %v1266 = vunpack.c.2.s8 %v1050
    %v1267 = vunpack.c.2.s8 %v1051
    %v1268 = vunpack.c.2.s8 %v1052
    %v1269 = vunpack.c.2.s8 %v1053
    %v1270 = vunpack.c.2.s8 %v1054
    %v1271 = vunpack.c.2.s8 %v1055
    %v1272 = vunpack.c.2.s8 %v1056
    %v1273 = vunpack.c.2.s8 %v1057
    %v1274 = vunpack.c.3.s8 %v1050
    %v1275 = vunpack.c.3.s8 %v1051
    %v1276 = vunpack.c.3.s8 %v1052
    %v1277 = vunpack.c.3.s8 %v1053
    %v1278 = vunpack.c.3.s8 %v1054
    %v1279 = vunpack.c.3.s8 %v1055
    %v1280 = vunpack.c.3.s8 %v1056
    %v1281 = vunpack.c.3.s8 %v1057
    %v1282 = vunpack.c.0.s8 %v1058
    %v1283 = vunpack.c.0.s8 %v1059
    %v1284 = vunpack.c.0.s8 %v1060
    %v1285 = vunpack.c.0.s8 %v1061
    %v1286 = vunpack.c.0.s8 %v1062
    %v1287 = vunpack.c.0.s8 %v1063
    %v1288 = vunpack.c.0.s8 %v1064
    %v1289 = vunpack.c.0.s8 %v1065
    %v1290 = vunpack.c.1.s8 %v1058
    %v1291 = vunpack.c.1.s8 %v1059
    %v1292 = vunpack.c.1.s8 %v1060
    %v1293 = vunpack.c.1.s8 %v1061
    %v1294 = vunpack.c.1.s8 %v1062
    %v1295 = vunpack.c.1.s8 %v1063
    %v1296 = vunpack.c.1.s8 %v1064
    %v1297 = vunpack.c.1.s8 %v1065
    %v1298 = vunpack.c.2.s8 %v1058
    %v1299 = vunpack.c.2.s8 %v1059
    %v1300 = vunpack.c.2.s8 %v1060
    %v1301 = vunpack.c.2.s8 %v1061
    %v1302 = vunpack.c.2.s8 %v1062
    %v1303 = vunpack.c.2.s8 %v1063
    %v1304 = vunpack.c.2.s8 %v1064
    %v1305 = vunpack.c.2.s8 %v1065
    %v1306 = vunpack.c.3.s8 %v1058
    %v1307 = vunpack.c.3.s8 %v1059
    %v1308 = vunpack.c.3.s8 %v1060
    %v1309 = vunpack.c.3.s8 %v1061
    %v1310 = vunpack.c.3.s8 %v1062
    %v1311 = vunpack.c.3.s8 %v1063
    %v1312 = vunpack.c.3.s8 %v1064
    %v1313 = vunpack.c.3.s8 %v1065
    %v1314 = vunpack.c.0.s8 %v1066
    %v1315 = vunpack.c.0.s8 %v1067
    %v1316 = vunpack.c.0.s8 %v1068
    %v1317 = vunpack.c.0.s8 %v1069
    %v1318 = vunpack.c.0.s8 %v1070
    %v1319 = vunpack.c.0.s8 %v1071
    %v1320 = vunpack.c.0.s8 %v1072
    %v1321 = vunpack.c.0.s8 %v1073
    %v1322 = vunpack.c.1.s8 %v1066
    %v1323 = vunpack.c.1.s8 %v1067
    %v1324 = vunpack.c.1.s8 %v1068
    %v1325 = vunpack.c.1.s8 %v1069
    %v1326 = vunpack.c.1.s8 %v1070
    %v1327 = vunpack.c.1.s8 %v1071
    %v1328 = vunpack.c.1.s8 %v1072
    %v1329 = vunpack.c.1.s8 %v1073
    %v1330 = vunpack.c.2.s8 %v1066
    %v1331 = vunpack.c.2.s8 %v1067
    %v1332 = vunpack.c.2.s8 %v1068
    %v1333 = vunpack.c.2.s8 %v1069
    %v1334 = vunpack.c.2.s8 %v1070
    %v1335 = vunpack.c.2.s8 %v1071
    %v1336 = vunpack.c.2.s8 %v1072
    %v1337 = vunpack.c.2.s8 %v1073
    %v1338 = vunpack.c.3.s8 %v1066
    %v1339 = vunpack.c.3.s8 %v1067
    %v1340 = vunpack.c.3.s8 %v1068
    %v1341 = vunpack.c.3.s8 %v1069
    %v1342 = vunpack.c.3.s8 %v1070
    %v1343 = vunpack.c.3.s8 %v1071
    %v1344 = vunpack.c.3.s8 %v1072
    %v1345 = vunpack.c.3.s8 %v1073
    %v1346 = vunpack.c.0.s8 %v1074
    %v1347 = vunpack.c.0.s8 %v1075
    %v1348 = vunpack.c.0.s8 %v1076
    %v1349 = vunpack.c.0.s8 %v1077
    %v1350 = vunpack.c.0.s8 %v1078
    %v1351 = vunpack.c.0.s8 %v1079
    %v1352 = vunpack.c.0.s8 %v1080
    %v1353 = vunpack.c.0.s8 %v1081
    %v1354 = vunpack.c.1.s8 %v1074
    %v1355 = vunpack.c.1.s8 %v1075
    %v1356 = vunpack.c.1.s8 %v1076
    %v1357 = vunpack.c.1.s8 %v1077
    %v1358 = vunpack.c.1.s8 %v1078
    %v1359 = vunpack.c.1.s8 %v1079
    %v1360 = vunpack.c.1.s8 %v1080
    %v1361 = vunpack.c.1.s8 %v1081
    %v1362 = vunpack.c.2.s8 %v1074
    %v1363 = vunpack.c.2.s8 %v1075
    %v1364 = vunpack.c.2.s8 %v1076
    %v1365 = vunpack.c.2.s8 %v1077
    %v1366 = vunpack.c.2.s8 %v1078
    %v1367 = vunpack.c.2.s8 %v1079
    %v1368 = vunpack.c.2.s8 %v1080
    %v1369 = vunpack.c.2.s8 %v1081
    %v1370 = vunpack.c.3.s8 %v1074
    %v1371 = vunpack.c.3.s8 %v1075
    %v1372 = vunpack.c.3.s8 %v1076
    %v1373 = vunpack.c.3.s8 %v1077
    %v1374 = vunpack.c.3.s8 %v1078
    %v1375 = vunpack.c.3.s8 %v1079
    %v1376 = vunpack.c.3.s8 %v1080
    %v1377 = vunpack.c.3.s8 %v1081
    %v1378 = vunpack.c.0.s8 %v1082
    %v1379 = vunpack.c.0.s8 %v1083
    %v1380 = vunpack.c.0.s8 %v1084
    %v1381 = vunpack.c.0.s8 %v1085
    %v1382 = vunpack.c.0.s8 %v1086
    %v1383 = vunpack.c.0.s8 %v1087
    %v1384 = vunpack.c.0.s8 %v1088
    %v1385 = vunpack.c.0.s8 %v1089
    %v1386 = vunpack.c.1.s8 %v1082
    %v1387 = vunpack.c.1.s8 %v1083
    %v1388 = vunpack.c.1.s8 %v1084
    %v1389 = vunpack.c.1.s8 %v1085
    %v1390 = vunpack.c.1.s8 %v1086
    %v1391 = vunpack.c.1.s8 %v1087
    %v1392 = vunpack.c.1.s8 %v1088
    %v1393 = vunpack.c.1.s8 %v1089
    %v1394 = vunpack.c.2.s8 %v1082
    %v1395 = vunpack.c.2.s8 %v1083
    %v1396 = vunpack.c.2.s8 %v1084
    %v1397 = vunpack.c.2.s8 %v1085
    %v1398 = vunpack.c.2.s8 %v1086
    %v1399 = vunpack.c.2.s8 %v1087
    %v1400 = vunpack.c.2.s8 %v1088
    %v1401 = vunpack.c.2.s8 %v1089
    %v1402 = vunpack.c.3.s8 %v1082
    %v1403 = vunpack.c.3.s8 %v1083
    %v1404 = vunpack.c.3.s8 %v1084
    %v1405 = vunpack.c.3.s8 %v1085
    %v1406 = vunpack.c.3.s8 %v1086
    %v1407 = vunpack.c.3.s8 %v1087
    %v1408 = vunpack.c.3.s8 %v1088
    %v1409 = vunpack.c.3.s8 %v1089
    %v1410 = vunpack.c.0.s8 %v1090
    %v1411 = vunpack.c.0.s8 %v1091
    %v1412 = vunpack.c.0.s8 %v1092
    %v1413 = vunpack.c.0.s8 %v1093
    %v1414 = vunpack.c.0.s8 %v1094
    %v1415 = vunpack.c.0.s8 %v1095
    %v1416 = vunpack.c.0.s8 %v1096
    %v1417 = vunpack.c.0.s8 %v1097
    %v1418 = vunpack.c.1.s8 %v1090
    %v1419 = vunpack.c.1.s8 %v1091
    %v1420 = vunpack.c.1.s8 %v1092
    %v1421 = vunpack.c.1.s8 %v1093
    %v1422 = vunpack.c.1.s8 %v1094
    %v1423 = vunpack.c.1.s8 %v1095
    %v1424 = vunpack.c.1.s8 %v1096
    %v1425 = vunpack.c.1.s8 %v1097
    %v1426 = vunpack.c.2.s8 %v1090
    %v1427 = vunpack.c.2.s8 %v1091
    %v1428 = vunpack.c.2.s8 %v1092
    %v1429 = vunpack.c.2.s8 %v1093
    %v1430 = vunpack.c.2.s8 %v1094
    %v1431 = vunpack.c.2.s8 %v1095
    %v1432 = vunpack.c.2.s8 %v1096
    %v1433 = vunpack.c.2.s8 %v1097
    %v1434 = vunpack.c.3.s8 %v1090
    %v1435 = vunpack.c.3.s8 %v1091
    %v1436 = vunpack.c.3.s8 %v1092
    %v1437 = vunpack.c.3.s8 %v1093
    %v1438 = vunpack.c.3.s8 %v1094
    %v1439 = vunpack.c.3.s8 %v1095
    %v1440 = vunpack.c.3.s8 %v1096
    %v1441 = vunpack.c.3.s8 %v1097
    %v1442 = vunpack.c.0.s8 %v1098
    %v1443 = vunpack.c.0.s8 %v1099
    %v1444 = vunpack.c.0.s8 %v1100
    %v1445 = vunpack.c.0.s8 %v1101
    %v1446 = vunpack.c.0.s8 %v1102
    %v1447 = vunpack.c.0.s8 %v1103
    %v1448 = vunpack.c.0.s8 %v1104
    %v1449 = vunpack.c.0.s8 %v1105
    %v1450 = vunpack.c.1.s8 %v1098
    %v1451 = vunpack.c.1.s8 %v1099
    %v1452 = vunpack.c.1.s8 %v1100
    %v1453 = vunpack.c.1.s8 %v1101
    %v1454 = vunpack.c.1.s8 %v1102
    %v1455 = vunpack.c.1.s8 %v1103
    %v1456 = vunpack.c.1.s8 %v1104
    %v1457 = vunpack.c.1.s8 %v1105
    %v1458 = vunpack.c.2.s8 %v1098
    %v1459 = vunpack.c.2.s8 %v1099
    %v1460 = vunpack.c.2.s8 %v1100
    %v1461 = vunpack.c.2.s8 %v1101
    %v1462 = vunpack.c.2.s8 %v1102
    %v1463 = vunpack.c.2.s8 %v1103
    %v1464 = vunpack.c.2.s8 %v1104
    %v1465 = vunpack.c.2.s8 %v1105
    %v1466 = vunpack.c.3.s8 %v1098
    %v1467 = vunpack.c.3.s8 %v1099
    %v1468 = vunpack.c.3.s8 %v1100
    %v1469 = vunpack.c.3.s8 %v1101
    %v1470 = vunpack.c.3.s8 %v1102
    %v1471 = vunpack.c.3.s8 %v1103
    %v1472 = vunpack.c.3.s8 %v1104
    %v1473 = vunpack.c.3.s8 %v1105
    %v1474 = vunpack.c.0.s8 %v1106
    %v1475 = vunpack.c.0.s8 %v1107
    %v1476 = vunpack.c.0.s8 %v1108
    %v1477 = vunpack.c.0.s8 %v1109
    %v1478 = vunpack.c.0.s8 %v1110
    %v1479 = vunpack.c.0.s8 %v1111
    %v1480 = vunpack.c.0.s8 %v1112
    %v1481 = vunpack.c.0.s8 %v1113
    %v1482 = vunpack.c.1.s8 %v1106
    %v1483 = vunpack.c.1.s8 %v1107
    %v1484 = vunpack.c.1.s8 %v1108
    %v1485 = vunpack.c.1.s8 %v1109
    %v1486 = vunpack.c.1.s8 %v1110
    %v1487 = vunpack.c.1.s8 %v1111
    %v1488 = vunpack.c.1.s8 %v1112
    %v1489 = vunpack.c.1.s8 %v1113
    %v1490 = vunpack.c.2.s8 %v1106
    %v1491 = vunpack.c.2.s8 %v1107
    %v1492 = vunpack.c.2.s8 %v1108
    %v1493 = vunpack.c.2.s8 %v1109
    %v1494 = vunpack.c.2.s8 %v1110
    %v1495 = vunpack.c.2.s8 %v1111
    %v1496 = vunpack.c.2.s8 %v1112
    %v1497 = vunpack.c.2.s8 %v1113
    %v1498 = vunpack.c.3.s8 %v1106
    %v1499 = vunpack.c.3.s8 %v1107
    %v1500 = vunpack.c.3.s8 %v1108
    %v1501 = vunpack.c.3.s8 %v1109
    %v1502 = vunpack.c.3.s8 %v1110
    %v1503 = vunpack.c.3.s8 %v1111
    %v1504 = vunpack.c.3.s8 %v1112
    %v1505 = vunpack.c.3.s8 %v1113
    %v1506 = vunpack.c.0.s8 %v1114
    %v1507 = vunpack.c.0.s8 %v1115
    %v1508 = vunpack.c.0.s8 %v1116
    %v1509 = vunpack.c.0.s8 %v1117
    %v1510 = vunpack.c.0.s8 %v1118
    %v1511 = vunpack.c.0.s8 %v1119
    %v1512 = vunpack.c.0.s8 %v1120
    %v1513 = vunpack.c.0.s8 %v1121
    %v1514 = vunpack.c.1.s8 %v1114
    %v1515 = vunpack.c.1.s8 %v1115
    %v1516 = vunpack.c.1.s8 %v1116
    %v1517 = vunpack.c.1.s8 %v1117
    %v1518 = vunpack.c.1.s8 %v1118
    %v1519 = vunpack.c.1.s8 %v1119
    %v1520 = vunpack.c.1.s8 %v1120
    %v1521 = vunpack.c.1.s8 %v1121
    %v1522 = vunpack.c.2.s8 %v1114
    %v1523 = vunpack.c.2.s8 %v1115
    %v1524 = vunpack.c.2.s8 %v1116
    %v1525 = vunpack.c.2.s8 %v1117
    %v1526 = vunpack.c.2.s8 %v1118
    %v1527 = vunpack.c.2.s8 %v1119
    %v1528 = vunpack.c.2.s8 %v1120
    %v1529 = vunpack.c.2.s8 %v1121
    %v1530 = vunpack.c.3.s8 %v1114
    %v1531 = vunpack.c.3.s8 %v1115
    %v1532 = vunpack.c.3.s8 %v1116
    %v1533 = vunpack.c.3.s8 %v1117
    %v1534 = vunpack.c.3.s8 %v1118
    %v1535 = vunpack.c.3.s8 %v1119
    %v1536 = vunpack.c.3.s8 %v1120
    %v1537 = vunpack.c.3.s8 %v1121
    %v1538 = vunpack.c.0.s8 %v1122
    %v1539 = vunpack.c.0.s8 %v1123
    %v1540 = vunpack.c.0.s8 %v1124
    %v1541 = vunpack.c.0.s8 %v1125
    %v1542 = vunpack.c.0.s8 %v1126
    %v1543 = vunpack.c.0.s8 %v1127
    %v1544 = vunpack.c.0.s8 %v1128
    %v1545 = vunpack.c.0.s8 %v1129
    %v1546 = vunpack.c.1.s8 %v1122
    %v1547 = vunpack.c.1.s8 %v1123
    %v1548 = vunpack.c.1.s8 %v1124
    %v1549 = vunpack.c.1.s8 %v1125
    %v1550 = vunpack.c.1.s8 %v1126
    %v1551 = vunpack.c.1.s8 %v1127
    %v1552 = vunpack.c.1.s8 %v1128
    %v1553 = vunpack.c.1.s8 %v1129
    %v1554 = vunpack.c.2.s8 %v1122
    %v1555 = vunpack.c.2.s8 %v1123
    %v1556 = vunpack.c.2.s8 %v1124
    %v1557 = vunpack.c.2.s8 %v1125
    %v1558 = vunpack.c.2.s8 %v1126
    %v1559 = vunpack.c.2.s8 %v1127
    %v1560 = vunpack.c.2.s8 %v1128
    %v1561 = vunpack.c.2.s8 %v1129
    %v1562 = vunpack.c.3.s8 %v1122
    %v1563 = vunpack.c.3.s8 %v1123
    %v1564 = vunpack.c.3.s8 %v1124
    %v1565 = vunpack.c.3.s8 %v1125
    %v1566 = vunpack.c.3.s8 %v1126
    %v1567 = vunpack.c.3.s8 %v1127
    %v1568 = vunpack.c.3.s8 %v1128
    %v1569 = vunpack.c.3.s8 %v1129
    %v1570 = vunpack.c.0.s8 %v1130
    %v1571 = vunpack.c.0.s8 %v1131
    %v1572 = vunpack.c.0.s8 %v1132
    %v1573 = vunpack.c.0.s8 %v1133
    %v1574 = vunpack.c.0.s8 %v1134
    %v1575 = vunpack.c.0.s8 %v1135
    %v1576 = vunpack.c.0.s8 %v1136
    %v1577 = vunpack.c.0.s8 %v1137
    %v1578 = vunpack.c.1.s8 %v1130
    %v1579 = vunpack.c.1.s8 %v1131
    %v1580 = vunpack.c.1.s8 %v1132
    %v1581 = vunpack.c.1.s8 %v1133
    %v1582 = vunpack.c.1.s8 %v1134
    %v1583 = vunpack.c.1.s8 %v1135
    %v1584 = vunpack.c.1.s8 %v1136
    %v1585 = vunpack.c.1.s8 %v1137
    %v1586 = vunpack.c.2.s8 %v1130
    %v1587 = vunpack.c.2.s8 %v1131
    %v1588 = vunpack.c.2.s8 %v1132
    %v1589 = vunpack.c.2.s8 %v1133
    %v1590 = vunpack.c.2.s8 %v1134
    %v1591 = vunpack.c.2.s8 %v1135
    %v1592 = vunpack.c.2.s8 %v1136
    %v1593 = vunpack.c.2.s8 %v1137
    %v1594 = vunpack.c.3.s8 %v1130
    %v1595 = vunpack.c.3.s8 %v1131
    %v1596 = vunpack.c.3.s8 %v1132
    %v1597 = vunpack.c.3.s8 %v1133
    %v1598 = vunpack.c.3.s8 %v1134
    %v1599 = vunpack.c.3.s8 %v1135
    %v1600 = vunpack.c.3.s8 %v1136
    %v1601 = vunpack.c.3.s8 %v1137
    %v1602 = vunpack.c.0.s8 %v1138
    %v1603 = vunpack.c.0.s8 %v1139
    %v1604 = vunpack.c.0.s8 %v1140
    %v1605 = vunpack.c.0.s8 %v1141
    %v1606 = vunpack.c.0.s8 %v1142
    %v1607 = vunpack.c.0.s8 %v1143
    %v1608 = vunpack.c.0.s8 %v1144
    %v1609 = vunpack.c.0.s8 %v1145
    %v1610 = vunpack.c.1.s8 %v1138
    %v1611 = vunpack.c.1.s8 %v1139
    %v1612 = vunpack.c.1.s8 %v1140
    %v1613 = vunpack.c.1.s8 %v1141
    %v1614 = vunpack.c.1.s8 %v1142
    %v1615 = vunpack.c.1.s8 %v1143
    %v1616 = vunpack.c.1.s8 %v1144
    %v1617 = vunpack.c.1.s8 %v1145
    %v1618 = vunpack.c.2.s8 %v1138
    %v1619 = vunpack.c.2.s8 %v1139
    %v1620 = vunpack.c.2.s8 %v1140
    %v1621 = vunpack.c.2.s8 %v1141
    %v1622 = vunpack.c.2.s8 %v1142
    %v1623 = vunpack.c.2.s8 %v1143
    %v1624 = vunpack.c.2.s8 %v1144
    %v1625 = vunpack.c.2.s8 %v1145
    %v1626 = vunpack.c.3.s8 %v1138
    %v1627 = vunpack.c.3.s8 %v1139
    %v1628 = vunpack.c.3.s8 %v1140
    %v1629 = vunpack.c.3.s8 %v1141
    %v1630 = vunpack.c.3.s8 %v1142
    %v1631 = vunpack.c.3.s8 %v1143
    %v1632 = vunpack.c.3.s8 %v1144
    %v1633 = vunpack.c.3.s8 %v1145
    %v1634 = vunpack.c.0.s8 %v1146
    %v1635 = vunpack.c.0.s8 %v1147
    %v1636 = vunpack.c.0.s8 %v1148
    %v1637 = vunpack.c.0.s8 %v1149
    %v1638 = vunpack.c.0.s8 %v1150
    %v1639 = vunpack.c.0.s8 %v1151
    %v1640 = vunpack.c.0.s8 %v1152
    %v1641 = vunpack.c.0.s8 %v1153
    %v1642 = vunpack.c.1.s8 %v1146
    %v1643 = vunpack.c.1.s8 %v1147
    %v1644 = vunpack.c.1.s8 %v1148
    %v1645 = vunpack.c.1.s8 %v1149
    %v1646 = vunpack.c.1.s8 %v1150
    %v1647 = vunpack.c.1.s8 %v1151
    %v1648 = vunpack.c.1.s8 %v1152
    %v1649 = vunpack.c.1.s8 %v1153
    %v1650 = vunpack.c.2.s8 %v1146
    %v1651 = vunpack.c.2.s8 %v1147
    %v1652 = vunpack.c.2.s8 %v1148
    %v1653 = vunpack.c.2.s8 %v1149
    %v1654 = vunpack.c.2.s8 %v1150
    %v1655 = vunpack.c.2.s8 %v1151
    %v1656 = vunpack.c.2.s8 %v1152
    %v1657 = vunpack.c.2.s8 %v1153
    %v1658 = vunpack.c.3.s8 %v1146
    %v1659 = vunpack.c.3.s8 %v1147
    %v1660 = vunpack.c.3.s8 %v1148
    %v1661 = vunpack.c.3.s8 %v1149
    %v1662 = vunpack.c.3.s8 %v1150
    %v1663 = vunpack.c.3.s8 %v1151
    %v1664 = vunpack.c.3.s8 %v1152
    %v1665 = vunpack.c.3.s8 %v1153
    %v1666 = vcvt.s32.f32 %v1154
    %v1667 = vcvt.s32.f32 %v1155
    %v1668 = vcvt.s32.f32 %v1156
    %v1669 = vcvt.s32.f32 %v1157
    %v1670 = vcvt.s32.f32 %v1158
    %v1671 = vcvt.s32.f32 %v1159
    %v1672 = vcvt.s32.f32 %v1160
    %v1673 = vcvt.s32.f32 %v1161
    %v1674 = vcvt.s32.f32 %v1162
    %v1675 = vcvt.s32.f32 %v1163
    %v1676 = vcvt.s32.f32 %v1164
    %v1677 = vcvt.s32.f32 %v1165
    %v1678 = vcvt.s32.f32 %v1166
    %v1679 = vcvt.s32.f32 %v1167
    %v1680 = vcvt.s32.f32 %v1168
    %v1681 = vcvt.s32.f32 %v1169
    %v1682 = vcvt.s32.f32 %v1170
    %v1683 = vcvt.s32.f32 %v1171
    %v1684 = vcvt.s32.f32 %v1172
    %v1685 = vcvt.s32.f32 %v1173
    %v1686 = vcvt.s32.f32 %v1174
    %v1687 = vcvt.s32.f32 %v1175
    %v1688 = vcvt.s32.f32 %v1176
    %v1689 = vcvt.s32.f32 %v1177
    %v1690 = vcvt.s32.f32 %v1178
    %v1691 = vcvt.s32.f32 %v1179
    %v1692 = vcvt.s32.f32 %v1180
    %v1693 = vcvt.s32.f32 %v1181
    %v1694 = vcvt.s32.f32 %v1182
    %v1695 = vcvt.s32.f32 %v1183
    %v1696 = vcvt.s32.f32 %v1184
    %v1697 = vcvt.s32.f32 %v1185
    %v1698 = vcvt.s32.f32 %v1186
    %v1699 = vcvt.s32.f32 %v1187
    %v1700 = vcvt.s32.f32 %v1188
    %v1701 = vcvt.s32.f32 %v1189
    %v1702 = vcvt.s32.f32 %v1190
    %v1703 = vcvt.s32.f32 %v1191
    %v1704 = vcvt.s32.f32 %v1192
    %v1705 = vcvt.s32.f32 %v1193
    %v1706 = vcvt.s32.f32 %v1194
    %v1707 = vcvt.s32.f32 %v1195
    %v1708 = vcvt.s32.f32 %v1196
    %v1709 = vcvt.s32.f32 %v1197
    %v1710 = vcvt.s32.f32 %v1198
    %v1711 = vcvt.s32.f32 %v1199
    %v1712 = vcvt.s32.f32 %v1200
    %v1713 = vcvt.s32.f32 %v1201
    %v1714 = vcvt.s32.f32 %v1202
    %v1715 = vcvt.s32.f32 %v1203
    %v1716 = vcvt.s32.f32 %v1204
    %v1717 = vcvt.s32.f32 %v1205
    %v1718 = vcvt.s32.f32 %v1206
    %v1719 = vcvt.s32.f32 %v1207
    %v1720 = vcvt.s32.f32 %v1208
    %v1721 = vcvt.s32.f32 %v1209
    %v1722 = vcvt.s32.f32 %v1210
    %v1723 = vcvt.s32.f32 %v1211
    %v1724 = vcvt.s32.f32 %v1212
    %v1725 = vcvt.s32.f32 %v1213
    %v1726 = vcvt.s32.f32 %v1214
    %v1727 = vcvt.s32.f32 %v1215
    %v1728 = vcvt.s32.f32 %v1216
    %v1729 = vcvt.s32.f32 %v1217
    %v1730 = vcvt.s32.f32 %v1218
    %v1731 = vcvt.s32.f32 %v1219
    %v1732 = vcvt.s32.f32 %v1220
    %v1733 = vcvt.s32.f32 %v1221
    %v1734 = vcvt.s32.f32 %v1222
    %v1735 = vcvt.s32.f32 %v1223
    %v1736 = vcvt.s32.f32 %v1224
    %v1737 = vcvt.s32.f32 %v1225
    %v1738 = vcvt.s32.f32 %v1226
    %v1739 = vcvt.s32.f32 %v1227
    %v1740 = vcvt.s32.f32 %v1228
    %v1741 = vcvt.s32.f32 %v1229
    %v1742 = vcvt.s32.f32 %v1230
    %v1743 = vcvt.s32.f32 %v1231
    %v1744 = vcvt.s32.f32 %v1232
    %v1745 = vcvt.s32.f32 %v1233
    %v1746 = vcvt.s32.f32 %v1234
    %v1747 = vcvt.s32.f32 %v1235
    %v1748 = vcvt.s32.f32 %v1236
    %v1749 = vcvt.s32.f32 %v1237
    %v1750 = vcvt.s32.f32 %v1238
    %v1751 = vcvt.s32.f32 %v1239
    %v1752 = vcvt.s32.f32 %v1240
    %v1753 = vcvt.s32.f32 %v1241
    %v1754 = vcvt.s32.f32 %v1242
    %v1755 = vcvt.s32.f32 %v1243
    %v1756 = vcvt.s32.f32 %v1244
    %v1757 = vcvt.s32.f32 %v1245
    %v1758 = vcvt.s32.f32 %v1246
    %v1759 = vcvt.s32.f32 %v1247
    %v1760 = vcvt.s32.f32 %v1248
    %v1761 = vcvt.s32.f32 %v1249
    %v1762 = vcvt.s32.f32 %v1250
    %v1763 = vcvt.s32.f32 %v1251
    %v1764 = vcvt.s32.f32 %v1252
    %v1765 = vcvt.s32.f32 %v1253
    %v1766 = vcvt.s32.f32 %v1254
    %v1767 = vcvt.s32.f32 %v1255
    %v1768 = vcvt.s32.f32 %v1256
    %v1769 = vcvt.s32.f32 %v1257
    %v1770 = vcvt.s32.f32 %v1258
    %v1771 = vcvt.s32.f32 %v1259
    %v1772 = vcvt.s32.f32 %v1260
    %v1773 = vcvt.s32.f32 %v1261
    %v1774 = vcvt.s32.f32 %v1262
    %v1775 = vcvt.s32.f32 %v1263
    %v1776 = vcvt.s32.f32 %v1264
    %v1777 = vcvt.s32.f32 %v1265
    %v1778 = vcvt.s32.f32 %v1266
    %v1779 = vcvt.s32.f32 %v1267
    %v1780 = vcvt.s32.f32 %v1268
    %v1781 = vcvt.s32.f32 %v1269
    %v1782 = vcvt.s32.f32 %v1270
    %v1783 = vcvt.s32.f32 %v1271
    %v1784 = vcvt.s32.f32 %v1272
    %v1785 = vcvt.s32.f32 %v1273
    %v1786 = vcvt.s32.f32 %v1274
    %v1787 = vcvt.s32.f32 %v1275
    %v1788 = vcvt.s32.f32 %v1276
    %v1789 = vcvt.s32.f32 %v1277
    %v1790 = vcvt.s32.f32 %v1278
    %v1791 = vcvt.s32.f32 %v1279
    %v1792 = vcvt.s32.f32 %v1280
    %v1793 = vcvt.s32.f32 %v1281
    %v1794 = vcvt.s32.f32 %v1282
    %v1795 = vcvt.s32.f32 %v1283
    %v1796 = vcvt.s32.f32 %v1284
    %v1797 = vcvt.s32.f32 %v1285
    %v1798 = vcvt.s32.f32 %v1286
    %v1799 = vcvt.s32.f32 %v1287
    %v1800 = vcvt.s32.f32 %v1288
    %v1801 = vcvt.s32.f32 %v1289
    %v1802 = vcvt.s32.f32 %v1290
    %v1803 = vcvt.s32.f32 %v1291
    %v1804 = vcvt.s32.f32 %v1292
    %v1805 = vcvt.s32.f32 %v1293
    %v1806 = vcvt.s32.f32 %v1294
    %v1807 = vcvt.s32.f32 %v1295
    %v1808 = vcvt.s32.f32 %v1296
    %v1809 = vcvt.s32.f32 %v1297
    %v1810 = vcvt.s32.f32 %v1298
    %v1811 = vcvt.s32.f32 %v1299
    %v1812 = vcvt.s32.f32 %v1300
    %v1813 = vcvt.s32.f32 %v1301
    %v1814 = vcvt.s32.f32 %v1302
    %v1815 = vcvt.s32.f32 %v1303
    %v1816 = vcvt.s32.f32 %v1304
    %v1817 = vcvt.s32.f32 %v1305
    %v1818 = vcvt.s32.f32 %v1306
    %v1819 = vcvt.s32.f32 %v1307
    %v1820 = vcvt.s32.f32 %v1308
    %v1821 = vcvt.s32.f32 %v1309
    %v1822 = vcvt.s32.f32 %v1310
    %v1823 = vcvt.s32.f32 %v1311
    %v1824 = vcvt.s32.f32 %v1312
    %v1825 = vcvt.s32.f32 %v1313
    %v1826 = vcvt.s32.f32 %v1314
    %v1827 = vcvt.s32.f32 %v1315
    %v1828 = vcvt.s32.f32 %v1316
    %v1829 = vcvt.s32.f32 %v1317
    %v1830 = vcvt.s32.f32 %v1318
    %v1831 = vcvt.s32.f32 %v1319
    %v1832 = vcvt.s32.f32 %v1320
    %v1833 = vcvt.s32.f32 %v1321
    %v1834 = vcvt.s32.f32 %v1322
    %v1835 = vcvt.s32.f32 %v1323
    %v1836 = vcvt.s32.f32 %v1324
    %v1837 = vcvt.s32.f32 %v1325
    %v1838 = vcvt.s32.f32 %v1326
    %v1839 = vcvt.s32.f32 %v1327
    %v1840 = vcvt.s32.f32 %v1328
    %v1841 = vcvt.s32.f32 %v1329
    %v1842 = vcvt.s32.f32 %v1330
    %v1843 = vcvt.s32.f32 %v1331
    %v1844 = vcvt.s32.f32 %v1332
    %v1845 = vcvt.s32.f32 %v1333
    %v1846 = vcvt.s32.f32 %v1334
    %v1847 = vcvt.s32.f32 %v1335
    %v1848 = vcvt.s32.f32 %v1336
    %v1849 = vcvt.s32.f32 %v1337
    %v1850 = vcvt.s32.f32 %v1338
    %v1851 = vcvt.s32.f32 %v1339
    %v1852 = vcvt.s32.f32 %v1340
    %v1853 = vcvt.s32.f32 %v1341
    %v1854 = vcvt.s32.f32 %v1342
    %v1855 = vcvt.s32.f32 %v1343
    %v1856 = vcvt.s32.f32 %v1344
    %v1857 = vcvt.s32.f32 %v1345
    %v1858 = vcvt.s32.f32 %v1346
    %v1859 = vcvt.s32.f32 %v1347
    %v1860 = vcvt.s32.f32 %v1348
    %v1861 = vcvt.s32.f32 %v1349
    %v1862 = vcvt.s32.f32 %v1350
    %v1863 = vcvt.s32.f32 %v1351
    %v1864 = vcvt.s32.f32 %v1352
    %v1865 = vcvt.s32.f32 %v1353
    %v1866 = vcvt.s32.f32 %v1354
    %v1867 = vcvt.s32.f32 %v1355
    %v1868 = vcvt.s32.f32 %v1356
    %v1869 = vcvt.s32.f32 %v1357
    %v1870 = vcvt.s32.f32 %v1358
    %v1871 = vcvt.s32.f32 %v1359
    %v1872 = vcvt.s32.f32 %v1360
    %v1873 = vcvt.s32.f32 %v1361
    %v1874 = vcvt.s32.f32 %v1362
    %v1875 = vcvt.s32.f32 %v1363
    %v1876 = vcvt.s32.f32 %v1364
    %v1877 = vcvt.s32.f32 %v1365
    %v1878 = vcvt.s32.f32 %v1366
    %v1879 = vcvt.s32.f32 %v1367
    %v1880 = vcvt.s32.f32 %v1368
    %v1881 = vcvt.s32.f32 %v1369
    %v1882 = vcvt.s32.f32 %v1370
    %v1883 = vcvt.s32.f32 %v1371
    %v1884 = vcvt.s32.f32 %v1372
    %v1885 = vcvt.s32.f32 %v1373
    %v1886 = vcvt.s32.f32 %v1374
    %v1887 = vcvt.s32.f32 %v1375
    %v1888 = vcvt.s32.f32 %v1376
    %v1889 = vcvt.s32.f32 %v1377
    %v1890 = vcvt.s32.f32 %v1378
    %v1891 = vcvt.s32.f32 %v1379
    %v1892 = vcvt.s32.f32 %v1380
    %v1893 = vcvt.s32.f32 %v1381
    %v1894 = vcvt.s32.f32 %v1382
    %v1895 = vcvt.s32.f32 %v1383
    %v1896 = vcvt.s32.f32 %v1384
    %v1897 = vcvt.s32.f32 %v1385
    %v1898 = vcvt.s32.f32 %v1386
    %v1899 = vcvt.s32.f32 %v1387
    %v1900 = vcvt.s32.f32 %v1388
    %v1901 = vcvt.s32.f32 %v1389
    %v1902 = vcvt.s32.f32 %v1390
    %v1903 = vcvt.s32.f32 %v1391
    %v1904 = vcvt.s32.f32 %v1392
    %v1905 = vcvt.s32.f32 %v1393
    %v1906 = vcvt.s32.f32 %v1394
    %v1907 = vcvt.s32.f32 %v1395
    %v1908 = vcvt.s32.f32 %v1396
    %v1909 = vcvt.s32.f32 %v1397
    %v1910 = vcvt.s32.f32 %v1398
    %v1911 = vcvt.s32.f32 %v1399
    %v1912 = vcvt.s32.f32 %v1400
    %v1913 = vcvt.s32.f32 %v1401
    %v1914 = vcvt.s32.f32 %v1402
    %v1915 = vcvt.s32.f32 %v1403
    %v1916 = vcvt.s32.f32 %v1404
    %v1917 = vcvt.s32.f32 %v1405
    %v1918 = vcvt.s32.f32 %v1406
    %v1919 = vcvt.s32.f32 %v1407
    %v1920 = vcvt.s32.f32 %v1408
    %v1921 = vcvt.s32.f32 %v1409
    %v1922 = vcvt.s32.f32 %v1410
    %v1923 = vcvt.s32.f32 %v1411
    %v1924 = vcvt.s32.f32 %v1412
    %v1925 = vcvt.s32.f32 %v1413
    %v1926 = vcvt.s32.f32 %v1414
    %v1927 = vcvt.s32.f32 %v1415
    %v1928 = vcvt.s32.f32 %v1416
    %v1929 = vcvt.s32.f32 %v1417
    %v1930 = vcvt.s32.f32 %v1418
    %v1931 = vcvt.s32.f32 %v1419
    %v1932 = vcvt.s32.f32 %v1420
    %v1933 = vcvt.s32.f32 %v1421
    %v1934 = vcvt.s32.f32 %v1422
    %v1935 = vcvt.s32.f32 %v1423
    %v1936 = vcvt.s32.f32 %v1424
    %v1937 = vcvt.s32.f32 %v1425
    %v1938 = vcvt.s32.f32 %v1426
    %v1939 = vcvt.s32.f32 %v1427
    %v1940 = vcvt.s32.f32 %v1428
    %v1941 = vcvt.s32.f32 %v1429
    %v1942 = vcvt.s32.f32 %v1430
    %v1943 = vcvt.s32.f32 %v1431
    %v1944 = vcvt.s32.f32 %v1432
    %v1945 = vcvt.s32.f32 %v1433
    %v1946 = vcvt.s32.f32 %v1434
    %v1947 = vcvt.s32.f32 %v1435
    %v1948 = vcvt.s32.f32 %v1436
    %v1949 = vcvt.s32.f32 %v1437
    %v1950 = vcvt.s32.f32 %v1438
    %v1951 = vcvt.s32.f32 %v1439
    %v1952 = vcvt.s32.f32 %v1440
    %v1953 = vcvt.s32.f32 %v1441
    %v1954 = vcvt.s32.f32 %v1442
    %v1955 = vcvt.s32.f32 %v1443
    %v1956 = vcvt.s32.f32 %v1444
    %v1957 = vcvt.s32.f32 %v1445
    %v1958 = vcvt.s32.f32 %v1446
    %v1959 = vcvt.s32.f32 %v1447
    %v1960 = vcvt.s32.f32 %v1448
    %v1961 = vcvt.s32.f32 %v1449
    %v1962 = vcvt.s32.f32 %v1450
    %v1963 = vcvt.s32.f32 %v1451
    %v1964 = vcvt.s32.f32 %v1452
    %v1965 = vcvt.s32.f32 %v1453
    %v1966 = vcvt.s32.f32 %v1454
    %v1967 = vcvt.s32.f32 %v1455
    %v1968 = vcvt.s32.f32 %v1456
    %v1969 = vcvt.s32.f32 %v1457
    %v1970 = vcvt.s32.f32 %v1458
    %v1971 = vcvt.s32.f32 %v1459
    %v1972 = vcvt.s32.f32 %v1460
    %v1973 = vcvt.s32.f32 %v1461
    %v1974 = vcvt.s32.f32 %v1462
    %v1975 = vcvt.s32.f32 %v1463
    %v1976 = vcvt.s32.f32 %v1464
    %v1977 = vcvt.s32.f32 %v1465
    %v1978 = vcvt.s32.f32 %v1466
    %v1979 = vcvt.s32.f32 %v1467
    %v1980 = vcvt.s32.f32 %v1468
    %v1981 = vcvt.s32.f32 %v1469
    %v1982 = vcvt.s32.f32 %v1470
    %v1983 = vcvt.s32.f32 %v1471
    %v1984 = vcvt.s32.f32 %v1472
    %v1985 = vcvt.s32.f32 %v1473
    %v1986 = vcvt.s32.f32 %v1474
    %v1987 = vcvt.s32.f32 %v1475
    %v1988 = vcvt.s32.f32 %v1476
    %v1989 = vcvt.s32.f32 %v1477
    %v1990 = vcvt.s32.f32 %v1478
    %v1991 = vcvt.s32.f32 %v1479
    %v1992 = vcvt.s32.f32 %v1480
    %v1993 = vcvt.s32.f32 %v1481
    %v1994 = vcvt.s32.f32 %v1482
    %v1995 = vcvt.s32.f32 %v1483
    %v1996 = vcvt.s32.f32 %v1484
    %v1997 = vcvt.s32.f32 %v1485
    %v1998 = vcvt.s32.f32 %v1486
    %v1999 = vcvt.s32.f32 %v1487
    %v2000 = vcvt.s32.f32 %v1488
    %v2001 = vcvt.s32.f32 %v1489
    %v2002 = vcvt.s32.f32 %v1490
    %v2003 = vcvt.s32.f32 %v1491
    %v2004 = vcvt.s32.f32 %v1492
    %v2005 = vcvt.s32.f32 %v1493
    %v2006 = vcvt.s32.f32 %v1494
    %v2007 = vcvt.s32.f32 %v1495
    %v2008 = vcvt.s32.f32 %v1496
    %v2009 = vcvt.s32.f32 %v1497
    %v2010 = vcvt.s32.f32 %v1498
    %v2011 = vcvt.s32.f32 %v1499
    %v2012 = vcvt.s32.f32 %v1500
    %v2013 = vcvt.s32.f32 %v1501
    %v2014 = vcvt.s32.f32 %v1502
    %v2015 = vcvt.s32.f32 %v1503
    %v2016 = vcvt.s32.f32 %v1504
    %v2017 = vcvt.s32.f32 %v1505
    %v2018 = vcvt.s32.f32 %v1506
    %v2019 = vcvt.s32.f32 %v1507
    %v2020 = vcvt.s32.f32 %v1508
    %v2021 = vcvt.s32.f32 %v1509
    %v2022 = vcvt.s32.f32 %v1510
    %v2023 = vcvt.s32.f32 %v1511
    %v2024 = vcvt.s32.f32 %v1512
    %v2025 = vcvt.s32.f32 %v1513
    %v2026 = vcvt.s32.f32 %v1514
    %v2027 = vcvt.s32.f32 %v1515
    %v2028 = vcvt.s32.f32 %v1516
    %v2029 = vcvt.s32.f32 %v1517
    %v2030 = vcvt.s32.f32 %v1518
    %v2031 = vcvt.s32.f32 %v1519
    %v2032 = vcvt.s32.f32 %v1520
    %v2033 = vcvt.s32.f32 %v1521
    %v2034 = vcvt.s32.f32 %v1522
    %v2035 = vcvt.s32.f32 %v1523
    %v2036 = vcvt.s32.f32 %v1524
    %v2037 = vcvt.s32.f32 %v1525
    %v2038 = vcvt.s32.f32 %v1526
    %v2039 = vcvt.s32.f32 %v1527
    %v2040 = vcvt.s32.f32 %v1528
    %v2041 = vcvt.s32.f32 %v1529
    %v2042 = vcvt.s32.f32 %v1530
    %v2043 = vcvt.s32.f32 %v1531
    %v2044 = vcvt.s32.f32 %v1532
    %v2045 = vcvt.s32.f32 %v1533
    %v2046 = vcvt.s32.f32 %v1534
    %v2047 = vcvt.s32.f32 %v1535
    %v2048 = vcvt.s32.f32 %v1536
    %v2049 = vcvt.s32.f32 %v1537
    %v2050 = vcvt.s32.f32 %v1538
    %v2051 = vcvt.s32.f32 %v1539
    %v2052 = vcvt.s32.f32 %v1540
    %v2053 = vcvt.s32.f32 %v1541
    %v2054 = vcvt.s32.f32 %v1542
    %v2055 = vcvt.s32.f32 %v1543
    %v2056 = vcvt.s32.f32 %v1544
    %v2057 = vcvt.s32.f32 %v1545
    %v2058 = vcvt.s32.f32 %v1546
    %v2059 = vcvt.s32.f32 %v1547
    %v2060 = vcvt.s32.f32 %v1548
    %v2061 = vcvt.s32.f32 %v1549
    %v2062 = vcvt.s32.f32 %v1550
    %v2063 = vcvt.s32.f32 %v1551
    %v2064 = vcvt.s32.f32 %v1552
    %v2065 = vcvt.s32.f32 %v1553
    %v2066 = vcvt.s32.f32 %v1554
    %v2067 = vcvt.s32.f32 %v1555
    %v2068 = vcvt.s32.f32 %v1556
    %v2069 = vcvt.s32.f32 %v1557
    %v2070 = vcvt.s32.f32 %v1558
    %v2071 = vcvt.s32.f32 %v1559
    %v2072 = vcvt.s32.f32 %v1560
    %v2073 = vcvt.s32.f32 %v1561
    %v2074 = vcvt.s32.f32 %v1562
    %v2075 = vcvt.s32.f32 %v1563
    %v2076 = vcvt.s32.f32 %v1564
    %v2077 = vcvt.s32.f32 %v1565
    %v2078 = vcvt.s32.f32 %v1566
    %v2079 = vcvt.s32.f32 %v1567
    %v2080 = vcvt.s32.f32 %v1568
    %v2081 = vcvt.s32.f32 %v1569
    %v2082 = vcvt.s32.f32 %v1570
    %v2083 = vcvt.s32.f32 %v1571
    %v2084 = vcvt.s32.f32 %v1572
    %v2085 = vcvt.s32.f32 %v1573
    %v2086 = vcvt.s32.f32 %v1574
    %v2087 = vcvt.s32.f32 %v1575
    %v2088 = vcvt.s32.f32 %v1576
    %v2089 = vcvt.s32.f32 %v1577
    %v2090 = vcvt.s32.f32 %v1578
    %v2091 = vcvt.s32.f32 %v1579
    %v2092 = vcvt.s32.f32 %v1580
    %v2093 = vcvt.s32.f32 %v1581
    %v2094 = vcvt.s32.f32 %v1582
    %v2095 = vcvt.s32.f32 %v1583
    %v2096 = vcvt.s32.f32 %v1584
    %v2097 = vcvt.s32.f32 %v1585
    %v2098 = vcvt.s32.f32 %v1586
    %v2099 = vcvt.s32.f32 %v1587
    %v2100 = vcvt.s32.f32 %v1588
    %v2101 = vcvt.s32.f32 %v1589
    %v2102 = vcvt.s32.f32 %v1590
    %v2103 = vcvt.s32.f32 %v1591
    %v2104 = vcvt.s32.f32 %v1592
    %v2105 = vcvt.s32.f32 %v1593
    %v2106 = vcvt.s32.f32 %v1594
    %v2107 = vcvt.s32.f32 %v1595
    %v2108 = vcvt.s32.f32 %v1596
    %v2109 = vcvt.s32.f32 %v1597
    %v2110 = vcvt.s32.f32 %v1598
    %v2111 = vcvt.s32.f32 %v1599
    %v2112 = vcvt.s32.f32 %v1600
    %v2113 = vcvt.s32.f32 %v1601
    %v2114 = vcvt.s32.f32 %v1602
    %v2115 = vcvt.s32.f32 %v1603
    %v2116 = vcvt.s32.f32 %v1604
    %v2117 = vcvt.s32.f32 %v1605
    %v2118 = vcvt.s32.f32 %v1606
    %v2119 = vcvt.s32.f32 %v1607
    %v2120 = vcvt.s32.f32 %v1608
    %v2121 = vcvt.s32.f32 %v1609
    %v2122 = vcvt.s32.f32 %v1610
    %v2123 = vcvt.s32.f32 %v1611
    %v2124 = vcvt.s32.f32 %v1612
    %v2125 = vcvt.s32.f32 %v1613
    %v2126 = vcvt.s32.f32 %v1614
    %v2127 = vcvt.s32.f32 %v1615
    %v2128 = vcvt.s32.f32 %v1616
    %v2129 = vcvt.s32.f32 %v1617
    %v2130 = vcvt.s32.f32 %v1618
    %v2131 = vcvt.s32.f32 %v1619
    %v2132 = vcvt.s32.f32 %v1620
    %v2133 = vcvt.s32.f32 %v1621
    %v2134 = vcvt.s32.f32 %v1622
    %v2135 = vcvt.s32.f32 %v1623
    %v2136 = vcvt.s32.f32 %v1624
    %v2137 = vcvt.s32.f32 %v1625
    %v2138 = vcvt.s32.f32 %v1626
    %v2139 = vcvt.s32.f32 %v1627
    %v2140 = vcvt.s32.f32 %v1628
    %v2141 = vcvt.s32.f32 %v1629
    %v2142 = vcvt.s32.f32 %v1630
    %v2143 = vcvt.s32.f32 %v1631
    %v2144 = vcvt.s32.f32 %v1632
    %v2145 = vcvt.s32.f32 %v1633
    %v2146 = vcvt.s32.f32 %v1634
    %v2147 = vcvt.s32.f32 %v1635
    %v2148 = vcvt.s32.f32 %v1636
    %v2149 = vcvt.s32.f32 %v1637
    %v2150 = vcvt.s32.f32 %v1638
    %v2151 = vcvt.s32.f32 %v1639
    %v2152 = vcvt.s32.f32 %v1640
    %v2153 = vcvt.s32.f32 %v1641
    %v2154 = vcvt.s32.f32 %v1642
    %v2155 = vcvt.s32.f32 %v1643
    %v2156 = vcvt.s32.f32 %v1644
    %v2157 = vcvt.s32.f32 %v1645
    %v2158 = vcvt.s32.f32 %v1646
    %v2159 = vcvt.s32.f32 %v1647
    %v2160 = vcvt.s32.f32 %v1648
    %v2161 = vcvt.s32.f32 %v1649
    %v2162 = vcvt.s32.f32 %v1650
    %v2163 = vcvt.s32.f32 %v1651
    %v2164 = vcvt.s32.f32 %v1652
    %v2165 = vcvt.s32.f32 %v1653
    %v2166 = vcvt.s32.f32 %v1654
    %v2167 = vcvt.s32.f32 %v1655
    %v2168 = vcvt.s32.f32 %v1656
    %v2169 = vcvt.s32.f32 %v1657
    %v2170 = vcvt.s32.f32 %v1658
    %v2171 = vcvt.s32.f32 %v1659
    %v2172 = vcvt.s32.f32 %v1660
    %v2173 = vcvt.s32.f32 %v1661
    %v2174 = vcvt.s32.f32 %v1662
    %v2175 = vcvt.s32.f32 %v1663
    %v2176 = vcvt.s32.f32 %v1664
    %v2177 = vcvt.s32.f32 %v1665
    %v2178 = vpack.c.bf16 %v1674, %v1666
    %v2179 = vpack.c.bf16 %v1675, %v1667
    %v2180 = vpack.c.bf16 %v1676, %v1668
    %v2181 = vpack.c.bf16 %v1677, %v1669
    %v2182 = vpack.c.bf16 %v1678, %v1670
    %v2183 = vpack.c.bf16 %v1679, %v1671
    %v2184 = vpack.c.bf16 %v1680, %v1672
    %v2185 = vpack.c.bf16 %v1681, %v1673
    %v2186 = vpack.c.bf16 %v1690, %v1682
    %v2187 = vpack.c.bf16 %v1691, %v1683
    %v2188 = vpack.c.bf16 %v1692, %v1684
    %v2189 = vpack.c.bf16 %v1693, %v1685
    %v2190 = vpack.c.bf16 %v1694, %v1686
    %v2191 = vpack.c.bf16 %v1695, %v1687
    %v2192 = vpack.c.bf16 %v1696, %v1688
    %v2193 = vpack.c.bf16 %v1697, %v1689
    %v2194 = vpack.c.bf16 %v1706, %v1698
    %v2195 = vpack.c.bf16 %v1707, %v1699
    %v2196 = vpack.c.bf16 %v1708, %v1700
    %v2197 = vpack.c.bf16 %v1709, %v1701
    %v2198 = vpack.c.bf16 %v1710, %v1702
    %v2199 = vpack.c.bf16 %v1711, %v1703
    %v2200 = vpack.c.bf16 %v1712, %v1704
    %v2201 = vpack.c.bf16 %v1713, %v1705
    %v2202 = vpack.c.bf16 %v1722, %v1714
    %v2203 = vpack.c.bf16 %v1723, %v1715
    %v2204 = vpack.c.bf16 %v1724, %v1716
    %v2205 = vpack.c.bf16 %v1725, %v1717
    %v2206 = vpack.c.bf16 %v1726, %v1718
    %v2207 = vpack.c.bf16 %v1727, %v1719
    %v2208 = vpack.c.bf16 %v1728, %v1720
    %v2209 = vpack.c.bf16 %v1729, %v1721
    %v2210 = vpack.c.bf16 %v1738, %v1730
    %v2211 = vpack.c.bf16 %v1739, %v1731
    %v2212 = vpack.c.bf16 %v1740, %v1732
    %v2213 = vpack.c.bf16 %v1741, %v1733
    %v2214 = vpack.c.bf16 %v1742, %v1734
    %v2215 = vpack.c.bf16 %v1743, %v1735
    %v2216 = vpack.c.bf16 %v1744, %v1736
    %v2217 = vpack.c.bf16 %v1745, %v1737
    %v2218 = vpack.c.bf16 %v1754, %v1746
    %v2219 = vpack.c.bf16 %v1755, %v1747
    %v2220 = vpack.c.bf16 %v1756, %v1748
    %v2221 = vpack.c.bf16 %v1757, %v1749
    %v2222 = vpack.c.bf16 %v1758, %v1750
    %v2223 = vpack.c.bf16 %v1759, %v1751
    %v2224 = vpack.c.bf16 %v1760, %v1752
    %v2225 = vpack.c.bf16 %v1761, %v1753
    %v2226 = vpack.c.bf16 %v1770, %v1762
    %v2227 = vpack.c.bf16 %v1771, %v1763
    %v2228 = vpack.c.bf16 %v1772, %v1764
    %v2229 = vpack.c.bf16 %v1773, %v1765
    %v2230 = vpack.c.bf16 %v1774, %v1766
    %v2231 = vpack.c.bf16 %v1775, %v1767
    %v2232 = vpack.c.bf16 %v1776, %v1768
    %v2233 = vpack.c.bf16 %v1777, %v1769
    %v2234 = vpack.c.bf16 %v1786, %v1778
    %v2235 = vpack.c.bf16 %v1787, %v1779
    %v2236 = vpack.c.bf16 %v1788, %v1780
    %v2237 = vpack.c.bf16 %v1789, %v1781
    %v2238 = vpack.c.bf16 %v1790, %v1782
    %v2239 = vpack.c.bf16 %v1791, %v1783
    %v2240 = vpack.c.bf16 %v1792, %v1784
    %v2241 = vpack.c.bf16 %v1793, %v1785
    %v2242 = vpack.c.bf16 %v1802, %v1794
    %v2243 = vpack.c.bf16 %v1803, %v1795
    %v2244 = vpack.c.bf16 %v1804, %v1796
    %v2245 = vpack.c.bf16 %v1805, %v1797
    %v2246 = vpack.c.bf16 %v1806, %v1798
    %v2247 = vpack.c.bf16 %v1807, %v1799
    %v2248 = vpack.c.bf16 %v1808, %v1800
    %v2249 = vpack.c.bf16 %v1809, %v1801
    %v2250 = vpack.c.bf16 %v1818, %v1810
    %v2251 = vpack.c.bf16 %v1819, %v1811
    %v2252 = vpack.c.bf16 %v1820, %v1812
    %v2253 = vpack.c.bf16 %v1821, %v1813
    %v2254 = vpack.c.bf16 %v1822, %v1814
    %v2255 = vpack.c.bf16 %v1823, %v1815
    %v2256 = vpack.c.bf16 %v1824, %v1816
    %v2257 = vpack.c.bf16 %v1825, %v1817
    %v2258 = vpack.c.bf16 %v1834, %v1826
    %v2259 = vpack.c.bf16 %v1835, %v1827
    %v2260 = vpack.c.bf16 %v1836, %v1828
    %v2261 = vpack.c.bf16 %v1837, %v1829
    %v2262 = vpack.c.bf16 %v1838, %v1830
    %v2263 = vpack.c.bf16 %v1839, %v1831
    %v2264 = vpack.c.bf16 %v1840, %v1832
    %v2265 = vpack.c.bf16 %v1841, %v1833
    %v2266 = vpack.c.bf16 %v1850, %v1842
    %v2267 = vpack.c.bf16 %v1851, %v1843
    %v2268 = vpack.c.bf16 %v1852, %v1844
    %v2269 = vpack.c.bf16 %v1853, %v1845
    %v2270 = vpack.c.bf16 %v1854, %v1846
    %v2271 = vpack.c.bf16 %v1855, %v1847
    %v2272 = vpack.c.bf16 %v1856, %v1848
    %v2273 = vpack.c.bf16 %v1857, %v1849
    %v2274 = vpack.c.bf16 %v1866, %v1858
    %v2275 = vpack.c.bf16 %v1867, %v1859
    %v2276 = vpack.c.bf16 %v1868, %v1860
    %v2277 = vpack.c.bf16 %v1869, %v1861
    %v2278 = vpack.c.bf16 %v1870, %v1862
    %v2279 = vpack.c.bf16 %v1871, %v1863
    %v2280 = vpack.c.bf16 %v1872, %v1864
    %v2281 = vpack.c.bf16 %v1873, %v1865
    %v2282 = vpack.c.bf16 %v1882, %v1874
    %v2283 = vpack.c.bf16 %v1883, %v1875
    %v2284 = vpack.c.bf16 %v1884, %v1876
    %v2285 = vpack.c.bf16 %v1885, %v1877
    %v2286 = vpack.c.bf16 %v1886, %v1878
    %v2287 = vpack.c.bf16 %v1887, %v1879
    %v2288 = vpack.c.bf16 %v1888, %v1880
    %v2289 = vpack.c.bf16 %v1889, %v1881
    %v2290 = vpack.c.bf16 %v1898, %v1890
    %v2291 = vpack.c.bf16 %v1899, %v1891
    %v2292 = vpack.c.bf16 %v1900, %v1892
    %v2293 = vpack.c.bf16 %v1901, %v1893
    %v2294 = vpack.c.bf16 %v1902, %v1894
    %v2295 = vpack.c.bf16 %v1903, %v1895
    %v2296 = vpack.c.bf16 %v1904, %v1896
    %v2297 = vpack.c.bf16 %v1905, %v1897
    %v2298 = vpack.c.bf16 %v1914, %v1906
    %v2299 = vpack.c.bf16 %v1915, %v1907
    %v2300 = vpack.c.bf16 %v1916, %v1908
    %v2301 = vpack.c.bf16 %v1917, %v1909
    %v2302 = vpack.c.bf16 %v1918, %v1910
    %v2303 = vpack.c.bf16 %v1919, %v1911
    %v2304 = vpack.c.bf16 %v1920, %v1912
    %v2305 = vpack.c.bf16 %v1921, %v1913
    %v2306 = vpack.c.bf16 %v1930, %v1922
    %v2307 = vpack.c.bf16 %v1931, %v1923
    %v2308 = vpack.c.bf16 %v1932, %v1924
    %v2309 = vpack.c.bf16 %v1933, %v1925
    %v2310 = vpack.c.bf16 %v1934, %v1926
    %v2311 = vpack.c.bf16 %v1935, %v1927
    %v2312 = vpack.c.bf16 %v1936, %v1928
    %v2313 = vpack.c.bf16 %v1937, %v1929
    %v2314 = vpack.c.bf16 %v1946, %v1938
    %v2315 = vpack.c.bf16 %v1947, %v1939
    %v2316 = vpack.c.bf16 %v1948, %v1940
    %v2317 = vpack.c.bf16 %v1949, %v1941
    %v2318 = vpack.c.bf16 %v1950, %v1942
    %v2319 = vpack.c.bf16 %v1951, %v1943
    %v2320 = vpack.c.bf16 %v1952, %v1944
    %v2321 = vpack.c.bf16 %v1953, %v1945
    %v2322 = vpack.c.bf16 %v1962, %v1954
    %v2323 = vpack.c.bf16 %v1963, %v1955
    %v2324 = vpack.c.bf16 %v1964, %v1956
    %v2325 = vpack.c.bf16 %v1965, %v1957
    %v2326 = vpack.c.bf16 %v1966, %v1958
    %v2327 = vpack.c.bf16 %v1967, %v1959
    %v2328 = vpack.c.bf16 %v1968, %v1960
    %v2329 = vpack.c.bf16 %v1969, %v1961
    %v2330 = vpack.c.bf16 %v1978, %v1970
    %v2331 = vpack.c.bf16 %v1979, %v1971
    %v2332 = vpack.c.bf16 %v1980, %v1972
    %v2333 = vpack.c.bf16 %v1981, %v1973
    %v2334 = vpack.c.bf16 %v1982, %v1974
    %v2335 = vpack.c.bf16 %v1983, %v1975
    %v2336 = vpack.c.bf16 %v1984, %v1976
    %v2337 = vpack.c.bf16 %v1985, %v1977
    %v2338 = vpack.c.bf16 %v1994, %v1986
    %v2339 = vpack.c.bf16 %v1995, %v1987
    %v2340 = vpack.c.bf16 %v1996, %v1988
    %v2341 = vpack.c.bf16 %v1997, %v1989
    %v2342 = vpack.c.bf16 %v1998, %v1990
    %v2343 = vpack.c.bf16 %v1999, %v1991
    %v2344 = vpack.c.bf16 %v2000, %v1992
    %v2345 = vpack.c.bf16 %v2001, %v1993
    %v2346 = vpack.c.bf16 %v2010, %v2002
    %v2347 = vpack.c.bf16 %v2011, %v2003
    %v2348 = vpack.c.bf16 %v2012, %v2004
    %v2349 = vpack.c.bf16 %v2013, %v2005
    %v2350 = vpack.c.bf16 %v2014, %v2006
    %v2351 = vpack.c.bf16 %v2015, %v2007
    %v2352 = vpack.c.bf16 %v2016, %v2008
    %v2353 = vpack.c.bf16 %v2017, %v2009
    %v2354 = vpack.c.bf16 %v2026, %v2018
    %v2355 = vpack.c.bf16 %v2027, %v2019
    %v2356 = vpack.c.bf16 %v2028, %v2020
    %v2357 = vpack.c.bf16 %v2029, %v2021
    %v2358 = vpack.c.bf16 %v2030, %v2022
    %v2359 = vpack.c.bf16 %v2031, %v2023
    %v2360 = vpack.c.bf16 %v2032, %v2024
    %v2361 = vpack.c.bf16 %v2033, %v2025
    %v2362 = vpack.c.bf16 %v2042, %v2034
    %v2363 = vpack.c.bf16 %v2043, %v2035
    %v2364 = vpack.c.bf16 %v2044, %v2036
    %v2365 = vpack.c.bf16 %v2045, %v2037
    %v2366 = vpack.c.bf16 %v2046, %v2038
    %v2367 = vpack.c.bf16 %v2047, %v2039
    %v2368 = vpack.c.bf16 %v2048, %v2040
    %v2369 = vpack.c.bf16 %v2049, %v2041
    %v2370 = vpack.c.bf16 %v2058, %v2050
    %v2371 = vpack.c.bf16 %v2059, %v2051
    %v2372 = vpack.c.bf16 %v2060, %v2052
    %v2373 = vpack.c.bf16 %v2061, %v2053
    %v2374 = vpack.c.bf16 %v2062, %v2054
    %v2375 = vpack.c.bf16 %v2063, %v2055
    %v2376 = vpack.c.bf16 %v2064, %v2056
    %v2377 = vpack.c.bf16 %v2065, %v2057
    %v2378 = vpack.c.bf16 %v2074, %v2066
    %v2379 = vpack.c.bf16 %v2075, %v2067
    %v2380 = vpack.c.bf16 %v2076, %v2068
    %v2381 = vpack.c.bf16 %v2077, %v2069
    %v2382 = vpack.c.bf16 %v2078, %v2070
    %v2383 = vpack.c.bf16 %v2079, %v2071
    %v2384 = vpack.c.bf16 %v2080, %v2072
    %v2385 = vpack.c.bf16 %v2081, %v2073
    %v2386 = vpack.c.bf16 %v2090, %v2082
    %v2387 = vpack.c.bf16 %v2091, %v2083
    %v2388 = vpack.c.bf16 %v2092, %v2084
    %v2389 = vpack.c.bf16 %v2093, %v2085
    %v2390 = vpack.c.bf16 %v2094, %v2086
    %v2391 = vpack.c.bf16 %v2095, %v2087
    %v2392 = vpack.c.bf16 %v2096, %v2088
    %v2393 = vpack.c.bf16 %v2097, %v2089
    %v2394 = vpack.c.bf16 %v2106, %v2098
    %v2395 = vpack.c.bf16 %v2107, %v2099
    %v2396 = vpack.c.bf16 %v2108, %v2100
    %v2397 = vpack.c.bf16 %v2109, %v2101
    %v2398 = vpack.c.bf16 %v2110, %v2102
    %v2399 = vpack.c.bf16 %v2111, %v2103
    %v2400 = vpack.c.bf16 %v2112, %v2104
    %v2401 = vpack.c.bf16 %v2113, %v2105
    %v2402 = vpack.c.bf16 %v2122, %v2114
    %v2403 = vpack.c.bf16 %v2123, %v2115
    %v2404 = vpack.c.bf16 %v2124, %v2116
    %v2405 = vpack.c.bf16 %v2125, %v2117
    %v2406 = vpack.c.bf16 %v2126, %v2118
    %v2407 = vpack.c.bf16 %v2127, %v2119
    %v2408 = vpack.c.bf16 %v2128, %v2120
    %v2409 = vpack.c.bf16 %v2129, %v2121
    %v2410 = vpack.c.bf16 %v2138, %v2130
    %v2411 = vpack.c.bf16 %v2139, %v2131
    %v2412 = vpack.c.bf16 %v2140, %v2132
    %v2413 = vpack.c.bf16 %v2141, %v2133
    %v2414 = vpack.c.bf16 %v2142, %v2134
    %v2415 = vpack.c.bf16 %v2143, %v2135
    %v2416 = vpack.c.bf16 %v2144, %v2136
    %v2417 = vpack.c.bf16 %v2145, %v2137
    %v2418 = vpack.c.bf16 %v2154, %v2146
    %v2419 = vpack.c.bf16 %v2155, %v2147
    %v2420 = vpack.c.bf16 %v2156, %v2148
    %v2421 = vpack.c.bf16 %v2157, %v2149
    %v2422 = vpack.c.bf16 %v2158, %v2150
    %v2423 = vpack.c.bf16 %v2159, %v2151
    %v2424 = vpack.c.bf16 %v2160, %v2152
    %v2425 = vpack.c.bf16 %v2161, %v2153
    %v2426 = vpack.c.bf16 %v2170, %v2162
    %v2427 = vpack.c.bf16 %v2171, %v2163
    %v2428 = vpack.c.bf16 %v2172, %v2164
    %v2429 = vpack.c.bf16 %v2173, %v2165
    %v2430 = vpack.c.bf16 %v2174, %v2166
    %v2431 = vpack.c.bf16 %v2175, %v2167
    %v2432 = vpack.c.bf16 %v2176, %v2168
    %v2433 = vpack.c.bf16 %v2177, %v2169
    %2434 = vmatpush.bf16.msra.mxu0 %v2234
    %2435 = vmatpush.bf16.msra.mxu0 %v2226
    %2436 = vmatpush.bf16.msra.mxu0 %v2218
    %2437 = vmatpush.bf16.msra.mxu0 %v2210
    %2438 = vmatpush.bf16.msra.mxu0 %v2202
    %2439 = vmatpush.bf16.msra.mxu0 %v2194
    %2440 = vmatpush.bf16.msra.mxu0 %v2186
    %2441 = vmatpush.bf16.msra.mxu0 %v2178
    %2442 = vmatmul.bf16.gmra.mxu0 %v1022
    %v2443 = vpop.f32.mrf.mxu0
    %v2444 = vadd.f32 0.0, %v2443
    %v2445 = vpop.f32.mrf.mxu0
    %2446 = vdwg.mxu0
    %2447 = vmatpush.bf16.msra.mxu0 %v2298
    %2448 = vmatpush.bf16.msra.mxu0 %v2290
    %2449 = vmatpush.bf16.msra.mxu0 %v2282
    %2450 = vmatpush.bf16.msra.mxu0 %v2274
    %2451 = vmatpush.bf16.msra.mxu0 %v2266
    %2452 = vmatpush.bf16.msra.mxu0 %v2258
    %2453 = vmatpush.bf16.msra.mxu0 %v2250
    %2454 = vmatpush.bf16.msra.mxu0 %v2242
    %2455 = vmatmul.bf16.gmra.mxu0 %v1023
    %v2456 = vpop.f32.mrf.mxu0
    %v2457 = vadd.f32 %v2444, %v2456
    %v2458 = vpop.f32.mrf.mxu0
    %2459 = vdwg.mxu0
    %2460 = vmatpush.bf16.msra.mxu0 %v2362
    %2461 = vmatpush.bf16.msra.mxu0 %v2354
    %2462 = vmatpush.bf16.msra.mxu0 %v2346
    %2463 = vmatpush.bf16.msra.mxu0 %v2338
    %2464 = vmatpush.bf16.msra.mxu0 %v2330
    %2465 = vmatpush.bf16.msra.mxu0 %v2322
    %2466 = vmatpush.bf16.msra.mxu0 %v2314
    %2467 = vmatpush.bf16.msra.mxu0 %v2306
    %2468 = vmatmul.bf16.gmra.mxu0 %v1024
    %v2469 = vpop.f32.mrf.mxu0
    %v2470 = vadd.f32 %v2457, %v2469
    %v2471 = vpop.f32.mrf.mxu0
    %2472 = vdwg.mxu0
    %2473 = vmatpush.bf16.msra.mxu0 %v2426
    %2474 = vmatpush.bf16.msra.mxu0 %v2418
    %2475 = vmatpush.bf16.msra.mxu0 %v2410
    %2476 = vmatpush.bf16.msra.mxu0 %v2402
    %2477 = vmatpush.bf16.msra.mxu0 %v2394
    %2478 = vmatpush.bf16.msra.mxu0 %v2386
    %2479 = vmatpush.bf16.msra.mxu0 %v2378
    %2480 = vmatpush.bf16.msra.mxu0 %v2370
    %2481 = vmatmul.bf16.gmra.mxu0 %v1025
    %v2482 = vpop.f32.mrf.mxu0
    %v2483 = vadd.f32 %v2470, %v2482
    %v2484 = vpop.f32.mrf.mxu0
    %2485 = vdwg.mxu0
    %2486 = vmatpush.bf16.msra.mxu0 %v2235
    %2487 = vmatpush.bf16.msra.mxu0 %v2227
    %2488 = vmatpush.bf16.msra.mxu0 %v2219
    %2489 = vmatpush.bf16.msra.mxu0 %v2211
    %2490 = vmatpush.bf16.msra.mxu0 %v2203
    %2491 = vmatpush.bf16.msra.mxu0 %v2195
    %2492 = vmatpush.bf16.msra.mxu0 %v2187
    %2493 = vmatpush.bf16.msra.mxu0 %v2179
    %2494 = vmatmul.bf16.gmra.mxu0 %v1022
    %v2495 = vpop.f32.mrf.mxu0
    %v2496 = vadd.f32 0.0, %v2495
    %v2497 = vpop.f32.mrf.mxu0
    %2498 = vdwg.mxu0
    %2499 = vmatpush.bf16.msra.mxu0 %v2299
    %2500 = vmatpush.bf16.msra.mxu0 %v2291
    %2501 = vmatpush.bf16.msra.mxu0 %v2283
    %2502 = vmatpush.bf16.msra.mxu0 %v2275
    %2503 = vmatpush.bf16.msra.mxu0 %v2267
    %2504 = vmatpush.bf16.msra.mxu0 %v2259
    %2505 = vmatpush.bf16.msra.mxu0 %v2251
    %2506 = vmatpush.bf16.msra.mxu0 %v2243
    %2507 = vmatmul.bf16.gmra.mxu0 %v1023
    %v2508 = vpop.f32.mrf.mxu0
    %v2509 = vadd.f32 %v2496, %v2508
    %v2510 = vpop.f32.mrf.mxu0
    %2511 = vdwg.mxu0
    %2512 = vmatpush.bf16.msra.mxu0 %v2363
    %2513 = vmatpush.bf16.msra.mxu0 %v2355
    %2514 = vmatpush.bf16.msra.mxu0 %v2347
    %2515 = vmatpush.bf16.msra.mxu0 %v2339
    %2516 = vmatpush.bf16.msra.mxu0 %v2331
    %2517 = vmatpush.bf16.msra.mxu0 %v2323
    %2518 = vmatpush.bf16.msra.mxu0 %v2315
    %2519 = vmatpush.bf16.msra.mxu0 %v2307
    %2520 = vmatmul.bf16.gmra.mxu0 %v1024
    %v2521 = vpop.f32.mrf.mxu0
    %v2522 = vadd.f32 %v2509, %v2521
    %v2523 = vpop.f32.mrf.mxu0
    %2524 = vdwg.mxu0
    %2525 = vmatpush.bf16.msra.mxu0 %v2427
    %2526 = vmatpush.bf16.msra.mxu0 %v2419
    %2527 = vmatpush.bf16.msra.mxu0 %v2411
    %2528 = vmatpush.bf16.msra.mxu0 %v2403
    %2529 = vmatpush.bf16.msra.mxu0 %v2395
    %2530 = vmatpush.bf16.msra.mxu0 %v2387
    %2531 = vmatpush.bf16.msra.mxu0 %v2379
    %2532 = vmatpush.bf16.msra.mxu0 %v2371
    %2533 = vmatmul.bf16.gmra.mxu0 %v1025
    %v2534 = vpop.f32.mrf.mxu0
    %v2535 = vadd.f32 %v2522, %v2534
    %v2536 = vpop.f32.mrf.mxu0
    %2537 = vdwg.mxu0
    %2538 = vmatpush.bf16.msra.mxu0 %v2236
    %2539 = vmatpush.bf16.msra.mxu0 %v2228
    %2540 = vmatpush.bf16.msra.mxu0 %v2220
    %2541 = vmatpush.bf16.msra.mxu0 %v2212
    %2542 = vmatpush.bf16.msra.mxu0 %v2204
    %2543 = vmatpush.bf16.msra.mxu0 %v2196
    %2544 = vmatpush.bf16.msra.mxu0 %v2188
    %2545 = vmatpush.bf16.msra.mxu0 %v2180
    %2546 = vmatmul.bf16.gmra.mxu0 %v1022
    %v2547 = vpop.f32.mrf.mxu0
    %v2548 = vadd.f32 0.0, %v2547
    %v2549 = vpop.f32.mrf.mxu0
    %2550 = vdwg.mxu0
    %2551 = vmatpush.bf16.msra.mxu0 %v2300
    %2552 = vmatpush.bf16.msra.mxu0 %v2292
    %2553 = vmatpush.bf16.msra.mxu0 %v2284
    %2554 = vmatpush.bf16.msra.mxu0 %v2276
    %2555 = vmatpush.bf16.msra.mxu0 %v2268
    %2556 = vmatpush.bf16.msra.mxu0 %v2260
    %2557 = vmatpush.bf16.msra.mxu0 %v2252
    %2558 = vmatpush.bf16.msra.mxu0 %v2244
    %2559 = vmatmul.bf16.gmra.mxu0 %v1023
    %v2560 = vpop.f32.mrf.mxu0
    %v2561 = vadd.f32 %v2548, %v2560
    %v2562 = vpop.f32.mrf.mxu0
    %2563 = vdwg.mxu0
    %2564 = vmatpush.bf16.msra.mxu0 %v2364
    %2565 = vmatpush.bf16.msra.mxu0 %v2356
    %2566 = vmatpush.bf16.msra.mxu0 %v2348
    %2567 = vmatpush.bf16.msra.mxu0 %v2340
    %2568 = vmatpush.bf16.msra.mxu0 %v2332
    %2569 = vmatpush.bf16.msra.mxu0 %v2324
    %2570 = vmatpush.bf16.msra.mxu0 %v2316
    %2571 = vmatpush.bf16.msra.mxu0 %v2308
    %2572 = vmatmul.bf16.gmra.mxu0 %v1024
    %v2573 = vpop.f32.mrf.mxu0
    %v2574 = vadd.f32 %v2561, %v2573
    %v2575 = vpop.f32.mrf.mxu0
    %2576 = vdwg.mxu0
    %2577 = vmatpush.bf16.msra.mxu0 %v2428
    %2578 = vmatpush.bf16.msra.mxu0 %v2420
    %2579 = vmatpush.bf16.msra.mxu0 %v2412
    %2580 = vmatpush.bf16.msra.mxu0 %v2404
    %2581 = vmatpush.bf16.msra.mxu0 %v2396
    %2582 = vmatpush.bf16.msra.mxu0 %v2388
    %2583 = vmatpush.bf16.msra.mxu0 %v2380
    %2584 = vmatpush.bf16.msra.mxu0 %v2372
    %2585 = vmatmul.bf16.gmra.mxu0 %v1025
    %v2586 = vpop.f32.mrf.mxu0
    %v2587 = vadd.f32 %v2574, %v2586
    %v2588 = vpop.f32.mrf.mxu0
    %2589 = vdwg.mxu0
    %2590 = vmatpush.bf16.msra.mxu0 %v2237
    %2591 = vmatpush.bf16.msra.mxu0 %v2229
    %2592 = vmatpush.bf16.msra.mxu0 %v2221
    %2593 = vmatpush.bf16.msra.mxu0 %v2213
    %2594 = vmatpush.bf16.msra.mxu0 %v2205
    %2595 = vmatpush.bf16.msra.mxu0 %v2197
    %2596 = vmatpush.bf16.msra.mxu0 %v2189
    %2597 = vmatpush.bf16.msra.mxu0 %v2181
    %2598 = vmatmul.bf16.gmra.mxu0 %v1022
    %v2599 = vpop.f32.mrf.mxu0
    %v2600 = vadd.f32 0.0, %v2599
    %v2601 = vpop.f32.mrf.mxu0
    %2602 = vdwg.mxu0
    %2603 = vmatpush.bf16.msra.mxu0 %v2301
    %2604 = vmatpush.bf16.msra.mxu0 %v2293
    %2605 = vmatpush.bf16.msra.mxu0 %v2285
    %2606 = vmatpush.bf16.msra.mxu0 %v2277
    %2607 = vmatpush.bf16.msra.mxu0 %v2269
    %2608 = vmatpush.bf16.msra.mxu0 %v2261
    %2609 = vmatpush.bf16.msra.mxu0 %v2253
    %2610 = vmatpush.bf16.msra.mxu0 %v2245
    %2611 = vmatmul.bf16.gmra.mxu0 %v1023
    %v2612 = vpop.f32.mrf.mxu0
    %v2613 = vadd.f32 %v2600, %v2612
    %v2614 = vpop.f32.mrf.mxu0
    %2615 = vdwg.mxu0
    %2616 = vmatpush.bf16.msra.mxu0 %v2365
    %2617 = vmatpush.bf16.msra.mxu0 %v2357
    %2618 = vmatpush.bf16.msra.mxu0 %v2349
    %2619 = vmatpush.bf16.msra.mxu0 %v2341
    %2620 = vmatpush.bf16.msra.mxu0 %v2333
    %2621 = vmatpush.bf16.msra.mxu0 %v2325
    %2622 = vmatpush.bf16.msra.mxu0 %v2317
    %2623 = vmatpush.bf16.msra.mxu0 %v2309
    %2624 = vmatmul.bf16.gmra.mxu0 %v1024
    %v2625 = vpop.f32.mrf.mxu0
    %v2626 = vadd.f32 %v2613, %v2625
    %v2627 = vpop.f32.mrf.mxu0
    %2628 = vdwg.mxu0
    %2629 = vmatpush.bf16.msra.mxu0 %v2429
    %2630 = vmatpush.bf16.msra.mxu0 %v2421
    %2631 = vmatpush.bf16.msra.mxu0 %v2413
    %2632 = vmatpush.bf16.msra.mxu0 %v2405
    %2633 = vmatpush.bf16.msra.mxu0 %v2397
    %2634 = vmatpush.bf16.msra.mxu0 %v2389
    %2635 = vmatpush.bf16.msra.mxu0 %v2381
    %2636 = vmatpush.bf16.msra.mxu0 %v2373
    %2637 = vmatmul.bf16.gmra.mxu0 %v1025
    %v2638 = vpop.f32.mrf.mxu0
    %v2639 = vadd.f32 %v2626, %v2638
    %v2640 = vpop.f32.mrf.mxu0
    %2641 = vdwg.mxu0
    %2642 = vmatpush.bf16.msra.mxu0 %v2238
    %2643 = vmatpush.bf16.msra.mxu0 %v2230
    %2644 = vmatpush.bf16.msra.mxu0 %v2222
    %2645 = vmatpush.bf16.msra.mxu0 %v2214
    %2646 = vmatpush.bf16.msra.mxu0 %v2206
    %2647 = vmatpush.bf16.msra.mxu0 %v2198
    %2648 = vmatpush.bf16.msra.mxu0 %v2190
    %2649 = vmatpush.bf16.msra.mxu0 %v2182
    %2650 = vmatmul.bf16.gmra.mxu0 %v1022
    %v2651 = vpop.f32.mrf.mxu0
    %v2652 = vadd.f32 0.0, %v2651
    %v2653 = vpop.f32.mrf.mxu0
    %2654 = vdwg.mxu0
    %2655 = vmatpush.bf16.msra.mxu0 %v2302
    %2656 = vmatpush.bf16.msra.mxu0 %v2294
    %2657 = vmatpush.bf16.msra.mxu0 %v2286
    %2658 = vmatpush.bf16.msra.mxu0 %v2278
    %2659 = vmatpush.bf16.msra.mxu0 %v2270
    %2660 = vmatpush.bf16.msra.mxu0 %v2262
    %2661 = vmatpush.bf16.msra.mxu0 %v2254
    %2662 = vmatpush.bf16.msra.mxu0 %v2246
    %2663 = vmatmul.bf16.gmra.mxu0 %v1023
    %v2664 = vpop.f32.mrf.mxu0
    %v2665 = vadd.f32 %v2652, %v2664
    %v2666 = vpop.f32.mrf.mxu0
    %2667 = vdwg.mxu0
    %2668 = vmatpush.bf16.msra.mxu0 %v2366
    %2669 = vmatpush.bf16.msra.mxu0 %v2358
    %2670 = vmatpush.bf16.msra.mxu0 %v2350
    %2671 = vmatpush.bf16.msra.mxu0 %v2342
    %2672 = vmatpush.bf16.msra.mxu0 %v2334
    %2673 = vmatpush.bf16.msra.mxu0 %v2326
    %2674 = vmatpush.bf16.msra.mxu0 %v2318
    %2675 = vmatpush.bf16.msra.mxu0 %v2310
    %2676 = vmatmul.bf16.gmra.mxu0 %v1024
    %v2677 = vpop.f32.mrf.mxu0
    %v2678 = vadd.f32 %v2665, %v2677
    %v2679 = vpop.f32.mrf.mxu0
    %2680 = vdwg.mxu0
    %2681 = vmatpush.bf16.msra.mxu0 %v2430
    %2682 = vmatpush.bf16.msra.mxu0 %v2422
    %2683 = vmatpush.bf16.msra.mxu0 %v2414
    %2684 = vmatpush.bf16.msra.mxu0 %v2406
    %2685 = vmatpush.bf16.msra.mxu0 %v2398
    %2686 = vmatpush.bf16.msra.mxu0 %v2390
    %2687 = vmatpush.bf16.msra.mxu0 %v2382
    %2688 = vmatpush.bf16.msra.mxu0 %v2374
    %2689 = vmatmul.bf16.gmra.mxu0 %v1025
    %v2690 = vpop.f32.mrf.mxu0
    %v2691 = vadd.f32 %v2678, %v2690
    %v2692 = vpop.f32.mrf.mxu0
    %2693 = vdwg.mxu0
    %2694 = vmatpush.bf16.msra.mxu0 %v2239
    %2695 = vmatpush.bf16.msra.mxu0 %v2231
    %2696 = vmatpush.bf16.msra.mxu0 %v2223
    %2697 = vmatpush.bf16.msra.mxu0 %v2215
    %2698 = vmatpush.bf16.msra.mxu0 %v2207
    %2699 = vmatpush.bf16.msra.mxu0 %v2199
    %2700 = vmatpush.bf16.msra.mxu0 %v2191
    %2701 = vmatpush.bf16.msra.mxu0 %v2183
    %2702 = vmatmul.bf16.gmra.mxu0 %v1022
    %v2703 = vpop.f32.mrf.mxu0
    %v2704 = vadd.f32 0.0, %v2703
    %v2705 = vpop.f32.mrf.mxu0
    %2706 = vdwg.mxu0
    %2707 = vmatpush.bf16.msra.mxu0 %v2303
    %2708 = vmatpush.bf16.msra.mxu0 %v2295
    %2709 = vmatpush.bf16.msra.mxu0 %v2287
    %2710 = vmatpush.bf16.msra.mxu0 %v2279
    %2711 = vmatpush.bf16.msra.mxu0 %v2271
    %2712 = vmatpush.bf16.msra.mxu0 %v2263
    %2713 = vmatpush.bf16.msra.mxu0 %v2255
    %2714 = vmatpush.bf16.msra.mxu0 %v2247
    %2715 = vmatmul.bf16.gmra.mxu0 %v1023
    %v2716 = vpop.f32.mrf.mxu0
    %v2717 = vadd.f32 %v2704, %v2716
    %v2718 = vpop.f32.mrf.mxu0
    %2719 = vdwg.mxu0
    %2720 = vmatpush.bf16.msra.mxu0 %v2367
    %2721 = vmatpush.bf16.msra.mxu0 %v2359
    %2722 = vmatpush.bf16.msra.mxu0 %v2351
    %2723 = vmatpush.bf16.msra.mxu0 %v2343
    %2724 = vmatpush.bf16.msra.mxu0 %v2335
    %2725 = vmatpush.bf16.msra.mxu0 %v2327
    %2726 = vmatpush.bf16.msra.mxu0 %v2319
    %2727 = vmatpush.bf16.msra.mxu0 %v2311
    %2728 = vmatmul.bf16.gmra.mxu0 %v1024
    %v2729 = vpop.f32.mrf.mxu0
    %v2730 = vadd.f32 %v2717, %v2729
    %v2731 = vpop.f32.mrf.mxu0
    %2732 = vdwg.mxu0
    %2733 = vmatpush.bf16.msra.mxu0 %v2431
    %2734 = vmatpush.bf16.msra.mxu0 %v2423
    %2735 = vmatpush.bf16.msra.mxu0 %v2415
    %2736 = vmatpush.bf16.msra.mxu0 %v2407
    %2737 = vmatpush.bf16.msra.mxu0 %v2399
    %2738 = vmatpush.bf16.msra.mxu0 %v2391
    %2739 = vmatpush.bf16.msra.mxu0 %v2383
    %2740 = vmatpush.bf16.msra.mxu0 %v2375
    %2741 = vmatmul.bf16.gmra.mxu0 %v1025
    %v2742 = vpop.f32.mrf.mxu0
    %v2743 = vadd.f32 %v2730, %v2742
    %v2744 = vpop.f32.mrf.mxu0
    %2745 = vdwg.mxu0
    %2746 = vmatpush.bf16.msra.mxu0 %v2240
    %2747 = vmatpush.bf16.msra.mxu0 %v2232
    %2748 = vmatpush.bf16.msra.mxu0 %v2224
    %2749 = vmatpush.bf16.msra.mxu0 %v2216
    %2750 = vmatpush.bf16.msra.mxu0 %v2208
    %2751 = vmatpush.bf16.msra.mxu0 %v2200
    %2752 = vmatpush.bf16.msra.mxu0 %v2192
    %2753 = vmatpush.bf16.msra.mxu0 %v2184
    %2754 = vmatmul.bf16.gmra.mxu0 %v1022
    %v2755 = vpop.f32.mrf.mxu0
    %v2756 = vadd.f32 0.0, %v2755
    %v2757 = vpop.f32.mrf.mxu0
    %2758 = vdwg.mxu0
    %2759 = vmatpush.bf16.msra.mxu0 %v2304
    %2760 = vmatpush.bf16.msra.mxu0 %v2296
    %2761 = vmatpush.bf16.msra.mxu0 %v2288
    %2762 = vmatpush.bf16.msra.mxu0 %v2280
    %2763 = vmatpush.bf16.msra.mxu0 %v2272
    %2764 = vmatpush.bf16.msra.mxu0 %v2264
    %2765 = vmatpush.bf16.msra.mxu0 %v2256
    %2766 = vmatpush.bf16.msra.mxu0 %v2248
    %2767 = vmatmul.bf16.gmra.mxu0 %v1023
    %v2768 = vpop.f32.mrf.mxu0
    %v2769 = vadd.f32 %v2756, %v2768
    %v2770 = vpop.f32.mrf.mxu0
    %2771 = vdwg.mxu0
    %2772 = vmatpush.bf16.msra.mxu0 %v2368
    %2773 = vmatpush.bf16.msra.mxu0 %v2360
    %2774 = vmatpush.bf16.msra.mxu0 %v2352
    %2775 = vmatpush.bf16.msra.mxu0 %v2344
    %2776 = vmatpush.bf16.msra.mxu0 %v2336
    %2777 = vmatpush.bf16.msra.mxu0 %v2328
    %2778 = vmatpush.bf16.msra.mxu0 %v2320
    %2779 = vmatpush.bf16.msra.mxu0 %v2312
    %2780 = vmatmul.bf16.gmra.mxu0 %v1024
    %v2781 = vpop.f32.mrf.mxu0
    %v2782 = vadd.f32 %v2769, %v2781
    %v2783 = vpop.f32.mrf.mxu0
    %2784 = vdwg.mxu0
    %2785 = vmatpush.bf16.msra.mxu0 %v2432
    %2786 = vmatpush.bf16.msra.mxu0 %v2424
    %2787 = vmatpush.bf16.msra.mxu0 %v2416
    %2788 = vmatpush.bf16.msra.mxu0 %v2408
    %2789 = vmatpush.bf16.msra.mxu0 %v2400
    %2790 = vmatpush.bf16.msra.mxu0 %v2392
    %2791 = vmatpush.bf16.msra.mxu0 %v2384
    %2792 = vmatpush.bf16.msra.mxu0 %v2376
    %2793 = vmatmul.bf16.gmra.mxu0 %v1025
    %v2794 = vpop.f32.mrf.mxu0
    %v2795 = vadd.f32 %v2782, %v2794
    %v2796 = vpop.f32.mrf.mxu0
    %2797 = vdwg.mxu0
    %2798 = vmatpush.bf16.msra.mxu0 %v2241
    %2799 = vmatpush.bf16.msra.mxu0 %v2233
    %2800 = vmatpush.bf16.msra.mxu0 %v2225
    %2801 = vmatpush.bf16.msra.mxu0 %v2217
    %2802 = vmatpush.bf16.msra.mxu0 %v2209
    %2803 = vmatpush.bf16.msra.mxu0 %v2201
    %2804 = vmatpush.bf16.msra.mxu0 %v2193
    %2805 = vmatpush.bf16.msra.mxu0 %v2185
    %2806 = vmatmul.bf16.gmra.mxu0 %v1022
    %v2807 = vpop.f32.mrf.mxu0
    %v2808 = vadd.f32 0.0, %v2807
    %v2809 = vpop.f32.mrf.mxu0
    %2810 = vdwg.mxu0
    %2811 = vmatpush.bf16.msra.mxu0 %v2305
    %2812 = vmatpush.bf16.msra.mxu0 %v2297
    %2813 = vmatpush.bf16.msra.mxu0 %v2289
    %2814 = vmatpush.bf16.msra.mxu0 %v2281
    %2815 = vmatpush.bf16.msra.mxu0 %v2273
    %2816 = vmatpush.bf16.msra.mxu0 %v2265
    %2817 = vmatpush.bf16.msra.mxu0 %v2257
    %2818 = vmatpush.bf16.msra.mxu0 %v2249
    %2819 = vmatmul.bf16.gmra.mxu0 %v1023
    %v2820 = vpop.f32.mrf.mxu0
    %v2821 = vadd.f32 %v2808, %v2820
    %v2822 = vpop.f32.mrf.mxu0
    %2823 = vdwg.mxu0
    %2824 = vmatpush.bf16.msra.mxu0 %v2369
    %2825 = vmatpush.bf16.msra.mxu0 %v2361
    %2826 = vmatpush.bf16.msra.mxu0 %v2353
    %2827 = vmatpush.bf16.msra.mxu0 %v2345
    %2828 = vmatpush.bf16.msra.mxu0 %v2337
    %2829 = vmatpush.bf16.msra.mxu0 %v2329
    %2830 = vmatpush.bf16.msra.mxu0 %v2321
    %2831 = vmatpush.bf16.msra.mxu0 %v2313
    %2832 = vmatmul.bf16.gmra.mxu0 %v1024
    %v2833 = vpop.f32.mrf.mxu0
    %v2834 = vadd.f32 %v2821, %v2833
    %v2835 = vpop.f32.mrf.mxu0
    %2836 = vdwg.mxu0
    %2837 = vmatpush.bf16.msra.mxu0 %v2433
    %2838 = vmatpush.bf16.msra.mxu0 %v2425
    %2839 = vmatpush.bf16.msra.mxu0 %v2417
    %2840 = vmatpush.bf16.msra.mxu0 %v2409
    %2841 = vmatpush.bf16.msra.mxu0 %v2401
    %2842 = vmatpush.bf16.msra.mxu0 %v2393
    %2843 = vmatpush.bf16.msra.mxu0 %v2385
    %2844 = vmatpush.bf16.msra.mxu0 %v2377
    %2845 = vmatmul.bf16.gmra.mxu0 %v1025
    %v2846 = vpop.f32.mrf.mxu0
    %v2847 = vadd.f32 %v2834, %v2846
    %v2848 = vpop.f32.mrf.mxu0
    %2849 = vdwg.mxu0
    %v2851 = vperm.slane %v132, 0
    %v2852 = vperm.slane %v132, 1
    %v2853 = vperm.slane %v132, 2
    %v2854 = vperm.slane %v132, 3
    %v2855 = vperm.slane %v132, 4
    %v2856 = vperm.slane %v132, 5
    %v2857 = vperm.slane %v132, 6
    %v2858 = vperm.slane %v132, 7
    %v2867 = vmul.f32 %v2483, %v2851
    %v2868 = vmul.f32 %v2535, %v2852
    %v2869 = vmul.f32 %v2587, %v2853
    %v2870 = vmul.f32 %v2639, %v2854
    %v2871 = vmul.f32 %v2691, %v2855
    %v2872 = vmul.f32 %v2743, %v2856
    %v2873 = vmul.f32 %v2795, %v2857
    %v2874 = vmul.f32 %v2847, %v2858
    %v2875 = vrot.slane %v2867, 4
    %v2876 = vadd.f32 %v2867, %v2875
    %v2877 = vrot.slane %v2876, 2
    %v2878 = vadd.f32 %v2876, %v2877
    %v2879 = vrot.slane %v2878, 1
    %v2880 = vadd.f32 %v2878, %v2879
    %v2881 = vrot.slane %v2868, 4
    %v2882 = vadd.f32 %v2868, %v2881
    %v2883 = vrot.slane %v2882, 2
    %v2884 = vadd.f32 %v2882, %v2883
    %v2885 = vrot.slane %v2884, 1
    %v2886 = vadd.f32 %v2884, %v2885
    %v2887 = vrot.slane %v2869, 4
    %v2888 = vadd.f32 %v2869, %v2887
    %v2889 = vrot.slane %v2888, 2
    %v2890 = vadd.f32 %v2888, %v2889
    %v2891 = vrot.slane %v2890, 1
    %v2892 = vadd.f32 %v2890, %v2891
    %v2893 = vrot.slane %v2870, 4
    %v2894 = vadd.f32 %v2870, %v2893
    %v2895 = vrot.slane %v2894, 2
    %v2896 = vadd.f32 %v2894, %v2895
    %v2897 = vrot.slane %v2896, 1
    %v2898 = vadd.f32 %v2896, %v2897
    %v2899 = vrot.slane %v2871, 4
    %v2900 = vadd.f32 %v2871, %v2899
    %v2901 = vrot.slane %v2900, 2
    %v2902 = vadd.f32 %v2900, %v2901
    %v2903 = vrot.slane %v2902, 1
    %v2904 = vadd.f32 %v2902, %v2903
    %v2905 = vrot.slane %v2872, 4
    %v2906 = vadd.f32 %v2872, %v2905
    %v2907 = vrot.slane %v2906, 2
    %v2908 = vadd.f32 %v2906, %v2907
    %v2909 = vrot.slane %v2908, 1
    %v2910 = vadd.f32 %v2908, %v2909
    %v2911 = vrot.slane %v2873, 4
    %v2912 = vadd.f32 %v2873, %v2911
    %v2913 = vrot.slane %v2912, 2
    %v2914 = vadd.f32 %v2912, %v2913
    %v2915 = vrot.slane %v2914, 1
    %v2916 = vadd.f32 %v2914, %v2915
    %v2917 = vrot.slane %v2874, 4
    %v2918 = vadd.f32 %v2874, %v2917
    %v2919 = vrot.slane %v2918, 2
    %v2920 = vadd.f32 %v2918, %v2919
    %v2921 = vrot.slane %v2920, 1
    %v2922 = vadd.f32 %v2920, %v2921
    %v2923 = vmul.f32 %v2880, %v324
    %v2924 = vmul.f32 %v2886, %v324
    %v2925 = vmul.f32 %v2892, %v324
    %v2926 = vmul.f32 %v2898, %v324
    %v2927 = vmul.f32 %v2904, %v324
    %v2928 = vmul.f32 %v2910, %v324
    %v2929 = vmul.f32 %v2916, %v324
    %v2930 = vmul.f32 %v2922, %v324
    %v2931 = vmul.f32 %v2867, %v2867
    %v2932 = vmul.f32 %v2868, %v2868
    %v2933 = vmul.f32 %v2869, %v2869
    %v2934 = vmul.f32 %v2870, %v2870
    %v2935 = vmul.f32 %v2871, %v2871
    %v2936 = vmul.f32 %v2872, %v2872
    %v2937 = vmul.f32 %v2873, %v2873
    %v2938 = vmul.f32 %v2874, %v2874
    %v2939 = vrot.slane %v2931, 4
    %v2940 = vadd.f32 %v2931, %v2939
    %v2941 = vrot.slane %v2940, 2
    %v2942 = vadd.f32 %v2940, %v2941
    %v2943 = vrot.slane %v2942, 1
    %v2944 = vadd.f32 %v2942, %v2943
    %v2945 = vrot.slane %v2932, 4
    %v2946 = vadd.f32 %v2932, %v2945
    %v2947 = vrot.slane %v2946, 2
    %v2948 = vadd.f32 %v2946, %v2947
    %v2949 = vrot.slane %v2948, 1
    %v2950 = vadd.f32 %v2948, %v2949
    %v2951 = vrot.slane %v2933, 4
    %v2952 = vadd.f32 %v2933, %v2951
    %v2953 = vrot.slane %v2952, 2
    %v2954 = vadd.f32 %v2952, %v2953
    %v2955 = vrot.slane %v2954, 1
    %v2956 = vadd.f32 %v2954, %v2955
    %v2957 = vrot.slane %v2934, 4
    %v2958 = vadd.f32 %v2934, %v2957
    %v2959 = vrot.slane %v2958, 2
    %v2960 = vadd.f32 %v2958, %v2959
    %v2961 = vrot.slane %v2960, 1
    %v2962 = vadd.f32 %v2960, %v2961
    %v2963 = vrot.slane %v2935, 4
    %v2964 = vadd.f32 %v2935, %v2963
    %v2965 = vrot.slane %v2964, 2
    %v2966 = vadd.f32 %v2964, %v2965
    %v2967 = vrot.slane %v2966, 1
    %v2968 = vadd.f32 %v2966, %v2967
    %v2969 = vrot.slane %v2936, 4
    %v2970 = vadd.f32 %v2936, %v2969
    %v2971 = vrot.slane %v2970, 2
    %v2972 = vadd.f32 %v2970, %v2971
    %v2973 = vrot.slane %v2972, 1
    %v2974 = vadd.f32 %v2972, %v2973
    %v2975 = vrot.slane %v2937, 4
    %v2976 = vadd.f32 %v2937, %v2975
    %v2977 = vrot.slane %v2976, 2
    %v2978 = vadd.f32 %v2976, %v2977
    %v2979 = vrot.slane %v2978, 1
    %v2980 = vadd.f32 %v2978, %v2979
    %v2981 = vrot.slane %v2938, 4
    %v2982 = vadd.f32 %v2938, %v2981
    %v2983 = vrot.slane %v2982, 2
    %v2984 = vadd.f32 %v2982, %v2983
    %v2985 = vrot.slane %v2984, 1
    %v2986 = vadd.f32 %v2984, %v2985
    %v2987 = vmul.f32 %v2944, %v324
    %v2988 = vmul.f32 %v2950, %v324
    %v2989 = vmul.f32 %v2956, %v324
    %v2990 = vmul.f32 %v2962, %v324
    %v2991 = vmul.f32 %v2968, %v324
    %v2992 = vmul.f32 %v2974, %v324
    %v2993 = vmul.f32 %v2980, %v324
    %v2994 = vmul.f32 %v2986, %v324
    %v2995 = vmul.f32 %v2923, %v2923
    %v2996 = vmul.f32 %v2924, %v2924
    %v2997 = vmul.f32 %v2925, %v2925
    %v2998 = vmul.f32 %v2926, %v2926
    %v2999 = vmul.f32 %v2927, %v2927
    %v3000 = vmul.f32 %v2928, %v2928
    %v3001 = vmul.f32 %v2929, %v2929
    %v3002 = vmul.f32 %v2930, %v2930
    %v3003 = vsub.f32 %v2987, %v2995
    %v3004 = vsub.f32 %v2988, %v2996
    %v3005 = vsub.f32 %v2989, %v2997
    %v3006 = vsub.f32 %v2990, %v2998
    %v3007 = vsub.f32 %v2991, %v2999
    %v3008 = vsub.f32 %v2992, %v3000
    %v3009 = vsub.f32 %v2993, %v3001
    %v3010 = vsub.f32 %v2994, %v3002
    %v3011 = vadd.f32 %v3003, 0.8
    %v3012 = vadd.f32 %v3004, 0.8
    %v3013 = vadd.f32 %v3005, 0.8
    %v3014 = vadd.f32 %v3006, 0.8
    %v3015 = vadd.f32 %v3007, 0.8
    %v3016 = vadd.f32 %v3008, 0.8
    %v3017 = vadd.f32 %v3009, 0.8
    %v3018 = vadd.f32 %v3010, 0.8
    %v3019 = vrsqrt.pop %v3011
    %v3020 = vmul.f32 %v3019, %v3011
    %v3021 = vmul.f32 %v3020, %v3019
    %v3022 = vmul.f32 0.5, %v3021
    %v3023 = vsub.f32 1.5, %v3022
    %v3024 = vmul.f32 %v3019, %v3023
    %vm3025 = vweird.f32 %v3011
    %vm3026 = vweird.f32 %v3019
    %vm3027 = vmor %vm3025, %vm3026
    %v3028 = vsel %vm3027, %v3019, %v3024
    %v3029 = vrsqrt.pop %v3012
    %v3030 = vmul.f32 %v3029, %v3012
    %v3031 = vmul.f32 %v3030, %v3029
    %v3032 = vmul.f32 0.5, %v3031
    %v3033 = vsub.f32 1.5, %v3032
    %v3034 = vmul.f32 %v3029, %v3033
    %vm3035 = vweird.f32 %v3012
    %vm3036 = vweird.f32 %v3029
    %vm3037 = vmor %vm3035, %vm3036
    %v3038 = vsel %vm3037, %v3029, %v3034
    %v3039 = vrsqrt.pop %v3013
    %v3040 = vmul.f32 %v3039, %v3013
    %v3041 = vmul.f32 %v3040, %v3039
    %v3042 = vmul.f32 0.5, %v3041
    %v3043 = vsub.f32 1.5, %v3042
    %v3044 = vmul.f32 %v3039, %v3043
    %vm3045 = vweird.f32 %v3013
    %vm3046 = vweird.f32 %v3039
    %vm3047 = vmor %vm3045, %vm3046
    %v3048 = vsel %vm3047, %v3039, %v3044
    %v3049 = vrsqrt.pop %v3014
    %v3050 = vmul.f32 %v3049, %v3014
    %v3051 = vmul.f32 %v3050, %v3049
    %v3052 = vmul.f32 0.5, %v3051
    %v3053 = vsub.f32 1.5, %v3052
    %v3054 = vmul.f32 %v3049, %v3053
    %vm3055 = vweird.f32 %v3014
    %vm3056 = vweird.f32 %v3049
    %vm3057 = vmor %vm3055, %vm3056
    %v3058 = vsel %vm3057, %v3049, %v3054
    %v3059 = vrsqrt.pop %v3015
    %v3060 = vmul.f32 %v3059, %v3015
    %v3061 = vmul.f32 %v3060, %v3059
    %v3062 = vmul.f32 0.5, %v3061
    %v3063 = vsub.f32 1.5, %v3062
    %v3064 = vmul.f32 %v3059, %v3063
    %vm3065 = vweird.f32 %v3015
    %vm3066 = vweird.f32 %v3059
    %vm3067 = vmor %vm3065, %vm3066
    %v3068 = vsel %vm3067, %v3059, %v3064
    %v3069 = vrsqrt.pop %v3016
    %v3070 = vmul.f32 %v3069, %v3016
    %v3071 = vmul.f32 %v3070, %v3069
    %v3072 = vmul.f32 0.5, %v3071
    %v3073 = vsub.f32 1.5, %v3072
    %v3074 = vmul.f32 %v3069, %v3073
    %vm3075 = vweird.f32 %v3016
    %vm3076 = vweird.f32 %v3069
    %vm3077 = vmor %vm3075, %vm3076
    %v3078 = vsel %vm3077, %v3069, %v3074
    %v3079 = vrsqrt.pop %v3017
    %v3080 = vmul.f32 %v3079, %v3017
    %v3081 = vmul.f32 %v3080, %v3079
    %v3082 = vmul.f32 0.5, %v3081
    %v3083 = vsub.f32 1.5, %v3082
    %v3084 = vmul.f32 %v3079, %v3083
    %vm3085 = vweird.f32 %v3017
    %vm3086 = vweird.f32 %v3079
    %vm3087 = vmor %vm3085, %vm3086
    %v3088 = vsel %vm3087, %v3079, %v3084
    %v3089 = vrsqrt.pop %v3018
    %v3090 = vmul.f32 %v3089, %v3018
    %v3091 = vmul.f32 %v3090, %v3089
    %v3092 = vmul.f32 0.5, %v3091
    %v3093 = vsub.f32 1.5, %v3092
    %v3094 = vmul.f32 %v3089, %v3093
    %vm3095 = vweird.f32 %v3018
    %vm3096 = vweird.f32 %v3089
    %vm3097 = vmor %vm3095, %vm3096
    %v3098 = vsel %vm3097, %v3089, %v3094
    %v3099 = vsub.f32 %v2867, %v2923
    %v3100 = vsub.f32 %v2868, %v2924
    %v3101 = vsub.f32 %v2869, %v2925
    %v3102 = vsub.f32 %v2870, %v2926
    %v3103 = vsub.f32 %v2871, %v2927
    %v3104 = vsub.f32 %v2872, %v2928
    %v3105 = vsub.f32 %v2873, %v2929
    %v3106 = vsub.f32 %v2874, %v2930
    %v3107 = vmul.f32 %v3099, %v3028
    %v3108 = vmul.f32 %v3100, %v3038
    %v3109 = vmul.f32 %v3101, %v3048
    %v3110 = vmul.f32 %v3102, %v3058
    %v3111 = vmul.f32 %v3103, %v3068
    %v3112 = vmul.f32 %v3104, %v3078
    %v3113 = vmul.f32 %v3105, %v3088
    %v3114 = vmul.f32 %v3106, %v3098
    %v3116 = vperm.slane %v136, 0
    %v3117 = vperm.slane %v136, 1
    %v3118 = vperm.slane %v136, 2
    %v3119 = vperm.slane %v136, 3
    %v3120 = vperm.slane %v136, 4
    %v3121 = vperm.slane %v136, 5
    %v3122 = vperm.slane %v136, 6
    %v3123 = vperm.slane %v136, 7
    %v3132 = vmul.f32 %v3107, %v3116
    %v3133 = vmul.f32 %v3108, %v3117
    %v3134 = vmul.f32 %v3109, %v3118
    %v3135 = vmul.f32 %v3110, %v3119
    %v3136 = vmul.f32 %v3111, %v3120
    %v3137 = vmul.f32 %v3112, %v3121
    %v3138 = vmul.f32 %v3113, %v3122
    %v3139 = vmul.f32 %v3114, %v3123
    %v3141 = vperm.slane %v140, 0
    %v3142 = vperm.slane %v140, 1
    %v3143 = vperm.slane %v140, 2
    %v3144 = vperm.slane %v140, 3
    %v3145 = vperm.slane %v140, 4
    %v3146 = vperm.slane %v140, 5
    %v3147 = vperm.slane %v140, 6
    %v3148 = vperm.slane %v140, 7
    %v3157 = vadd.f32 %v3132, %v3141
    %v3158 = vadd.f32 %v3133, %v3142
    %v3159 = vadd.f32 %v3134, %v3143
    %v3160 = vadd.f32 %v3135, %v3144
    %v3161 = vadd.f32 %v3136, %v3145
    %v3162 = vadd.f32 %v3137, %v3146
    %v3163 = vadd.f32 %v3138, %v3147
    %v3164 = vadd.f32 %v3139, %v3148
    %vm3165 = vcmp.gt.f32.partialorder %v3157, 0.0
    %vm3166 = vcmp.gt.f32.partialorder %v3158, 0.0
    %vm3167 = vcmp.gt.f32.partialorder %v3159, 0.0
    %vm3168 = vcmp.gt.f32.partialorder %v3160, 0.0
    %vm3169 = vcmp.gt.f32.partialorder %v3161, 0.0
    %vm3170 = vcmp.gt.f32.partialorder %v3162, 0.0
    %vm3171 = vcmp.gt.f32.partialorder %v3163, 0.0
    %vm3172 = vcmp.gt.f32.partialorder %v3164, 0.0
    %v3173 = vmul.f32 %v3157, 0.2
    %v3174 = vmul.f32 %v3158, 0.2
    %v3175 = vmul.f32 %v3159, 0.2
    %v3176 = vmul.f32 %v3160, 0.2
    %v3177 = vmul.f32 %v3161, 0.2
    %v3178 = vmul.f32 %v3162, 0.2
    %v3179 = vmul.f32 %v3163, 0.2
    %v3180 = vmul.f32 %v3164, 0.2
    %v3181 = vsel %vm3165, %v3157, %v3173
    %v3182 = vsel %vm3166, %v3158, %v3174
    %v3183 = vsel %vm3167, %v3159, %v3175
    %v3184 = vsel %vm3168, %v3160, %v3176
    %v3185 = vsel %vm3169, %v3161, %v3177
    %v3186 = vsel %vm3170, %v3162, %v3178
    %v3187 = vsel %vm3171, %v3163, %v3179
    %v3188 = vsel %vm3172, %v3164, %v3180
    %v3189 = vpack.c.bf16 %v3181, %v3181
    %v3190 = vpack.c.bf16 %v3182, %v3182
    %v3191 = vpack.c.bf16 %v3183, %v3183
    %v3192 = vpack.c.bf16 %v3184, %v3184
    %v3193 = vpack.c.bf16 %v3185, %v3185
    %v3194 = vpack.c.bf16 %v3186, %v3186
    %v3195 = vpack.c.bf16 %v3187, %v3187
    %v3196 = vpack.c.bf16 %v3188, %v3188
    %v3197 = vld [vmem:[#allocation11 + $0x400] sm:$0xff]
    %v3198 = vld [vmem:[#allocation11 + $0x408] sm:$0xff]
    %v3199 = vld [vmem:[#allocation11 + $0x410] sm:$0xff]
    %v3200 = vld [vmem:[#allocation11 + $0x418] sm:$0xff]
    %v3201 = vld [vmem:[#allocation11 + $0x420] sm:$0xff]
    %v3202 = vld [vmem:[#allocation11 + $0x428] sm:$0xff]
    %v3203 = vld [vmem:[#allocation11 + $0x430] sm:$0xff]
    %v3204 = vld [vmem:[#allocation11 + $0x438] sm:$0xff]
    %v3205 = vld [vmem:[#allocation11 + $0x440] sm:$0xff]
    %v3206 = vld [vmem:[#allocation11 + $0x448] sm:$0xff]
    %v3207 = vld [vmem:[#allocation11 + $0x450] sm:$0xff]
    %v3208 = vld [vmem:[#allocation11 + $0x458] sm:$0xff]
    %v3209 = vld [vmem:[#allocation11 + $0x460] sm:$0xff]
    %v3210 = vld [vmem:[#allocation11 + $0x468] sm:$0xff]
    %v3211 = vld [vmem:[#allocation11 + $0x470] sm:$0xff]
    %v3212 = vld [vmem:[#allocation11 + $0x478] sm:$0xff]
    %v3213 = vld [vmem:[#allocation11 + $0x480] sm:$0xff]
    %v3214 = vld [vmem:[#allocation11 + $0x488] sm:$0xff]
    %v3215 = vld [vmem:[#allocation11 + $0x490] sm:$0xff]
    %v3216 = vld [vmem:[#allocation11 + $0x498] sm:$0xff]
    %v3217 = vld [vmem:[#allocation11 + $0x4a0] sm:$0xff]
    %v3218 = vld [vmem:[#allocation11 + $0x4a8] sm:$0xff]
    %v3219 = vld [vmem:[#allocation11 + $0x4b0] sm:$0xff]
    %v3220 = vld [vmem:[#allocation11 + $0x4b8] sm:$0xff]
    %v3221 = vld [vmem:[#allocation11 + $0x4c0] sm:$0xff]
    %v3222 = vld [vmem:[#allocation11 + $0x4c8] sm:$0xff]
    %v3223 = vld [vmem:[#allocation11 + $0x4d0] sm:$0xff]
    %v3224 = vld [vmem:[#allocation11 + $0x4d8] sm:$0xff]
    %v3225 = vld [vmem:[#allocation11 + $0x4e0] sm:$0xff]
    %v3226 = vld [vmem:[#allocation11 + $0x4e8] sm:$0xff]
    %v3227 = vld [vmem:[#allocation11 + $0x4f0] sm:$0xff]
    %v3228 = vld [vmem:[#allocation11 + $0x4f8] sm:$0xff]
    %v3229 = vld [vmem:[#allocation11 + $0x500] sm:$0xff]
    %v3230 = vld [vmem:[#allocation11 + $0x508] sm:$0xff]
    %v3231 = vld [vmem:[#allocation11 + $0x510] sm:$0xff]
    %v3232 = vld [vmem:[#allocation11 + $0x518] sm:$0xff]
    %v3233 = vld [vmem:[#allocation11 + $0x520] sm:$0xff]
    %v3234 = vld [vmem:[#allocation11 + $0x528] sm:$0xff]
    %v3235 = vld [vmem:[#allocation11 + $0x530] sm:$0xff]
    %v3236 = vld [vmem:[#allocation11 + $0x538] sm:$0xff]
    %v3237 = vld [vmem:[#allocation11 + $0x540] sm:$0xff]
    %v3238 = vld [vmem:[#allocation11 + $0x548] sm:$0xff]
    %v3239 = vld [vmem:[#allocation11 + $0x550] sm:$0xff]
    %v3240 = vld [vmem:[#allocation11 + $0x558] sm:$0xff]
    %v3241 = vld [vmem:[#allocation11 + $0x560] sm:$0xff]
    %v3242 = vld [vmem:[#allocation11 + $0x568] sm:$0xff]
    %v3243 = vld [vmem:[#allocation11 + $0x570] sm:$0xff]
    %v3244 = vld [vmem:[#allocation11 + $0x578] sm:$0xff]
    %v3245 = vld [vmem:[#allocation11 + $0x580] sm:$0xff]
    %v3246 = vld [vmem:[#allocation11 + $0x588] sm:$0xff]
    %v3247 = vld [vmem:[#allocation11 + $0x590] sm:$0xff]
    %v3248 = vld [vmem:[#allocation11 + $0x598] sm:$0xff]
    %v3249 = vld [vmem:[#allocation11 + $0x5a0] sm:$0xff]
    %v3250 = vld [vmem:[#allocation11 + $0x5a8] sm:$0xff]
    %v3251 = vld [vmem:[#allocation11 + $0x5b0] sm:$0xff]
    %v3252 = vld [vmem:[#allocation11 + $0x5b8] sm:$0xff]
    %v3253 = vld [vmem:[#allocation11 + $0x5c0] sm:$0xff]
    %v3254 = vld [vmem:[#allocation11 + $0x5c8] sm:$0xff]
    %v3255 = vld [vmem:[#allocation11 + $0x5d0] sm:$0xff]
    %v3256 = vld [vmem:[#allocation11 + $0x5d8] sm:$0xff]
    %v3257 = vld [vmem:[#allocation11 + $0x5e0] sm:$0xff]
    %v3258 = vld [vmem:[#allocation11 + $0x5e8] sm:$0xff]
    %v3259 = vld [vmem:[#allocation11 + $0x5f0] sm:$0xff]
    %v3260 = vld [vmem:[#allocation11 + $0x5f8] sm:$0xff]
    %v3261 = vld [vmem:[#allocation11 + $0x600] sm:$0xff]
    %v3262 = vld [vmem:[#allocation11 + $0x608] sm:$0xff]
    %v3263 = vld [vmem:[#allocation11 + $0x610] sm:$0xff]
    %v3264 = vld [vmem:[#allocation11 + $0x618] sm:$0xff]
    %v3265 = vld [vmem:[#allocation11 + $0x620] sm:$0xff]
    %v3266 = vld [vmem:[#allocation11 + $0x628] sm:$0xff]
    %v3267 = vld [vmem:[#allocation11 + $0x630] sm:$0xff]
    %v3268 = vld [vmem:[#allocation11 + $0x638] sm:$0xff]
    %v3269 = vld [vmem:[#allocation11 + $0x640] sm:$0xff]
    %v3270 = vld [vmem:[#allocation11 + $0x648] sm:$0xff]
    %v3271 = vld [vmem:[#allocation11 + $0x650] sm:$0xff]
    %v3272 = vld [vmem:[#allocation11 + $0x658] sm:$0xff]
    %v3273 = vld [vmem:[#allocation11 + $0x660] sm:$0xff]
    %v3274 = vld [vmem:[#allocation11 + $0x668] sm:$0xff]
    %v3275 = vld [vmem:[#allocation11 + $0x670] sm:$0xff]
    %v3276 = vld [vmem:[#allocation11 + $0x678] sm:$0xff]
    %v3277 = vld [vmem:[#allocation11 + $0x680] sm:$0xff]
    %v3278 = vld [vmem:[#allocation11 + $0x688] sm:$0xff]
    %v3279 = vld [vmem:[#allocation11 + $0x690] sm:$0xff]
    %v3280 = vld [vmem:[#allocation11 + $0x698] sm:$0xff]
    %v3281 = vld [vmem:[#allocation11 + $0x6a0] sm:$0xff]
    %v3282 = vld [vmem:[#allocation11 + $0x6a8] sm:$0xff]
    %v3283 = vld [vmem:[#allocation11 + $0x6b0] sm:$0xff]
    %v3284 = vld [vmem:[#allocation11 + $0x6b8] sm:$0xff]
    %v3285 = vld [vmem:[#allocation11 + $0x6c0] sm:$0xff]
    %v3286 = vld [vmem:[#allocation11 + $0x6c8] sm:$0xff]
    %v3287 = vld [vmem:[#allocation11 + $0x6d0] sm:$0xff]
    %v3288 = vld [vmem:[#allocation11 + $0x6d8] sm:$0xff]
    %v3289 = vld [vmem:[#allocation11 + $0x6e0] sm:$0xff]
    %v3290 = vld [vmem:[#allocation11 + $0x6e8] sm:$0xff]
    %v3291 = vld [vmem:[#allocation11 + $0x6f0] sm:$0xff]
    %v3292 = vld [vmem:[#allocation11 + $0x6f8] sm:$0xff]
    %v3293 = vld [vmem:[#allocation11 + $0x700] sm:$0xff]
    %v3294 = vld [vmem:[#allocation11 + $0x708] sm:$0xff]
    %v3295 = vld [vmem:[#allocation11 + $0x710] sm:$0xff]
    %v3296 = vld [vmem:[#allocation11 + $0x718] sm:$0xff]
    %v3297 = vld [vmem:[#allocation11 + $0x720] sm:$0xff]
    %v3298 = vld [vmem:[#allocation11 + $0x728] sm:$0xff]
    %v3299 = vld [vmem:[#allocation11 + $0x730] sm:$0xff]
    %v3300 = vld [vmem:[#allocation11 + $0x738] sm:$0xff]
    %v3301 = vld [vmem:[#allocation11 + $0x740] sm:$0xff]
    %v3302 = vld [vmem:[#allocation11 + $0x748] sm:$0xff]
    %v3303 = vld [vmem:[#allocation11 + $0x750] sm:$0xff]
    %v3304 = vld [vmem:[#allocation11 + $0x758] sm:$0xff]
    %v3305 = vld [vmem:[#allocation11 + $0x760] sm:$0xff]
    %v3306 = vld [vmem:[#allocation11 + $0x768] sm:$0xff]
    %v3307 = vld [vmem:[#allocation11 + $0x770] sm:$0xff]
    %v3308 = vld [vmem:[#allocation11 + $0x778] sm:$0xff]
    %v3309 = vld [vmem:[#allocation11 + $0x780] sm:$0xff]
    %v3310 = vld [vmem:[#allocation11 + $0x788] sm:$0xff]
    %v3311 = vld [vmem:[#allocation11 + $0x790] sm:$0xff]
    %v3312 = vld [vmem:[#allocation11 + $0x798] sm:$0xff]
    %v3313 = vld [vmem:[#allocation11 + $0x7a0] sm:$0xff]
    %v3314 = vld [vmem:[#allocation11 + $0x7a8] sm:$0xff]
    %v3315 = vld [vmem:[#allocation11 + $0x7b0] sm:$0xff]
    %v3316 = vld [vmem:[#allocation11 + $0x7b8] sm:$0xff]
    %v3317 = vld [vmem:[#allocation11 + $0x7c0] sm:$0xff]
    %v3318 = vld [vmem:[#allocation11 + $0x7c8] sm:$0xff]
    %v3319 = vld [vmem:[#allocation11 + $0x7d0] sm:$0xff]
    %v3320 = vld [vmem:[#allocation11 + $0x7d8] sm:$0xff]
    %v3321 = vld [vmem:[#allocation11 + $0x7e0] sm:$0xff]
    %v3322 = vld [vmem:[#allocation11 + $0x7e8] sm:$0xff]
    %v3323 = vld [vmem:[#allocation11 + $0x7f0] sm:$0xff]
    %v3324 = vld [vmem:[#allocation11 + $0x7f8] sm:$0xff]
    %v3325 = vld [vmem:[#allocation11 + $0x800] sm:$0xff]
    %v3326 = vld [vmem:[#allocation11 + $0x808] sm:$0xff]
    %v3327 = vld [vmem:[#allocation11 + $0x810] sm:$0xff]
    %v3328 = vld [vmem:[#allocation11 + $0x818] sm:$0xff]
    %v3329 = vld [vmem:[#allocation11 + $0x820] sm:$0xff]
    %v3330 = vld [vmem:[#allocation11 + $0x828] sm:$0xff]
    %v3331 = vld [vmem:[#allocation11 + $0x830] sm:$0xff]
    %v3332 = vld [vmem:[#allocation11 + $0x838] sm:$0xff]
    %v3333 = vld [vmem:[#allocation11 + $0x840] sm:$0xff]
    %v3334 = vld [vmem:[#allocation11 + $0x848] sm:$0xff]
    %v3335 = vld [vmem:[#allocation11 + $0x850] sm:$0xff]
    %v3336 = vld [vmem:[#allocation11 + $0x858] sm:$0xff]
    %v3337 = vld [vmem:[#allocation11 + $0x860] sm:$0xff]
    %v3338 = vld [vmem:[#allocation11 + $0x868] sm:$0xff]
    %v3339 = vld [vmem:[#allocation11 + $0x870] sm:$0xff]
    %v3340 = vld [vmem:[#allocation11 + $0x878] sm:$0xff]
    %v3341 = vld [vmem:[#allocation11 + $0x880] sm:$0xff]
    %v3342 = vld [vmem:[#allocation11 + $0x888] sm:$0xff]
    %v3343 = vld [vmem:[#allocation11 + $0x890] sm:$0xff]
    %v3344 = vld [vmem:[#allocation11 + $0x898] sm:$0xff]
    %v3345 = vld [vmem:[#allocation11 + $0x8a0] sm:$0xff]
    %v3346 = vld [vmem:[#allocation11 + $0x8a8] sm:$0xff]
    %v3347 = vld [vmem:[#allocation11 + $0x8b0] sm:$0xff]
    %v3348 = vld [vmem:[#allocation11 + $0x8b8] sm:$0xff]
    %v3349 = vld [vmem:[#allocation11 + $0x8c0] sm:$0xff]
    %v3350 = vld [vmem:[#allocation11 + $0x8c8] sm:$0xff]
    %v3351 = vld [vmem:[#allocation11 + $0x8d0] sm:$0xff]
    %v3352 = vld [vmem:[#allocation11 + $0x8d8] sm:$0xff]
    %v3353 = vld [vmem:[#allocation11 + $0x8e0] sm:$0xff]
    %v3354 = vld [vmem:[#allocation11 + $0x8e8] sm:$0xff]
    %v3355 = vld [vmem:[#allocation11 + $0x8f0] sm:$0xff]
    %v3356 = vld [vmem:[#allocation11 + $0x8f8] sm:$0xff]
    %v3357 = vld [vmem:[#allocation11 + $0x900] sm:$0xff]
    %v3358 = vld [vmem:[#allocation11 + $0x908] sm:$0xff]
    %v3359 = vld [vmem:[#allocation11 + $0x910] sm:$0xff]
    %v3360 = vld [vmem:[#allocation11 + $0x918] sm:$0xff]
    %v3361 = vld [vmem:[#allocation11 + $0x920] sm:$0xff]
    %v3362 = vld [vmem:[#allocation11 + $0x928] sm:$0xff]
    %v3363 = vld [vmem:[#allocation11 + $0x930] sm:$0xff]
    %v3364 = vld [vmem:[#allocation11 + $0x938] sm:$0xff]
    %v3365 = vld [vmem:[#allocation11 + $0x940] sm:$0xff]
    %v3366 = vld [vmem:[#allocation11 + $0x948] sm:$0xff]
    %v3367 = vld [vmem:[#allocation11 + $0x950] sm:$0xff]
    %v3368 = vld [vmem:[#allocation11 + $0x958] sm:$0xff]
    %v3369 = vld [vmem:[#allocation11 + $0x960] sm:$0xff]
    %v3370 = vld [vmem:[#allocation11 + $0x968] sm:$0xff]
    %v3371 = vld [vmem:[#allocation11 + $0x970] sm:$0xff]
    %v3372 = vld [vmem:[#allocation11 + $0x978] sm:$0xff]
    %v3373 = vld [vmem:[#allocation11 + $0x980] sm:$0xff]
    %v3374 = vld [vmem:[#allocation11 + $0x988] sm:$0xff]
    %v3375 = vld [vmem:[#allocation11 + $0x990] sm:$0xff]
    %v3376 = vld [vmem:[#allocation11 + $0x998] sm:$0xff]
    %v3377 = vld [vmem:[#allocation11 + $0x9a0] sm:$0xff]
    %v3378 = vld [vmem:[#allocation11 + $0x9a8] sm:$0xff]
    %v3379 = vld [vmem:[#allocation11 + $0x9b0] sm:$0xff]
    %v3380 = vld [vmem:[#allocation11 + $0x9b8] sm:$0xff]
    %v3381 = vld [vmem:[#allocation11 + $0x9c0] sm:$0xff]
    %v3382 = vld [vmem:[#allocation11 + $0x9c8] sm:$0xff]
    %v3383 = vld [vmem:[#allocation11 + $0x9d0] sm:$0xff]
    %v3384 = vld [vmem:[#allocation11 + $0x9d8] sm:$0xff]
    %v3385 = vld [vmem:[#allocation11 + $0x9e0] sm:$0xff]
    %v3386 = vld [vmem:[#allocation11 + $0x9e8] sm:$0xff]
    %v3387 = vld [vmem:[#allocation11 + $0x9f0] sm:$0xff]
    %v3388 = vld [vmem:[#allocation11 + $0x9f8] sm:$0xff]
    %v3389 = vld [vmem:[#allocation11 + $0xa00] sm:$0xff]
    %v3390 = vld [vmem:[#allocation11 + $0xa08] sm:$0xff]
    %v3391 = vld [vmem:[#allocation11 + $0xa10] sm:$0xff]
    %v3392 = vld [vmem:[#allocation11 + $0xa18] sm:$0xff]
    %v3393 = vld [vmem:[#allocation11 + $0xa20] sm:$0xff]
    %v3394 = vld [vmem:[#allocation11 + $0xa28] sm:$0xff]
    %v3395 = vld [vmem:[#allocation11 + $0xa30] sm:$0xff]
    %v3396 = vld [vmem:[#allocation11 + $0xa38] sm:$0xff]
    %v3397 = vld [vmem:[#allocation11 + $0xa40] sm:$0xff]
    %v3398 = vld [vmem:[#allocation11 + $0xa48] sm:$0xff]
    %v3399 = vld [vmem:[#allocation11 + $0xa50] sm:$0xff]
    %v3400 = vld [vmem:[#allocation11 + $0xa58] sm:$0xff]
    %v3401 = vld [vmem:[#allocation11 + $0xa60] sm:$0xff]
    %v3402 = vld [vmem:[#allocation11 + $0xa68] sm:$0xff]
    %v3403 = vld [vmem:[#allocation11 + $0xa70] sm:$0xff]
    %v3404 = vld [vmem:[#allocation11 + $0xa78] sm:$0xff]
    %v3405 = vld [vmem:[#allocation11 + $0xa80] sm:$0xff]
    %v3406 = vld [vmem:[#allocation11 + $0xa88] sm:$0xff]
    %v3407 = vld [vmem:[#allocation11 + $0xa90] sm:$0xff]
    %v3408 = vld [vmem:[#allocation11 + $0xa98] sm:$0xff]
    %v3409 = vld [vmem:[#allocation11 + $0xaa0] sm:$0xff]
    %v3410 = vld [vmem:[#allocation11 + $0xaa8] sm:$0xff]
    %v3411 = vld [vmem:[#allocation11 + $0xab0] sm:$0xff]
    %v3412 = vld [vmem:[#allocation11 + $0xab8] sm:$0xff]
    %v3413 = vld [vmem:[#allocation11 + $0xac0] sm:$0xff]
    %v3414 = vld [vmem:[#allocation11 + $0xac8] sm:$0xff]
    %v3415 = vld [vmem:[#allocation11 + $0xad0] sm:$0xff]
    %v3416 = vld [vmem:[#allocation11 + $0xad8] sm:$0xff]
    %v3417 = vld [vmem:[#allocation11 + $0xae0] sm:$0xff]
    %v3418 = vld [vmem:[#allocation11 + $0xae8] sm:$0xff]
    %v3419 = vld [vmem:[#allocation11 + $0xaf0] sm:$0xff]
    %v3420 = vld [vmem:[#allocation11 + $0xaf8] sm:$0xff]
    %v3421 = vld [vmem:[#allocation11 + $0xb00] sm:$0xff]
    %v3422 = vld [vmem:[#allocation11 + $0xb08] sm:$0xff]
    %v3423 = vld [vmem:[#allocation11 + $0xb10] sm:$0xff]
    %v3424 = vld [vmem:[#allocation11 + $0xb18] sm:$0xff]
    %v3425 = vld [vmem:[#allocation11 + $0xb20] sm:$0xff]
    %v3426 = vld [vmem:[#allocation11 + $0xb28] sm:$0xff]
    %v3427 = vld [vmem:[#allocation11 + $0xb30] sm:$0xff]
    %v3428 = vld [vmem:[#allocation11 + $0xb38] sm:$0xff]
    %v3429 = vld [vmem:[#allocation11 + $0xb40] sm:$0xff]
    %v3430 = vld [vmem:[#allocation11 + $0xb48] sm:$0xff]
    %v3431 = vld [vmem:[#allocation11 + $0xb50] sm:$0xff]
    %v3432 = vld [vmem:[#allocation11 + $0xb58] sm:$0xff]
    %v3433 = vld [vmem:[#allocation11 + $0xb60] sm:$0xff]
    %v3434 = vld [vmem:[#allocation11 + $0xb68] sm:$0xff]
    %v3435 = vld [vmem:[#allocation11 + $0xb70] sm:$0xff]
    %v3436 = vld [vmem:[#allocation11 + $0xb78] sm:$0xff]
    %v3437 = vld [vmem:[#allocation11 + $0xb80] sm:$0xff]
    %v3438 = vld [vmem:[#allocation11 + $0xb88] sm:$0xff]
    %v3439 = vld [vmem:[#allocation11 + $0xb90] sm:$0xff]
    %v3440 = vld [vmem:[#allocation11 + $0xb98] sm:$0xff]
    %v3441 = vld [vmem:[#allocation11 + $0xba0] sm:$0xff]
    %v3442 = vld [vmem:[#allocation11 + $0xba8] sm:$0xff]
    %v3443 = vld [vmem:[#allocation11 + $0xbb0] sm:$0xff]
    %v3444 = vld [vmem:[#allocation11 + $0xbb8] sm:$0xff]
    %v3445 = vld [vmem:[#allocation11 + $0xbc0] sm:$0xff]
    %v3446 = vld [vmem:[#allocation11 + $0xbc8] sm:$0xff]
    %v3447 = vld [vmem:[#allocation11 + $0xbd0] sm:$0xff]
    %v3448 = vld [vmem:[#allocation11 + $0xbd8] sm:$0xff]
    %v3449 = vld [vmem:[#allocation11 + $0xbe0] sm:$0xff]
    %v3450 = vld [vmem:[#allocation11 + $0xbe8] sm:$0xff]
    %v3451 = vld [vmem:[#allocation11 + $0xbf0] sm:$0xff]
    %v3452 = vld [vmem:[#allocation11 + $0xbf8] sm:$0xff]
    %v3453 = vunpack.c.0.s8 %v3197
    %v3454 = vunpack.c.0.s8 %v3198
    %v3455 = vunpack.c.0.s8 %v3199
    %v3456 = vunpack.c.0.s8 %v3200
    %v3457 = vunpack.c.0.s8 %v3201
    %v3458 = vunpack.c.0.s8 %v3202
    %v3459 = vunpack.c.0.s8 %v3203
    %v3460 = vunpack.c.0.s8 %v3204
    %v3461 = vunpack.c.1.s8 %v3197
    %v3462 = vunpack.c.1.s8 %v3198
    %v3463 = vunpack.c.1.s8 %v3199
    %v3464 = vunpack.c.1.s8 %v3200
    %v3465 = vunpack.c.1.s8 %v3201
    %v3466 = vunpack.c.1.s8 %v3202
    %v3467 = vunpack.c.1.s8 %v3203
    %v3468 = vunpack.c.1.s8 %v3204
    %v3469 = vunpack.c.2.s8 %v3197
    %v3470 = vunpack.c.2.s8 %v3198
    %v3471 = vunpack.c.2.s8 %v3199
    %v3472 = vunpack.c.2.s8 %v3200
    %v3473 = vunpack.c.2.s8 %v3201
    %v3474 = vunpack.c.2.s8 %v3202
    %v3475 = vunpack.c.2.s8 %v3203
    %v3476 = vunpack.c.2.s8 %v3204
    %v3477 = vunpack.c.3.s8 %v3197
    %v3478 = vunpack.c.3.s8 %v3198
    %v3479 = vunpack.c.3.s8 %v3199
    %v3480 = vunpack.c.3.s8 %v3200
    %v3481 = vunpack.c.3.s8 %v3201
    %v3482 = vunpack.c.3.s8 %v3202
    %v3483 = vunpack.c.3.s8 %v3203
    %v3484 = vunpack.c.3.s8 %v3204
    %v3485 = vunpack.c.0.s8 %v3205
    %v3486 = vunpack.c.0.s8 %v3206
    %v3487 = vunpack.c.0.s8 %v3207
    %v3488 = vunpack.c.0.s8 %v3208
    %v3489 = vunpack.c.0.s8 %v3209
    %v3490 = vunpack.c.0.s8 %v3210
    %v3491 = vunpack.c.0.s8 %v3211
    %v3492 = vunpack.c.0.s8 %v3212
    %v3493 = vunpack.c.1.s8 %v3205
    %v3494 = vunpack.c.1.s8 %v3206
    %v3495 = vunpack.c.1.s8 %v3207
    %v3496 = vunpack.c.1.s8 %v3208
    %v3497 = vunpack.c.1.s8 %v3209
    %v3498 = vunpack.c.1.s8 %v3210
    %v3499 = vunpack.c.1.s8 %v3211
    %v3500 = vunpack.c.1.s8 %v3212
    %v3501 = vunpack.c.2.s8 %v3205
    %v3502 = vunpack.c.2.s8 %v3206
    %v3503 = vunpack.c.2.s8 %v3207
    %v3504 = vunpack.c.2.s8 %v3208
    %v3505 = vunpack.c.2.s8 %v3209
    %v3506 = vunpack.c.2.s8 %v3210
    %v3507 = vunpack.c.2.s8 %v3211
    %v3508 = vunpack.c.2.s8 %v3212
    %v3509 = vunpack.c.3.s8 %v3205
    %v3510 = vunpack.c.3.s8 %v3206
    %v3511 = vunpack.c.3.s8 %v3207
    %v3512 = vunpack.c.3.s8 %v3208
    %v3513 = vunpack.c.3.s8 %v3209
    %v3514 = vunpack.c.3.s8 %v3210
    %v3515 = vunpack.c.3.s8 %v3211
    %v3516 = vunpack.c.3.s8 %v3212
    %v3517 = vunpack.c.0.s8 %v3213
    %v3518 = vunpack.c.0.s8 %v3214
    %v3519 = vunpack.c.0.s8 %v3215
    %v3520 = vunpack.c.0.s8 %v3216
    %v3521 = vunpack.c.0.s8 %v3217
    %v3522 = vunpack.c.0.s8 %v3218
    %v3523 = vunpack.c.0.s8 %v3219
    %v3524 = vunpack.c.0.s8 %v3220
    %v3525 = vunpack.c.1.s8 %v3213
    %v3526 = vunpack.c.1.s8 %v3214
    %v3527 = vunpack.c.1.s8 %v3215
    %v3528 = vunpack.c.1.s8 %v3216
    %v3529 = vunpack.c.1.s8 %v3217
    %v3530 = vunpack.c.1.s8 %v3218
    %v3531 = vunpack.c.1.s8 %v3219
    %v3532 = vunpack.c.1.s8 %v3220
    %v3533 = vunpack.c.2.s8 %v3213
    %v3534 = vunpack.c.2.s8 %v3214
    %v3535 = vunpack.c.2.s8 %v3215
    %v3536 = vunpack.c.2.s8 %v3216
    %v3537 = vunpack.c.2.s8 %v3217
    %v3538 = vunpack.c.2.s8 %v3218
    %v3539 = vunpack.c.2.s8 %v3219
    %v3540 = vunpack.c.2.s8 %v3220
    %v3541 = vunpack.c.3.s8 %v3213
    %v3542 = vunpack.c.3.s8 %v3214
    %v3543 = vunpack.c.3.s8 %v3215
    %v3544 = vunpack.c.3.s8 %v3216
    %v3545 = vunpack.c.3.s8 %v3217
    %v3546 = vunpack.c.3.s8 %v3218
    %v3547 = vunpack.c.3.s8 %v3219
    %v3548 = vunpack.c.3.s8 %v3220
    %v3549 = vunpack.c.0.s8 %v3221
    %v3550 = vunpack.c.0.s8 %v3222
    %v3551 = vunpack.c.0.s8 %v3223
    %v3552 = vunpack.c.0.s8 %v3224
    %v3553 = vunpack.c.0.s8 %v3225
    %v3554 = vunpack.c.0.s8 %v3226
    %v3555 = vunpack.c.0.s8 %v3227
    %v3556 = vunpack.c.0.s8 %v3228
    %v3557 = vunpack.c.1.s8 %v3221
    %v3558 = vunpack.c.1.s8 %v3222
    %v3559 = vunpack.c.1.s8 %v3223
    %v3560 = vunpack.c.1.s8 %v3224
    %v3561 = vunpack.c.1.s8 %v3225
    %v3562 = vunpack.c.1.s8 %v3226
    %v3563 = vunpack.c.1.s8 %v3227
    %v3564 = vunpack.c.1.s8 %v3228
    %v3565 = vunpack.c.2.s8 %v3221
    %v3566 = vunpack.c.2.s8 %v3222
    %v3567 = vunpack.c.2.s8 %v3223
    %v3568 = vunpack.c.2.s8 %v3224
    %v3569 = vunpack.c.2.s8 %v3225
    %v3570 = vunpack.c.2.s8 %v3226
    %v3571 = vunpack.c.2.s8 %v3227
    %v3572 = vunpack.c.2.s8 %v3228
    %v3573 = vunpack.c.3.s8 %v3221
    %v3574 = vunpack.c.3.s8 %v3222
    %v3575 = vunpack.c.3.s8 %v3223
    %v3576 = vunpack.c.3.s8 %v3224
    %v3577 = vunpack.c.3.s8 %v3225
    %v3578 = vunpack.c.3.s8 %v3226
    %v3579 = vunpack.c.3.s8 %v3227
    %v3580 = vunpack.c.3.s8 %v3228
    %v3581 = vunpack.c.0.s8 %v3229
    %v3582 = vunpack.c.0.s8 %v3230
    %v3583 = vunpack.c.0.s8 %v3231
    %v3584 = vunpack.c.0.s8 %v3232
    %v3585 = vunpack.c.0.s8 %v3233
    %v3586 = vunpack.c.0.s8 %v3234
    %v3587 = vunpack.c.0.s8 %v3235
    %v3588 = vunpack.c.0.s8 %v3236
    %v3589 = vunpack.c.1.s8 %v3229
    %v3590 = vunpack.c.1.s8 %v3230
    %v3591 = vunpack.c.1.s8 %v3231
    %v3592 = vunpack.c.1.s8 %v3232
    %v3593 = vunpack.c.1.s8 %v3233
    %v3594 = vunpack.c.1.s8 %v3234
    %v3595 = vunpack.c.1.s8 %v3235
    %v3596 = vunpack.c.1.s8 %v3236
    %v3597 = vunpack.c.2.s8 %v3229
    %v3598 = vunpack.c.2.s8 %v3230
    %v3599 = vunpack.c.2.s8 %v3231
    %v3600 = vunpack.c.2.s8 %v3232
    %v3601 = vunpack.c.2.s8 %v3233
    %v3602 = vunpack.c.2.s8 %v3234
    %v3603 = vunpack.c.2.s8 %v3235
    %v3604 = vunpack.c.2.s8 %v3236
    %v3605 = vunpack.c.3.s8 %v3229
    %v3606 = vunpack.c.3.s8 %v3230
    %v3607 = vunpack.c.3.s8 %v3231
    %v3608 = vunpack.c.3.s8 %v3232
    %v3609 = vunpack.c.3.s8 %v3233
    %v3610 = vunpack.c.3.s8 %v3234
    %v3611 = vunpack.c.3.s8 %v3235
    %v3612 = vunpack.c.3.s8 %v3236
    %v3613 = vunpack.c.0.s8 %v3237
    %v3614 = vunpack.c.0.s8 %v3238
    %v3615 = vunpack.c.0.s8 %v3239
    %v3616 = vunpack.c.0.s8 %v3240
    %v3617 = vunpack.c.0.s8 %v3241
    %v3618 = vunpack.c.0.s8 %v3242
    %v3619 = vunpack.c.0.s8 %v3243
    %v3620 = vunpack.c.0.s8 %v3244
    %v3621 = vunpack.c.1.s8 %v3237
    %v3622 = vunpack.c.1.s8 %v3238
    %v3623 = vunpack.c.1.s8 %v3239
    %v3624 = vunpack.c.1.s8 %v3240
    %v3625 = vunpack.c.1.s8 %v3241
    %v3626 = vunpack.c.1.s8 %v3242
    %v3627 = vunpack.c.1.s8 %v3243
    %v3628 = vunpack.c.1.s8 %v3244
    %v3629 = vunpack.c.2.s8 %v3237
    %v3630 = vunpack.c.2.s8 %v3238
    %v3631 = vunpack.c.2.s8 %v3239
    %v3632 = vunpack.c.2.s8 %v3240
    %v3633 = vunpack.c.2.s8 %v3241
    %v3634 = vunpack.c.2.s8 %v3242
    %v3635 = vunpack.c.2.s8 %v3243
    %v3636 = vunpack.c.2.s8 %v3244
    %v3637 = vunpack.c.3.s8 %v3237
    %v3638 = vunpack.c.3.s8 %v3238
    %v3639 = vunpack.c.3.s8 %v3239
    %v3640 = vunpack.c.3.s8 %v3240
    %v3641 = vunpack.c.3.s8 %v3241
    %v3642 = vunpack.c.3.s8 %v3242
    %v3643 = vunpack.c.3.s8 %v3243
    %v3644 = vunpack.c.3.s8 %v3244
    %v3645 = vunpack.c.0.s8 %v3245
    %v3646 = vunpack.c.0.s8 %v3246
    %v3647 = vunpack.c.0.s8 %v3247
    %v3648 = vunpack.c.0.s8 %v3248
    %v3649 = vunpack.c.0.s8 %v3249
    %v3650 = vunpack.c.0.s8 %v3250
    %v3651 = vunpack.c.0.s8 %v3251
    %v3652 = vunpack.c.0.s8 %v3252
    %v3653 = vunpack.c.1.s8 %v3245
    %v3654 = vunpack.c.1.s8 %v3246
    %v3655 = vunpack.c.1.s8 %v3247
    %v3656 = vunpack.c.1.s8 %v3248
    %v3657 = vunpack.c.1.s8 %v3249
    %v3658 = vunpack.c.1.s8 %v3250
    %v3659 = vunpack.c.1.s8 %v3251
    %v3660 = vunpack.c.1.s8 %v3252
    %v3661 = vunpack.c.2.s8 %v3245
    %v3662 = vunpack.c.2.s8 %v3246
    %v3663 = vunpack.c.2.s8 %v3247
    %v3664 = vunpack.c.2.s8 %v3248
    %v3665 = vunpack.c.2.s8 %v3249
    %v3666 = vunpack.c.2.s8 %v3250
    %v3667 = vunpack.c.2.s8 %v3251
    %v3668 = vunpack.c.2.s8 %v3252
    %v3669 = vunpack.c.3.s8 %v3245
    %v3670 = vunpack.c.3.s8 %v3246
    %v3671 = vunpack.c.3.s8 %v3247
    %v3672 = vunpack.c.3.s8 %v3248
    %v3673 = vunpack.c.3.s8 %v3249
    %v3674 = vunpack.c.3.s8 %v3250
    %v3675 = vunpack.c.3.s8 %v3251
    %v3676 = vunpack.c.3.s8 %v3252
    %v3677 = vunpack.c.0.s8 %v3253
    %v3678 = vunpack.c.0.s8 %v3254
    %v3679 = vunpack.c.0.s8 %v3255
    %v3680 = vunpack.c.0.s8 %v3256
    %v3681 = vunpack.c.0.s8 %v3257
    %v3682 = vunpack.c.0.s8 %v3258
    %v3683 = vunpack.c.0.s8 %v3259
    %v3684 = vunpack.c.0.s8 %v3260
    %v3685 = vunpack.c.1.s8 %v3253
    %v3686 = vunpack.c.1.s8 %v3254
    %v3687 = vunpack.c.1.s8 %v3255
    %v3688 = vunpack.c.1.s8 %v3256
    %v3689 = vunpack.c.1.s8 %v3257
    %v3690 = vunpack.c.1.s8 %v3258
    %v3691 = vunpack.c.1.s8 %v3259
    %v3692 = vunpack.c.1.s8 %v3260
    %v3693 = vunpack.c.2.s8 %v3253
    %v3694 = vunpack.c.2.s8 %v3254
    %v3695 = vunpack.c.2.s8 %v3255
    %v3696 = vunpack.c.2.s8 %v3256
    %v3697 = vunpack.c.2.s8 %v3257
    %v3698 = vunpack.c.2.s8 %v3258
    %v3699 = vunpack.c.2.s8 %v3259
    %v3700 = vunpack.c.2.s8 %v3260
    %v3701 = vunpack.c.3.s8 %v3253
    %v3702 = vunpack.c.3.s8 %v3254
    %v3703 = vunpack.c.3.s8 %v3255
    %v3704 = vunpack.c.3.s8 %v3256
    %v3705 = vunpack.c.3.s8 %v3257
    %v3706 = vunpack.c.3.s8 %v3258
    %v3707 = vunpack.c.3.s8 %v3259
    %v3708 = vunpack.c.3.s8 %v3260
    %v3709 = vunpack.c.0.s8 %v3261
    %v3710 = vunpack.c.0.s8 %v3262
    %v3711 = vunpack.c.0.s8 %v3263
    %v3712 = vunpack.c.0.s8 %v3264
    %v3713 = vunpack.c.0.s8 %v3265
    %v3714 = vunpack.c.0.s8 %v3266
    %v3715 = vunpack.c.0.s8 %v3267
    %v3716 = vunpack.c.0.s8 %v3268
    %v3717 = vunpack.c.1.s8 %v3261
    %v3718 = vunpack.c.1.s8 %v3262
    %v3719 = vunpack.c.1.s8 %v3263
    %v3720 = vunpack.c.1.s8 %v3264
    %v3721 = vunpack.c.1.s8 %v3265
    %v3722 = vunpack.c.1.s8 %v3266
    %v3723 = vunpack.c.1.s8 %v3267
    %v3724 = vunpack.c.1.s8 %v3268
    %v3725 = vunpack.c.2.s8 %v3261
    %v3726 = vunpack.c.2.s8 %v3262
    %v3727 = vunpack.c.2.s8 %v3263
    %v3728 = vunpack.c.2.s8 %v3264
    %v3729 = vunpack.c.2.s8 %v3265
    %v3730 = vunpack.c.2.s8 %v3266
    %v3731 = vunpack.c.2.s8 %v3267
    %v3732 = vunpack.c.2.s8 %v3268
    %v3733 = vunpack.c.3.s8 %v3261
    %v3734 = vunpack.c.3.s8 %v3262
    %v3735 = vunpack.c.3.s8 %v3263
    %v3736 = vunpack.c.3.s8 %v3264
    %v3737 = vunpack.c.3.s8 %v3265
    %v3738 = vunpack.c.3.s8 %v3266
    %v3739 = vunpack.c.3.s8 %v3267
    %v3740 = vunpack.c.3.s8 %v3268
    %v3741 = vunpack.c.0.s8 %v3269
    %v3742 = vunpack.c.0.s8 %v3270
    %v3743 = vunpack.c.0.s8 %v3271
    %v3744 = vunpack.c.0.s8 %v3272
    %v3745 = vunpack.c.0.s8 %v3273
    %v3746 = vunpack.c.0.s8 %v3274
    %v3747 = vunpack.c.0.s8 %v3275
    %v3748 = vunpack.c.0.s8 %v3276
    %v3749 = vunpack.c.1.s8 %v3269
    %v3750 = vunpack.c.1.s8 %v3270
    %v3751 = vunpack.c.1.s8 %v3271
    %v3752 = vunpack.c.1.s8 %v3272
    %v3753 = vunpack.c.1.s8 %v3273
    %v3754 = vunpack.c.1.s8 %v3274
    %v3755 = vunpack.c.1.s8 %v3275
    %v3756 = vunpack.c.1.s8 %v3276
    %v3757 = vunpack.c.2.s8 %v3269
    %v3758 = vunpack.c.2.s8 %v3270
    %v3759 = vunpack.c.2.s8 %v3271
    %v3760 = vunpack.c.2.s8 %v3272
    %v3761 = vunpack.c.2.s8 %v3273
    %v3762 = vunpack.c.2.s8 %v3274
    %v3763 = vunpack.c.2.s8 %v3275
    %v3764 = vunpack.c.2.s8 %v3276
    %v3765 = vunpack.c.3.s8 %v3269
    %v3766 = vunpack.c.3.s8 %v3270
    %v3767 = vunpack.c.3.s8 %v3271
    %v3768 = vunpack.c.3.s8 %v3272
    %v3769 = vunpack.c.3.s8 %v3273
    %v3770 = vunpack.c.3.s8 %v3274
    %v3771 = vunpack.c.3.s8 %v3275
    %v3772 = vunpack.c.3.s8 %v3276
    %v3773 = vunpack.c.0.s8 %v3277
    %v3774 = vunpack.c.0.s8 %v3278
    %v3775 = vunpack.c.0.s8 %v3279
    %v3776 = vunpack.c.0.s8 %v3280
    %v3777 = vunpack.c.0.s8 %v3281
    %v3778 = vunpack.c.0.s8 %v3282
    %v3779 = vunpack.c.0.s8 %v3283
    %v3780 = vunpack.c.0.s8 %v3284
    %v3781 = vunpack.c.1.s8 %v3277
    %v3782 = vunpack.c.1.s8 %v3278
    %v3783 = vunpack.c.1.s8 %v3279
    %v3784 = vunpack.c.1.s8 %v3280
    %v3785 = vunpack.c.1.s8 %v3281
    %v3786 = vunpack.c.1.s8 %v3282
    %v3787 = vunpack.c.1.s8 %v3283
    %v3788 = vunpack.c.1.s8 %v3284
    %v3789 = vunpack.c.2.s8 %v3277
    %v3790 = vunpack.c.2.s8 %v3278
    %v3791 = vunpack.c.2.s8 %v3279
    %v3792 = vunpack.c.2.s8 %v3280
    %v3793 = vunpack.c.2.s8 %v3281
    %v3794 = vunpack.c.2.s8 %v3282
    %v3795 = vunpack.c.2.s8 %v3283
    %v3796 = vunpack.c.2.s8 %v3284
    %v3797 = vunpack.c.3.s8 %v3277
    %v3798 = vunpack.c.3.s8 %v3278
    %v3799 = vunpack.c.3.s8 %v3279
    %v3800 = vunpack.c.3.s8 %v3280
    %v3801 = vunpack.c.3.s8 %v3281
    %v3802 = vunpack.c.3.s8 %v3282
    %v3803 = vunpack.c.3.s8 %v3283
    %v3804 = vunpack.c.3.s8 %v3284
    %v3805 = vunpack.c.0.s8 %v3285
    %v3806 = vunpack.c.0.s8 %v3286
    %v3807 = vunpack.c.0.s8 %v3287
    %v3808 = vunpack.c.0.s8 %v3288
    %v3809 = vunpack.c.0.s8 %v3289
    %v3810 = vunpack.c.0.s8 %v3290
    %v3811 = vunpack.c.0.s8 %v3291
    %v3812 = vunpack.c.0.s8 %v3292
    %v3813 = vunpack.c.1.s8 %v3285
    %v3814 = vunpack.c.1.s8 %v3286
    %v3815 = vunpack.c.1.s8 %v3287
    %v3816 = vunpack.c.1.s8 %v3288
    %v3817 = vunpack.c.1.s8 %v3289
    %v3818 = vunpack.c.1.s8 %v3290
    %v3819 = vunpack.c.1.s8 %v3291
    %v3820 = vunpack.c.1.s8 %v3292
    %v3821 = vunpack.c.2.s8 %v3285
    %v3822 = vunpack.c.2.s8 %v3286
    %v3823 = vunpack.c.2.s8 %v3287
    %v3824 = vunpack.c.2.s8 %v3288
    %v3825 = vunpack.c.2.s8 %v3289
    %v3826 = vunpack.c.2.s8 %v3290
    %v3827 = vunpack.c.2.s8 %v3291
    %v3828 = vunpack.c.2.s8 %v3292
    %v3829 = vunpack.c.3.s8 %v3285
    %v3830 = vunpack.c.3.s8 %v3286
    %v3831 = vunpack.c.3.s8 %v3287
    %v3832 = vunpack.c.3.s8 %v3288
    %v3833 = vunpack.c.3.s8 %v3289
    %v3834 = vunpack.c.3.s8 %v3290
    %v3835 = vunpack.c.3.s8 %v3291
    %v3836 = vunpack.c.3.s8 %v3292
    %v3837 = vunpack.c.0.s8 %v3293
    %v3838 = vunpack.c.0.s8 %v3294
    %v3839 = vunpack.c.0.s8 %v3295
    %v3840 = vunpack.c.0.s8 %v3296
    %v3841 = vunpack.c.0.s8 %v3297
    %v3842 = vunpack.c.0.s8 %v3298
    %v3843 = vunpack.c.0.s8 %v3299
    %v3844 = vunpack.c.0.s8 %v3300
    %v3845 = vunpack.c.1.s8 %v3293
    %v3846 = vunpack.c.1.s8 %v3294
    %v3847 = vunpack.c.1.s8 %v3295
    %v3848 = vunpack.c.1.s8 %v3296
    %v3849 = vunpack.c.1.s8 %v3297
    %v3850 = vunpack.c.1.s8 %v3298
    %v3851 = vunpack.c.1.s8 %v3299
    %v3852 = vunpack.c.1.s8 %v3300
    %v3853 = vunpack.c.2.s8 %v3293
    %v3854 = vunpack.c.2.s8 %v3294
    %v3855 = vunpack.c.2.s8 %v3295
    %v3856 = vunpack.c.2.s8 %v3296
    %v3857 = vunpack.c.2.s8 %v3297
    %v3858 = vunpack.c.2.s8 %v3298
    %v3859 = vunpack.c.2.s8 %v3299
    %v3860 = vunpack.c.2.s8 %v3300
    %v3861 = vunpack.c.3.s8 %v3293
    %v3862 = vunpack.c.3.s8 %v3294
    %v3863 = vunpack.c.3.s8 %v3295
    %v3864 = vunpack.c.3.s8 %v3296
    %v3865 = vunpack.c.3.s8 %v3297
    %v3866 = vunpack.c.3.s8 %v3298
    %v3867 = vunpack.c.3.s8 %v3299
    %v3868 = vunpack.c.3.s8 %v3300
    %v3869 = vunpack.c.0.s8 %v3301
    %v3870 = vunpack.c.0.s8 %v3302
    %v3871 = vunpack.c.0.s8 %v3303
    %v3872 = vunpack.c.0.s8 %v3304
    %v3873 = vunpack.c.0.s8 %v3305
    %v3874 = vunpack.c.0.s8 %v3306
    %v3875 = vunpack.c.0.s8 %v3307
    %v3876 = vunpack.c.0.s8 %v3308
    %v3877 = vunpack.c.1.s8 %v3301
    %v3878 = vunpack.c.1.s8 %v3302
    %v3879 = vunpack.c.1.s8 %v3303
    %v3880 = vunpack.c.1.s8 %v3304
    %v3881 = vunpack.c.1.s8 %v3305
    %v3882 = vunpack.c.1.s8 %v3306
    %v3883 = vunpack.c.1.s8 %v3307
    %v3884 = vunpack.c.1.s8 %v3308
    %v3885 = vunpack.c.2.s8 %v3301
    %v3886 = vunpack.c.2.s8 %v3302
    %v3887 = vunpack.c.2.s8 %v3303
    %v3888 = vunpack.c.2.s8 %v3304
    %v3889 = vunpack.c.2.s8 %v3305
    %v3890 = vunpack.c.2.s8 %v3306
    %v3891 = vunpack.c.2.s8 %v3307
    %v3892 = vunpack.c.2.s8 %v3308
    %v3893 = vunpack.c.3.s8 %v3301
    %v3894 = vunpack.c.3.s8 %v3302
    %v3895 = vunpack.c.3.s8 %v3303
    %v3896 = vunpack.c.3.s8 %v3304
    %v3897 = vunpack.c.3.s8 %v3305
    %v3898 = vunpack.c.3.s8 %v3306
    %v3899 = vunpack.c.3.s8 %v3307
    %v3900 = vunpack.c.3.s8 %v3308
    %v3901 = vunpack.c.0.s8 %v3309
    %v3902 = vunpack.c.0.s8 %v3310
    %v3903 = vunpack.c.0.s8 %v3311
    %v3904 = vunpack.c.0.s8 %v3312
    %v3905 = vunpack.c.0.s8 %v3313
    %v3906 = vunpack.c.0.s8 %v3314
    %v3907 = vunpack.c.0.s8 %v3315
    %v3908 = vunpack.c.0.s8 %v3316
    %v3909 = vunpack.c.1.s8 %v3309
    %v3910 = vunpack.c.1.s8 %v3310
    %v3911 = vunpack.c.1.s8 %v3311
    %v3912 = vunpack.c.1.s8 %v3312
    %v3913 = vunpack.c.1.s8 %v3313
    %v3914 = vunpack.c.1.s8 %v3314
    %v3915 = vunpack.c.1.s8 %v3315
    %v3916 = vunpack.c.1.s8 %v3316
    %v3917 = vunpack.c.2.s8 %v3309
    %v3918 = vunpack.c.2.s8 %v3310
    %v3919 = vunpack.c.2.s8 %v3311
    %v3920 = vunpack.c.2.s8 %v3312
    %v3921 = vunpack.c.2.s8 %v3313
    %v3922 = vunpack.c.2.s8 %v3314
    %v3923 = vunpack.c.2.s8 %v3315
    %v3924 = vunpack.c.2.s8 %v3316
    %v3925 = vunpack.c.3.s8 %v3309
    %v3926 = vunpack.c.3.s8 %v3310
    %v3927 = vunpack.c.3.s8 %v3311
    %v3928 = vunpack.c.3.s8 %v3312
    %v3929 = vunpack.c.3.s8 %v3313
    %v3930 = vunpack.c.3.s8 %v3314
    %v3931 = vunpack.c.3.s8 %v3315
    %v3932 = vunpack.c.3.s8 %v3316
    %v3933 = vunpack.c.0.s8 %v3317
    %v3934 = vunpack.c.0.s8 %v3318
    %v3935 = vunpack.c.0.s8 %v3319
    %v3936 = vunpack.c.0.s8 %v3320
    %v3937 = vunpack.c.0.s8 %v3321
    %v3938 = vunpack.c.0.s8 %v3322
    %v3939 = vunpack.c.0.s8 %v3323
    %v3940 = vunpack.c.0.s8 %v3324
    %v3941 = vunpack.c.1.s8 %v3317
    %v3942 = vunpack.c.1.s8 %v3318
    %v3943 = vunpack.c.1.s8 %v3319
    %v3944 = vunpack.c.1.s8 %v3320
    %v3945 = vunpack.c.1.s8 %v3321
    %v3946 = vunpack.c.1.s8 %v3322
    %v3947 = vunpack.c.1.s8 %v3323
    %v3948 = vunpack.c.1.s8 %v3324
    %v3949 = vunpack.c.2.s8 %v3317
    %v3950 = vunpack.c.2.s8 %v3318
    %v3951 = vunpack.c.2.s8 %v3319
    %v3952 = vunpack.c.2.s8 %v3320
    %v3953 = vunpack.c.2.s8 %v3321
    %v3954 = vunpack.c.2.s8 %v3322
    %v3955 = vunpack.c.2.s8 %v3323
    %v3956 = vunpack.c.2.s8 %v3324
    %v3957 = vunpack.c.3.s8 %v3317
    %v3958 = vunpack.c.3.s8 %v3318
    %v3959 = vunpack.c.3.s8 %v3319
    %v3960 = vunpack.c.3.s8 %v3320
    %v3961 = vunpack.c.3.s8 %v3321
    %v3962 = vunpack.c.3.s8 %v3322
    %v3963 = vunpack.c.3.s8 %v3323
    %v3964 = vunpack.c.3.s8 %v3324
    %v3965 = vunpack.c.0.s8 %v3325
    %v3966 = vunpack.c.0.s8 %v3326
    %v3967 = vunpack.c.0.s8 %v3327
    %v3968 = vunpack.c.0.s8 %v3328
    %v3969 = vunpack.c.0.s8 %v3329
    %v3970 = vunpack.c.0.s8 %v3330
    %v3971 = vunpack.c.0.s8 %v3331
    %v3972 = vunpack.c.0.s8 %v3332
    %v3973 = vunpack.c.1.s8 %v3325
    %v3974 = vunpack.c.1.s8 %v3326
    %v3975 = vunpack.c.1.s8 %v3327
    %v3976 = vunpack.c.1.s8 %v3328
    %v3977 = vunpack.c.1.s8 %v3329
    %v3978 = vunpack.c.1.s8 %v3330
    %v3979 = vunpack.c.1.s8 %v3331
    %v3980 = vunpack.c.1.s8 %v3332
    %v3981 = vunpack.c.2.s8 %v3325
    %v3982 = vunpack.c.2.s8 %v3326
    %v3983 = vunpack.c.2.s8 %v3327
    %v3984 = vunpack.c.2.s8 %v3328
    %v3985 = vunpack.c.2.s8 %v3329
    %v3986 = vunpack.c.2.s8 %v3330
    %v3987 = vunpack.c.2.s8 %v3331
    %v3988 = vunpack.c.2.s8 %v3332
    %v3989 = vunpack.c.3.s8 %v3325
    %v3990 = vunpack.c.3.s8 %v3326
    %v3991 = vunpack.c.3.s8 %v3327
    %v3992 = vunpack.c.3.s8 %v3328
    %v3993 = vunpack.c.3.s8 %v3329
    %v3994 = vunpack.c.3.s8 %v3330
    %v3995 = vunpack.c.3.s8 %v3331
    %v3996 = vunpack.c.3.s8 %v3332
    %v3997 = vunpack.c.0.s8 %v3333
    %v3998 = vunpack.c.0.s8 %v3334
    %v3999 = vunpack.c.0.s8 %v3335
    %v4000 = vunpack.c.0.s8 %v3336
    %v4001 = vunpack.c.0.s8 %v3337
    %v4002 = vunpack.c.0.s8 %v3338
    %v4003 = vunpack.c.0.s8 %v3339
    %v4004 = vunpack.c.0.s8 %v3340
    %v4005 = vunpack.c.1.s8 %v3333
    %v4006 = vunpack.c.1.s8 %v3334
    %v4007 = vunpack.c.1.s8 %v3335
    %v4008 = vunpack.c.1.s8 %v3336
    %v4009 = vunpack.c.1.s8 %v3337
    %v4010 = vunpack.c.1.s8 %v3338
    %v4011 = vunpack.c.1.s8 %v3339
    %v4012 = vunpack.c.1.s8 %v3340
    %v4013 = vunpack.c.2.s8 %v3333
    %v4014 = vunpack.c.2.s8 %v3334
    %v4015 = vunpack.c.2.s8 %v3335
    %v4016 = vunpack.c.2.s8 %v3336
    %v4017 = vunpack.c.2.s8 %v3337
    %v4018 = vunpack.c.2.s8 %v3338
    %v4019 = vunpack.c.2.s8 %v3339
    %v4020 = vunpack.c.2.s8 %v3340
    %v4021 = vunpack.c.3.s8 %v3333
    %v4022 = vunpack.c.3.s8 %v3334
    %v4023 = vunpack.c.3.s8 %v3335
    %v4024 = vunpack.c.3.s8 %v3336
    %v4025 = vunpack.c.3.s8 %v3337
    %v4026 = vunpack.c.3.s8 %v3338
    %v4027 = vunpack.c.3.s8 %v3339
    %v4028 = vunpack.c.3.s8 %v3340
    %v4029 = vunpack.c.0.s8 %v3341
    %v4030 = vunpack.c.0.s8 %v3342
    %v4031 = vunpack.c.0.s8 %v3343
    %v4032 = vunpack.c.0.s8 %v3344
    %v4033 = vunpack.c.0.s8 %v3345
    %v4034 = vunpack.c.0.s8 %v3346
    %v4035 = vunpack.c.0.s8 %v3347
    %v4036 = vunpack.c.0.s8 %v3348
    %v4037 = vunpack.c.1.s8 %v3341
    %v4038 = vunpack.c.1.s8 %v3342
    %v4039 = vunpack.c.1.s8 %v3343
    %v4040 = vunpack.c.1.s8 %v3344
    %v4041 = vunpack.c.1.s8 %v3345
    %v4042 = vunpack.c.1.s8 %v3346
    %v4043 = vunpack.c.1.s8 %v3347
    %v4044 = vunpack.c.1.s8 %v3348
    %v4045 = vunpack.c.2.s8 %v3341
    %v4046 = vunpack.c.2.s8 %v3342
    %v4047 = vunpack.c.2.s8 %v3343
    %v4048 = vunpack.c.2.s8 %v3344
    %v4049 = vunpack.c.2.s8 %v3345
    %v4050 = vunpack.c.2.s8 %v3346
    %v4051 = vunpack.c.2.s8 %v3347
    %v4052 = vunpack.c.2.s8 %v3348
    %v4053 = vunpack.c.3.s8 %v3341
    %v4054 = vunpack.c.3.s8 %v3342
    %v4055 = vunpack.c.3.s8 %v3343
    %v4056 = vunpack.c.3.s8 %v3344
    %v4057 = vunpack.c.3.s8 %v3345
    %v4058 = vunpack.c.3.s8 %v3346
    %v4059 = vunpack.c.3.s8 %v3347
    %v4060 = vunpack.c.3.s8 %v3348
    %v4061 = vunpack.c.0.s8 %v3349
    %v4062 = vunpack.c.0.s8 %v3350
    %v4063 = vunpack.c.0.s8 %v3351
    %v4064 = vunpack.c.0.s8 %v3352
    %v4065 = vunpack.c.0.s8 %v3353
    %v4066 = vunpack.c.0.s8 %v3354
    %v4067 = vunpack.c.0.s8 %v3355
    %v4068 = vunpack.c.0.s8 %v3356
    %v4069 = vunpack.c.1.s8 %v3349
    %v4070 = vunpack.c.1.s8 %v3350
    %v4071 = vunpack.c.1.s8 %v3351
    %v4072 = vunpack.c.1.s8 %v3352
    %v4073 = vunpack.c.1.s8 %v3353
    %v4074 = vunpack.c.1.s8 %v3354
    %v4075 = vunpack.c.1.s8 %v3355
    %v4076 = vunpack.c.1.s8 %v3356
    %v4077 = vunpack.c.2.s8 %v3349
    %v4078 = vunpack.c.2.s8 %v3350
    %v4079 = vunpack.c.2.s8 %v3351
    %v4080 = vunpack.c.2.s8 %v3352
    %v4081 = vunpack.c.2.s8 %v3353
    %v4082 = vunpack.c.2.s8 %v3354
    %v4083 = vunpack.c.2.s8 %v3355
    %v4084 = vunpack.c.2.s8 %v3356
    %v4085 = vunpack.c.3.s8 %v3349
    %v4086 = vunpack.c.3.s8 %v3350
    %v4087 = vunpack.c.3.s8 %v3351
    %v4088 = vunpack.c.3.s8 %v3352
    %v4089 = vunpack.c.3.s8 %v3353
    %v4090 = vunpack.c.3.s8 %v3354
    %v4091 = vunpack.c.3.s8 %v3355
    %v4092 = vunpack.c.3.s8 %v3356
    %v4093 = vunpack.c.0.s8 %v3357
    %v4094 = vunpack.c.0.s8 %v3358
    %v4095 = vunpack.c.0.s8 %v3359
    %v4096 = vunpack.c.0.s8 %v3360
    %v4097 = vunpack.c.0.s8 %v3361
    %v4098 = vunpack.c.0.s8 %v3362
    %v4099 = vunpack.c.0.s8 %v3363
    %v4100 = vunpack.c.0.s8 %v3364
    %v4101 = vunpack.c.1.s8 %v3357
    %v4102 = vunpack.c.1.s8 %v3358
    %v4103 = vunpack.c.1.s8 %v3359
    %v4104 = vunpack.c.1.s8 %v3360
    %v4105 = vunpack.c.1.s8 %v3361
    %v4106 = vunpack.c.1.s8 %v3362
    %v4107 = vunpack.c.1.s8 %v3363
    %v4108 = vunpack.c.1.s8 %v3364
    %v4109 = vunpack.c.2.s8 %v3357
    %v4110 = vunpack.c.2.s8 %v3358
    %v4111 = vunpack.c.2.s8 %v3359
    %v4112 = vunpack.c.2.s8 %v3360
    %v4113 = vunpack.c.2.s8 %v3361
    %v4114 = vunpack.c.2.s8 %v3362
    %v4115 = vunpack.c.2.s8 %v3363
    %v4116 = vunpack.c.2.s8 %v3364
    %v4117 = vunpack.c.3.s8 %v3357
    %v4118 = vunpack.c.3.s8 %v3358
    %v4119 = vunpack.c.3.s8 %v3359
    %v4120 = vunpack.c.3.s8 %v3360
    %v4121 = vunpack.c.3.s8 %v3361
    %v4122 = vunpack.c.3.s8 %v3362
    %v4123 = vunpack.c.3.s8 %v3363
    %v4124 = vunpack.c.3.s8 %v3364
    %v4125 = vunpack.c.0.s8 %v3365
    %v4126 = vunpack.c.0.s8 %v3366
    %v4127 = vunpack.c.0.s8 %v3367
    %v4128 = vunpack.c.0.s8 %v3368
    %v4129 = vunpack.c.0.s8 %v3369
    %v4130 = vunpack.c.0.s8 %v3370
    %v4131 = vunpack.c.0.s8 %v3371
    %v4132 = vunpack.c.0.s8 %v3372
    %v4133 = vunpack.c.1.s8 %v3365
    %v4134 = vunpack.c.1.s8 %v3366
    %v4135 = vunpack.c.1.s8 %v3367
    %v4136 = vunpack.c.1.s8 %v3368
    %v4137 = vunpack.c.1.s8 %v3369
    %v4138 = vunpack.c.1.s8 %v3370
    %v4139 = vunpack.c.1.s8 %v3371
    %v4140 = vunpack.c.1.s8 %v3372
    %v4141 = vunpack.c.2.s8 %v3365
    %v4142 = vunpack.c.2.s8 %v3366
    %v4143 = vunpack.c.2.s8 %v3367
    %v4144 = vunpack.c.2.s8 %v3368
    %v4145 = vunpack.c.2.s8 %v3369
    %v4146 = vunpack.c.2.s8 %v3370
    %v4147 = vunpack.c.2.s8 %v3371
    %v4148 = vunpack.c.2.s8 %v3372
    %v4149 = vunpack.c.3.s8 %v3365
    %v4150 = vunpack.c.3.s8 %v3366
    %v4151 = vunpack.c.3.s8 %v3367
    %v4152 = vunpack.c.3.s8 %v3368
    %v4153 = vunpack.c.3.s8 %v3369
    %v4154 = vunpack.c.3.s8 %v3370
    %v4155 = vunpack.c.3.s8 %v3371
    %v4156 = vunpack.c.3.s8 %v3372
    %v4157 = vunpack.c.0.s8 %v3373
    %v4158 = vunpack.c.0.s8 %v3374
    %v4159 = vunpack.c.0.s8 %v3375
    %v4160 = vunpack.c.0.s8 %v3376
    %v4161 = vunpack.c.0.s8 %v3377
    %v4162 = vunpack.c.0.s8 %v3378
    %v4163 = vunpack.c.0.s8 %v3379
    %v4164 = vunpack.c.0.s8 %v3380
    %v4165 = vunpack.c.1.s8 %v3373
    %v4166 = vunpack.c.1.s8 %v3374
    %v4167 = vunpack.c.1.s8 %v3375
    %v4168 = vunpack.c.1.s8 %v3376
    %v4169 = vunpack.c.1.s8 %v3377
    %v4170 = vunpack.c.1.s8 %v3378
    %v4171 = vunpack.c.1.s8 %v3379
    %v4172 = vunpack.c.1.s8 %v3380
    %v4173 = vunpack.c.2.s8 %v3373
    %v4174 = vunpack.c.2.s8 %v3374
    %v4175 = vunpack.c.2.s8 %v3375
    %v4176 = vunpack.c.2.s8 %v3376
    %v4177 = vunpack.c.2.s8 %v3377
    %v4178 = vunpack.c.2.s8 %v3378
    %v4179 = vunpack.c.2.s8 %v3379
    %v4180 = vunpack.c.2.s8 %v3380
    %v4181 = vunpack.c.3.s8 %v3373
    %v4182 = vunpack.c.3.s8 %v3374
    %v4183 = vunpack.c.3.s8 %v3375
    %v4184 = vunpack.c.3.s8 %v3376
    %v4185 = vunpack.c.3.s8 %v3377
    %v4186 = vunpack.c.3.s8 %v3378
    %v4187 = vunpack.c.3.s8 %v3379
    %v4188 = vunpack.c.3.s8 %v3380
    %v4189 = vunpack.c.0.s8 %v3381
    %v4190 = vunpack.c.0.s8 %v3382
    %v4191 = vunpack.c.0.s8 %v3383
    %v4192 = vunpack.c.0.s8 %v3384
    %v4193 = vunpack.c.0.s8 %v3385
    %v4194 = vunpack.c.0.s8 %v3386
    %v4195 = vunpack.c.0.s8 %v3387
    %v4196 = vunpack.c.0.s8 %v3388
    %v4197 = vunpack.c.1.s8 %v3381
    %v4198 = vunpack.c.1.s8 %v3382
    %v4199 = vunpack.c.1.s8 %v3383
    %v4200 = vunpack.c.1.s8 %v3384
    %v4201 = vunpack.c.1.s8 %v3385
    %v4202 = vunpack.c.1.s8 %v3386
    %v4203 = vunpack.c.1.s8 %v3387
    %v4204 = vunpack.c.1.s8 %v3388
    %v4205 = vunpack.c.2.s8 %v3381
    %v4206 = vunpack.c.2.s8 %v3382
    %v4207 = vunpack.c.2.s8 %v3383
    %v4208 = vunpack.c.2.s8 %v3384
    %v4209 = vunpack.c.2.s8 %v3385
    %v4210 = vunpack.c.2.s8 %v3386
    %v4211 = vunpack.c.2.s8 %v3387
    %v4212 = vunpack.c.2.s8 %v3388
    %v4213 = vunpack.c.3.s8 %v3381
    %v4214 = vunpack.c.3.s8 %v3382
    %v4215 = vunpack.c.3.s8 %v3383
    %v4216 = vunpack.c.3.s8 %v3384
    %v4217 = vunpack.c.3.s8 %v3385
    %v4218 = vunpack.c.3.s8 %v3386
    %v4219 = vunpack.c.3.s8 %v3387
    %v4220 = vunpack.c.3.s8 %v3388
    %v4221 = vunpack.c.0.s8 %v3389
    %v4222 = vunpack.c.0.s8 %v3390
    %v4223 = vunpack.c.0.s8 %v3391
    %v4224 = vunpack.c.0.s8 %v3392
    %v4225 = vunpack.c.0.s8 %v3393
    %v4226 = vunpack.c.0.s8 %v3394
    %v4227 = vunpack.c.0.s8 %v3395
    %v4228 = vunpack.c.0.s8 %v3396
    %v4229 = vunpack.c.1.s8 %v3389
    %v4230 = vunpack.c.1.s8 %v3390
    %v4231 = vunpack.c.1.s8 %v3391
    %v4232 = vunpack.c.1.s8 %v3392
    %v4233 = vunpack.c.1.s8 %v3393
    %v4234 = vunpack.c.1.s8 %v3394
    %v4235 = vunpack.c.1.s8 %v3395
    %v4236 = vunpack.c.1.s8 %v3396
    %v4237 = vunpack.c.2.s8 %v3389
    %v4238 = vunpack.c.2.s8 %v3390
    %v4239 = vunpack.c.2.s8 %v3391
    %v4240 = vunpack.c.2.s8 %v3392
    %v4241 = vunpack.c.2.s8 %v3393
    %v4242 = vunpack.c.2.s8 %v3394
    %v4243 = vunpack.c.2.s8 %v3395
    %v4244 = vunpack.c.2.s8 %v3396
    %v4245 = vunpack.c.3.s8 %v3389
    %v4246 = vunpack.c.3.s8 %v3390
    %v4247 = vunpack.c.3.s8 %v3391
    %v4248 = vunpack.c.3.s8 %v3392
    %v4249 = vunpack.c.3.s8 %v3393
    %v4250 = vunpack.c.3.s8 %v3394
    %v4251 = vunpack.c.3.s8 %v3395
    %v4252 = vunpack.c.3.s8 %v3396
    %v4253 = vunpack.c.0.s8 %v3397
    %v4254 = vunpack.c.0.s8 %v3398
    %v4255 = vunpack.c.0.s8 %v3399
    %v4256 = vunpack.c.0.s8 %v3400
    %v4257 = vunpack.c.0.s8 %v3401
    %v4258 = vunpack.c.0.s8 %v3402
    %v4259 = vunpack.c.0.s8 %v3403
    %v4260 = vunpack.c.0.s8 %v3404
    %v4261 = vunpack.c.1.s8 %v3397
    %v4262 = vunpack.c.1.s8 %v3398
    %v4263 = vunpack.c.1.s8 %v3399
    %v4264 = vunpack.c.1.s8 %v3400
    %v4265 = vunpack.c.1.s8 %v3401
    %v4266 = vunpack.c.1.s8 %v3402
    %v4267 = vunpack.c.1.s8 %v3403
    %v4268 = vunpack.c.1.s8 %v3404
    %v4269 = vunpack.c.2.s8 %v3397
    %v4270 = vunpack.c.2.s8 %v3398
    %v4271 = vunpack.c.2.s8 %v3399
    %v4272 = vunpack.c.2.s8 %v3400
    %v4273 = vunpack.c.2.s8 %v3401
    %v4274 = vunpack.c.2.s8 %v3402
    %v4275 = vunpack.c.2.s8 %v3403
    %v4276 = vunpack.c.2.s8 %v3404
    %v4277 = vunpack.c.3.s8 %v3397
    %v4278 = vunpack.c.3.s8 %v3398
    %v4279 = vunpack.c.3.s8 %v3399
    %v4280 = vunpack.c.3.s8 %v3400
    %v4281 = vunpack.c.3.s8 %v3401
    %v4282 = vunpack.c.3.s8 %v3402
    %v4283 = vunpack.c.3.s8 %v3403
    %v4284 = vunpack.c.3.s8 %v3404
    %v4285 = vunpack.c.0.s8 %v3405
    %v4286 = vunpack.c.0.s8 %v3406
    %v4287 = vunpack.c.0.s8 %v3407
    %v4288 = vunpack.c.0.s8 %v3408
    %v4289 = vunpack.c.0.s8 %v3409
    %v4290 = vunpack.c.0.s8 %v3410
    %v4291 = vunpack.c.0.s8 %v3411
    %v4292 = vunpack.c.0.s8 %v3412
    %v4293 = vunpack.c.1.s8 %v3405
    %v4294 = vunpack.c.1.s8 %v3406
    %v4295 = vunpack.c.1.s8 %v3407
    %v4296 = vunpack.c.1.s8 %v3408
    %v4297 = vunpack.c.1.s8 %v3409
    %v4298 = vunpack.c.1.s8 %v3410
    %v4299 = vunpack.c.1.s8 %v3411
    %v4300 = vunpack.c.1.s8 %v3412
    %v4301 = vunpack.c.2.s8 %v3405
    %v4302 = vunpack.c.2.s8 %v3406
    %v4303 = vunpack.c.2.s8 %v3407
    %v4304 = vunpack.c.2.s8 %v3408
    %v4305 = vunpack.c.2.s8 %v3409
    %v4306 = vunpack.c.2.s8 %v3410
    %v4307 = vunpack.c.2.s8 %v3411
    %v4308 = vunpack.c.2.s8 %v3412
    %v4309 = vunpack.c.3.s8 %v3405
    %v4310 = vunpack.c.3.s8 %v3406
    %v4311 = vunpack.c.3.s8 %v3407
    %v4312 = vunpack.c.3.s8 %v3408
    %v4313 = vunpack.c.3.s8 %v3409
    %v4314 = vunpack.c.3.s8 %v3410
    %v4315 = vunpack.c.3.s8 %v3411
    %v4316 = vunpack.c.3.s8 %v3412
    %v4317 = vunpack.c.0.s8 %v3413
    %v4318 = vunpack.c.0.s8 %v3414
    %v4319 = vunpack.c.0.s8 %v3415
    %v4320 = vunpack.c.0.s8 %v3416
    %v4321 = vunpack.c.0.s8 %v3417
    %v4322 = vunpack.c.0.s8 %v3418
    %v4323 = vunpack.c.0.s8 %v3419
    %v4324 = vunpack.c.0.s8 %v3420
    %v4325 = vunpack.c.1.s8 %v3413
    %v4326 = vunpack.c.1.s8 %v3414
    %v4327 = vunpack.c.1.s8 %v3415
    %v4328 = vunpack.c.1.s8 %v3416
    %v4329 = vunpack.c.1.s8 %v3417
    %v4330 = vunpack.c.1.s8 %v3418
    %v4331 = vunpack.c.1.s8 %v3419
    %v4332 = vunpack.c.1.s8 %v3420
    %v4333 = vunpack.c.2.s8 %v3413
    %v4334 = vunpack.c.2.s8 %v3414
    %v4335 = vunpack.c.2.s8 %v3415
    %v4336 = vunpack.c.2.s8 %v3416
    %v4337 = vunpack.c.2.s8 %v3417
    %v4338 = vunpack.c.2.s8 %v3418
    %v4339 = vunpack.c.2.s8 %v3419
    %v4340 = vunpack.c.2.s8 %v3420
    %v4341 = vunpack.c.3.s8 %v3413
    %v4342 = vunpack.c.3.s8 %v3414
    %v4343 = vunpack.c.3.s8 %v3415
    %v4344 = vunpack.c.3.s8 %v3416
    %v4345 = vunpack.c.3.s8 %v3417
    %v4346 = vunpack.c.3.s8 %v3418
    %v4347 = vunpack.c.3.s8 %v3419
    %v4348 = vunpack.c.3.s8 %v3420
    %v4349 = vunpack.c.0.s8 %v3421
    %v4350 = vunpack.c.0.s8 %v3422
    %v4351 = vunpack.c.0.s8 %v3423
    %v4352 = vunpack.c.0.s8 %v3424
    %v4353 = vunpack.c.0.s8 %v3425
    %v4354 = vunpack.c.0.s8 %v3426
    %v4355 = vunpack.c.0.s8 %v3427
    %v4356 = vunpack.c.0.s8 %v3428
    %v4357 = vunpack.c.1.s8 %v3421
    %v4358 = vunpack.c.1.s8 %v3422
    %v4359 = vunpack.c.1.s8 %v3423
    %v4360 = vunpack.c.1.s8 %v3424
    %v4361 = vunpack.c.1.s8 %v3425
    %v4362 = vunpack.c.1.s8 %v3426
    %v4363 = vunpack.c.1.s8 %v3427
    %v4364 = vunpack.c.1.s8 %v3428
    %v4365 = vunpack.c.2.s8 %v3421
    %v4366 = vunpack.c.2.s8 %v3422
    %v4367 = vunpack.c.2.s8 %v3423
    %v4368 = vunpack.c.2.s8 %v3424
    %v4369 = vunpack.c.2.s8 %v3425
    %v4370 = vunpack.c.2.s8 %v3426
    %v4371 = vunpack.c.2.s8 %v3427
    %v4372 = vunpack.c.2.s8 %v3428
    %v4373 = vunpack.c.3.s8 %v3421
    %v4374 = vunpack.c.3.s8 %v3422
    %v4375 = vunpack.c.3.s8 %v3423
    %v4376 = vunpack.c.3.s8 %v3424
    %v4377 = vunpack.c.3.s8 %v3425
    %v4378 = vunpack.c.3.s8 %v3426
    %v4379 = vunpack.c.3.s8 %v3427
    %v4380 = vunpack.c.3.s8 %v3428
    %v4381 = vunpack.c.0.s8 %v3429
    %v4382 = vunpack.c.0.s8 %v3430
    %v4383 = vunpack.c.0.s8 %v3431
    %v4384 = vunpack.c.0.s8 %v3432
    %v4385 = vunpack.c.0.s8 %v3433
    %v4386 = vunpack.c.0.s8 %v3434
    %v4387 = vunpack.c.0.s8 %v3435
    %v4388 = vunpack.c.0.s8 %v3436
    %v4389 = vunpack.c.1.s8 %v3429
    %v4390 = vunpack.c.1.s8 %v3430
    %v4391 = vunpack.c.1.s8 %v3431
    %v4392 = vunpack.c.1.s8 %v3432
    %v4393 = vunpack.c.1.s8 %v3433
    %v4394 = vunpack.c.1.s8 %v3434
    %v4395 = vunpack.c.1.s8 %v3435
    %v4396 = vunpack.c.1.s8 %v3436
    %v4397 = vunpack.c.2.s8 %v3429
    %v4398 = vunpack.c.2.s8 %v3430
    %v4399 = vunpack.c.2.s8 %v3431
    %v4400 = vunpack.c.2.s8 %v3432
    %v4401 = vunpack.c.2.s8 %v3433
    %v4402 = vunpack.c.2.s8 %v3434
    %v4403 = vunpack.c.2.s8 %v3435
    %v4404 = vunpack.c.2.s8 %v3436
    %v4405 = vunpack.c.3.s8 %v3429
    %v4406 = vunpack.c.3.s8 %v3430
    %v4407 = vunpack.c.3.s8 %v3431
    %v4408 = vunpack.c.3.s8 %v3432
    %v4409 = vunpack.c.3.s8 %v3433
    %v4410 = vunpack.c.3.s8 %v3434
    %v4411 = vunpack.c.3.s8 %v3435
    %v4412 = vunpack.c.3.s8 %v3436
    %v4413 = vunpack.c.0.s8 %v3437
    %v4414 = vunpack.c.0.s8 %v3438
    %v4415 = vunpack.c.0.s8 %v3439
    %v4416 = vunpack.c.0.s8 %v3440
    %v4417 = vunpack.c.0.s8 %v3441
    %v4418 = vunpack.c.0.s8 %v3442
    %v4419 = vunpack.c.0.s8 %v3443
    %v4420 = vunpack.c.0.s8 %v3444
    %v4421 = vunpack.c.1.s8 %v3437
    %v4422 = vunpack.c.1.s8 %v3438
    %v4423 = vunpack.c.1.s8 %v3439
    %v4424 = vunpack.c.1.s8 %v3440
    %v4425 = vunpack.c.1.s8 %v3441
    %v4426 = vunpack.c.1.s8 %v3442
    %v4427 = vunpack.c.1.s8 %v3443
    %v4428 = vunpack.c.1.s8 %v3444
    %v4429 = vunpack.c.2.s8 %v3437
    %v4430 = vunpack.c.2.s8 %v3438
    %v4431 = vunpack.c.2.s8 %v3439
    %v4432 = vunpack.c.2.s8 %v3440
    %v4433 = vunpack.c.2.s8 %v3441
    %v4434 = vunpack.c.2.s8 %v3442
    %v4435 = vunpack.c.2.s8 %v3443
    %v4436 = vunpack.c.2.s8 %v3444
    %v4437 = vunpack.c.3.s8 %v3437
    %v4438 = vunpack.c.3.s8 %v3438
    %v4439 = vunpack.c.3.s8 %v3439
    %v4440 = vunpack.c.3.s8 %v3440
    %v4441 = vunpack.c.3.s8 %v3441
    %v4442 = vunpack.c.3.s8 %v3442
    %v4443 = vunpack.c.3.s8 %v3443
    %v4444 = vunpack.c.3.s8 %v3444
    %v4445 = vunpack.c.0.s8 %v3445
    %v4446 = vunpack.c.0.s8 %v3446
    %v4447 = vunpack.c.0.s8 %v3447
    %v4448 = vunpack.c.0.s8 %v3448
    %v4449 = vunpack.c.0.s8 %v3449
    %v4450 = vunpack.c.0.s8 %v3450
    %v4451 = vunpack.c.0.s8 %v3451
    %v4452 = vunpack.c.0.s8 %v3452
    %v4453 = vunpack.c.1.s8 %v3445
    %v4454 = vunpack.c.1.s8 %v3446
    %v4455 = vunpack.c.1.s8 %v3447
    %v4456 = vunpack.c.1.s8 %v3448
    %v4457 = vunpack.c.1.s8 %v3449
    %v4458 = vunpack.c.1.s8 %v3450
    %v4459 = vunpack.c.1.s8 %v3451
    %v4460 = vunpack.c.1.s8 %v3452
    %v4461 = vunpack.c.2.s8 %v3445
    %v4462 = vunpack.c.2.s8 %v3446
    %v4463 = vunpack.c.2.s8 %v3447
    %v4464 = vunpack.c.2.s8 %v3448
    %v4465 = vunpack.c.2.s8 %v3449
    %v4466 = vunpack.c.2.s8 %v3450
    %v4467 = vunpack.c.2.s8 %v3451
    %v4468 = vunpack.c.2.s8 %v3452
    %v4469 = vunpack.c.3.s8 %v3445
    %v4470 = vunpack.c.3.s8 %v3446
    %v4471 = vunpack.c.3.s8 %v3447
    %v4472 = vunpack.c.3.s8 %v3448
    %v4473 = vunpack.c.3.s8 %v3449
    %v4474 = vunpack.c.3.s8 %v3450
    %v4475 = vunpack.c.3.s8 %v3451
    %v4476 = vunpack.c.3.s8 %v3452
    %v4477 = vcvt.s32.f32 %v3453
    %v4478 = vcvt.s32.f32 %v3454
    %v4479 = vcvt.s32.f32 %v3455
    %v4480 = vcvt.s32.f32 %v3456
    %v4481 = vcvt.s32.f32 %v3457
    %v4482 = vcvt.s32.f32 %v3458
    %v4483 = vcvt.s32.f32 %v3459
    %v4484 = vcvt.s32.f32 %v3460
    %v4485 = vcvt.s32.f32 %v3461
    %v4486 = vcvt.s32.f32 %v3462
    %v4487 = vcvt.s32.f32 %v3463
    %v4488 = vcvt.s32.f32 %v3464
    %v4489 = vcvt.s32.f32 %v3465
    %v4490 = vcvt.s32.f32 %v3466
    %v4491 = vcvt.s32.f32 %v3467
    %v4492 = vcvt.s32.f32 %v3468
    %v4493 = vcvt.s32.f32 %v3469
    %v4494 = vcvt.s32.f32 %v3470
    %v4495 = vcvt.s32.f32 %v3471
    %v4496 = vcvt.s32.f32 %v3472
    %v4497 = vcvt.s32.f32 %v3473
    %v4498 = vcvt.s32.f32 %v3474
    %v4499 = vcvt.s32.f32 %v3475
    %v4500 = vcvt.s32.f32 %v3476
    %v4501 = vcvt.s32.f32 %v3477
    %v4502 = vcvt.s32.f32 %v3478
    %v4503 = vcvt.s32.f32 %v3479
    %v4504 = vcvt.s32.f32 %v3480
    %v4505 = vcvt.s32.f32 %v3481
    %v4506 = vcvt.s32.f32 %v3482
    %v4507 = vcvt.s32.f32 %v3483
    %v4508 = vcvt.s32.f32 %v3484
    %v4509 = vcvt.s32.f32 %v3485
    %v4510 = vcvt.s32.f32 %v3486
    %v4511 = vcvt.s32.f32 %v3487
    %v4512 = vcvt.s32.f32 %v3488
    %v4513 = vcvt.s32.f32 %v3489
    %v4514 = vcvt.s32.f32 %v3490
    %v4515 = vcvt.s32.f32 %v3491
    %v4516 = vcvt.s32.f32 %v3492
    %v4517 = vcvt.s32.f32 %v3493
    %v4518 = vcvt.s32.f32 %v3494
    %v4519 = vcvt.s32.f32 %v3495
    %v4520 = vcvt.s32.f32 %v3496
    %v4521 = vcvt.s32.f32 %v3497
    %v4522 = vcvt.s32.f32 %v3498
    %v4523 = vcvt.s32.f32 %v3499
    %v4524 = vcvt.s32.f32 %v3500
    %v4525 = vcvt.s32.f32 %v3501
    %v4526 = vcvt.s32.f32 %v3502
    %v4527 = vcvt.s32.f32 %v3503
    %v4528 = vcvt.s32.f32 %v3504
    %v4529 = vcvt.s32.f32 %v3505
    %v4530 = vcvt.s32.f32 %v3506
    %v4531 = vcvt.s32.f32 %v3507
    %v4532 = vcvt.s32.f32 %v3508
    %v4533 = vcvt.s32.f32 %v3509
    %v4534 = vcvt.s32.f32 %v3510
    %v4535 = vcvt.s32.f32 %v3511
    %v4536 = vcvt.s32.f32 %v3512
    %v4537 = vcvt.s32.f32 %v3513
    %v4538 = vcvt.s32.f32 %v3514
    %v4539 = vcvt.s32.f32 %v3515
    %v4540 = vcvt.s32.f32 %v3516
    %v4541 = vcvt.s32.f32 %v3517
    %v4542 = vcvt.s32.f32 %v3518
    %v4543 = vcvt.s32.f32 %v3519
    %v4544 = vcvt.s32.f32 %v3520
    %v4545 = vcvt.s32.f32 %v3521
    %v4546 = vcvt.s32.f32 %v3522
    %v4547 = vcvt.s32.f32 %v3523
    %v4548 = vcvt.s32.f32 %v3524
    %v4549 = vcvt.s32.f32 %v3525
    %v4550 = vcvt.s32.f32 %v3526
    %v4551 = vcvt.s32.f32 %v3527
    %v4552 = vcvt.s32.f32 %v3528
    %v4553 = vcvt.s32.f32 %v3529
    %v4554 = vcvt.s32.f32 %v3530
    %v4555 = vcvt.s32.f32 %v3531
    %v4556 = vcvt.s32.f32 %v3532
    %v4557 = vcvt.s32.f32 %v3533
    %v4558 = vcvt.s32.f32 %v3534
    %v4559 = vcvt.s32.f32 %v3535
    %v4560 = vcvt.s32.f32 %v3536
    %v4561 = vcvt.s32.f32 %v3537
    %v4562 = vcvt.s32.f32 %v3538
    %v4563 = vcvt.s32.f32 %v3539
    %v4564 = vcvt.s32.f32 %v3540
    %v4565 = vcvt.s32.f32 %v3541
    %v4566 = vcvt.s32.f32 %v3542
    %v4567 = vcvt.s32.f32 %v3543
    %v4568 = vcvt.s32.f32 %v3544
    %v4569 = vcvt.s32.f32 %v3545
    %v4570 = vcvt.s32.f32 %v3546
    %v4571 = vcvt.s32.f32 %v3547
    %v4572 = vcvt.s32.f32 %v3548
    %v4573 = vcvt.s32.f32 %v3549
    %v4574 = vcvt.s32.f32 %v3550
    %v4575 = vcvt.s32.f32 %v3551
    %v4576 = vcvt.s32.f32 %v3552
    %v4577 = vcvt.s32.f32 %v3553
    %v4578 = vcvt.s32.f32 %v3554
    %v4579 = vcvt.s32.f32 %v3555
    %v4580 = vcvt.s32.f32 %v3556
    %v4581 = vcvt.s32.f32 %v3557
    %v4582 = vcvt.s32.f32 %v3558
    %v4583 = vcvt.s32.f32 %v3559
    %v4584 = vcvt.s32.f32 %v3560
    %v4585 = vcvt.s32.f32 %v3561
    %v4586 = vcvt.s32.f32 %v3562
    %v4587 = vcvt.s32.f32 %v3563
    %v4588 = vcvt.s32.f32 %v3564
    %v4589 = vcvt.s32.f32 %v3565
    %v4590 = vcvt.s32.f32 %v3566
    %v4591 = vcvt.s32.f32 %v3567
    %v4592 = vcvt.s32.f32 %v3568
    %v4593 = vcvt.s32.f32 %v3569
    %v4594 = vcvt.s32.f32 %v3570
    %v4595 = vcvt.s32.f32 %v3571
    %v4596 = vcvt.s32.f32 %v3572
    %v4597 = vcvt.s32.f32 %v3573
    %v4598 = vcvt.s32.f32 %v3574
    %v4599 = vcvt.s32.f32 %v3575
    %v4600 = vcvt.s32.f32 %v3576
    %v4601 = vcvt.s32.f32 %v3577
    %v4602 = vcvt.s32.f32 %v3578
    %v4603 = vcvt.s32.f32 %v3579
    %v4604 = vcvt.s32.f32 %v3580
    %v4605 = vcvt.s32.f32 %v3581
    %v4606 = vcvt.s32.f32 %v3582
    %v4607 = vcvt.s32.f32 %v3583
    %v4608 = vcvt.s32.f32 %v3584
    %v4609 = vcvt.s32.f32 %v3585
    %v4610 = vcvt.s32.f32 %v3586
    %v4611 = vcvt.s32.f32 %v3587
    %v4612 = vcvt.s32.f32 %v3588
    %v4613 = vcvt.s32.f32 %v3589
    %v4614 = vcvt.s32.f32 %v3590
    %v4615 = vcvt.s32.f32 %v3591
    %v4616 = vcvt.s32.f32 %v3592
    %v4617 = vcvt.s32.f32 %v3593
    %v4618 = vcvt.s32.f32 %v3594
    %v4619 = vcvt.s32.f32 %v3595
    %v4620 = vcvt.s32.f32 %v3596
    %v4621 = vcvt.s32.f32 %v3597
    %v4622 = vcvt.s32.f32 %v3598
    %v4623 = vcvt.s32.f32 %v3599
    %v4624 = vcvt.s32.f32 %v3600
    %v4625 = vcvt.s32.f32 %v3601
    %v4626 = vcvt.s32.f32 %v3602
    %v4627 = vcvt.s32.f32 %v3603
    %v4628 = vcvt.s32.f32 %v3604
    %v4629 = vcvt.s32.f32 %v3605
    %v4630 = vcvt.s32.f32 %v3606
    %v4631 = vcvt.s32.f32 %v3607
    %v4632 = vcvt.s32.f32 %v3608
    %v4633 = vcvt.s32.f32 %v3609
    %v4634 = vcvt.s32.f32 %v3610
    %v4635 = vcvt.s32.f32 %v3611
    %v4636 = vcvt.s32.f32 %v3612
    %v4637 = vcvt.s32.f32 %v3613
    %v4638 = vcvt.s32.f32 %v3614
    %v4639 = vcvt.s32.f32 %v3615
    %v4640 = vcvt.s32.f32 %v3616
    %v4641 = vcvt.s32.f32 %v3617
    %v4642 = vcvt.s32.f32 %v3618
    %v4643 = vcvt.s32.f32 %v3619
    %v4644 = vcvt.s32.f32 %v3620
    %v4645 = vcvt.s32.f32 %v3621
    %v4646 = vcvt.s32.f32 %v3622
    %v4647 = vcvt.s32.f32 %v3623
    %v4648 = vcvt.s32.f32 %v3624
    %v4649 = vcvt.s32.f32 %v3625
    %v4650 = vcvt.s32.f32 %v3626
    %v4651 = vcvt.s32.f32 %v3627
    %v4652 = vcvt.s32.f32 %v3628
    %v4653 = vcvt.s32.f32 %v3629
    %v4654 = vcvt.s32.f32 %v3630
    %v4655 = vcvt.s32.f32 %v3631
    %v4656 = vcvt.s32.f32 %v3632
    %v4657 = vcvt.s32.f32 %v3633
    %v4658 = vcvt.s32.f32 %v3634
    %v4659 = vcvt.s32.f32 %v3635
    %v4660 = vcvt.s32.f32 %v3636
    %v4661 = vcvt.s32.f32 %v3637
    %v4662 = vcvt.s32.f32 %v3638
    %v4663 = vcvt.s32.f32 %v3639
    %v4664 = vcvt.s32.f32 %v3640
    %v4665 = vcvt.s32.f32 %v3641
    %v4666 = vcvt.s32.f32 %v3642
    %v4667 = vcvt.s32.f32 %v3643
    %v4668 = vcvt.s32.f32 %v3644
    %v4669 = vcvt.s32.f32 %v3645
    %v4670 = vcvt.s32.f32 %v3646
    %v4671 = vcvt.s32.f32 %v3647
    %v4672 = vcvt.s32.f32 %v3648
    %v4673 = vcvt.s32.f32 %v3649
    %v4674 = vcvt.s32.f32 %v3650
    %v4675 = vcvt.s32.f32 %v3651
    %v4676 = vcvt.s32.f32 %v3652
    %v4677 = vcvt.s32.f32 %v3653
    %v4678 = vcvt.s32.f32 %v3654
    %v4679 = vcvt.s32.f32 %v3655
    %v4680 = vcvt.s32.f32 %v3656
    %v4681 = vcvt.s32.f32 %v3657
    %v4682 = vcvt.s32.f32 %v3658
    %v4683 = vcvt.s32.f32 %v3659
    %v4684 = vcvt.s32.f32 %v3660
    %v4685 = vcvt.s32.f32 %v3661
    %v4686 = vcvt.s32.f32 %v3662
    %v4687 = vcvt.s32.f32 %v3663
    %v4688 = vcvt.s32.f32 %v3664
    %v4689 = vcvt.s32.f32 %v3665
    %v4690 = vcvt.s32.f32 %v3666
    %v4691 = vcvt.s32.f32 %v3667
    %v4692 = vcvt.s32.f32 %v3668
    %v4693 = vcvt.s32.f32 %v3669
    %v4694 = vcvt.s32.f32 %v3670
    %v4695 = vcvt.s32.f32 %v3671
    %v4696 = vcvt.s32.f32 %v3672
    %v4697 = vcvt.s32.f32 %v3673
    %v4698 = vcvt.s32.f32 %v3674
    %v4699 = vcvt.s32.f32 %v3675
    %v4700 = vcvt.s32.f32 %v3676
    %v4701 = vcvt.s32.f32 %v3677
    %v4702 = vcvt.s32.f32 %v3678
    %v4703 = vcvt.s32.f32 %v3679
    %v4704 = vcvt.s32.f32 %v3680
    %v4705 = vcvt.s32.f32 %v3681
    %v4706 = vcvt.s32.f32 %v3682
    %v4707 = vcvt.s32.f32 %v3683
    %v4708 = vcvt.s32.f32 %v3684
    %v4709 = vcvt.s32.f32 %v3685
    %v4710 = vcvt.s32.f32 %v3686
    %v4711 = vcvt.s32.f32 %v3687
    %v4712 = vcvt.s32.f32 %v3688
    %v4713 = vcvt.s32.f32 %v3689
    %v4714 = vcvt.s32.f32 %v3690
    %v4715 = vcvt.s32.f32 %v3691
    %v4716 = vcvt.s32.f32 %v3692
    %v4717 = vcvt.s32.f32 %v3693
    %v4718 = vcvt.s32.f32 %v3694
    %v4719 = vcvt.s32.f32 %v3695
    %v4720 = vcvt.s32.f32 %v3696
    %v4721 = vcvt.s32.f32 %v3697
    %v4722 = vcvt.s32.f32 %v3698
    %v4723 = vcvt.s32.f32 %v3699
    %v4724 = vcvt.s32.f32 %v3700
    %v4725 = vcvt.s32.f32 %v3701
    %v4726 = vcvt.s32.f32 %v3702
    %v4727 = vcvt.s32.f32 %v3703
    %v4728 = vcvt.s32.f32 %v3704
    %v4729 = vcvt.s32.f32 %v3705
    %v4730 = vcvt.s32.f32 %v3706
    %v4731 = vcvt.s32.f32 %v3707
    %v4732 = vcvt.s32.f32 %v3708
    %v4733 = vcvt.s32.f32 %v3709
    %v4734 = vcvt.s32.f32 %v3710
    %v4735 = vcvt.s32.f32 %v3711
    %v4736 = vcvt.s32.f32 %v3712
    %v4737 = vcvt.s32.f32 %v3713
    %v4738 = vcvt.s32.f32 %v3714
    %v4739 = vcvt.s32.f32 %v3715
    %v4740 = vcvt.s32.f32 %v3716
    %v4741 = vcvt.s32.f32 %v3717
    %v4742 = vcvt.s32.f32 %v3718
    %v4743 = vcvt.s32.f32 %v3719
    %v4744 = vcvt.s32.f32 %v3720
    %v4745 = vcvt.s32.f32 %v3721
    %v4746 = vcvt.s32.f32 %v3722
    %v4747 = vcvt.s32.f32 %v3723
    %v4748 = vcvt.s32.f32 %v3724
    %v4749 = vcvt.s32.f32 %v3725
    %v4750 = vcvt.s32.f32 %v3726
    %v4751 = vcvt.s32.f32 %v3727
    %v4752 = vcvt.s32.f32 %v3728
    %v4753 = vcvt.s32.f32 %v3729
    %v4754 = vcvt.s32.f32 %v3730
    %v4755 = vcvt.s32.f32 %v3731
    %v4756 = vcvt.s32.f32 %v3732
    %v4757 = vcvt.s32.f32 %v3733
    %v4758 = vcvt.s32.f32 %v3734
    %v4759 = vcvt.s32.f32 %v3735
    %v4760 = vcvt.s32.f32 %v3736
    %v4761 = vcvt.s32.f32 %v3737
    %v4762 = vcvt.s32.f32 %v3738
    %v4763 = vcvt.s32.f32 %v3739
    %v4764 = vcvt.s32.f32 %v3740
    %v4765 = vcvt.s32.f32 %v3741
    %v4766 = vcvt.s32.f32 %v3742
    %v4767 = vcvt.s32.f32 %v3743
    %v4768 = vcvt.s32.f32 %v3744
    %v4769 = vcvt.s32.f32 %v3745
    %v4770 = vcvt.s32.f32 %v3746
    %v4771 = vcvt.s32.f32 %v3747
    %v4772 = vcvt.s32.f32 %v3748
    %v4773 = vcvt.s32.f32 %v3749
    %v4774 = vcvt.s32.f32 %v3750
    %v4775 = vcvt.s32.f32 %v3751
    %v4776 = vcvt.s32.f32 %v3752
    %v4777 = vcvt.s32.f32 %v3753
    %v4778 = vcvt.s32.f32 %v3754
    %v4779 = vcvt.s32.f32 %v3755
    %v4780 = vcvt.s32.f32 %v3756
    %v4781 = vcvt.s32.f32 %v3757
    %v4782 = vcvt.s32.f32 %v3758
    %v4783 = vcvt.s32.f32 %v3759
    %v4784 = vcvt.s32.f32 %v3760
    %v4785 = vcvt.s32.f32 %v3761
    %v4786 = vcvt.s32.f32 %v3762
    %v4787 = vcvt.s32.f32 %v3763
    %v4788 = vcvt.s32.f32 %v3764
    %v4789 = vcvt.s32.f32 %v3765
    %v4790 = vcvt.s32.f32 %v3766
    %v4791 = vcvt.s32.f32 %v3767
    %v4792 = vcvt.s32.f32 %v3768
    %v4793 = vcvt.s32.f32 %v3769
    %v4794 = vcvt.s32.f32 %v3770
    %v4795 = vcvt.s32.f32 %v3771
    %v4796 = vcvt.s32.f32 %v3772
    %v4797 = vcvt.s32.f32 %v3773
    %v4798 = vcvt.s32.f32 %v3774
    %v4799 = vcvt.s32.f32 %v3775
    %v4800 = vcvt.s32.f32 %v3776
    %v4801 = vcvt.s32.f32 %v3777
    %v4802 = vcvt.s32.f32 %v3778
    %v4803 = vcvt.s32.f32 %v3779
    %v4804 = vcvt.s32.f32 %v3780
    %v4805 = vcvt.s32.f32 %v3781
    %v4806 = vcvt.s32.f32 %v3782
    %v4807 = vcvt.s32.f32 %v3783
    %v4808 = vcvt.s32.f32 %v3784
    %v4809 = vcvt.s32.f32 %v3785
    %v4810 = vcvt.s32.f32 %v3786
    %v4811 = vcvt.s32.f32 %v3787
    %v4812 = vcvt.s32.f32 %v3788
    %v4813 = vcvt.s32.f32 %v3789
    %v4814 = vcvt.s32.f32 %v3790
    %v4815 = vcvt.s32.f32 %v3791
    %v4816 = vcvt.s32.f32 %v3792
    %v4817 = vcvt.s32.f32 %v3793
    %v4818 = vcvt.s32.f32 %v3794
    %v4819 = vcvt.s32.f32 %v3795
    %v4820 = vcvt.s32.f32 %v3796
    %v4821 = vcvt.s32.f32 %v3797
    %v4822 = vcvt.s32.f32 %v3798
    %v4823 = vcvt.s32.f32 %v3799
    %v4824 = vcvt.s32.f32 %v3800
    %v4825 = vcvt.s32.f32 %v3801
    %v4826 = vcvt.s32.f32 %v3802
    %v4827 = vcvt.s32.f32 %v3803
    %v4828 = vcvt.s32.f32 %v3804
    %v4829 = vcvt.s32.f32 %v3805
    %v4830 = vcvt.s32.f32 %v3806
    %v4831 = vcvt.s32.f32 %v3807
    %v4832 = vcvt.s32.f32 %v3808
    %v4833 = vcvt.s32.f32 %v3809
    %v4834 = vcvt.s32.f32 %v3810
    %v4835 = vcvt.s32.f32 %v3811
    %v4836 = vcvt.s32.f32 %v3812
    %v4837 = vcvt.s32.f32 %v3813
    %v4838 = vcvt.s32.f32 %v3814
    %v4839 = vcvt.s32.f32 %v3815
    %v4840 = vcvt.s32.f32 %v3816
    %v4841 = vcvt.s32.f32 %v3817
    %v4842 = vcvt.s32.f32 %v3818
    %v4843 = vcvt.s32.f32 %v3819
    %v4844 = vcvt.s32.f32 %v3820
    %v4845 = vcvt.s32.f32 %v3821
    %v4846 = vcvt.s32.f32 %v3822
    %v4847 = vcvt.s32.f32 %v3823
    %v4848 = vcvt.s32.f32 %v3824
    %v4849 = vcvt.s32.f32 %v3825
    %v4850 = vcvt.s32.f32 %v3826
    %v4851 = vcvt.s32.f32 %v3827
    %v4852 = vcvt.s32.f32 %v3828
    %v4853 = vcvt.s32.f32 %v3829
    %v4854 = vcvt.s32.f32 %v3830
    %v4855 = vcvt.s32.f32 %v3831
    %v4856 = vcvt.s32.f32 %v3832
    %v4857 = vcvt.s32.f32 %v3833
    %v4858 = vcvt.s32.f32 %v3834
    %v4859 = vcvt.s32.f32 %v3835
    %v4860 = vcvt.s32.f32 %v3836
    %v4861 = vcvt.s32.f32 %v3837
    %v4862 = vcvt.s32.f32 %v3838
    %v4863 = vcvt.s32.f32 %v3839
    %v4864 = vcvt.s32.f32 %v3840
    %v4865 = vcvt.s32.f32 %v3841
    %v4866 = vcvt.s32.f32 %v3842
    %v4867 = vcvt.s32.f32 %v3843
    %v4868 = vcvt.s32.f32 %v3844
    %v4869 = vcvt.s32.f32 %v3845
    %v4870 = vcvt.s32.f32 %v3846
    %v4871 = vcvt.s32.f32 %v3847
    %v4872 = vcvt.s32.f32 %v3848
    %v4873 = vcvt.s32.f32 %v3849
    %v4874 = vcvt.s32.f32 %v3850
    %v4875 = vcvt.s32.f32 %v3851
    %v4876 = vcvt.s32.f32 %v3852
    %v4877 = vcvt.s32.f32 %v3853
    %v4878 = vcvt.s32.f32 %v3854
    %v4879 = vcvt.s32.f32 %v3855
    %v4880 = vcvt.s32.f32 %v3856
    %v4881 = vcvt.s32.f32 %v3857
    %v4882 = vcvt.s32.f32 %v3858
    %v4883 = vcvt.s32.f32 %v3859
    %v4884 = vcvt.s32.f32 %v3860
    %v4885 = vcvt.s32.f32 %v3861
    %v4886 = vcvt.s32.f32 %v3862
    %v4887 = vcvt.s32.f32 %v3863
    %v4888 = vcvt.s32.f32 %v3864
    %v4889 = vcvt.s32.f32 %v3865
    %v4890 = vcvt.s32.f32 %v3866
    %v4891 = vcvt.s32.f32 %v3867
    %v4892 = vcvt.s32.f32 %v3868
    %v4893 = vcvt.s32.f32 %v3869
    %v4894 = vcvt.s32.f32 %v3870
    %v4895 = vcvt.s32.f32 %v3871
    %v4896 = vcvt.s32.f32 %v3872
    %v4897 = vcvt.s32.f32 %v3873
    %v4898 = vcvt.s32.f32 %v3874
    %v4899 = vcvt.s32.f32 %v3875
    %v4900 = vcvt.s32.f32 %v3876
    %v4901 = vcvt.s32.f32 %v3877
    %v4902 = vcvt.s32.f32 %v3878
    %v4903 = vcvt.s32.f32 %v3879
    %v4904 = vcvt.s32.f32 %v3880
    %v4905 = vcvt.s32.f32 %v3881
    %v4906 = vcvt.s32.f32 %v3882
    %v4907 = vcvt.s32.f32 %v3883
    %v4908 = vcvt.s32.f32 %v3884
    %v4909 = vcvt.s32.f32 %v3885
    %v4910 = vcvt.s32.f32 %v3886
    %v4911 = vcvt.s32.f32 %v3887
    %v4912 = vcvt.s32.f32 %v3888
    %v4913 = vcvt.s32.f32 %v3889
    %v4914 = vcvt.s32.f32 %v3890
    %v4915 = vcvt.s32.f32 %v3891
    %v4916 = vcvt.s32.f32 %v3892
    %v4917 = vcvt.s32.f32 %v3893
    %v4918 = vcvt.s32.f32 %v3894
    %v4919 = vcvt.s32.f32 %v3895
    %v4920 = vcvt.s32.f32 %v3896
    %v4921 = vcvt.s32.f32 %v3897
    %v4922 = vcvt.s32.f32 %v3898
    %v4923 = vcvt.s32.f32 %v3899
    %v4924 = vcvt.s32.f32 %v3900
    %v4925 = vcvt.s32.f32 %v3901
    %v4926 = vcvt.s32.f32 %v3902
    %v4927 = vcvt.s32.f32 %v3903
    %v4928 = vcvt.s32.f32 %v3904
    %v4929 = vcvt.s32.f32 %v3905
    %v4930 = vcvt.s32.f32 %v3906
    %v4931 = vcvt.s32.f32 %v3907
    %v4932 = vcvt.s32.f32 %v3908
    %v4933 = vcvt.s32.f32 %v3909
    %v4934 = vcvt.s32.f32 %v3910
    %v4935 = vcvt.s32.f32 %v3911
    %v4936 = vcvt.s32.f32 %v3912
    %v4937 = vcvt.s32.f32 %v3913
    %v4938 = vcvt.s32.f32 %v3914
    %v4939 = vcvt.s32.f32 %v3915
    %v4940 = vcvt.s32.f32 %v3916
    %v4941 = vcvt.s32.f32 %v3917
    %v4942 = vcvt.s32.f32 %v3918
    %v4943 = vcvt.s32.f32 %v3919
    %v4944 = vcvt.s32.f32 %v3920
    %v4945 = vcvt.s32.f32 %v3921
    %v4946 = vcvt.s32.f32 %v3922
    %v4947 = vcvt.s32.f32 %v3923
    %v4948 = vcvt.s32.f32 %v3924
    %v4949 = vcvt.s32.f32 %v3925
    %v4950 = vcvt.s32.f32 %v3926
    %v4951 = vcvt.s32.f32 %v3927
    %v4952 = vcvt.s32.f32 %v3928
    %v4953 = vcvt.s32.f32 %v3929
    %v4954 = vcvt.s32.f32 %v3930
    %v4955 = vcvt.s32.f32 %v3931
    %v4956 = vcvt.s32.f32 %v3932
    %v4957 = vcvt.s32.f32 %v3933
    %v4958 = vcvt.s32.f32 %v3934
    %v4959 = vcvt.s32.f32 %v3935
    %v4960 = vcvt.s32.f32 %v3936
    %v4961 = vcvt.s32.f32 %v3937
    %v4962 = vcvt.s32.f32 %v3938
    %v4963 = vcvt.s32.f32 %v3939
    %v4964 = vcvt.s32.f32 %v3940
    %v4965 = vcvt.s32.f32 %v3941
    %v4966 = vcvt.s32.f32 %v3942
    %v4967 = vcvt.s32.f32 %v3943
    %v4968 = vcvt.s32.f32 %v3944
    %v4969 = vcvt.s32.f32 %v3945
    %v4970 = vcvt.s32.f32 %v3946
    %v4971 = vcvt.s32.f32 %v3947
    %v4972 = vcvt.s32.f32 %v3948
    %v4973 = vcvt.s32.f32 %v3949
    %v4974 = vcvt.s32.f32 %v3950
    %v4975 = vcvt.s32.f32 %v3951
    %v4976 = vcvt.s32.f32 %v3952
    %v4977 = vcvt.s32.f32 %v3953
    %v4978 = vcvt.s32.f32 %v3954
    %v4979 = vcvt.s32.f32 %v3955
    %v4980 = vcvt.s32.f32 %v3956
    %v4981 = vcvt.s32.f32 %v3957
    %v4982 = vcvt.s32.f32 %v3958
    %v4983 = vcvt.s32.f32 %v3959
    %v4984 = vcvt.s32.f32 %v3960
    %v4985 = vcvt.s32.f32 %v3961
    %v4986 = vcvt.s32.f32 %v3962
    %v4987 = vcvt.s32.f32 %v3963
    %v4988 = vcvt.s32.f32 %v3964
    %v4989 = vcvt.s32.f32 %v3965
    %v4990 = vcvt.s32.f32 %v3966
    %v4991 = vcvt.s32.f32 %v3967
    %v4992 = vcvt.s32.f32 %v3968
    %v4993 = vcvt.s32.f32 %v3969
    %v4994 = vcvt.s32.f32 %v3970
    %v4995 = vcvt.s32.f32 %v3971
    %v4996 = vcvt.s32.f32 %v3972
    %v4997 = vcvt.s32.f32 %v3973
    %v4998 = vcvt.s32.f32 %v3974
    %v4999 = vcvt.s32.f32 %v3975
    %v5000 = vcvt.s32.f32 %v3976
    %v5001 = vcvt.s32.f32 %v3977
    %v5002 = vcvt.s32.f32 %v3978
    %v5003 = vcvt.s32.f32 %v3979
    %v5004 = vcvt.s32.f32 %v3980
    %v5005 = vcvt.s32.f32 %v3981
    %v5006 = vcvt.s32.f32 %v3982
    %v5007 = vcvt.s32.f32 %v3983
    %v5008 = vcvt.s32.f32 %v3984
    %v5009 = vcvt.s32.f32 %v3985
    %v5010 = vcvt.s32.f32 %v3986
    %v5011 = vcvt.s32.f32 %v3987
    %v5012 = vcvt.s32.f32 %v3988
    %v5013 = vcvt.s32.f32 %v3989
    %v5014 = vcvt.s32.f32 %v3990
    %v5015 = vcvt.s32.f32 %v3991
    %v5016 = vcvt.s32.f32 %v3992
    %v5017 = vcvt.s32.f32 %v3993
    %v5018 = vcvt.s32.f32 %v3994
    %v5019 = vcvt.s32.f32 %v3995
    %v5020 = vcvt.s32.f32 %v3996
    %v5021 = vcvt.s32.f32 %v3997
    %v5022 = vcvt.s32.f32 %v3998
    %v5023 = vcvt.s32.f32 %v3999
    %v5024 = vcvt.s32.f32 %v4000
    %v5025 = vcvt.s32.f32 %v4001
    %v5026 = vcvt.s32.f32 %v4002
    %v5027 = vcvt.s32.f32 %v4003
    %v5028 = vcvt.s32.f32 %v4004
    %v5029 = vcvt.s32.f32 %v4005
    %v5030 = vcvt.s32.f32 %v4006
    %v5031 = vcvt.s32.f32 %v4007
    %v5032 = vcvt.s32.f32 %v4008
    %v5033 = vcvt.s32.f32 %v4009
    %v5034 = vcvt.s32.f32 %v4010
    %v5035 = vcvt.s32.f32 %v4011
    %v5036 = vcvt.s32.f32 %v4012
    %v5037 = vcvt.s32.f32 %v4013
    %v5038 = vcvt.s32.f32 %v4014
    %v5039 = vcvt.s32.f32 %v4015
    %v5040 = vcvt.s32.f32 %v4016
    %v5041 = vcvt.s32.f32 %v4017
    %v5042 = vcvt.s32.f32 %v4018
    %v5043 = vcvt.s32.f32 %v4019
    %v5044 = vcvt.s32.f32 %v4020
    %v5045 = vcvt.s32.f32 %v4021
    %v5046 = vcvt.s32.f32 %v4022
    %v5047 = vcvt.s32.f32 %v4023
    %v5048 = vcvt.s32.f32 %v4024
    %v5049 = vcvt.s32.f32 %v4025
    %v5050 = vcvt.s32.f32 %v4026
    %v5051 = vcvt.s32.f32 %v4027
    %v5052 = vcvt.s32.f32 %v4028
    %v5053 = vcvt.s32.f32 %v4029
    %v5054 = vcvt.s32.f32 %v4030
    %v5055 = vcvt.s32.f32 %v4031
    %v5056 = vcvt.s32.f32 %v4032
    %v5057 = vcvt.s32.f32 %v4033
    %v5058 = vcvt.s32.f32 %v4034
    %v5059 = vcvt.s32.f32 %v4035
    %v5060 = vcvt.s32.f32 %v4036
    %v5061 = vcvt.s32.f32 %v4037
    %v5062 = vcvt.s32.f32 %v4038
    %v5063 = vcvt.s32.f32 %v4039
    %v5064 = vcvt.s32.f32 %v4040
    %v5065 = vcvt.s32.f32 %v4041
    %v5066 = vcvt.s32.f32 %v4042
    %v5067 = vcvt.s32.f32 %v4043
    %v5068 = vcvt.s32.f32 %v4044
    %v5069 = vcvt.s32.f32 %v4045
    %v5070 = vcvt.s32.f32 %v4046
    %v5071 = vcvt.s32.f32 %v4047
    %v5072 = vcvt.s32.f32 %v4048
    %v5073 = vcvt.s32.f32 %v4049
    %v5074 = vcvt.s32.f32 %v4050
    %v5075 = vcvt.s32.f32 %v4051
    %v5076 = vcvt.s32.f32 %v4052
    %v5077 = vcvt.s32.f32 %v4053
    %v5078 = vcvt.s32.f32 %v4054
    %v5079 = vcvt.s32.f32 %v4055
    %v5080 = vcvt.s32.f32 %v4056
    %v5081 = vcvt.s32.f32 %v4057
    %v5082 = vcvt.s32.f32 %v4058
    %v5083 = vcvt.s32.f32 %v4059
    %v5084 = vcvt.s32.f32 %v4060
    %v5085 = vcvt.s32.f32 %v4061
    %v5086 = vcvt.s32.f32 %v4062
    %v5087 = vcvt.s32.f32 %v4063
    %v5088 = vcvt.s32.f32 %v4064
    %v5089 = vcvt.s32.f32 %v4065
    %v5090 = vcvt.s32.f32 %v4066
    %v5091 = vcvt.s32.f32 %v4067
    %v5092 = vcvt.s32.f32 %v4068
    %v5093 = vcvt.s32.f32 %v4069
    %v5094 = vcvt.s32.f32 %v4070
    %v5095 = vcvt.s32.f32 %v4071
    %v5096 = vcvt.s32.f32 %v4072
    %v5097 = vcvt.s32.f32 %v4073
    %v5098 = vcvt.s32.f32 %v4074
    %v5099 = vcvt.s32.f32 %v4075
    %v5100 = vcvt.s32.f32 %v4076
    %v5101 = vcvt.s32.f32 %v4077
    %v5102 = vcvt.s32.f32 %v4078
    %v5103 = vcvt.s32.f32 %v4079
    %v5104 = vcvt.s32.f32 %v4080
    %v5105 = vcvt.s32.f32 %v4081
    %v5106 = vcvt.s32.f32 %v4082
    %v5107 = vcvt.s32.f32 %v4083
    %v5108 = vcvt.s32.f32 %v4084
    %v5109 = vcvt.s32.f32 %v4085
    %v5110 = vcvt.s32.f32 %v4086
    %v5111 = vcvt.s32.f32 %v4087
    %v5112 = vcvt.s32.f32 %v4088
    %v5113 = vcvt.s32.f32 %v4089
    %v5114 = vcvt.s32.f32 %v4090
    %v5115 = vcvt.s32.f32 %v4091
    %v5116 = vcvt.s32.f32 %v4092
    %v5117 = vcvt.s32.f32 %v4093
    %v5118 = vcvt.s32.f32 %v4094
    %v5119 = vcvt.s32.f32 %v4095
    %v5120 = vcvt.s32.f32 %v4096
    %v5121 = vcvt.s32.f32 %v4097
    %v5122 = vcvt.s32.f32 %v4098
    %v5123 = vcvt.s32.f32 %v4099
    %v5124 = vcvt.s32.f32 %v4100
    %v5125 = vcvt.s32.f32 %v4101
    %v5126 = vcvt.s32.f32 %v4102
    %v5127 = vcvt.s32.f32 %v4103
    %v5128 = vcvt.s32.f32 %v4104
    %v5129 = vcvt.s32.f32 %v4105
    %v5130 = vcvt.s32.f32 %v4106
    %v5131 = vcvt.s32.f32 %v4107
    %v5132 = vcvt.s32.f32 %v4108
    %v5133 = vcvt.s32.f32 %v4109
    %v5134 = vcvt.s32.f32 %v4110
    %v5135 = vcvt.s32.f32 %v4111
    %v5136 = vcvt.s32.f32 %v4112
    %v5137 = vcvt.s32.f32 %v4113
    %v5138 = vcvt.s32.f32 %v4114
    %v5139 = vcvt.s32.f32 %v4115
    %v5140 = vcvt.s32.f32 %v4116
    %v5141 = vcvt.s32.f32 %v4117
    %v5142 = vcvt.s32.f32 %v4118
    %v5143 = vcvt.s32.f32 %v4119
    %v5144 = vcvt.s32.f32 %v4120
    %v5145 = vcvt.s32.f32 %v4121
    %v5146 = vcvt.s32.f32 %v4122
    %v5147 = vcvt.s32.f32 %v4123
    %v5148 = vcvt.s32.f32 %v4124
    %v5149 = vcvt.s32.f32 %v4125
    %v5150 = vcvt.s32.f32 %v4126
    %v5151 = vcvt.s32.f32 %v4127
    %v5152 = vcvt.s32.f32 %v4128
    %v5153 = vcvt.s32.f32 %v4129
    %v5154 = vcvt.s32.f32 %v4130
    %v5155 = vcvt.s32.f32 %v4131
    %v5156 = vcvt.s32.f32 %v4132
    %v5157 = vcvt.s32.f32 %v4133
    %v5158 = vcvt.s32.f32 %v4134
    %v5159 = vcvt.s32.f32 %v4135
    %v5160 = vcvt.s32.f32 %v4136
    %v5161 = vcvt.s32.f32 %v4137
    %v5162 = vcvt.s32.f32 %v4138
    %v5163 = vcvt.s32.f32 %v4139
    %v5164 = vcvt.s32.f32 %v4140
    %v5165 = vcvt.s32.f32 %v4141
    %v5166 = vcvt.s32.f32 %v4142
    %v5167 = vcvt.s32.f32 %v4143
    %v5168 = vcvt.s32.f32 %v4144
    %v5169 = vcvt.s32.f32 %v4145
    %v5170 = vcvt.s32.f32 %v4146
    %v5171 = vcvt.s32.f32 %v4147
    %v5172 = vcvt.s32.f32 %v4148
    %v5173 = vcvt.s32.f32 %v4149
    %v5174 = vcvt.s32.f32 %v4150
    %v5175 = vcvt.s32.f32 %v4151
    %v5176 = vcvt.s32.f32 %v4152
    %v5177 = vcvt.s32.f32 %v4153
    %v5178 = vcvt.s32.f32 %v4154
    %v5179 = vcvt.s32.f32 %v4155
    %v5180 = vcvt.s32.f32 %v4156
    %v5181 = vcvt.s32.f32 %v4157
    %v5182 = vcvt.s32.f32 %v4158
    %v5183 = vcvt.s32.f32 %v4159
    %v5184 = vcvt.s32.f32 %v4160
    %v5185 = vcvt.s32.f32 %v4161
    %v5186 = vcvt.s32.f32 %v4162
    %v5187 = vcvt.s32.f32 %v4163
    %v5188 = vcvt.s32.f32 %v4164
    %v5189 = vcvt.s32.f32 %v4165
    %v5190 = vcvt.s32.f32 %v4166
    %v5191 = vcvt.s32.f32 %v4167
    %v5192 = vcvt.s32.f32 %v4168
    %v5193 = vcvt.s32.f32 %v4169
    %v5194 = vcvt.s32.f32 %v4170
    %v5195 = vcvt.s32.f32 %v4171
    %v5196 = vcvt.s32.f32 %v4172
    %v5197 = vcvt.s32.f32 %v4173
    %v5198 = vcvt.s32.f32 %v4174
    %v5199 = vcvt.s32.f32 %v4175
    %v5200 = vcvt.s32.f32 %v4176
    %v5201 = vcvt.s32.f32 %v4177
    %v5202 = vcvt.s32.f32 %v4178
    %v5203 = vcvt.s32.f32 %v4179
    %v5204 = vcvt.s32.f32 %v4180
    %v5205 = vcvt.s32.f32 %v4181
    %v5206 = vcvt.s32.f32 %v4182
    %v5207 = vcvt.s32.f32 %v4183
    %v5208 = vcvt.s32.f32 %v4184
    %v5209 = vcvt.s32.f32 %v4185
    %v5210 = vcvt.s32.f32 %v4186
    %v5211 = vcvt.s32.f32 %v4187
    %v5212 = vcvt.s32.f32 %v4188
    %v5213 = vcvt.s32.f32 %v4189
    %v5214 = vcvt.s32.f32 %v4190
    %v5215 = vcvt.s32.f32 %v4191
    %v5216 = vcvt.s32.f32 %v4192
    %v5217 = vcvt.s32.f32 %v4193
    %v5218 = vcvt.s32.f32 %v4194
    %v5219 = vcvt.s32.f32 %v4195
    %v5220 = vcvt.s32.f32 %v4196
    %v5221 = vcvt.s32.f32 %v4197
    %v5222 = vcvt.s32.f32 %v4198
    %v5223 = vcvt.s32.f32 %v4199
    %v5224 = vcvt.s32.f32 %v4200
    %v5225 = vcvt.s32.f32 %v4201
    %v5226 = vcvt.s32.f32 %v4202
    %v5227 = vcvt.s32.f32 %v4203
    %v5228 = vcvt.s32.f32 %v4204
    %v5229 = vcvt.s32.f32 %v4205
    %v5230 = vcvt.s32.f32 %v4206
    %v5231 = vcvt.s32.f32 %v4207
    %v5232 = vcvt.s32.f32 %v4208
    %v5233 = vcvt.s32.f32 %v4209
    %v5234 = vcvt.s32.f32 %v4210
    %v5235 = vcvt.s32.f32 %v4211
    %v5236 = vcvt.s32.f32 %v4212
    %v5237 = vcvt.s32.f32 %v4213
    %v5238 = vcvt.s32.f32 %v4214
    %v5239 = vcvt.s32.f32 %v4215
    %v5240 = vcvt.s32.f32 %v4216
    %v5241 = vcvt.s32.f32 %v4217
    %v5242 = vcvt.s32.f32 %v4218
    %v5243 = vcvt.s32.f32 %v4219
    %v5244 = vcvt.s32.f32 %v4220
    %v5245 = vcvt.s32.f32 %v4221
    %v5246 = vcvt.s32.f32 %v4222
    %v5247 = vcvt.s32.f32 %v4223
    %v5248 = vcvt.s32.f32 %v4224
    %v5249 = vcvt.s32.f32 %v4225
    %v5250 = vcvt.s32.f32 %v4226
    %v5251 = vcvt.s32.f32 %v4227
    %v5252 = vcvt.s32.f32 %v4228
    %v5253 = vcvt.s32.f32 %v4229
    %v5254 = vcvt.s32.f32 %v4230
    %v5255 = vcvt.s32.f32 %v4231
    %v5256 = vcvt.s32.f32 %v4232
    %v5257 = vcvt.s32.f32 %v4233
    %v5258 = vcvt.s32.f32 %v4234
    %v5259 = vcvt.s32.f32 %v4235
    %v5260 = vcvt.s32.f32 %v4236
    %v5261 = vcvt.s32.f32 %v4237
    %v5262 = vcvt.s32.f32 %v4238
    %v5263 = vcvt.s32.f32 %v4239
    %v5264 = vcvt.s32.f32 %v4240
    %v5265 = vcvt.s32.f32 %v4241
    %v5266 = vcvt.s32.f32 %v4242
    %v5267 = vcvt.s32.f32 %v4243
    %v5268 = vcvt.s32.f32 %v4244
    %v5269 = vcvt.s32.f32 %v4245
    %v5270 = vcvt.s32.f32 %v4246
    %v5271 = vcvt.s32.f32 %v4247
    %v5272 = vcvt.s32.f32 %v4248
    %v5273 = vcvt.s32.f32 %v4249
    %v5274 = vcvt.s32.f32 %v4250
    %v5275 = vcvt.s32.f32 %v4251
    %v5276 = vcvt.s32.f32 %v4252
    %v5277 = vcvt.s32.f32 %v4253
    %v5278 = vcvt.s32.f32 %v4254
    %v5279 = vcvt.s32.f32 %v4255
    %v5280 = vcvt.s32.f32 %v4256
    %v5281 = vcvt.s32.f32 %v4257
    %v5282 = vcvt.s32.f32 %v4258
    %v5283 = vcvt.s32.f32 %v4259
    %v5284 = vcvt.s32.f32 %v4260
    %v5285 = vcvt.s32.f32 %v4261
    %v5286 = vcvt.s32.f32 %v4262
    %v5287 = vcvt.s32.f32 %v4263
    %v5288 = vcvt.s32.f32 %v4264
    %v5289 = vcvt.s32.f32 %v4265
    %v5290 = vcvt.s32.f32 %v4266
    %v5291 = vcvt.s32.f32 %v4267
    %v5292 = vcvt.s32.f32 %v4268
    %v5293 = vcvt.s32.f32 %v4269
    %v5294 = vcvt.s32.f32 %v4270
    %v5295 = vcvt.s32.f32 %v4271
    %v5296 = vcvt.s32.f32 %v4272
    %v5297 = vcvt.s32.f32 %v4273
    %v5298 = vcvt.s32.f32 %v4274
    %v5299 = vcvt.s32.f32 %v4275
    %v5300 = vcvt.s32.f32 %v4276
    %v5301 = vcvt.s32.f32 %v4277
    %v5302 = vcvt.s32.f32 %v4278
    %v5303 = vcvt.s32.f32 %v4279
    %v5304 = vcvt.s32.f32 %v4280
    %v5305 = vcvt.s32.f32 %v4281
    %v5306 = vcvt.s32.f32 %v4282
    %v5307 = vcvt.s32.f32 %v4283
    %v5308 = vcvt.s32.f32 %v4284
    %v5309 = vcvt.s32.f32 %v4285
    %v5310 = vcvt.s32.f32 %v4286
    %v5311 = vcvt.s32.f32 %v4287
    %v5312 = vcvt.s32.f32 %v4288
    %v5313 = vcvt.s32.f32 %v4289
    %v5314 = vcvt.s32.f32 %v4290
    %v5315 = vcvt.s32.f32 %v4291
    %v5316 = vcvt.s32.f32 %v4292
    %v5317 = vcvt.s32.f32 %v4293
    %v5318 = vcvt.s32.f32 %v4294
    %v5319 = vcvt.s32.f32 %v4295
    %v5320 = vcvt.s32.f32 %v4296
    %v5321 = vcvt.s32.f32 %v4297
    %v5322 = vcvt.s32.f32 %v4298
    %v5323 = vcvt.s32.f32 %v4299
    %v5324 = vcvt.s32.f32 %v4300
    %v5325 = vcvt.s32.f32 %v4301
    %v5326 = vcvt.s32.f32 %v4302
    %v5327 = vcvt.s32.f32 %v4303
    %v5328 = vcvt.s32.f32 %v4304
    %v5329 = vcvt.s32.f32 %v4305
    %v5330 = vcvt.s32.f32 %v4306
    %v5331 = vcvt.s32.f32 %v4307
    %v5332 = vcvt.s32.f32 %v4308
    %v5333 = vcvt.s32.f32 %v4309
    %v5334 = vcvt.s32.f32 %v4310
    %v5335 = vcvt.s32.f32 %v4311
    %v5336 = vcvt.s32.f32 %v4312
    %v5337 = vcvt.s32.f32 %v4313
    %v5338 = vcvt.s32.f32 %v4314
    %v5339 = vcvt.s32.f32 %v4315
    %v5340 = vcvt.s32.f32 %v4316
    %v5341 = vcvt.s32.f32 %v4317
    %v5342 = vcvt.s32.f32 %v4318
    %v5343 = vcvt.s32.f32 %v4319
    %v5344 = vcvt.s32.f32 %v4320
    %v5345 = vcvt.s32.f32 %v4321
    %v5346 = vcvt.s32.f32 %v4322
    %v5347 = vcvt.s32.f32 %v4323
    %v5348 = vcvt.s32.f32 %v4324
    %v5349 = vcvt.s32.f32 %v4325
    %v5350 = vcvt.s32.f32 %v4326
    %v5351 = vcvt.s32.f32 %v4327
    %v5352 = vcvt.s32.f32 %v4328
    %v5353 = vcvt.s32.f32 %v4329
    %v5354 = vcvt.s32.f32 %v4330
    %v5355 = vcvt.s32.f32 %v4331
    %v5356 = vcvt.s32.f32 %v4332
    %v5357 = vcvt.s32.f32 %v4333
    %v5358 = vcvt.s32.f32 %v4334
    %v5359 = vcvt.s32.f32 %v4335
    %v5360 = vcvt.s32.f32 %v4336
    %v5361 = vcvt.s32.f32 %v4337
    %v5362 = vcvt.s32.f32 %v4338
    %v5363 = vcvt.s32.f32 %v4339
    %v5364 = vcvt.s32.f32 %v4340
    %v5365 = vcvt.s32.f32 %v4341
    %v5366 = vcvt.s32.f32 %v4342
    %v5367 = vcvt.s32.f32 %v4343
    %v5368 = vcvt.s32.f32 %v4344
    %v5369 = vcvt.s32.f32 %v4345
    %v5370 = vcvt.s32.f32 %v4346
    %v5371 = vcvt.s32.f32 %v4347
    %v5372 = vcvt.s32.f32 %v4348
    %v5373 = vcvt.s32.f32 %v4349
    %v5374 = vcvt.s32.f32 %v4350
    %v5375 = vcvt.s32.f32 %v4351
    %v5376 = vcvt.s32.f32 %v4352
    %v5377 = vcvt.s32.f32 %v4353
    %v5378 = vcvt.s32.f32 %v4354
    %v5379 = vcvt.s32.f32 %v4355
    %v5380 = vcvt.s32.f32 %v4356
    %v5381 = vcvt.s32.f32 %v4357
    %v5382 = vcvt.s32.f32 %v4358
    %v5383 = vcvt.s32.f32 %v4359
    %v5384 = vcvt.s32.f32 %v4360
    %v5385 = vcvt.s32.f32 %v4361
    %v5386 = vcvt.s32.f32 %v4362
    %v5387 = vcvt.s32.f32 %v4363
    %v5388 = vcvt.s32.f32 %v4364
    %v5389 = vcvt.s32.f32 %v4365
    %v5390 = vcvt.s32.f32 %v4366
    %v5391 = vcvt.s32.f32 %v4367
    %v5392 = vcvt.s32.f32 %v4368
    %v5393 = vcvt.s32.f32 %v4369
    %v5394 = vcvt.s32.f32 %v4370
    %v5395 = vcvt.s32.f32 %v4371
    %v5396 = vcvt.s32.f32 %v4372
    %v5397 = vcvt.s32.f32 %v4373
    %v5398 = vcvt.s32.f32 %v4374
    %v5399 = vcvt.s32.f32 %v4375
    %v5400 = vcvt.s32.f32 %v4376
    %v5401 = vcvt.s32.f32 %v4377
    %v5402 = vcvt.s32.f32 %v4378
    %v5403 = vcvt.s32.f32 %v4379
    %v5404 = vcvt.s32.f32 %v4380
    %v5405 = vcvt.s32.f32 %v4381
    %v5406 = vcvt.s32.f32 %v4382
    %v5407 = vcvt.s32.f32 %v4383
    %v5408 = vcvt.s32.f32 %v4384
    %v5409 = vcvt.s32.f32 %v4385
    %v5410 = vcvt.s32.f32 %v4386
    %v5411 = vcvt.s32.f32 %v4387
    %v5412 = vcvt.s32.f32 %v4388
    %v5413 = vcvt.s32.f32 %v4389
    %v5414 = vcvt.s32.f32 %v4390
    %v5415 = vcvt.s32.f32 %v4391
    %v5416 = vcvt.s32.f32 %v4392
    %v5417 = vcvt.s32.f32 %v4393
    %v5418 = vcvt.s32.f32 %v4394
    %v5419 = vcvt.s32.f32 %v4395
    %v5420 = vcvt.s32.f32 %v4396
    %v5421 = vcvt.s32.f32 %v4397
    %v5422 = vcvt.s32.f32 %v4398
    %v5423 = vcvt.s32.f32 %v4399
    %v5424 = vcvt.s32.f32 %v4400
    %v5425 = vcvt.s32.f32 %v4401
    %v5426 = vcvt.s32.f32 %v4402
    %v5427 = vcvt.s32.f32 %v4403
    %v5428 = vcvt.s32.f32 %v4404
    %v5429 = vcvt.s32.f32 %v4405
    %v5430 = vcvt.s32.f32 %v4406
    %v5431 = vcvt.s32.f32 %v4407
    %v5432 = vcvt.s32.f32 %v4408
    %v5433 = vcvt.s32.f32 %v4409
    %v5434 = vcvt.s32.f32 %v4410
    %v5435 = vcvt.s32.f32 %v4411
    %v5436 = vcvt.s32.f32 %v4412
    %v5437 = vcvt.s32.f32 %v4413
    %v5438 = vcvt.s32.f32 %v4414
    %v5439 = vcvt.s32.f32 %v4415
    %v5440 = vcvt.s32.f32 %v4416
    %v5441 = vcvt.s32.f32 %v4417
    %v5442 = vcvt.s32.f32 %v4418
    %v5443 = vcvt.s32.f32 %v4419
    %v5444 = vcvt.s32.f32 %v4420
    %v5445 = vcvt.s32.f32 %v4421
    %v5446 = vcvt.s32.f32 %v4422
    %v5447 = vcvt.s32.f32 %v4423
    %v5448 = vcvt.s32.f32 %v4424
    %v5449 = vcvt.s32.f32 %v4425
    %v5450 = vcvt.s32.f32 %v4426
    %v5451 = vcvt.s32.f32 %v4427
    %v5452 = vcvt.s32.f32 %v4428
    %v5453 = vcvt.s32.f32 %v4429
    %v5454 = vcvt.s32.f32 %v4430
    %v5455 = vcvt.s32.f32 %v4431
    %v5456 = vcvt.s32.f32 %v4432
    %v5457 = vcvt.s32.f32 %v4433
    %v5458 = vcvt.s32.f32 %v4434
    %v5459 = vcvt.s32.f32 %v4435
    %v5460 = vcvt.s32.f32 %v4436
    %v5461 = vcvt.s32.f32 %v4437
    %v5462 = vcvt.s32.f32 %v4438
    %v5463 = vcvt.s32.f32 %v4439
    %v5464 = vcvt.s32.f32 %v4440
    %v5465 = vcvt.s32.f32 %v4441
    %v5466 = vcvt.s32.f32 %v4442
    %v5467 = vcvt.s32.f32 %v4443
    %v5468 = vcvt.s32.f32 %v4444
    %v5469 = vcvt.s32.f32 %v4445
    %v5470 = vcvt.s32.f32 %v4446
    %v5471 = vcvt.s32.f32 %v4447
    %v5472 = vcvt.s32.f32 %v4448
    %v5473 = vcvt.s32.f32 %v4449
    %v5474 = vcvt.s32.f32 %v4450
    %v5475 = vcvt.s32.f32 %v4451
    %v5476 = vcvt.s32.f32 %v4452
    %v5477 = vcvt.s32.f32 %v4453
    %v5478 = vcvt.s32.f32 %v4454
    %v5479 = vcvt.s32.f32 %v4455
    %v5480 = vcvt.s32.f32 %v4456
    %v5481 = vcvt.s32.f32 %v4457
    %v5482 = vcvt.s32.f32 %v4458
    %v5483 = vcvt.s32.f32 %v4459
    %v5484 = vcvt.s32.f32 %v4460
    %v5485 = vcvt.s32.f32 %v4461
    %v5486 = vcvt.s32.f32 %v4462
    %v5487 = vcvt.s32.f32 %v4463
    %v5488 = vcvt.s32.f32 %v4464
    %v5489 = vcvt.s32.f32 %v4465
    %v5490 = vcvt.s32.f32 %v4466
    %v5491 = vcvt.s32.f32 %v4467
    %v5492 = vcvt.s32.f32 %v4468
    %v5493 = vcvt.s32.f32 %v4469
    %v5494 = vcvt.s32.f32 %v4470
    %v5495 = vcvt.s32.f32 %v4471
    %v5496 = vcvt.s32.f32 %v4472
    %v5497 = vcvt.s32.f32 %v4473
    %v5498 = vcvt.s32.f32 %v4474
    %v5499 = vcvt.s32.f32 %v4475
    %v5500 = vcvt.s32.f32 %v4476
    %v5501 = vpack.c.bf16 %v4485, %v4477
    %v5502 = vpack.c.bf16 %v4486, %v4478
    %v5503 = vpack.c.bf16 %v4487, %v4479
    %v5504 = vpack.c.bf16 %v4488, %v4480
    %v5505 = vpack.c.bf16 %v4489, %v4481
    %v5506 = vpack.c.bf16 %v4490, %v4482
    %v5507 = vpack.c.bf16 %v4491, %v4483
    %v5508 = vpack.c.bf16 %v4492, %v4484
    %v5509 = vpack.c.bf16 %v4501, %v4493
    %v5510 = vpack.c.bf16 %v4502, %v4494
    %v5511 = vpack.c.bf16 %v4503, %v4495
    %v5512 = vpack.c.bf16 %v4504, %v4496
    %v5513 = vpack.c.bf16 %v4505, %v4497
    %v5514 = vpack.c.bf16 %v4506, %v4498
    %v5515 = vpack.c.bf16 %v4507, %v4499
    %v5516 = vpack.c.bf16 %v4508, %v4500
    %v5517 = vpack.c.bf16 %v4517, %v4509
    %v5518 = vpack.c.bf16 %v4518, %v4510
    %v5519 = vpack.c.bf16 %v4519, %v4511
    %v5520 = vpack.c.bf16 %v4520, %v4512
    %v5521 = vpack.c.bf16 %v4521, %v4513
    %v5522 = vpack.c.bf16 %v4522, %v4514
    %v5523 = vpack.c.bf16 %v4523, %v4515
    %v5524 = vpack.c.bf16 %v4524, %v4516
    %v5525 = vpack.c.bf16 %v4533, %v4525
    %v5526 = vpack.c.bf16 %v4534, %v4526
    %v5527 = vpack.c.bf16 %v4535, %v4527
    %v5528 = vpack.c.bf16 %v4536, %v4528
    %v5529 = vpack.c.bf16 %v4537, %v4529
    %v5530 = vpack.c.bf16 %v4538, %v4530
    %v5531 = vpack.c.bf16 %v4539, %v4531
    %v5532 = vpack.c.bf16 %v4540, %v4532
    %v5533 = vpack.c.bf16 %v4549, %v4541
    %v5534 = vpack.c.bf16 %v4550, %v4542
    %v5535 = vpack.c.bf16 %v4551, %v4543
    %v5536 = vpack.c.bf16 %v4552, %v4544
    %v5537 = vpack.c.bf16 %v4553, %v4545
    %v5538 = vpack.c.bf16 %v4554, %v4546
    %v5539 = vpack.c.bf16 %v4555, %v4547
    %v5540 = vpack.c.bf16 %v4556, %v4548
    %v5541 = vpack.c.bf16 %v4565, %v4557
    %v5542 = vpack.c.bf16 %v4566, %v4558
    %v5543 = vpack.c.bf16 %v4567, %v4559
    %v5544 = vpack.c.bf16 %v4568, %v4560
    %v5545 = vpack.c.bf16 %v4569, %v4561
    %v5546 = vpack.c.bf16 %v4570, %v4562
    %v5547 = vpack.c.bf16 %v4571, %v4563
    %v5548 = vpack.c.bf16 %v4572, %v4564
    %v5549 = vpack.c.bf16 %v4581, %v4573
    %v5550 = vpack.c.bf16 %v4582, %v4574
    %v5551 = vpack.c.bf16 %v4583, %v4575
    %v5552 = vpack.c.bf16 %v4584, %v4576
    %v5553 = vpack.c.bf16 %v4585, %v4577
    %v5554 = vpack.c.bf16 %v4586, %v4578
    %v5555 = vpack.c.bf16 %v4587, %v4579
    %v5556 = vpack.c.bf16 %v4588, %v4580
    %v5557 = vpack.c.bf16 %v4597, %v4589
    %v5558 = vpack.c.bf16 %v4598, %v4590
    %v5559 = vpack.c.bf16 %v4599, %v4591
    %v5560 = vpack.c.bf16 %v4600, %v4592
    %v5561 = vpack.c.bf16 %v4601, %v4593
    %v5562 = vpack.c.bf16 %v4602, %v4594
    %v5563 = vpack.c.bf16 %v4603, %v4595
    %v5564 = vpack.c.bf16 %v4604, %v4596
    %v5565 = vpack.c.bf16 %v4613, %v4605
    %v5566 = vpack.c.bf16 %v4614, %v4606
    %v5567 = vpack.c.bf16 %v4615, %v4607
    %v5568 = vpack.c.bf16 %v4616, %v4608
    %v5569 = vpack.c.bf16 %v4617, %v4609
    %v5570 = vpack.c.bf16 %v4618, %v4610
    %v5571 = vpack.c.bf16 %v4619, %v4611
    %v5572 = vpack.c.bf16 %v4620, %v4612
    %v5573 = vpack.c.bf16 %v4629, %v4621
    %v5574 = vpack.c.bf16 %v4630, %v4622
    %v5575 = vpack.c.bf16 %v4631, %v4623
    %v5576 = vpack.c.bf16 %v4632, %v4624
    %v5577 = vpack.c.bf16 %v4633, %v4625
    %v5578 = vpack.c.bf16 %v4634, %v4626
    %v5579 = vpack.c.bf16 %v4635, %v4627
    %v5580 = vpack.c.bf16 %v4636, %v4628
    %v5581 = vpack.c.bf16 %v4645, %v4637
    %v5582 = vpack.c.bf16 %v4646, %v4638
    %v5583 = vpack.c.bf16 %v4647, %v4639
    %v5584 = vpack.c.bf16 %v4648, %v4640
    %v5585 = vpack.c.bf16 %v4649, %v4641
    %v5586 = vpack.c.bf16 %v4650, %v4642
    %v5587 = vpack.c.bf16 %v4651, %v4643
    %v5588 = vpack.c.bf16 %v4652, %v4644
    %v5589 = vpack.c.bf16 %v4661, %v4653
    %v5590 = vpack.c.bf16 %v4662, %v4654
    %v5591 = vpack.c.bf16 %v4663, %v4655
    %v5592 = vpack.c.bf16 %v4664, %v4656
    %v5593 = vpack.c.bf16 %v4665, %v4657
    %v5594 = vpack.c.bf16 %v4666, %v4658
    %v5595 = vpack.c.bf16 %v4667, %v4659
    %v5596 = vpack.c.bf16 %v4668, %v4660
    %v5597 = vpack.c.bf16 %v4677, %v4669
    %v5598 = vpack.c.bf16 %v4678, %v4670
    %v5599 = vpack.c.bf16 %v4679, %v4671
    %v5600 = vpack.c.bf16 %v4680, %v4672
    %v5601 = vpack.c.bf16 %v4681, %v4673
    %v5602 = vpack.c.bf16 %v4682, %v4674
    %v5603 = vpack.c.bf16 %v4683, %v4675
    %v5604 = vpack.c.bf16 %v4684, %v4676
    %v5605 = vpack.c.bf16 %v4693, %v4685
    %v5606 = vpack.c.bf16 %v4694, %v4686
    %v5607 = vpack.c.bf16 %v4695, %v4687
    %v5608 = vpack.c.bf16 %v4696, %v4688
    %v5609 = vpack.c.bf16 %v4697, %v4689
    %v5610 = vpack.c.bf16 %v4698, %v4690
    %v5611 = vpack.c.bf16 %v4699, %v4691
    %v5612 = vpack.c.bf16 %v4700, %v4692
    %v5613 = vpack.c.bf16 %v4709, %v4701
    %v5614 = vpack.c.bf16 %v4710, %v4702
    %v5615 = vpack.c.bf16 %v4711, %v4703
    %v5616 = vpack.c.bf16 %v4712, %v4704
    %v5617 = vpack.c.bf16 %v4713, %v4705
    %v5618 = vpack.c.bf16 %v4714, %v4706
    %v5619 = vpack.c.bf16 %v4715, %v4707
    %v5620 = vpack.c.bf16 %v4716, %v4708
    %v5621 = vpack.c.bf16 %v4725, %v4717
    %v5622 = vpack.c.bf16 %v4726, %v4718
    %v5623 = vpack.c.bf16 %v4727, %v4719
    %v5624 = vpack.c.bf16 %v4728, %v4720
    %v5625 = vpack.c.bf16 %v4729, %v4721
    %v5626 = vpack.c.bf16 %v4730, %v4722
    %v5627 = vpack.c.bf16 %v4731, %v4723
    %v5628 = vpack.c.bf16 %v4732, %v4724
    %v5629 = vpack.c.bf16 %v4741, %v4733
    %v5630 = vpack.c.bf16 %v4742, %v4734
    %v5631 = vpack.c.bf16 %v4743, %v4735
    %v5632 = vpack.c.bf16 %v4744, %v4736
    %v5633 = vpack.c.bf16 %v4745, %v4737
    %v5634 = vpack.c.bf16 %v4746, %v4738
    %v5635 = vpack.c.bf16 %v4747, %v4739
    %v5636 = vpack.c.bf16 %v4748, %v4740
    %v5637 = vpack.c.bf16 %v4757, %v4749
    %v5638 = vpack.c.bf16 %v4758, %v4750
    %v5639 = vpack.c.bf16 %v4759, %v4751
    %v5640 = vpack.c.bf16 %v4760, %v4752
    %v5641 = vpack.c.bf16 %v4761, %v4753
    %v5642 = vpack.c.bf16 %v4762, %v4754
    %v5643 = vpack.c.bf16 %v4763, %v4755
    %v5644 = vpack.c.bf16 %v4764, %v4756
    %v5645 = vpack.c.bf16 %v4773, %v4765
    %v5646 = vpack.c.bf16 %v4774, %v4766
    %v5647 = vpack.c.bf16 %v4775, %v4767
    %v5648 = vpack.c.bf16 %v4776, %v4768
    %v5649 = vpack.c.bf16 %v4777, %v4769
    %v5650 = vpack.c.bf16 %v4778, %v4770
    %v5651 = vpack.c.bf16 %v4779, %v4771
    %v5652 = vpack.c.bf16 %v4780, %v4772
    %v5653 = vpack.c.bf16 %v4789, %v4781
    %v5654 = vpack.c.bf16 %v4790, %v4782
    %v5655 = vpack.c.bf16 %v4791, %v4783
    %v5656 = vpack.c.bf16 %v4792, %v4784
    %v5657 = vpack.c.bf16 %v4793, %v4785
    %v5658 = vpack.c.bf16 %v4794, %v4786
    %v5659 = vpack.c.bf16 %v4795, %v4787
    %v5660 = vpack.c.bf16 %v4796, %v4788
    %v5661 = vpack.c.bf16 %v4805, %v4797
    %v5662 = vpack.c.bf16 %v4806, %v4798
    %v5663 = vpack.c.bf16 %v4807, %v4799
    %v5664 = vpack.c.bf16 %v4808, %v4800
    %v5665 = vpack.c.bf16 %v4809, %v4801
    %v5666 = vpack.c.bf16 %v4810, %v4802
    %v5667 = vpack.c.bf16 %v4811, %v4803
    %v5668 = vpack.c.bf16 %v4812, %v4804
    %v5669 = vpack.c.bf16 %v4821, %v4813
    %v5670 = vpack.c.bf16 %v4822, %v4814
    %v5671 = vpack.c.bf16 %v4823, %v4815
    %v5672 = vpack.c.bf16 %v4824, %v4816
    %v5673 = vpack.c.bf16 %v4825, %v4817
    %v5674 = vpack.c.bf16 %v4826, %v4818
    %v5675 = vpack.c.bf16 %v4827, %v4819
    %v5676 = vpack.c.bf16 %v4828, %v4820
    %v5677 = vpack.c.bf16 %v4837, %v4829
    %v5678 = vpack.c.bf16 %v4838, %v4830
    %v5679 = vpack.c.bf16 %v4839, %v4831
    %v5680 = vpack.c.bf16 %v4840, %v4832
    %v5681 = vpack.c.bf16 %v4841, %v4833
    %v5682 = vpack.c.bf16 %v4842, %v4834
    %v5683 = vpack.c.bf16 %v4843, %v4835
    %v5684 = vpack.c.bf16 %v4844, %v4836
    %v5685 = vpack.c.bf16 %v4853, %v4845
    %v5686 = vpack.c.bf16 %v4854, %v4846
    %v5687 = vpack.c.bf16 %v4855, %v4847
    %v5688 = vpack.c.bf16 %v4856, %v4848
    %v5689 = vpack.c.bf16 %v4857, %v4849
    %v5690 = vpack.c.bf16 %v4858, %v4850
    %v5691 = vpack.c.bf16 %v4859, %v4851
    %v5692 = vpack.c.bf16 %v4860, %v4852
    %v5693 = vpack.c.bf16 %v4869, %v4861
    %v5694 = vpack.c.bf16 %v4870, %v4862
    %v5695 = vpack.c.bf16 %v4871, %v4863
    %v5696 = vpack.c.bf16 %v4872, %v4864
    %v5697 = vpack.c.bf16 %v4873, %v4865
    %v5698 = vpack.c.bf16 %v4874, %v4866
    %v5699 = vpack.c.bf16 %v4875, %v4867
    %v5700 = vpack.c.bf16 %v4876, %v4868
    %v5701 = vpack.c.bf16 %v4885, %v4877
    %v5702 = vpack.c.bf16 %v4886, %v4878
    %v5703 = vpack.c.bf16 %v4887, %v4879
    %v5704 = vpack.c.bf16 %v4888, %v4880
    %v5705 = vpack.c.bf16 %v4889, %v4881
    %v5706 = vpack.c.bf16 %v4890, %v4882
    %v5707 = vpack.c.bf16 %v4891, %v4883
    %v5708 = vpack.c.bf16 %v4892, %v4884
    %v5709 = vpack.c.bf16 %v4901, %v4893
    %v5710 = vpack.c.bf16 %v4902, %v4894
    %v5711 = vpack.c.bf16 %v4903, %v4895
    %v5712 = vpack.c.bf16 %v4904, %v4896
    %v5713 = vpack.c.bf16 %v4905, %v4897
    %v5714 = vpack.c.bf16 %v4906, %v4898
    %v5715 = vpack.c.bf16 %v4907, %v4899
    %v5716 = vpack.c.bf16 %v4908, %v4900
    %v5717 = vpack.c.bf16 %v4917, %v4909
    %v5718 = vpack.c.bf16 %v4918, %v4910
    %v5719 = vpack.c.bf16 %v4919, %v4911
    %v5720 = vpack.c.bf16 %v4920, %v4912
    %v5721 = vpack.c.bf16 %v4921, %v4913
    %v5722 = vpack.c.bf16 %v4922, %v4914
    %v5723 = vpack.c.bf16 %v4923, %v4915
    %v5724 = vpack.c.bf16 %v4924, %v4916
    %v5725 = vpack.c.bf16 %v4933, %v4925
    %v5726 = vpack.c.bf16 %v4934, %v4926
    %v5727 = vpack.c.bf16 %v4935, %v4927
    %v5728 = vpack.c.bf16 %v4936, %v4928
    %v5729 = vpack.c.bf16 %v4937, %v4929
    %v5730 = vpack.c.bf16 %v4938, %v4930
    %v5731 = vpack.c.bf16 %v4939, %v4931
    %v5732 = vpack.c.bf16 %v4940, %v4932
    %v5733 = vpack.c.bf16 %v4949, %v4941
    %v5734 = vpack.c.bf16 %v4950, %v4942
    %v5735 = vpack.c.bf16 %v4951, %v4943
    %v5736 = vpack.c.bf16 %v4952, %v4944
    %v5737 = vpack.c.bf16 %v4953, %v4945
    %v5738 = vpack.c.bf16 %v4954, %v4946
    %v5739 = vpack.c.bf16 %v4955, %v4947
    %v5740 = vpack.c.bf16 %v4956, %v4948
    %v5741 = vpack.c.bf16 %v4965, %v4957
    %v5742 = vpack.c.bf16 %v4966, %v4958
    %v5743 = vpack.c.bf16 %v4967, %v4959
    %v5744 = vpack.c.bf16 %v4968, %v4960
    %v5745 = vpack.c.bf16 %v4969, %v4961
    %v5746 = vpack.c.bf16 %v4970, %v4962
    %v5747 = vpack.c.bf16 %v4971, %v4963
    %v5748 = vpack.c.bf16 %v4972, %v4964
    %v5749 = vpack.c.bf16 %v4981, %v4973
    %v5750 = vpack.c.bf16 %v4982, %v4974
    %v5751 = vpack.c.bf16 %v4983, %v4975
    %v5752 = vpack.c.bf16 %v4984, %v4976
    %v5753 = vpack.c.bf16 %v4985, %v4977
    %v5754 = vpack.c.bf16 %v4986, %v4978
    %v5755 = vpack.c.bf16 %v4987, %v4979
    %v5756 = vpack.c.bf16 %v4988, %v4980
    %v5757 = vpack.c.bf16 %v4997, %v4989
    %v5758 = vpack.c.bf16 %v4998, %v4990
    %v5759 = vpack.c.bf16 %v4999, %v4991
    %v5760 = vpack.c.bf16 %v5000, %v4992
    %v5761 = vpack.c.bf16 %v5001, %v4993
    %v5762 = vpack.c.bf16 %v5002, %v4994
    %v5763 = vpack.c.bf16 %v5003, %v4995
    %v5764 = vpack.c.bf16 %v5004, %v4996
    %v5765 = vpack.c.bf16 %v5013, %v5005
    %v5766 = vpack.c.bf16 %v5014, %v5006
    %v5767 = vpack.c.bf16 %v5015, %v5007
    %v5768 = vpack.c.bf16 %v5016, %v5008
    %v5769 = vpack.c.bf16 %v5017, %v5009
    %v5770 = vpack.c.bf16 %v5018, %v5010
    %v5771 = vpack.c.bf16 %v5019, %v5011
    %v5772 = vpack.c.bf16 %v5020, %v5012
    %v5773 = vpack.c.bf16 %v5029, %v5021
    %v5774 = vpack.c.bf16 %v5030, %v5022
    %v5775 = vpack.c.bf16 %v5031, %v5023
    %v5776 = vpack.c.bf16 %v5032, %v5024
    %v5777 = vpack.c.bf16 %v5033, %v5025
    %v5778 = vpack.c.bf16 %v5034, %v5026
    %v5779 = vpack.c.bf16 %v5035, %v5027
    %v5780 = vpack.c.bf16 %v5036, %v5028
    %v5781 = vpack.c.bf16 %v5045, %v5037
    %v5782 = vpack.c.bf16 %v5046, %v5038
    %v5783 = vpack.c.bf16 %v5047, %v5039
    %v5784 = vpack.c.bf16 %v5048, %v5040
    %v5785 = vpack.c.bf16 %v5049, %v5041
    %v5786 = vpack.c.bf16 %v5050, %v5042
    %v5787 = vpack.c.bf16 %v5051, %v5043
    %v5788 = vpack.c.bf16 %v5052, %v5044
    %v5789 = vpack.c.bf16 %v5061, %v5053
    %v5790 = vpack.c.bf16 %v5062, %v5054
    %v5791 = vpack.c.bf16 %v5063, %v5055
    %v5792 = vpack.c.bf16 %v5064, %v5056
    %v5793 = vpack.c.bf16 %v5065, %v5057
    %v5794 = vpack.c.bf16 %v5066, %v5058
    %v5795 = vpack.c.bf16 %v5067, %v5059
    %v5796 = vpack.c.bf16 %v5068, %v5060
    %v5797 = vpack.c.bf16 %v5077, %v5069
    %v5798 = vpack.c.bf16 %v5078, %v5070
    %v5799 = vpack.c.bf16 %v5079, %v5071
    %v5800 = vpack.c.bf16 %v5080, %v5072
    %v5801 = vpack.c.bf16 %v5081, %v5073
    %v5802 = vpack.c.bf16 %v5082, %v5074
    %v5803 = vpack.c.bf16 %v5083, %v5075
    %v5804 = vpack.c.bf16 %v5084, %v5076
    %v5805 = vpack.c.bf16 %v5093, %v5085
    %v5806 = vpack.c.bf16 %v5094, %v5086
    %v5807 = vpack.c.bf16 %v5095, %v5087
    %v5808 = vpack.c.bf16 %v5096, %v5088
    %v5809 = vpack.c.bf16 %v5097, %v5089
    %v5810 = vpack.c.bf16 %v5098, %v5090
    %v5811 = vpack.c.bf16 %v5099, %v5091
    %v5812 = vpack.c.bf16 %v5100, %v5092
    %v5813 = vpack.c.bf16 %v5109, %v5101
    %v5814 = vpack.c.bf16 %v5110, %v5102
    %v5815 = vpack.c.bf16 %v5111, %v5103
    %v5816 = vpack.c.bf16 %v5112, %v5104
    %v5817 = vpack.c.bf16 %v5113, %v5105
    %v5818 = vpack.c.bf16 %v5114, %v5106
    %v5819 = vpack.c.bf16 %v5115, %v5107
    %v5820 = vpack.c.bf16 %v5116, %v5108
    %v5821 = vpack.c.bf16 %v5125, %v5117
    %v5822 = vpack.c.bf16 %v5126, %v5118
    %v5823 = vpack.c.bf16 %v5127, %v5119
    %v5824 = vpack.c.bf16 %v5128, %v5120
    %v5825 = vpack.c.bf16 %v5129, %v5121
    %v5826 = vpack.c.bf16 %v5130, %v5122
    %v5827 = vpack.c.bf16 %v5131, %v5123
    %v5828 = vpack.c.bf16 %v5132, %v5124
    %v5829 = vpack.c.bf16 %v5141, %v5133
    %v5830 = vpack.c.bf16 %v5142, %v5134
    %v5831 = vpack.c.bf16 %v5143, %v5135
    %v5832 = vpack.c.bf16 %v5144, %v5136
    %v5833 = vpack.c.bf16 %v5145, %v5137
    %v5834 = vpack.c.bf16 %v5146, %v5138
    %v5835 = vpack.c.bf16 %v5147, %v5139
    %v5836 = vpack.c.bf16 %v5148, %v5140
    %v5837 = vpack.c.bf16 %v5157, %v5149
    %v5838 = vpack.c.bf16 %v5158, %v5150
    %v5839 = vpack.c.bf16 %v5159, %v5151
    %v5840 = vpack.c.bf16 %v5160, %v5152
    %v5841 = vpack.c.bf16 %v5161, %v5153
    %v5842 = vpack.c.bf16 %v5162, %v5154
    %v5843 = vpack.c.bf16 %v5163, %v5155
    %v5844 = vpack.c.bf16 %v5164, %v5156
    %v5845 = vpack.c.bf16 %v5173, %v5165
    %v5846 = vpack.c.bf16 %v5174, %v5166
    %v5847 = vpack.c.bf16 %v5175, %v5167
    %v5848 = vpack.c.bf16 %v5176, %v5168
    %v5849 = vpack.c.bf16 %v5177, %v5169
    %v5850 = vpack.c.bf16 %v5178, %v5170
    %v5851 = vpack.c.bf16 %v5179, %v5171
    %v5852 = vpack.c.bf16 %v5180, %v5172
    %v5853 = vpack.c.bf16 %v5189, %v5181
    %v5854 = vpack.c.bf16 %v5190, %v5182
    %v5855 = vpack.c.bf16 %v5191, %v5183
    %v5856 = vpack.c.bf16 %v5192, %v5184
    %v5857 = vpack.c.bf16 %v5193, %v5185
    %v5858 = vpack.c.bf16 %v5194, %v5186
    %v5859 = vpack.c.bf16 %v5195, %v5187
    %v5860 = vpack.c.bf16 %v5196, %v5188
    %v5861 = vpack.c.bf16 %v5205, %v5197
    %v5862 = vpack.c.bf16 %v5206, %v5198
    %v5863 = vpack.c.bf16 %v5207, %v5199
    %v5864 = vpack.c.bf16 %v5208, %v5200
    %v5865 = vpack.c.bf16 %v5209, %v5201
    %v5866 = vpack.c.bf16 %v5210, %v5202
    %v5867 = vpack.c.bf16 %v5211, %v5203
    %v5868 = vpack.c.bf16 %v5212, %v5204
    %v5869 = vpack.c.bf16 %v5221, %v5213
    %v5870 = vpack.c.bf16 %v5222, %v5214
    %v5871 = vpack.c.bf16 %v5223, %v5215
    %v5872 = vpack.c.bf16 %v5224, %v5216
    %v5873 = vpack.c.bf16 %v5225, %v5217
    %v5874 = vpack.c.bf16 %v5226, %v5218
    %v5875 = vpack.c.bf16 %v5227, %v5219
    %v5876 = vpack.c.bf16 %v5228, %v5220
    %v5877 = vpack.c.bf16 %v5237, %v5229
    %v5878 = vpack.c.bf16 %v5238, %v5230
    %v5879 = vpack.c.bf16 %v5239, %v5231
    %v5880 = vpack.c.bf16 %v5240, %v5232
    %v5881 = vpack.c.bf16 %v5241, %v5233
    %v5882 = vpack.c.bf16 %v5242, %v5234
    %v5883 = vpack.c.bf16 %v5243, %v5235
    %v5884 = vpack.c.bf16 %v5244, %v5236
    %v5885 = vpack.c.bf16 %v5253, %v5245
    %v5886 = vpack.c.bf16 %v5254, %v5246
    %v5887 = vpack.c.bf16 %v5255, %v5247
    %v5888 = vpack.c.bf16 %v5256, %v5248
    %v5889 = vpack.c.bf16 %v5257, %v5249
    %v5890 = vpack.c.bf16 %v5258, %v5250
    %v5891 = vpack.c.bf16 %v5259, %v5251
    %v5892 = vpack.c.bf16 %v5260, %v5252
    %v5893 = vpack.c.bf16 %v5269, %v5261
    %v5894 = vpack.c.bf16 %v5270, %v5262
    %v5895 = vpack.c.bf16 %v5271, %v5263
    %v5896 = vpack.c.bf16 %v5272, %v5264
    %v5897 = vpack.c.bf16 %v5273, %v5265
    %v5898 = vpack.c.bf16 %v5274, %v5266
    %v5899 = vpack.c.bf16 %v5275, %v5267
    %v5900 = vpack.c.bf16 %v5276, %v5268
    %v5901 = vpack.c.bf16 %v5285, %v5277
    %v5902 = vpack.c.bf16 %v5286, %v5278
    %v5903 = vpack.c.bf16 %v5287, %v5279
    %v5904 = vpack.c.bf16 %v5288, %v5280
    %v5905 = vpack.c.bf16 %v5289, %v5281
    %v5906 = vpack.c.bf16 %v5290, %v5282
    %v5907 = vpack.c.bf16 %v5291, %v5283
    %v5908 = vpack.c.bf16 %v5292, %v5284
    %v5909 = vpack.c.bf16 %v5301, %v5293
    %v5910 = vpack.c.bf16 %v5302, %v5294
    %v5911 = vpack.c.bf16 %v5303, %v5295
    %v5912 = vpack.c.bf16 %v5304, %v5296
    %v5913 = vpack.c.bf16 %v5305, %v5297
    %v5914 = vpack.c.bf16 %v5306, %v5298
    %v5915 = vpack.c.bf16 %v5307, %v5299
    %v5916 = vpack.c.bf16 %v5308, %v5300
    %v5917 = vpack.c.bf16 %v5317, %v5309
    %v5918 = vpack.c.bf16 %v5318, %v5310
    %v5919 = vpack.c.bf16 %v5319, %v5311
    %v5920 = vpack.c.bf16 %v5320, %v5312
    %v5921 = vpack.c.bf16 %v5321, %v5313
    %v5922 = vpack.c.bf16 %v5322, %v5314
    %v5923 = vpack.c.bf16 %v5323, %v5315
    %v5924 = vpack.c.bf16 %v5324, %v5316
    %v5925 = vpack.c.bf16 %v5333, %v5325
    %v5926 = vpack.c.bf16 %v5334, %v5326
    %v5927 = vpack.c.bf16 %v5335, %v5327
    %v5928 = vpack.c.bf16 %v5336, %v5328
    %v5929 = vpack.c.bf16 %v5337, %v5329
    %v5930 = vpack.c.bf16 %v5338, %v5330
    %v5931 = vpack.c.bf16 %v5339, %v5331
    %v5932 = vpack.c.bf16 %v5340, %v5332
    %v5933 = vpack.c.bf16 %v5349, %v5341
    %v5934 = vpack.c.bf16 %v5350, %v5342
    %v5935 = vpack.c.bf16 %v5351, %v5343
    %v5936 = vpack.c.bf16 %v5352, %v5344
    %v5937 = vpack.c.bf16 %v5353, %v5345
    %v5938 = vpack.c.bf16 %v5354, %v5346
    %v5939 = vpack.c.bf16 %v5355, %v5347
    %v5940 = vpack.c.bf16 %v5356, %v5348
    %v5941 = vpack.c.bf16 %v5365, %v5357
    %v5942 = vpack.c.bf16 %v5366, %v5358
    %v5943 = vpack.c.bf16 %v5367, %v5359
    %v5944 = vpack.c.bf16 %v5368, %v5360
    %v5945 = vpack.c.bf16 %v5369, %v5361
    %v5946 = vpack.c.bf16 %v5370, %v5362
    %v5947 = vpack.c.bf16 %v5371, %v5363
    %v5948 = vpack.c.bf16 %v5372, %v5364
    %v5949 = vpack.c.bf16 %v5381, %v5373
    %v5950 = vpack.c.bf16 %v5382, %v5374
    %v5951 = vpack.c.bf16 %v5383, %v5375
    %v5952 = vpack.c.bf16 %v5384, %v5376
    %v5953 = vpack.c.bf16 %v5385, %v5377
    %v5954 = vpack.c.bf16 %v5386, %v5378
    %v5955 = vpack.c.bf16 %v5387, %v5379
    %v5956 = vpack.c.bf16 %v5388, %v5380
    %v5957 = vpack.c.bf16 %v5397, %v5389
    %v5958 = vpack.c.bf16 %v5398, %v5390
    %v5959 = vpack.c.bf16 %v5399, %v5391
    %v5960 = vpack.c.bf16 %v5400, %v5392
    %v5961 = vpack.c.bf16 %v5401, %v5393
    %v5962 = vpack.c.bf16 %v5402, %v5394
    %v5963 = vpack.c.bf16 %v5403, %v5395
    %v5964 = vpack.c.bf16 %v5404, %v5396
    %v5965 = vpack.c.bf16 %v5413, %v5405
    %v5966 = vpack.c.bf16 %v5414, %v5406
    %v5967 = vpack.c.bf16 %v5415, %v5407
    %v5968 = vpack.c.bf16 %v5416, %v5408
    %v5969 = vpack.c.bf16 %v5417, %v5409
    %v5970 = vpack.c.bf16 %v5418, %v5410
    %v5971 = vpack.c.bf16 %v5419, %v5411
    %v5972 = vpack.c.bf16 %v5420, %v5412
    %v5973 = vpack.c.bf16 %v5429, %v5421
    %v5974 = vpack.c.bf16 %v5430, %v5422
    %v5975 = vpack.c.bf16 %v5431, %v5423
    %v5976 = vpack.c.bf16 %v5432, %v5424
    %v5977 = vpack.c.bf16 %v5433, %v5425
    %v5978 = vpack.c.bf16 %v5434, %v5426
    %v5979 = vpack.c.bf16 %v5435, %v5427
    %v5980 = vpack.c.bf16 %v5436, %v5428
    %v5981 = vpack.c.bf16 %v5445, %v5437
    %v5982 = vpack.c.bf16 %v5446, %v5438
    %v5983 = vpack.c.bf16 %v5447, %v5439
    %v5984 = vpack.c.bf16 %v5448, %v5440
    %v5985 = vpack.c.bf16 %v5449, %v5441
    %v5986 = vpack.c.bf16 %v5450, %v5442
    %v5987 = vpack.c.bf16 %v5451, %v5443
    %v5988 = vpack.c.bf16 %v5452, %v5444
    %v5989 = vpack.c.bf16 %v5461, %v5453
    %v5990 = vpack.c.bf16 %v5462, %v5454
    %v5991 = vpack.c.bf16 %v5463, %v5455
    %v5992 = vpack.c.bf16 %v5464, %v5456
    %v5993 = vpack.c.bf16 %v5465, %v5457
    %v5994 = vpack.c.bf16 %v5466, %v5458
    %v5995 = vpack.c.bf16 %v5467, %v5459
    %v5996 = vpack.c.bf16 %v5468, %v5460
    %v5997 = vpack.c.bf16 %v5477, %v5469
    %v5998 = vpack.c.bf16 %v5478, %v5470
    %v5999 = vpack.c.bf16 %v5479, %v5471
    %v6000 = vpack.c.bf16 %v5480, %v5472
    %v6001 = vpack.c.bf16 %v5481, %v5473
    %v6002 = vpack.c.bf16 %v5482, %v5474
    %v6003 = vpack.c.bf16 %v5483, %v5475
    %v6004 = vpack.c.bf16 %v5484, %v5476
    %v6005 = vpack.c.bf16 %v5493, %v5485
    %v6006 = vpack.c.bf16 %v5494, %v5486
    %v6007 = vpack.c.bf16 %v5495, %v5487
    %v6008 = vpack.c.bf16 %v5496, %v5488
    %v6009 = vpack.c.bf16 %v5497, %v5489
    %v6010 = vpack.c.bf16 %v5498, %v5490
    %v6011 = vpack.c.bf16 %v5499, %v5491
    %v6012 = vpack.c.bf16 %v5500, %v5492
    %6013 = vmatpush.bf16.msra.mxu0 %v5557
    %6014 = vmatpush.bf16.msra.mxu0 %v5549
    %6015 = vmatpush.bf16.msra.mxu0 %v5541
    %6016 = vmatpush.bf16.msra.mxu0 %v5533
    %6017 = vmatpush.bf16.msra.mxu0 %v5525
    %6018 = vmatpush.bf16.msra.mxu0 %v5517
    %6019 = vmatpush.bf16.msra.mxu0 %v5509
    %6020 = vmatpush.bf16.msra.mxu0 %v5501
    %6021 = vmatmul.bf16.gmra.mxu0 %v3189
    %v6022 = vpop.f32.mrf.mxu0
    %v6023 = vadd.f32 0.0, %v6022
    %v6024 = vpop.f32.mrf.mxu0
    %6025 = vdwg.mxu0
    %6026 = vmatpush.bf16.msra.mxu0 %v5621
    %6027 = vmatpush.bf16.msra.mxu0 %v5613
    %6028 = vmatpush.bf16.msra.mxu0 %v5605
    %6029 = vmatpush.bf16.msra.mxu0 %v5597
    %6030 = vmatpush.bf16.msra.mxu0 %v5589
    %6031 = vmatpush.bf16.msra.mxu0 %v5581
    %6032 = vmatpush.bf16.msra.mxu0 %v5573
    %6033 = vmatpush.bf16.msra.mxu0 %v5565
    %6034 = vmatmul.bf16.gmra.mxu0 %v3190
    %v6035 = vpop.f32.mrf.mxu0
    %v6036 = vadd.f32 %v6023, %v6035
    %v6037 = vpop.f32.mrf.mxu0
    %6038 = vdwg.mxu0
    %6039 = vmatpush.bf16.msra.mxu0 %v5685
    %6040 = vmatpush.bf16.msra.mxu0 %v5677
    %6041 = vmatpush.bf16.msra.mxu0 %v5669
    %6042 = vmatpush.bf16.msra.mxu0 %v5661
    %6043 = vmatpush.bf16.msra.mxu0 %v5653
    %6044 = vmatpush.bf16.msra.mxu0 %v5645
    %6045 = vmatpush.bf16.msra.mxu0 %v5637
    %6046 = vmatpush.bf16.msra.mxu0 %v5629
    %6047 = vmatmul.bf16.gmra.mxu0 %v3191
    %v6048 = vpop.f32.mrf.mxu0
    %v6049 = vadd.f32 %v6036, %v6048
    %v6050 = vpop.f32.mrf.mxu0
    %6051 = vdwg.mxu0
    %6052 = vmatpush.bf16.msra.mxu0 %v5749
    %6053 = vmatpush.bf16.msra.mxu0 %v5741
    %6054 = vmatpush.bf16.msra.mxu0 %v5733
    %6055 = vmatpush.bf16.msra.mxu0 %v5725
    %6056 = vmatpush.bf16.msra.mxu0 %v5717
    %6057 = vmatpush.bf16.msra.mxu0 %v5709
    %6058 = vmatpush.bf16.msra.mxu0 %v5701
    %6059 = vmatpush.bf16.msra.mxu0 %v5693
    %6060 = vmatmul.bf16.gmra.mxu0 %v3192
    %v6061 = vpop.f32.mrf.mxu0
    %v6062 = vadd.f32 %v6049, %v6061
    %v6063 = vpop.f32.mrf.mxu0
    %6064 = vdwg.mxu0
    %6065 = vmatpush.bf16.msra.mxu0 %v5813
    %6066 = vmatpush.bf16.msra.mxu0 %v5805
    %6067 = vmatpush.bf16.msra.mxu0 %v5797
    %6068 = vmatpush.bf16.msra.mxu0 %v5789
    %6069 = vmatpush.bf16.msra.mxu0 %v5781
    %6070 = vmatpush.bf16.msra.mxu0 %v5773
    %6071 = vmatpush.bf16.msra.mxu0 %v5765
    %6072 = vmatpush.bf16.msra.mxu0 %v5757
    %6073 = vmatmul.bf16.gmra.mxu0 %v3193
    %v6074 = vpop.f32.mrf.mxu0
    %v6075 = vadd.f32 %v6062, %v6074
    %v6076 = vpop.f32.mrf.mxu0
    %6077 = vdwg.mxu0
    %6078 = vmatpush.bf16.msra.mxu0 %v5877
    %6079 = vmatpush.bf16.msra.mxu0 %v5869
    %6080 = vmatpush.bf16.msra.mxu0 %v5861
    %6081 = vmatpush.bf16.msra.mxu0 %v5853
    %6082 = vmatpush.bf16.msra.mxu0 %v5845
    %6083 = vmatpush.bf16.msra.mxu0 %v5837
    %6084 = vmatpush.bf16.msra.mxu0 %v5829
    %6085 = vmatpush.bf16.msra.mxu0 %v5821
    %6086 = vmatmul.bf16.gmra.mxu0 %v3194
    %v6087 = vpop.f32.mrf.mxu0
    %v6088 = vadd.f32 %v6075, %v6087
    %v6089 = vpop.f32.mrf.mxu0
    %6090 = vdwg.mxu0
    %6091 = vmatpush.bf16.msra.mxu0 %v5941
    %6092 = vmatpush.bf16.msra.mxu0 %v5933
    %6093 = vmatpush.bf16.msra.mxu0 %v5925
    %6094 = vmatpush.bf16.msra.mxu0 %v5917
    %6095 = vmatpush.bf16.msra.mxu0 %v5909
    %6096 = vmatpush.bf16.msra.mxu0 %v5901
    %6097 = vmatpush.bf16.msra.mxu0 %v5893
    %6098 = vmatpush.bf16.msra.mxu0 %v5885
    %6099 = vmatmul.bf16.gmra.mxu0 %v3195
    %v6100 = vpop.f32.mrf.mxu0
    %v6101 = vadd.f32 %v6088, %v6100
    %v6102 = vpop.f32.mrf.mxu0
    %6103 = vdwg.mxu0
    %6104 = vmatpush.bf16.msra.mxu0 %v6005
    %6105 = vmatpush.bf16.msra.mxu0 %v5997
    %6106 = vmatpush.bf16.msra.mxu0 %v5989
    %6107 = vmatpush.bf16.msra.mxu0 %v5981
    %6108 = vmatpush.bf16.msra.mxu0 %v5973
    %6109 = vmatpush.bf16.msra.mxu0 %v5965
    %6110 = vmatpush.bf16.msra.mxu0 %v5957
    %6111 = vmatpush.bf16.msra.mxu0 %v5949
    %6112 = vmatmul.bf16.gmra.mxu0 %v3196
    %v6113 = vpop.f32.mrf.mxu0
    %v6114 = vadd.f32 %v6101, %v6113
    %v6115 = vpop.f32.mrf.mxu0
    %6116 = vdwg.mxu0
    %6117 = vmatpush.bf16.msra.mxu0 %v5558
    %6118 = vmatpush.bf16.msra.mxu0 %v5550
    %6119 = vmatpush.bf16.msra.mxu0 %v5542
    %6120 = vmatpush.bf16.msra.mxu0 %v5534
    %6121 = vmatpush.bf16.msra.mxu0 %v5526
    %6122 = vmatpush.bf16.msra.mxu0 %v5518
    %6123 = vmatpush.bf16.msra.mxu0 %v5510
    %6124 = vmatpush.bf16.msra.mxu0 %v5502
    %6125 = vmatmul.bf16.gmra.mxu0 %v3189
    %v6126 = vpop.f32.mrf.mxu0
    %v6127 = vadd.f32 0.0, %v6126
    %v6128 = vpop.f32.mrf.mxu0
    %6129 = vdwg.mxu0
    %6130 = vmatpush.bf16.msra.mxu0 %v5622
    %6131 = vmatpush.bf16.msra.mxu0 %v5614
    %6132 = vmatpush.bf16.msra.mxu0 %v5606
    %6133 = vmatpush.bf16.msra.mxu0 %v5598
    %6134 = vmatpush.bf16.msra.mxu0 %v5590
    %6135 = vmatpush.bf16.msra.mxu0 %v5582
    %6136 = vmatpush.bf16.msra.mxu0 %v5574
    %6137 = vmatpush.bf16.msra.mxu0 %v5566
    %6138 = vmatmul.bf16.gmra.mxu0 %v3190
    %v6139 = vpop.f32.mrf.mxu0
    %v6140 = vadd.f32 %v6127, %v6139
    %v6141 = vpop.f32.mrf.mxu0
    %6142 = vdwg.mxu0
    %6143 = vmatpush.bf16.msra.mxu0 %v5686
    %6144 = vmatpush.bf16.msra.mxu0 %v5678
    %6145 = vmatpush.bf16.msra.mxu0 %v5670
    %6146 = vmatpush.bf16.msra.mxu0 %v5662
    %6147 = vmatpush.bf16.msra.mxu0 %v5654
    %6148 = vmatpush.bf16.msra.mxu0 %v5646
    %6149 = vmatpush.bf16.msra.mxu0 %v5638
    %6150 = vmatpush.bf16.msra.mxu0 %v5630
    %6151 = vmatmul.bf16.gmra.mxu0 %v3191
    %v6152 = vpop.f32.mrf.mxu0
    %v6153 = vadd.f32 %v6140, %v6152
    %v6154 = vpop.f32.mrf.mxu0
    %6155 = vdwg.mxu0
    %6156 = vmatpush.bf16.msra.mxu0 %v5750
    %6157 = vmatpush.bf16.msra.mxu0 %v5742
    %6158 = vmatpush.bf16.msra.mxu0 %v5734
    %6159 = vmatpush.bf16.msra.mxu0 %v5726
    %6160 = vmatpush.bf16.msra.mxu0 %v5718
    %6161 = vmatpush.bf16.msra.mxu0 %v5710
    %6162 = vmatpush.bf16.msra.mxu0 %v5702
    %6163 = vmatpush.bf16.msra.mxu0 %v5694
    %6164 = vmatmul.bf16.gmra.mxu0 %v3192
    %v6165 = vpop.f32.mrf.mxu0
    %v6166 = vadd.f32 %v6153, %v6165
    %v6167 = vpop.f32.mrf.mxu0
    %6168 = vdwg.mxu0
    %6169 = vmatpush.bf16.msra.mxu0 %v5814
    %6170 = vmatpush.bf16.msra.mxu0 %v5806
    %6171 = vmatpush.bf16.msra.mxu0 %v5798
    %6172 = vmatpush.bf16.msra.mxu0 %v5790
    %6173 = vmatpush.bf16.msra.mxu0 %v5782
    %6174 = vmatpush.bf16.msra.mxu0 %v5774
    %6175 = vmatpush.bf16.msra.mxu0 %v5766
    %6176 = vmatpush.bf16.msra.mxu0 %v5758
    %6177 = vmatmul.bf16.gmra.mxu0 %v3193
    %v6178 = vpop.f32.mrf.mxu0
    %v6179 = vadd.f32 %v6166, %v6178
    %v6180 = vpop.f32.mrf.mxu0
    %6181 = vdwg.mxu0
    %6182 = vmatpush.bf16.msra.mxu0 %v5878
    %6183 = vmatpush.bf16.msra.mxu0 %v5870
    %6184 = vmatpush.bf16.msra.mxu0 %v5862
    %6185 = vmatpush.bf16.msra.mxu0 %v5854
    %6186 = vmatpush.bf16.msra.mxu0 %v5846
    %6187 = vmatpush.bf16.msra.mxu0 %v5838
    %6188 = vmatpush.bf16.msra.mxu0 %v5830
    %6189 = vmatpush.bf16.msra.mxu0 %v5822
    %6190 = vmatmul.bf16.gmra.mxu0 %v3194
    %v6191 = vpop.f32.mrf.mxu0
    %v6192 = vadd.f32 %v6179, %v6191
    %v6193 = vpop.f32.mrf.mxu0
    %6194 = vdwg.mxu0
    %6195 = vmatpush.bf16.msra.mxu0 %v5942
    %6196 = vmatpush.bf16.msra.mxu0 %v5934
    %6197 = vmatpush.bf16.msra.mxu0 %v5926
    %6198 = vmatpush.bf16.msra.mxu0 %v5918
    %6199 = vmatpush.bf16.msra.mxu0 %v5910
    %6200 = vmatpush.bf16.msra.mxu0 %v5902
    %6201 = vmatpush.bf16.msra.mxu0 %v5894
    %6202 = vmatpush.bf16.msra.mxu0 %v5886
    %6203 = vmatmul.bf16.gmra.mxu0 %v3195
    %v6204 = vpop.f32.mrf.mxu0
    %v6205 = vadd.f32 %v6192, %v6204
    %v6206 = vpop.f32.mrf.mxu0
    %6207 = vdwg.mxu0
    %6208 = vmatpush.bf16.msra.mxu0 %v6006
    %6209 = vmatpush.bf16.msra.mxu0 %v5998
    %6210 = vmatpush.bf16.msra.mxu0 %v5990
    %6211 = vmatpush.bf16.msra.mxu0 %v5982
    %6212 = vmatpush.bf16.msra.mxu0 %v5974
    %6213 = vmatpush.bf16.msra.mxu0 %v5966
    %6214 = vmatpush.bf16.msra.mxu0 %v5958
    %6215 = vmatpush.bf16.msra.mxu0 %v5950
    %6216 = vmatmul.bf16.gmra.mxu0 %v3196
    %v6217 = vpop.f32.mrf.mxu0
    %v6218 = vadd.f32 %v6205, %v6217
    %v6219 = vpop.f32.mrf.mxu0
    %6220 = vdwg.mxu0
    %6221 = vmatpush.bf16.msra.mxu0 %v5559
    %6222 = vmatpush.bf16.msra.mxu0 %v5551
    %6223 = vmatpush.bf16.msra.mxu0 %v5543
    %6224 = vmatpush.bf16.msra.mxu0 %v5535
    %6225 = vmatpush.bf16.msra.mxu0 %v5527
    %6226 = vmatpush.bf16.msra.mxu0 %v5519
    %6227 = vmatpush.bf16.msra.mxu0 %v5511
    %6228 = vmatpush.bf16.msra.mxu0 %v5503
    %6229 = vmatmul.bf16.gmra.mxu0 %v3189
    %v6230 = vpop.f32.mrf.mxu0
    %v6231 = vadd.f32 0.0, %v6230
    %v6232 = vpop.f32.mrf.mxu0
    %6233 = vdwg.mxu0
    %6234 = vmatpush.bf16.msra.mxu0 %v5623
    %6235 = vmatpush.bf16.msra.mxu0 %v5615
    %6236 = vmatpush.bf16.msra.mxu0 %v5607
    %6237 = vmatpush.bf16.msra.mxu0 %v5599
    %6238 = vmatpush.bf16.msra.mxu0 %v5591
    %6239 = vmatpush.bf16.msra.mxu0 %v5583
    %6240 = vmatpush.bf16.msra.mxu0 %v5575
    %6241 = vmatpush.bf16.msra.mxu0 %v5567
    %6242 = vmatmul.bf16.gmra.mxu0 %v3190
    %v6243 = vpop.f32.mrf.mxu0
    %v6244 = vadd.f32 %v6231, %v6243
    %v6245 = vpop.f32.mrf.mxu0
    %6246 = vdwg.mxu0
    %6247 = vmatpush.bf16.msra.mxu0 %v5687
    %6248 = vmatpush.bf16.msra.mxu0 %v5679
    %6249 = vmatpush.bf16.msra.mxu0 %v5671
    %6250 = vmatpush.bf16.msra.mxu0 %v5663
    %6251 = vmatpush.bf16.msra.mxu0 %v5655
    %6252 = vmatpush.bf16.msra.mxu0 %v5647
    %6253 = vmatpush.bf16.msra.mxu0 %v5639
    %6254 = vmatpush.bf16.msra.mxu0 %v5631
    %6255 = vmatmul.bf16.gmra.mxu0 %v3191
    %v6256 = vpop.f32.mrf.mxu0
    %v6257 = vadd.f32 %v6244, %v6256
    %v6258 = vpop.f32.mrf.mxu0
    %6259 = vdwg.mxu0
    %6260 = vmatpush.bf16.msra.mxu0 %v5751
    %6261 = vmatpush.bf16.msra.mxu0 %v5743
    %6262 = vmatpush.bf16.msra.mxu0 %v5735
    %6263 = vmatpush.bf16.msra.mxu0 %v5727
    %6264 = vmatpush.bf16.msra.mxu0 %v5719
    %6265 = vmatpush.bf16.msra.mxu0 %v5711
    %6266 = vmatpush.bf16.msra.mxu0 %v5703
    %6267 = vmatpush.bf16.msra.mxu0 %v5695
    %6268 = vmatmul.bf16.gmra.mxu0 %v3192
    %v6269 = vpop.f32.mrf.mxu0
    %v6270 = vadd.f32 %v6257, %v6269
    %v6271 = vpop.f32.mrf.mxu0
    %6272 = vdwg.mxu0
    %6273 = vmatpush.bf16.msra.mxu0 %v5815
    %6274 = vmatpush.bf16.msra.mxu0 %v5807
    %6275 = vmatpush.bf16.msra.mxu0 %v5799
    %6276 = vmatpush.bf16.msra.mxu0 %v5791
    %6277 = vmatpush.bf16.msra.mxu0 %v5783
    %6278 = vmatpush.bf16.msra.mxu0 %v5775
    %6279 = vmatpush.bf16.msra.mxu0 %v5767
    %6280 = vmatpush.bf16.msra.mxu0 %v5759
    %6281 = vmatmul.bf16.gmra.mxu0 %v3193
    %v6282 = vpop.f32.mrf.mxu0
    %v6283 = vadd.f32 %v6270, %v6282
    %v6284 = vpop.f32.mrf.mxu0
    %6285 = vdwg.mxu0
    %6286 = vmatpush.bf16.msra.mxu0 %v5879
    %6287 = vmatpush.bf16.msra.mxu0 %v5871
    %6288 = vmatpush.bf16.msra.mxu0 %v5863
    %6289 = vmatpush.bf16.msra.mxu0 %v5855
    %6290 = vmatpush.bf16.msra.mxu0 %v5847
    %6291 = vmatpush.bf16.msra.mxu0 %v5839
    %6292 = vmatpush.bf16.msra.mxu0 %v5831
    %6293 = vmatpush.bf16.msra.mxu0 %v5823
    %6294 = vmatmul.bf16.gmra.mxu0 %v3194
    %v6295 = vpop.f32.mrf.mxu0
    %v6296 = vadd.f32 %v6283, %v6295
    %v6297 = vpop.f32.mrf.mxu0
    %6298 = vdwg.mxu0
    %6299 = vmatpush.bf16.msra.mxu0 %v5943
    %6300 = vmatpush.bf16.msra.mxu0 %v5935
    %6301 = vmatpush.bf16.msra.mxu0 %v5927
    %6302 = vmatpush.bf16.msra.mxu0 %v5919
    %6303 = vmatpush.bf16.msra.mxu0 %v5911
    %6304 = vmatpush.bf16.msra.mxu0 %v5903
    %6305 = vmatpush.bf16.msra.mxu0 %v5895
    %6306 = vmatpush.bf16.msra.mxu0 %v5887
    %6307 = vmatmul.bf16.gmra.mxu0 %v3195
    %v6308 = vpop.f32.mrf.mxu0
    %v6309 = vadd.f32 %v6296, %v6308
    %v6310 = vpop.f32.mrf.mxu0
    %6311 = vdwg.mxu0
    %6312 = vmatpush.bf16.msra.mxu0 %v6007
    %6313 = vmatpush.bf16.msra.mxu0 %v5999
    %6314 = vmatpush.bf16.msra.mxu0 %v5991
    %6315 = vmatpush.bf16.msra.mxu0 %v5983
    %6316 = vmatpush.bf16.msra.mxu0 %v5975
    %6317 = vmatpush.bf16.msra.mxu0 %v5967
    %6318 = vmatpush.bf16.msra.mxu0 %v5959
    %6319 = vmatpush.bf16.msra.mxu0 %v5951
    %6320 = vmatmul.bf16.gmra.mxu0 %v3196
    %v6321 = vpop.f32.mrf.mxu0
    %v6322 = vadd.f32 %v6309, %v6321
    %v6323 = vpop.f32.mrf.mxu0
    %6324 = vdwg.mxu0
    %6325 = vmatpush.bf16.msra.mxu0 %v5560
    %6326 = vmatpush.bf16.msra.mxu0 %v5552
    %6327 = vmatpush.bf16.msra.mxu0 %v5544
    %6328 = vmatpush.bf16.msra.mxu0 %v5536
    %6329 = vmatpush.bf16.msra.mxu0 %v5528
    %6330 = vmatpush.bf16.msra.mxu0 %v5520
    %6331 = vmatpush.bf16.msra.mxu0 %v5512
    %6332 = vmatpush.bf16.msra.mxu0 %v5504
    %6333 = vmatmul.bf16.gmra.mxu0 %v3189
    %v6334 = vpop.f32.mrf.mxu0
    %v6335 = vadd.f32 0.0, %v6334
    %v6336 = vpop.f32.mrf.mxu0
    %6337 = vdwg.mxu0
    %6338 = vmatpush.bf16.msra.mxu0 %v5624
    %6339 = vmatpush.bf16.msra.mxu0 %v5616
    %6340 = vmatpush.bf16.msra.mxu0 %v5608
    %6341 = vmatpush.bf16.msra.mxu0 %v5600
    %6342 = vmatpush.bf16.msra.mxu0 %v5592
    %6343 = vmatpush.bf16.msra.mxu0 %v5584
    %6344 = vmatpush.bf16.msra.mxu0 %v5576
    %6345 = vmatpush.bf16.msra.mxu0 %v5568
    %6346 = vmatmul.bf16.gmra.mxu0 %v3190
    %v6347 = vpop.f32.mrf.mxu0
    %v6348 = vadd.f32 %v6335, %v6347
    %v6349 = vpop.f32.mrf.mxu0
    %6350 = vdwg.mxu0
    %6351 = vmatpush.bf16.msra.mxu0 %v5688
    %6352 = vmatpush.bf16.msra.mxu0 %v5680
    %6353 = vmatpush.bf16.msra.mxu0 %v5672
    %6354 = vmatpush.bf16.msra.mxu0 %v5664
    %6355 = vmatpush.bf16.msra.mxu0 %v5656
    %6356 = vmatpush.bf16.msra.mxu0 %v5648
    %6357 = vmatpush.bf16.msra.mxu0 %v5640
    %6358 = vmatpush.bf16.msra.mxu0 %v5632
    %6359 = vmatmul.bf16.gmra.mxu0 %v3191
    %v6360 = vpop.f32.mrf.mxu0
    %v6361 = vadd.f32 %v6348, %v6360
    %v6362 = vpop.f32.mrf.mxu0
    %6363 = vdwg.mxu0
    %6364 = vmatpush.bf16.msra.mxu0 %v5752
    %6365 = vmatpush.bf16.msra.mxu0 %v5744
    %6366 = vmatpush.bf16.msra.mxu0 %v5736
    %6367 = vmatpush.bf16.msra.mxu0 %v5728
    %6368 = vmatpush.bf16.msra.mxu0 %v5720
    %6369 = vmatpush.bf16.msra.mxu0 %v5712
    %6370 = vmatpush.bf16.msra.mxu0 %v5704
    %6371 = vmatpush.bf16.msra.mxu0 %v5696
    %6372 = vmatmul.bf16.gmra.mxu0 %v3192
    %v6373 = vpop.f32.mrf.mxu0
    %v6374 = vadd.f32 %v6361, %v6373
    %v6375 = vpop.f32.mrf.mxu0
    %6376 = vdwg.mxu0
    %6377 = vmatpush.bf16.msra.mxu0 %v5816
    %6378 = vmatpush.bf16.msra.mxu0 %v5808
    %6379 = vmatpush.bf16.msra.mxu0 %v5800
    %6380 = vmatpush.bf16.msra.mxu0 %v5792
    %6381 = vmatpush.bf16.msra.mxu0 %v5784
    %6382 = vmatpush.bf16.msra.mxu0 %v5776
    %6383 = vmatpush.bf16.msra.mxu0 %v5768
    %6384 = vmatpush.bf16.msra.mxu0 %v5760
    %6385 = vmatmul.bf16.gmra.mxu0 %v3193
    %v6386 = vpop.f32.mrf.mxu0
    %v6387 = vadd.f32 %v6374, %v6386
    %v6388 = vpop.f32.mrf.mxu0
    %6389 = vdwg.mxu0
    %6390 = vmatpush.bf16.msra.mxu0 %v5880
    %6391 = vmatpush.bf16.msra.mxu0 %v5872
    %6392 = vmatpush.bf16.msra.mxu0 %v5864
    %6393 = vmatpush.bf16.msra.mxu0 %v5856
    %6394 = vmatpush.bf16.msra.mxu0 %v5848
    %6395 = vmatpush.bf16.msra.mxu0 %v5840
    %6396 = vmatpush.bf16.msra.mxu0 %v5832
    %6397 = vmatpush.bf16.msra.mxu0 %v5824
    %6398 = vmatmul.bf16.gmra.mxu0 %v3194
    %v6399 = vpop.f32.mrf.mxu0
    %v6400 = vadd.f32 %v6387, %v6399
    %v6401 = vpop.f32.mrf.mxu0
    %6402 = vdwg.mxu0
    %6403 = vmatpush.bf16.msra.mxu0 %v5944
    %6404 = vmatpush.bf16.msra.mxu0 %v5936
    %6405 = vmatpush.bf16.msra.mxu0 %v5928
    %6406 = vmatpush.bf16.msra.mxu0 %v5920
    %6407 = vmatpush.bf16.msra.mxu0 %v5912
    %6408 = vmatpush.bf16.msra.mxu0 %v5904
    %6409 = vmatpush.bf16.msra.mxu0 %v5896
    %6410 = vmatpush.bf16.msra.mxu0 %v5888
    %6411 = vmatmul.bf16.gmra.mxu0 %v3195
    %v6412 = vpop.f32.mrf.mxu0
    %v6413 = vadd.f32 %v6400, %v6412
    %v6414 = vpop.f32.mrf.mxu0
    %6415 = vdwg.mxu0
    %6416 = vmatpush.bf16.msra.mxu0 %v6008
    %6417 = vmatpush.bf16.msra.mxu0 %v6000
    %6418 = vmatpush.bf16.msra.mxu0 %v5992
    %6419 = vmatpush.bf16.msra.mxu0 %v5984
    %6420 = vmatpush.bf16.msra.mxu0 %v5976
    %6421 = vmatpush.bf16.msra.mxu0 %v5968
    %6422 = vmatpush.bf16.msra.mxu0 %v5960
    %6423 = vmatpush.bf16.msra.mxu0 %v5952
    %6424 = vmatmul.bf16.gmra.mxu0 %v3196
    %v6425 = vpop.f32.mrf.mxu0
    %v6426 = vadd.f32 %v6413, %v6425
    %v6427 = vpop.f32.mrf.mxu0
    %6428 = vdwg.mxu0
    %6429 = vmatpush.bf16.msra.mxu0 %v5561
    %6430 = vmatpush.bf16.msra.mxu0 %v5553
    %6431 = vmatpush.bf16.msra.mxu0 %v5545
    %6432 = vmatpush.bf16.msra.mxu0 %v5537
    %6433 = vmatpush.bf16.msra.mxu0 %v5529
    %6434 = vmatpush.bf16.msra.mxu0 %v5521
    %6435 = vmatpush.bf16.msra.mxu0 %v5513
    %6436 = vmatpush.bf16.msra.mxu0 %v5505
    %6437 = vmatmul.bf16.gmra.mxu0 %v3189
    %v6438 = vpop.f32.mrf.mxu0
    %v6439 = vadd.f32 0.0, %v6438
    %v6440 = vpop.f32.mrf.mxu0
    %6441 = vdwg.mxu0
    %6442 = vmatpush.bf16.msra.mxu0 %v5625
    %6443 = vmatpush.bf16.msra.mxu0 %v5617
    %6444 = vmatpush.bf16.msra.mxu0 %v5609
    %6445 = vmatpush.bf16.msra.mxu0 %v5601
    %6446 = vmatpush.bf16.msra.mxu0 %v5593
    %6447 = vmatpush.bf16.msra.mxu0 %v5585
    %6448 = vmatpush.bf16.msra.mxu0 %v5577
    %6449 = vmatpush.bf16.msra.mxu0 %v5569
    %6450 = vmatmul.bf16.gmra.mxu0 %v3190
    %v6451 = vpop.f32.mrf.mxu0
    %v6452 = vadd.f32 %v6439, %v6451
    %v6453 = vpop.f32.mrf.mxu0
    %6454 = vdwg.mxu0
    %6455 = vmatpush.bf16.msra.mxu0 %v5689
    %6456 = vmatpush.bf16.msra.mxu0 %v5681
    %6457 = vmatpush.bf16.msra.mxu0 %v5673
    %6458 = vmatpush.bf16.msra.mxu0 %v5665
    %6459 = vmatpush.bf16.msra.mxu0 %v5657
    %6460 = vmatpush.bf16.msra.mxu0 %v5649
    %6461 = vmatpush.bf16.msra.mxu0 %v5641
    %6462 = vmatpush.bf16.msra.mxu0 %v5633
    %6463 = vmatmul.bf16.gmra.mxu0 %v3191
    %v6464 = vpop.f32.mrf.mxu0
    %v6465 = vadd.f32 %v6452, %v6464
    %v6466 = vpop.f32.mrf.mxu0
    %6467 = vdwg.mxu0
    %6468 = vmatpush.bf16.msra.mxu0 %v5753
    %6469 = vmatpush.bf16.msra.mxu0 %v5745
    %6470 = vmatpush.bf16.msra.mxu0 %v5737
    %6471 = vmatpush.bf16.msra.mxu0 %v5729
    %6472 = vmatpush.bf16.msra.mxu0 %v5721
    %6473 = vmatpush.bf16.msra.mxu0 %v5713
    %6474 = vmatpush.bf16.msra.mxu0 %v5705
    %6475 = vmatpush.bf16.msra.mxu0 %v5697
    %6476 = vmatmul.bf16.gmra.mxu0 %v3192
    %v6477 = vpop.f32.mrf.mxu0
    %v6478 = vadd.f32 %v6465, %v6477
    %v6479 = vpop.f32.mrf.mxu0
    %6480 = vdwg.mxu0
    %6481 = vmatpush.bf16.msra.mxu0 %v5817
    %6482 = vmatpush.bf16.msra.mxu0 %v5809
    %6483 = vmatpush.bf16.msra.mxu0 %v5801
    %6484 = vmatpush.bf16.msra.mxu0 %v5793
    %6485 = vmatpush.bf16.msra.mxu0 %v5785
    %6486 = vmatpush.bf16.msra.mxu0 %v5777
    %6487 = vmatpush.bf16.msra.mxu0 %v5769
    %6488 = vmatpush.bf16.msra.mxu0 %v5761
    %6489 = vmatmul.bf16.gmra.mxu0 %v3193
    %v6490 = vpop.f32.mrf.mxu0
    %v6491 = vadd.f32 %v6478, %v6490
    %v6492 = vpop.f32.mrf.mxu0
    %6493 = vdwg.mxu0
    %6494 = vmatpush.bf16.msra.mxu0 %v5881
    %6495 = vmatpush.bf16.msra.mxu0 %v5873
    %6496 = vmatpush.bf16.msra.mxu0 %v5865
    %6497 = vmatpush.bf16.msra.mxu0 %v5857
    %6498 = vmatpush.bf16.msra.mxu0 %v5849
    %6499 = vmatpush.bf16.msra.mxu0 %v5841
    %6500 = vmatpush.bf16.msra.mxu0 %v5833
    %6501 = vmatpush.bf16.msra.mxu0 %v5825
    %6502 = vmatmul.bf16.gmra.mxu0 %v3194
    %v6503 = vpop.f32.mrf.mxu0
    %v6504 = vadd.f32 %v6491, %v6503
    %v6505 = vpop.f32.mrf.mxu0
    %6506 = vdwg.mxu0
    %6507 = vmatpush.bf16.msra.mxu0 %v5945
    %6508 = vmatpush.bf16.msra.mxu0 %v5937
    %6509 = vmatpush.bf16.msra.mxu0 %v5929
    %6510 = vmatpush.bf16.msra.mxu0 %v5921
    %6511 = vmatpush.bf16.msra.mxu0 %v5913
    %6512 = vmatpush.bf16.msra.mxu0 %v5905
    %6513 = vmatpush.bf16.msra.mxu0 %v5897
    %6514 = vmatpush.bf16.msra.mxu0 %v5889
    %6515 = vmatmul.bf16.gmra.mxu0 %v3195
    %v6516 = vpop.f32.mrf.mxu0
    %v6517 = vadd.f32 %v6504, %v6516
    %v6518 = vpop.f32.mrf.mxu0
    %6519 = vdwg.mxu0
    %6520 = vmatpush.bf16.msra.mxu0 %v6009
    %6521 = vmatpush.bf16.msra.mxu0 %v6001
    %6522 = vmatpush.bf16.msra.mxu0 %v5993
    %6523 = vmatpush.bf16.msra.mxu0 %v5985
    %6524 = vmatpush.bf16.msra.mxu0 %v5977
    %6525 = vmatpush.bf16.msra.mxu0 %v5969
    %6526 = vmatpush.bf16.msra.mxu0 %v5961
    %6527 = vmatpush.bf16.msra.mxu0 %v5953
    %6528 = vmatmul.bf16.gmra.mxu0 %v3196
    %v6529 = vpop.f32.mrf.mxu0
    %v6530 = vadd.f32 %v6517, %v6529
    %v6531 = vpop.f32.mrf.mxu0
    %6532 = vdwg.mxu0
    %6533 = vmatpush.bf16.msra.mxu0 %v5562
    %6534 = vmatpush.bf16.msra.mxu0 %v5554
    %6535 = vmatpush.bf16.msra.mxu0 %v5546
    %6536 = vmatpush.bf16.msra.mxu0 %v5538
    %6537 = vmatpush.bf16.msra.mxu0 %v5530
    %6538 = vmatpush.bf16.msra.mxu0 %v5522
    %6539 = vmatpush.bf16.msra.mxu0 %v5514
    %6540 = vmatpush.bf16.msra.mxu0 %v5506
    %6541 = vmatmul.bf16.gmra.mxu0 %v3189
    %v6542 = vpop.f32.mrf.mxu0
    %v6543 = vadd.f32 0.0, %v6542
    %v6544 = vpop.f32.mrf.mxu0
    %6545 = vdwg.mxu0
    %6546 = vmatpush.bf16.msra.mxu0 %v5626
    %6547 = vmatpush.bf16.msra.mxu0 %v5618
    %6548 = vmatpush.bf16.msra.mxu0 %v5610
    %6549 = vmatpush.bf16.msra.mxu0 %v5602
    %6550 = vmatpush.bf16.msra.mxu0 %v5594
    %6551 = vmatpush.bf16.msra.mxu0 %v5586
    %6552 = vmatpush.bf16.msra.mxu0 %v5578
    %6553 = vmatpush.bf16.msra.mxu0 %v5570
    %6554 = vmatmul.bf16.gmra.mxu0 %v3190
    %v6555 = vpop.f32.mrf.mxu0
    %v6556 = vadd.f32 %v6543, %v6555
    %v6557 = vpop.f32.mrf.mxu0
    %6558 = vdwg.mxu0
    %6559 = vmatpush.bf16.msra.mxu0 %v5690
    %6560 = vmatpush.bf16.msra.mxu0 %v5682
    %6561 = vmatpush.bf16.msra.mxu0 %v5674
    %6562 = vmatpush.bf16.msra.mxu0 %v5666
    %6563 = vmatpush.bf16.msra.mxu0 %v5658
    %6564 = vmatpush.bf16.msra.mxu0 %v5650
    %6565 = vmatpush.bf16.msra.mxu0 %v5642
    %6566 = vmatpush.bf16.msra.mxu0 %v5634
    %6567 = vmatmul.bf16.gmra.mxu0 %v3191
    %v6568 = vpop.f32.mrf.mxu0
    %v6569 = vadd.f32 %v6556, %v6568
    %v6570 = vpop.f32.mrf.mxu0
    %6571 = vdwg.mxu0
    %6572 = vmatpush.bf16.msra.mxu0 %v5754
    %6573 = vmatpush.bf16.msra.mxu0 %v5746
    %6574 = vmatpush.bf16.msra.mxu0 %v5738
    %6575 = vmatpush.bf16.msra.mxu0 %v5730
    %6576 = vmatpush.bf16.msra.mxu0 %v5722
    %6577 = vmatpush.bf16.msra.mxu0 %v5714
    %6578 = vmatpush.bf16.msra.mxu0 %v5706
    %6579 = vmatpush.bf16.msra.mxu0 %v5698
    %6580 = vmatmul.bf16.gmra.mxu0 %v3192
    %v6581 = vpop.f32.mrf.mxu0
    %v6582 = vadd.f32 %v6569, %v6581
    %v6583 = vpop.f32.mrf.mxu0
    %6584 = vdwg.mxu0
    %6585 = vmatpush.bf16.msra.mxu0 %v5818
    %6586 = vmatpush.bf16.msra.mxu0 %v5810
    %6587 = vmatpush.bf16.msra.mxu0 %v5802
    %6588 = vmatpush.bf16.msra.mxu0 %v5794
    %6589 = vmatpush.bf16.msra.mxu0 %v5786
    %6590 = vmatpush.bf16.msra.mxu0 %v5778
    %6591 = vmatpush.bf16.msra.mxu0 %v5770
    %6592 = vmatpush.bf16.msra.mxu0 %v5762
    %6593 = vmatmul.bf16.gmra.mxu0 %v3193
    %v6594 = vpop.f32.mrf.mxu0
    %v6595 = vadd.f32 %v6582, %v6594
    %v6596 = vpop.f32.mrf.mxu0
    %6597 = vdwg.mxu0
    %6598 = vmatpush.bf16.msra.mxu0 %v5882
    %6599 = vmatpush.bf16.msra.mxu0 %v5874
    %6600 = vmatpush.bf16.msra.mxu0 %v5866
    %6601 = vmatpush.bf16.msra.mxu0 %v5858
    %6602 = vmatpush.bf16.msra.mxu0 %v5850
    %6603 = vmatpush.bf16.msra.mxu0 %v5842
    %6604 = vmatpush.bf16.msra.mxu0 %v5834
    %6605 = vmatpush.bf16.msra.mxu0 %v5826
    %6606 = vmatmul.bf16.gmra.mxu0 %v3194
    %v6607 = vpop.f32.mrf.mxu0
    %v6608 = vadd.f32 %v6595, %v6607
    %v6609 = vpop.f32.mrf.mxu0
    %6610 = vdwg.mxu0
    %6611 = vmatpush.bf16.msra.mxu0 %v5946
    %6612 = vmatpush.bf16.msra.mxu0 %v5938
    %6613 = vmatpush.bf16.msra.mxu0 %v5930
    %6614 = vmatpush.bf16.msra.mxu0 %v5922
    %6615 = vmatpush.bf16.msra.mxu0 %v5914
    %6616 = vmatpush.bf16.msra.mxu0 %v5906
    %6617 = vmatpush.bf16.msra.mxu0 %v5898
    %6618 = vmatpush.bf16.msra.mxu0 %v5890
    %6619 = vmatmul.bf16.gmra.mxu0 %v3195
    %v6620 = vpop.f32.mrf.mxu0
    %v6621 = vadd.f32 %v6608, %v6620
    %v6622 = vpop.f32.mrf.mxu0
    %6623 = vdwg.mxu0
    %6624 = vmatpush.bf16.msra.mxu0 %v6010
    %6625 = vmatpush.bf16.msra.mxu0 %v6002
    %6626 = vmatpush.bf16.msra.mxu0 %v5994
    %6627 = vmatpush.bf16.msra.mxu0 %v5986
    %6628 = vmatpush.bf16.msra.mxu0 %v5978
    %6629 = vmatpush.bf16.msra.mxu0 %v5970
    %6630 = vmatpush.bf16.msra.mxu0 %v5962
    %6631 = vmatpush.bf16.msra.mxu0 %v5954
    %6632 = vmatmul.bf16.gmra.mxu0 %v3196
    %v6633 = vpop.f32.mrf.mxu0
    %v6634 = vadd.f32 %v6621, %v6633
    %v6635 = vpop.f32.mrf.mxu0
    %6636 = vdwg.mxu0
    %6637 = vmatpush.bf16.msra.mxu0 %v5563
    %6638 = vmatpush.bf16.msra.mxu0 %v5555
    %6639 = vmatpush.bf16.msra.mxu0 %v5547
    %6640 = vmatpush.bf16.msra.mxu0 %v5539
    %6641 = vmatpush.bf16.msra.mxu0 %v5531
    %6642 = vmatpush.bf16.msra.mxu0 %v5523
    %6643 = vmatpush.bf16.msra.mxu0 %v5515
    %6644 = vmatpush.bf16.msra.mxu0 %v5507
    %6645 = vmatmul.bf16.gmra.mxu0 %v3189
    %v6646 = vpop.f32.mrf.mxu0
    %v6647 = vadd.f32 0.0, %v6646
    %v6648 = vpop.f32.mrf.mxu0
    %6649 = vdwg.mxu0
    %6650 = vmatpush.bf16.msra.mxu0 %v5627
    %6651 = vmatpush.bf16.msra.mxu0 %v5619
    %6652 = vmatpush.bf16.msra.mxu0 %v5611
    %6653 = vmatpush.bf16.msra.mxu0 %v5603
    %6654 = vmatpush.bf16.msra.mxu0 %v5595
    %6655 = vmatpush.bf16.msra.mxu0 %v5587
    %6656 = vmatpush.bf16.msra.mxu0 %v5579
    %6657 = vmatpush.bf16.msra.mxu0 %v5571
    %6658 = vmatmul.bf16.gmra.mxu0 %v3190
    %v6659 = vpop.f32.mrf.mxu0
    %v6660 = vadd.f32 %v6647, %v6659
    %v6661 = vpop.f32.mrf.mxu0
    %6662 = vdwg.mxu0
    %6663 = vmatpush.bf16.msra.mxu0 %v5691
    %6664 = vmatpush.bf16.msra.mxu0 %v5683
    %6665 = vmatpush.bf16.msra.mxu0 %v5675
    %6666 = vmatpush.bf16.msra.mxu0 %v5667
    %6667 = vmatpush.bf16.msra.mxu0 %v5659
    %6668 = vmatpush.bf16.msra.mxu0 %v5651
    %6669 = vmatpush.bf16.msra.mxu0 %v5643
    %6670 = vmatpush.bf16.msra.mxu0 %v5635
    %6671 = vmatmul.bf16.gmra.mxu0 %v3191
    %v6672 = vpop.f32.mrf.mxu0
    %v6673 = vadd.f32 %v6660, %v6672
    %v6674 = vpop.f32.mrf.mxu0
    %6675 = vdwg.mxu0
    %6676 = vmatpush.bf16.msra.mxu0 %v5755
    %6677 = vmatpush.bf16.msra.mxu0 %v5747
    %6678 = vmatpush.bf16.msra.mxu0 %v5739
    %6679 = vmatpush.bf16.msra.mxu0 %v5731
    %6680 = vmatpush.bf16.msra.mxu0 %v5723
    %6681 = vmatpush.bf16.msra.mxu0 %v5715
    %6682 = vmatpush.bf16.msra.mxu0 %v5707
    %6683 = vmatpush.bf16.msra.mxu0 %v5699
    %6684 = vmatmul.bf16.gmra.mxu0 %v3192
    %v6685 = vpop.f32.mrf.mxu0
    %v6686 = vadd.f32 %v6673, %v6685
    %v6687 = vpop.f32.mrf.mxu0
    %6688 = vdwg.mxu0
    %6689 = vmatpush.bf16.msra.mxu0 %v5819
    %6690 = vmatpush.bf16.msra.mxu0 %v5811
    %6691 = vmatpush.bf16.msra.mxu0 %v5803
    %6692 = vmatpush.bf16.msra.mxu0 %v5795
    %6693 = vmatpush.bf16.msra.mxu0 %v5787
    %6694 = vmatpush.bf16.msra.mxu0 %v5779
    %6695 = vmatpush.bf16.msra.mxu0 %v5771
    %6696 = vmatpush.bf16.msra.mxu0 %v5763
    %6697 = vmatmul.bf16.gmra.mxu0 %v3193
    %v6698 = vpop.f32.mrf.mxu0
    %v6699 = vadd.f32 %v6686, %v6698
    %v6700 = vpop.f32.mrf.mxu0
    %6701 = vdwg.mxu0
    %6702 = vmatpush.bf16.msra.mxu0 %v5883
    %6703 = vmatpush.bf16.msra.mxu0 %v5875
    %6704 = vmatpush.bf16.msra.mxu0 %v5867
    %6705 = vmatpush.bf16.msra.mxu0 %v5859
    %6706 = vmatpush.bf16.msra.mxu0 %v5851
    %6707 = vmatpush.bf16.msra.mxu0 %v5843
    %6708 = vmatpush.bf16.msra.mxu0 %v5835
    %6709 = vmatpush.bf16.msra.mxu0 %v5827
    %6710 = vmatmul.bf16.gmra.mxu0 %v3194
    %v6711 = vpop.f32.mrf.mxu0
    %v6712 = vadd.f32 %v6699, %v6711
    %v6713 = vpop.f32.mrf.mxu0
    %6714 = vdwg.mxu0
    %6715 = vmatpush.bf16.msra.mxu0 %v5947
    %6716 = vmatpush.bf16.msra.mxu0 %v5939
    %6717 = vmatpush.bf16.msra.mxu0 %v5931
    %6718 = vmatpush.bf16.msra.mxu0 %v5923
    %6719 = vmatpush.bf16.msra.mxu0 %v5915
    %6720 = vmatpush.bf16.msra.mxu0 %v5907
    %6721 = vmatpush.bf16.msra.mxu0 %v5899
    %6722 = vmatpush.bf16.msra.mxu0 %v5891
    %6723 = vmatmul.bf16.gmra.mxu0 %v3195
    %v6724 = vpop.f32.mrf.mxu0
    %v6725 = vadd.f32 %v6712, %v6724
    %v6726 = vpop.f32.mrf.mxu0
    %6727 = vdwg.mxu0
    %6728 = vmatpush.bf16.msra.mxu0 %v6011
    %6729 = vmatpush.bf16.msra.mxu0 %v6003
    %6730 = vmatpush.bf16.msra.mxu0 %v5995
    %6731 = vmatpush.bf16.msra.mxu0 %v5987
    %6732 = vmatpush.bf16.msra.mxu0 %v5979
    %6733 = vmatpush.bf16.msra.mxu0 %v5971
    %6734 = vmatpush.bf16.msra.mxu0 %v5963
    %6735 = vmatpush.bf16.msra.mxu0 %v5955
    %6736 = vmatmul.bf16.gmra.mxu0 %v3196
    %v6737 = vpop.f32.mrf.mxu0
    %v6738 = vadd.f32 %v6725, %v6737
    %v6739 = vpop.f32.mrf.mxu0
    %6740 = vdwg.mxu0
    %6741 = vmatpush.bf16.msra.mxu0 %v5564
    %6742 = vmatpush.bf16.msra.mxu0 %v5556
    %6743 = vmatpush.bf16.msra.mxu0 %v5548
    %6744 = vmatpush.bf16.msra.mxu0 %v5540
    %6745 = vmatpush.bf16.msra.mxu0 %v5532
    %6746 = vmatpush.bf16.msra.mxu0 %v5524
    %6747 = vmatpush.bf16.msra.mxu0 %v5516
    %6748 = vmatpush.bf16.msra.mxu0 %v5508
    %6749 = vmatmul.bf16.gmra.mxu0 %v3189
    %v6750 = vpop.f32.mrf.mxu0
    %v6751 = vadd.f32 0.0, %v6750
    %v6752 = vpop.f32.mrf.mxu0
    %6753 = vdwg.mxu0
    %6754 = vmatpush.bf16.msra.mxu0 %v5628
    %6755 = vmatpush.bf16.msra.mxu0 %v5620
    %6756 = vmatpush.bf16.msra.mxu0 %v5612
    %6757 = vmatpush.bf16.msra.mxu0 %v5604
    %6758 = vmatpush.bf16.msra.mxu0 %v5596
    %6759 = vmatpush.bf16.msra.mxu0 %v5588
    %6760 = vmatpush.bf16.msra.mxu0 %v5580
    %6761 = vmatpush.bf16.msra.mxu0 %v5572
    %6762 = vmatmul.bf16.gmra.mxu0 %v3190
    %v6763 = vpop.f32.mrf.mxu0
    %v6764 = vadd.f32 %v6751, %v6763
    %v6765 = vpop.f32.mrf.mxu0
    %6766 = vdwg.mxu0
    %6767 = vmatpush.bf16.msra.mxu0 %v5692
    %6768 = vmatpush.bf16.msra.mxu0 %v5684
    %6769 = vmatpush.bf16.msra.mxu0 %v5676
    %6770 = vmatpush.bf16.msra.mxu0 %v5668
    %6771 = vmatpush.bf16.msra.mxu0 %v5660
    %6772 = vmatpush.bf16.msra.mxu0 %v5652
    %6773 = vmatpush.bf16.msra.mxu0 %v5644
    %6774 = vmatpush.bf16.msra.mxu0 %v5636
    %6775 = vmatmul.bf16.gmra.mxu0 %v3191
    %v6776 = vpop.f32.mrf.mxu0
    %v6777 = vadd.f32 %v6764, %v6776
    %v6778 = vpop.f32.mrf.mxu0
    %6779 = vdwg.mxu0
    %6780 = vmatpush.bf16.msra.mxu0 %v5756
    %6781 = vmatpush.bf16.msra.mxu0 %v5748
    %6782 = vmatpush.bf16.msra.mxu0 %v5740
    %6783 = vmatpush.bf16.msra.mxu0 %v5732
    %6784 = vmatpush.bf16.msra.mxu0 %v5724
    %6785 = vmatpush.bf16.msra.mxu0 %v5716
    %6786 = vmatpush.bf16.msra.mxu0 %v5708
    %6787 = vmatpush.bf16.msra.mxu0 %v5700
    %6788 = vmatmul.bf16.gmra.mxu0 %v3192
    %v6789 = vpop.f32.mrf.mxu0
    %v6790 = vadd.f32 %v6777, %v6789
    %v6791 = vpop.f32.mrf.mxu0
    %6792 = vdwg.mxu0
    %6793 = vmatpush.bf16.msra.mxu0 %v5820
    %6794 = vmatpush.bf16.msra.mxu0 %v5812
    %6795 = vmatpush.bf16.msra.mxu0 %v5804
    %6796 = vmatpush.bf16.msra.mxu0 %v5796
    %6797 = vmatpush.bf16.msra.mxu0 %v5788
    %6798 = vmatpush.bf16.msra.mxu0 %v5780
    %6799 = vmatpush.bf16.msra.mxu0 %v5772
    %6800 = vmatpush.bf16.msra.mxu0 %v5764
    %6801 = vmatmul.bf16.gmra.mxu0 %v3193
    %v6802 = vpop.f32.mrf.mxu0
    %v6803 = vadd.f32 %v6790, %v6802
    %v6804 = vpop.f32.mrf.mxu0
    %6805 = vdwg.mxu0
    %6806 = vmatpush.bf16.msra.mxu0 %v5884
    %6807 = vmatpush.bf16.msra.mxu0 %v5876
    %6808 = vmatpush.bf16.msra.mxu0 %v5868
    %6809 = vmatpush.bf16.msra.mxu0 %v5860
    %6810 = vmatpush.bf16.msra.mxu0 %v5852
    %6811 = vmatpush.bf16.msra.mxu0 %v5844
    %6812 = vmatpush.bf16.msra.mxu0 %v5836
    %6813 = vmatpush.bf16.msra.mxu0 %v5828
    %6814 = vmatmul.bf16.gmra.mxu0 %v3194
    %v6815 = vpop.f32.mrf.mxu0
    %v6816 = vadd.f32 %v6803, %v6815
    %v6817 = vpop.f32.mrf.mxu0
    %6818 = vdwg.mxu0
    %6819 = vmatpush.bf16.msra.mxu0 %v5948
    %6820 = vmatpush.bf16.msra.mxu0 %v5940
    %6821 = vmatpush.bf16.msra.mxu0 %v5932
    %6822 = vmatpush.bf16.msra.mxu0 %v5924
    %6823 = vmatpush.bf16.msra.mxu0 %v5916
    %6824 = vmatpush.bf16.msra.mxu0 %v5908
    %6825 = vmatpush.bf16.msra.mxu0 %v5900
    %6826 = vmatpush.bf16.msra.mxu0 %v5892
    %6827 = vmatmul.bf16.gmra.mxu0 %v3195
    %v6828 = vpop.f32.mrf.mxu0
    %v6829 = vadd.f32 %v6816, %v6828
    %v6830 = vpop.f32.mrf.mxu0
    %6831 = vdwg.mxu0
    %6832 = vmatpush.bf16.msra.mxu0 %v6012
    %6833 = vmatpush.bf16.msra.mxu0 %v6004
    %6834 = vmatpush.bf16.msra.mxu0 %v5996
    %6835 = vmatpush.bf16.msra.mxu0 %v5988
    %6836 = vmatpush.bf16.msra.mxu0 %v5980
    %6837 = vmatpush.bf16.msra.mxu0 %v5972
    %6838 = vmatpush.bf16.msra.mxu0 %v5964
    %6839 = vmatpush.bf16.msra.mxu0 %v5956
    %6840 = vmatmul.bf16.gmra.mxu0 %v3196
    %v6841 = vpop.f32.mrf.mxu0
    %v6842 = vadd.f32 %v6829, %v6841
    %v6843 = vpop.f32.mrf.mxu0
    %6844 = vdwg.mxu0
    %v6846 = vperm.slane %v144, 0
    %v6847 = vperm.slane %v144, 1
    %v6848 = vperm.slane %v144, 2
    %v6849 = vperm.slane %v144, 3
    %v6850 = vperm.slane %v144, 4
    %v6851 = vperm.slane %v144, 5
    %v6852 = vperm.slane %v144, 6
    %v6853 = vperm.slane %v144, 7
    %v6862 = vmul.f32 %v6114, %v6846
    %v6863 = vmul.f32 %v6218, %v6847
    %v6864 = vmul.f32 %v6322, %v6848
    %v6865 = vmul.f32 %v6426, %v6849
    %v6866 = vmul.f32 %v6530, %v6850
    %v6867 = vmul.f32 %v6634, %v6851
    %v6868 = vmul.f32 %v6738, %v6852
    %v6869 = vmul.f32 %v6842, %v6853
    %v6871 = vperm.slane %v148, 0
    %v6872 = vperm.slane %v148, 1
    %v6873 = vperm.slane %v148, 2
    %v6874 = vperm.slane %v148, 3
    %v6875 = vperm.slane %v148, 4
    %v6876 = vperm.slane %v148, 5
    %v6877 = vperm.slane %v148, 6
    %v6878 = vperm.slane %v148, 7
    %v6887 = vadd.f32 %v6862, %v6871
    %v6888 = vadd.f32 %v6863, %v6872
    %v6889 = vadd.f32 %v6864, %v6873
    %v6890 = vadd.f32 %v6865, %v6874
    %v6891 = vadd.f32 %v6866, %v6875
    %v6892 = vadd.f32 %v6867, %v6876
    %v6893 = vadd.f32 %v6868, %v6877
    %v6894 = vadd.f32 %v6869, %v6878
    %v6895 = vtanh.pop %v6887
    %v6896 = vtanh.pop %v6888
    %v6897 = vtanh.pop %v6889
    %v6898 = vtanh.pop %v6890
    %v6899 = vtanh.pop %v6891
    %v6900 = vtanh.pop %v6892
    %v6901 = vtanh.pop %v6893
    %v6902 = vtanh.pop %v6894
    %v6903 = vpack.c.bf16 %v6896, %v6895
    %v6904 = vpack.c.bf16 %v6898, %v6897
    %v6905 = vpack.c.bf16 %v6900, %v6899
    %v6906 = vpack.c.bf16 %v6902, %v6901
    %6907 = vst [vmem:[#allocation13] sm:$0xff] %v6903
    %6908 = vst [vmem:[#allocation13 + $0x8] sm:$0xff] %v6904
    %6909 = vst [vmem:[#allocation13 + $0x10] sm:$0xff] %v6905
    %6910 = vst [vmem:[#allocation13 + $0x18] sm:$0xff] %v6906
    // Predicated region
    $region50: #{tpu_custom_call.1} parent=1 // pred_check
      _
    $region51: #{tpu_custom_call.1} parent=1 // pred_check_branch
      %6912 = sbr.rel (0) target = $region53
    $region52: #{tpu_custom_call.1} parent=1 // pred_region
      %6914 = vsyncadd [#allocation4], 0
      %s6916 = sshll.u32 [#allocation13], 4
      %s6917 = int_to_ptr.vmem [resolvable:$true] %s6916
      %s6918 = sshll.u32 %s6, 4
      %s6919 = int_to_ptr.hbm [resolvable:$true] %s6918
      %6921 = dma.vmem_to_hbm [thread:$0]  %s6917, 512, %s6919, [#allocation4]
    $region53: #{tpu_custom_call.1} parent=1 // pred_fallthru
      _
    // Predicated region
    $region54: #{tpu_custom_call.1} parent=1 // pred_check
      _
    $region55: #{tpu_custom_call.1} parent=1 // pred_check_branch
      %6923 = sbr.rel (0) target = $region57
    $region56: #{tpu_custom_call.1} parent=1 // pred_region
      %6925 = dma.done [#allocation4], 512
    $region57: #{tpu_custom_call.1} parent=1 // pred_fallthru
      _
    %6926 = vsyncpa [#allocation3], 1
    %6927 = vsyncpa [#allocation6], 1
    %6928 = vsyncpa [#allocation9], 1
    %6929 = vsyncpa [#allocation12], 1
    %6930 = vsyncpa [#allocation4], 1

</llo_original>
